<compile_context>
chip_gen: v5e
topology: v5e:2x2
jax: 0.10.0
libtpu: 0.0.40
codegen_flags: <defaults>
</compile_context>

<pallas_src>
import functools

import numpy as np
import jax
import jax.numpy as jnp
from jax.experimental import pallas as pl
from jax.experimental.pallas import tpu as pltpu

EPS = 0.001


# --------------------------------------------------------------------------
# Pallas kernel: conv-as-one-matmul + training-mode BN + ReLU, fully fused
# --------------------------------------------------------------------------
def _conv_bn_relu_kernel(x_ref, w_ref, gamma_ref, beta_ref, out_ref, *, rows):
    """x_ref: (R, Kdim) bf16 im2col'd activations (R = N*H*W)
       w_ref: (Kdim, C) bf16 conv weight with (ky, kx, cin) folded into Kdim
       gamma_ref, beta_ref: (1, C) f32
       out_ref: (R, C) f32 = relu(batchnorm(conv(x)))"""
    acc = jnp.dot(x_ref[...], w_ref[...], preferred_element_type=jnp.float32)
    inv_cnt = jnp.float32(1.0 / rows)
    mean = jnp.sum(acc, axis=0, keepdims=True) * inv_cnt
    centered = acc - mean
    var = jnp.sum(centered * centered, axis=0, keepdims=True) * inv_cnt
    scale = gamma_ref[...] * jax.lax.rsqrt(var + EPS)
    out_ref[...] = jnp.maximum(centered * scale + beta_ref[...], 0.0)


def conv_bn_relu(cols, w_mat, gamma, beta):
    """cols: (R, Kdim), w_mat: (Kdim, C). Returns (R, C) f32."""
    R, Kdim = cols.shape
    Cout = w_mat.shape[1]
    return pl.pallas_call(
        functools.partial(_conv_bn_relu_kernel, rows=R),
        grid=(1,),
        out_shape=jax.ShapeDtypeStruct((R, Cout), jnp.float32),
        in_specs=[pl.BlockSpec((R, Kdim), lambda i: (0, 0)),
                  pl.BlockSpec((Kdim, Cout), lambda i: (0, 0)),
                  pl.BlockSpec((1, Cout), lambda i: (0, 0)),
                  pl.BlockSpec((1, Cout), lambda i: (0, 0))],
        out_specs=pl.BlockSpec((R, Cout), lambda i: (0, 0)),
        compiler_params=pltpu.CompilerParams(
            dimension_semantics=("parallel",)),
    )(cols.astype(jnp.bfloat16), w_mat.astype(jnp.bfloat16),
      gamma.reshape(1, Cout).astype(jnp.float32),
      beta.reshape(1, Cout).astype(jnp.float32))


# --------------------------------------------------------------------------
# Glue (pure data movement / tiny VPU work)
# --------------------------------------------------------------------------
def _im2col(x_nhwc, K, pad):
    """(N,H,W,Cin) -> (N*H*W, K*K*Cin); (ky,kx,cin) row-major in last dim."""
    N, H, W, Cin = x_nhwc.shape
    if K == 1:
        return x_nhwc.reshape(N * H * W, Cin)
    xp = jnp.pad(x_nhwc, ((0, 0), (pad, pad), (pad, pad), (0, 0)))
    taps = [xp[:, i:i + H, j:j + W, :] for i in range(K) for j in range(K)]
    return jnp.concatenate(taps, axis=-1).reshape(N * H * W, K * K * Cin)


def _avgpool3(x_nhwc):
    """AvgPool2d(3, stride=1, pad=1, count_include_pad=True)."""
    N, H, W, _ = x_nhwc.shape
    xp = jnp.pad(x_nhwc, ((0, 0), (1, 1), (1, 1), (0, 0)))
    acc = jnp.zeros_like(x_nhwc)
    for i in range(3):
        for j in range(3):
            acc = acc + xp[:, i:i + H, j:j + W, :]
    return acc / 9.0


# --------------------------------------------------------------------------
# Inception1 forward (matches the PyTorch module)
# --------------------------------------------------------------------------
def inception1_forward(x_nchw, P):
    x = jnp.transpose(x_nchw, (0, 2, 3, 1)).astype(jnp.float32)   # NHWC
    N, H, W, Cin = x.shape
    R = N * H * W

    # ---- fused 1x1 stem over [x, avgpool(x)] -> [b1 | b2_in | b3_in | b4]
    pooled = _avgpool3(x)
    stem_in = jnp.concatenate([x, pooled], axis=-1).reshape(R, 2 * Cin)

    w1 = P['w1_1'].reshape(Cin, -1)      # (Cin, 64)
    w2 = P['w2_1'].reshape(Cin, -1)      # (Cin, 48)
    w3 = P['w3_1'].reshape(Cin, -1)      # (Cin, 64)
    w4 = P['w4_1'].reshape(Cin, -1)      # (Cin, C4)
    c1, c2, c3, c4 = w1.shape[1], w2.shape[1], w3.shape[1], w4.shape[1]
    z = jnp.zeros
    w_top = jnp.concatenate([w1, w2, w3, z((Cin, c4), jnp.float32)], axis=1)
    w_bot = jnp.concatenate([z((Cin, c1 + c2 + c3), jnp.float32), w4], axis=1)
    w_stem = jnp.concatenate([w_top, w_bot], axis=0)          # (2*Cin, 208)

    g_stem = jnp.concatenate([P['bn1_1'][0], P['bn2_1'][0],
                              P['bn3_1'][0], P['bn4_1'][0]])
    b_stem = jnp.concatenate([P['bn1_1'][1], P['bn2_1'][1],
                              P['bn3_1'][1], P['bn4_1'][1]])

    stem = conv_bn_relu(stem_in, w_stem, g_stem, b_stem)       # (R, 208)

    b1 = stem[:, :c1]                                          # (R, 64)
    b2 = stem[:, c1:c1 + c2].reshape(N, H, W, c2)              # (N,H,W,48)
    b3 = stem[:, c1 + c2:c1 + c2 + c3].reshape(N, H, W, c3)    # (N,H,W,64)
    b4 = stem[:, c1 + c2 + c3:]                                # (R, C4)

    # ---- branch 2: 5x5 conv (contraction 5*5*48 = 1200) ------------------
    b2 = conv_bn_relu(_im2col(b2, 5, 2), P['w2_2'].reshape(-1, 64),
                      *P['bn2_2'])                             # (R, 64)

    # ---- branch 3: two 3x3 convs (contractions 576 and 864) --------------
    b3 = conv_bn_relu(_im2col(b3, 3, 1), P['w3_2'].reshape(-1, 96),
                      *P['bn3_2'])
    b3 = conv_bn_relu(_im2col(b3.reshape(N, H, W, 96), 3, 1),
                      P['w3_3'].reshape(-1, 96), *P['bn3_3'])  # (R, 96)

    out = jnp.concatenate([b1, b2, b3, b4], axis=-1)           # (R, 256)
    out = out.reshape(N, H, W, -1)
    return jnp.transpose(out, (0, 3, 1, 2))                    # back to NCHW


# --------------------------------------------------------------------------
# Deterministic parameter init (shapes per the PyTorch __init__)
# --------------------------------------------------------------------------
def init_params(key, input_channels, pool_output_channels):
    keys = jax.random.split(key, 14)

    def conv_w(k, cin, cout, ksz):                    # HWIO layout
        fan_in = cin * ksz * ksz
        return jax.random.normal(k, (ksz, ksz, cin, cout),
                                 jnp.float32) / np.sqrt(fan_in)

    def bn_p(k, c):
        k1, k2 = jax.random.split(k)
        gamma = jax.random.uniform(k1, (c,), jnp.float32, 0.5, 1.5)
        beta = 0.1 * jax.random.normal(k2, (c,), jnp.float32)
        return gamma, beta

    P = {}
    P['w1_1'] = conv_w(keys[0], input_channels, 64, 1); P['bn1_1'] = bn_p(keys[1], 64)
    P['w2_1'] = conv_w(keys[2], input_channels, 48, 1); P['bn2_1'] = bn_p(keys[3], 48)
    P['w2_2'] = conv_w(keys[4], 48, 64, 5);             P['bn2_2'] = bn_p(keys[5], 64)
    P['w3_1'] = conv_w(keys[6], input_channels, 64, 1); P['bn3_1'] = bn_p(keys[7], 64)
    P['w3_2'] = conv_w(keys[8], 64, 96, 3);             P['bn3_2'] = bn_p(keys[9], 96)
    P['w3_3'] = conv_w(keys[10], 96, 96, 3);            P['bn3_3'] = bn_p(keys[11], 96)
    P['w4_1'] = conv_w(keys[12], input_channels, pool_output_channels, 1)
    P['bn4_1'] = bn_p(keys[13], pool_output_channels)
    return P


# --------------------------------------------------------------------------
# Reference (same numerics: bf16 conv operands, f32 accumulate, f32 BN)
# --------------------------------------------------------------------------
def ref_forward(x_nchw, P):
    x = jnp.transpose(x_nchw, (0, 2, 3, 1))

    def conv(h, w, pad):
        return jax.lax.conv_general_dilated(
            h.astype(jnp.bfloat16), w.astype(jnp.bfloat16), (1, 1),
            [(pad, pad), (pad, pad)],
            dimension_numbers=('NHWC', 'HWIO', 'NHWC'),
            preferred_element_type=jnp.float32)

    def bnrelu(y, gamma, beta):
        mean = jnp.mean(y, axis=(0, 1, 2))
        var = jnp.var(y, axis=(0, 1, 2))               # biased, training-mode BN
        return jnp.maximum((y - mean) * (gamma / jnp.sqrt(var + EPS)) + beta, 0.0)

    b1 = bnrelu(conv(x, P['w1_1'], 0), *P['bn1_1'])
    b2 = bnrelu(conv(x, P['w2_1'], 0), *P['bn2_1'])
    b2 = bnrelu(conv(b2, P['w2_2'], 2), *P['bn2_2'])
    b3 = bnrelu(conv(x, P['w3_1'], 0), *P['bn3_1'])
    b3 = bnrelu(conv(b3, P['w3_2'], 1), *P['bn3_2'])
    b3 = bnrelu(conv(b3, P['w3_3'], 1), *P['bn3_3'])
    pooled = jax.lax.reduce_window(
        x, 0.0, jax.lax.add, (1, 3, 3, 1), (1, 1, 1, 1),
        [(0, 0), (1, 1), (1, 1), (0, 0)]) / 9.0
    b4 = bnrelu(conv(pooled, P['w4_1'], 0), *P['bn4_1'])
    out = jnp.concatenate([b1, b2, b3, b4], axis=-1)
    return jnp.transpose(out, (0, 3, 1, 2))


# --------------------------------------------------------------------------
if __name__ == "__main__":
    key = jax.random.PRNGKey(0)
    kx, kp = jax.random.split(key)

    N, C, H, W = 2, 4, 16, 16
    pool_output_channels = 32

    x = jax.random.normal(kx, (N, C, H, W), jnp.float32)
    P = init_params(kp, C, pool_output_channels)

    out = jax.block_until_ready(jax.jit(inception1_forward)(x, P))
    assert out.shape == (N, 64 + 64 + 96 + pool_output_channels, H, W), out.shape

    ref = jax.block_until_ready(ref_forward(x, P))
    if not np.allclose(np.asarray(out), np.asarray(ref), rtol=5e-2, atol=5e-2):
        diff = float(np.max(np.abs(np.asarray(out) - np.asarray(ref))))
        raise AssertionError(f"Pallas output mismatch vs reference, max|diff|={diff}")

    print("KERNEL_OK")
</pallas_src>

<mosaic_0001>
module attributes {stable_mosaic.version = 11 : i64} {
  func.func @_conv_bn_relu_kernel(%arg0: i32, %arg1: memref<512x8xbf16, #tpu.memory_space<vmem>>, %arg2: memref<8x208xbf16, #tpu.memory_space<vmem>>, %arg3: memref<1x208xf32, #tpu.memory_space<vmem>>, %arg4: memref<1x208xf32, #tpu.memory_space<vmem>>, %arg5: memref<512x208xf32, #tpu.memory_space<vmem>>) attributes {dimension_semantics = [#tpu.dimension_semantics<parallel>], iteration_bounds = array<i64: 1>, scalar_prefetch = 0 : i64, scratch_operands = 0 : i64, tpu.core_type = #tpu.core_type<tc>, window_params = [{pipeline_mode = #tpu.pipeline_mode<synchronous>, transform_indices = @transform_0, window_bounds = array<i64: 512, 8>}, {pipeline_mode = #tpu.pipeline_mode<synchronous>, transform_indices = @transform_1, window_bounds = array<i64: 8, 208>}, {pipeline_mode = #tpu.pipeline_mode<synchronous>, transform_indices = @transform_2, window_bounds = array<i64: 1, 208>}, {pipeline_mode = #tpu.pipeline_mode<synchronous>, transform_indices = @transform_3, window_bounds = array<i64: 1, 208>}, {pipeline_mode = #tpu.pipeline_mode<synchronous>, transform_indices = @transform_4, window_bounds = array<i64: 512, 208>}]} {
    %c0 = arith.constant 0 : index
    %c0_0 = arith.constant 0 : index
    %0 = vector.load %arg1[%c0, %c0_0] : memref<512x8xbf16, #tpu.memory_space<vmem>>, vector<512x8xbf16>
    %c0_1 = arith.constant 0 : index
    %c0_2 = arith.constant 0 : index
    %1 = vector.load %arg2[%c0_1, %c0_2] : memref<8x208xbf16, #tpu.memory_space<vmem>>, vector<8x208xbf16>
    %cst = arith.constant dense<0.000000e+00> : vector<512x208xf32>
    %2 = tpu.matmul %0, %1, %cst {dimension_numbers = #tpu.dot_dimension_numbers<[1], [0], [0], [1], [0, 0, 1, 1], [], []>} : vector<512x8xbf16>, vector<8x208xbf16>, vector<512x208xf32> -> vector<512x208xf32>
    %cst_3 = arith.constant dense<0.000000e+00> : vector<208xf32>
    %3 = vector.multi_reduction <add>, %2, %cst_3 [0] : vector<512x208xf32> to vector<208xf32>
    %4 = vector.shape_cast %3 : vector<208xf32> to vector<1x208xf32>
    %cst_4 = arith.constant 0.001953125 : f32
    %5 = vector.broadcast %cst_4 : f32 to vector<1x208xf32>
    %6 = arith.mulf %4, %5 : vector<1x208xf32>
    %7 = vector.broadcast %6 : vector<1x208xf32> to vector<512x208xf32>
    %8 = arith.subf %2, %7 : vector<512x208xf32>
    %9 = arith.mulf %8, %8 : vector<512x208xf32>
    %cst_5 = arith.constant dense<0.000000e+00> : vector<208xf32>
    %10 = vector.multi_reduction <add>, %9, %cst_5 [0] : vector<512x208xf32> to vector<208xf32>
    %11 = vector.shape_cast %10 : vector<208xf32> to vector<1x208xf32>
    %cst_6 = arith.constant 0.001953125 : f32
    %12 = vector.broadcast %cst_6 : f32 to vector<1x208xf32>
    %13 = arith.mulf %11, %12 : vector<1x208xf32>
    %c0_7 = arith.constant 0 : index
    %c0_8 = arith.constant 0 : index
    %14 = vector.load %arg3[%c0_7, %c0_8] : memref<1x208xf32, #tpu.memory_space<vmem>>, vector<1x208xf32>
    %cst_9 = arith.constant 1.000000e-03 : f32
    %15 = vector.broadcast %cst_9 : f32 to vector<1x208xf32>
    %16 = arith.addf %13, %15 : vector<1x208xf32>
    %17 = math.rsqrt %16 : vector<1x208xf32>
    %18 = arith.mulf %14, %17 : vector<1x208xf32>
    %19 = vector.broadcast %18 : vector<1x208xf32> to vector<512x208xf32>
    %20 = arith.mulf %8, %19 : vector<512x208xf32>
    %c0_10 = arith.constant 0 : index
    %c0_11 = arith.constant 0 : index
    %21 = vector.load %arg4[%c0_10, %c0_11] : memref<1x208xf32, #tpu.memory_space<vmem>>, vector<1x208xf32>
    %22 = vector.broadcast %21 : vector<1x208xf32> to vector<512x208xf32>
    %23 = arith.addf %20, %22 : vector<512x208xf32>
    %cst_12 = arith.constant 0.000000e+00 : f32
    %24 = vector.broadcast %cst_12 : f32 to vector<512x208xf32>
    %25 = arith.maximumf %23, %24 : vector<512x208xf32>
    %c0_13 = arith.constant 0 : index
    %c0_14 = arith.constant 0 : index
    %26 = vector.load %arg5[%c0_13, %c0_14] : memref<512x208xf32, #tpu.memory_space<vmem>>, vector<512x208xf32>
    tpu.vector_store %arg5[%c0_13, %c0_14], %25 {strides = array<i32>} : memref<512x208xf32, #tpu.memory_space<vmem>>, vector<512x208xf32>,
    return
  }
  func.func @transform_0(%arg0: i32) -> (i32, i32) {
    %c0_i32 = arith.constant 0 : i32
    %c0_i32_0 = arith.constant 0 : i32
    %c0_i32_1 = arith.constant 0 : i32
    return %c0_i32, %c0_i32_0 : i32, i32
  }
  func.func @transform_1(%arg0: i32) -> (i32, i32) {
    %c0_i32 = arith.constant 0 : i32
    %c0_i32_0 = arith.constant 0 : i32
    %c0_i32_1 = arith.constant 0 : i32
    return %c0_i32, %c0_i32_0 : i32, i32
  }
  func.func @transform_2(%arg0: i32) -> (i32, i32) {
    %c0_i32 = arith.constant 0 : i32
    %c0_i32_0 = arith.constant 0 : i32
    %c0_i32_1 = arith.constant 0 : i32
    return %c0_i32, %c0_i32_0 : i32, i32
  }
  func.func @transform_3(%arg0: i32) -> (i32, i32) {
    %c0_i32 = arith.constant 0 : i32
    %c0_i32_0 = arith.constant 0 : i32
    %c0_i32_1 = arith.constant 0 : i32
    return %c0_i32, %c0_i32_0 : i32, i32
  }
  func.func @transform_4(%arg0: i32) -> (i32, i32) {
    %c0_i32 = arith.constant 0 : i32
    %c0_i32_0 = arith.constant 0 : i32
    %c0_i32_1 = arith.constant 0 : i32
    return %c0_i32, %c0_i32_0 : i32, i32
  }
}

module attributes {stable_mosaic.version = 11 : i64} {
  func.func @_conv_bn_relu_kernel(%arg0: i32, %arg1: memref<512x1200xbf16, #tpu.memory_space<vmem>>, %arg2: memref<1200x64xbf16, #tpu.memory_space<vmem>>, %arg3: memref<1x64xf32, #tpu.memory_space<vmem>>, %arg4: memref<1x64xf32, #tpu.memory_space<vmem>>, %arg5: memref<512x64xf32, #tpu.memory_space<vmem>>) attributes {dimension_semantics = [#tpu.dimension_semantics<parallel>], iteration_bounds = array<i64: 1>, scalar_prefetch = 0 : i64, scratch_operands = 0 : i64, tpu.core_type = #tpu.core_type<tc>, window_params = [{pipeline_mode = #tpu.pipeline_mode<synchronous>, transform_indices = @transform_0, window_bounds = array<i64: 512, 1200>}, {pipeline_mode = #tpu.pipeline_mode<synchronous>, transform_indices = @transform_1, window_bounds = array<i64: 1200, 64>}, {pipeline_mode = #tpu.pipeline_mode<synchronous>, transform_indices = @transform_2, window_bounds = array<i64: 1, 64>}, {pipeline_mode = #tpu.pipeline_mode<synchronous>, transform_indices = @transform_3, window_bounds = array<i64: 1, 64>}, {pipeline_mode = #tpu.pipeline_mode<synchronous>, transform_indices = @transform_4, window_bounds = array<i64: 512, 64>}]} {
    %c0 = arith.constant 0 : index
    %c0_0 = arith.constant 0 : index
    %0 = vector.load %arg1[%c0, %c0_0] : memref<512x1200xbf16, #tpu.memory_space<vmem>>, vector<512x1200xbf16>
    %c0_1 = arith.constant 0 : index
    %c0_2 = arith.constant 0 : index
    %1 = vector.load %arg2[%c0_1, %c0_2] : memref<1200x64xbf16, #tpu.memory_space<vmem>>, vector<1200x64xbf16>
    %cst = arith.constant dense<0.000000e+00> : vector<512x64xf32>
    %2 = tpu.matmul %0, %1, %cst {dimension_numbers = #tpu.dot_dimension_numbers<[1], [0], [0], [1], [0, 0, 1, 1], [], []>} : vector<512x1200xbf16>, vector<1200x64xbf16>, vector<512x64xf32> -> vector<512x64xf32>
    %cst_3 = arith.constant dense<0.000000e+00> : vector<64xf32>
    %3 = vector.multi_reduction <add>, %2, %cst_3 [0] : vector<512x64xf32> to vector<64xf32>
    %4 = vector.shape_cast %3 : vector<64xf32> to vector<1x64xf32>
    %cst_4 = arith.constant 0.001953125 : f32
    %5 = vector.broadcast %cst_4 : f32 to vector<1x64xf32>
    %6 = arith.mulf %4, %5 : vector<1x64xf32>
    %7 = vector.broadcast %6 : vector<1x64xf32> to vector<512x64xf32>
    %8 = arith.subf %2, %7 : vector<512x64xf32>
    %9 = arith.mulf %8, %8 : vector<512x64xf32>
    %cst_5 = arith.constant dense<0.000000e+00> : vector<64xf32>
    %10 = vector.multi_reduction <add>, %9, %cst_5 [0] : vector<512x64xf32> to vector<64xf32>
    %11 = vector.shape_cast %10 : vector<64xf32> to vector<1x64xf32>
    %cst_6 = arith.constant 0.001953125 : f32
    %12 = vector.broadcast %cst_6 : f32 to vector<1x64xf32>
    %13 = arith.mulf %11, %12 : vector<1x64xf32>
    %c0_7 = arith.constant 0 : index
    %c0_8 = arith.constant 0 : index
    %14 = vector.load %arg3[%c0_7, %c0_8] : memref<1x64xf32, #tpu.memory_space<vmem>>, vector<1x64xf32>
    %cst_9 = arith.constant 1.000000e-03 : f32
    %15 = vector.broadcast %cst_9 : f32 to vector<1x64xf32>
    %16 = arith.addf %13, %15 : vector<1x64xf32>
    %17 = math.rsqrt %16 : vector<1x64xf32>
    %18 = arith.mulf %14, %17 : vector<1x64xf32>
    %19 = vector.broadcast %18 : vector<1x64xf32> to vector<512x64xf32>
    %20 = arith.mulf %8, %19 : vector<512x64xf32>
    %c0_10 = arith.constant 0 : index
    %c0_11 = arith.constant 0 : index
    %21 = vector.load %arg4[%c0_10, %c0_11] : memref<1x64xf32, #tpu.memory_space<vmem>>, vector<1x64xf32>
    %22 = vector.broadcast %21 : vector<1x64xf32> to vector<512x64xf32>
    %23 = arith.addf %20, %22 : vector<512x64xf32>
    %cst_12 = arith.constant 0.000000e+00 : f32
    %24 = vector.broadcast %cst_12 : f32 to vector<512x64xf32>
    %25 = arith.maximumf %23, %24 : vector<512x64xf32>
    %c0_13 = arith.constant 0 : index
    %c0_14 = arith.constant 0 : index
    %26 = vector.load %arg5[%c0_13, %c0_14] : memref<512x64xf32, #tpu.memory_space<vmem>>, vector<512x64xf32>
    tpu.vector_store %arg5[%c0_13, %c0_14], %25 {strides = array<i32>} : memref<512x64xf32, #tpu.memory_space<vmem>>, vector<512x64xf32>,
    return
  }
  func.func @transform_0(%arg0: i32) -> (i32, i32) {
    %c0_i32 = arith.constant 0 : i32
    %c0_i32_0 = arith.constant 0 : i32
    %c0_i32_1 = arith.constant 0 : i32
    return %c0_i32, %c0_i32_0 : i32, i32
  }
  func.func @transform_1(%arg0: i32) -> (i32, i32) {
    %c0_i32 = arith.constant 0 : i32
    %c0_i32_0 = arith.constant 0 : i32
    %c0_i32_1 = arith.constant 0 : i32
    return %c0_i32, %c0_i32_0 : i32, i32
  }
  func.func @transform_2(%arg0: i32) -> (i32, i32) {
    %c0_i32 = arith.constant 0 : i32
    %c0_i32_0 = arith.constant 0 : i32
    %c0_i32_1 = arith.constant 0 : i32
    return %c0_i32, %c0_i32_0 : i32, i32
  }
  func.func @transform_3(%arg0: i32) -> (i32, i32) {
    %c0_i32 = arith.constant 0 : i32
    %c0_i32_0 = arith.constant 0 : i32
    %c0_i32_1 = arith.constant 0 : i32
    return %c0_i32, %c0_i32_0 : i32, i32
  }
  func.func @transform_4(%arg0: i32) -> (i32, i32) {
    %c0_i32 = arith.constant 0 : i32
    %c0_i32_0 = arith.constant 0 : i32
    %c0_i32_1 = arith.constant 0 : i32
    return %c0_i32, %c0_i32_0 : i32, i32
  }
}

module attributes {stable_mosaic.version = 11 : i64} {
  func.func @_conv_bn_relu_kernel(%arg0: i32, %arg1: memref<512x576xbf16, #tpu.memory_space<vmem>>, %arg2: memref<576x96xbf16, #tpu.memory_space<vmem>>, %arg3: memref<1x96xf32, #tpu.memory_space<vmem>>, %arg4: memref<1x96xf32, #tpu.memory_space<vmem>>, %arg5: memref<512x96xf32, #tpu.memory_space<vmem>>) attributes {dimension_semantics = [#tpu.dimension_semantics<parallel>], iteration_bounds = array<i64: 1>, scalar_prefetch = 0 : i64, scratch_operands = 0 : i64, tpu.core_type = #tpu.core_type<tc>, window_params = [{pipeline_mode = #tpu.pipeline_mode<synchronous>, transform_indices = @transform_0, window_bounds = array<i64: 512, 576>}, {pipeline_mode = #tpu.pipeline_mode<synchronous>, transform_indices = @transform_1, window_bounds = array<i64: 576, 96>}, {pipeline_mode = #tpu.pipeline_mode<synchronous>, transform_indices = @transform_2, window_bounds = array<i64: 1, 96>}, {pipeline_mode = #tpu.pipeline_mode<synchronous>, transform_indices = @transform_3, window_bounds = array<i64: 1, 96>}, {pipeline_mode = #tpu.pipeline_mode<synchronous>, transform_indices = @transform_4, window_bounds = array<i64: 512, 96>}]} {
    %c0 = arith.constant 0 : index
    %c0_0 = arith.constant 0 : index
    %0 = vector.load %arg1[%c0, %c0_0] : memref<512x576xbf16, #tpu.memory_space<vmem>>, vector<512x576xbf16>
    %c0_1 = arith.constant 0 : index
    %c0_2 = arith.constant 0 : index
    %1 = vector.load %arg2[%c0_1, %c0_2] : memref<576x96xbf16, #tpu.memory_space<vmem>>, vector<576x96xbf16>
    %cst = arith.constant dense<0.000000e+00> : vector<512x96xf32>
    %2 = tpu.matmul %0, %1, %cst {dimension_numbers = #tpu.dot_dimension_numbers<[1], [0], [0], [1], [0, 0, 1, 1], [], []>} : vector<512x576xbf16>, vector<576x96xbf16>, vector<512x96xf32> -> vector<512x96xf32>
    %cst_3 = arith.constant dense<0.000000e+00> : vector<96xf32>
    %3 = vector.multi_reduction <add>, %2, %cst_3 [0] : vector<512x96xf32> to vector<96xf32>
    %4 = vector.shape_cast %3 : vector<96xf32> to vector<1x96xf32>
    %cst_4 = arith.constant 0.001953125 : f32
    %5 = vector.broadcast %cst_4 : f32 to vector<1x96xf32>
    %6 = arith.mulf %4, %5 : vector<1x96xf32>
    %7 = vector.broadcast %6 : vector<1x96xf32> to vector<512x96xf32>
    %8 = arith.subf %2, %7 : vector<512x96xf32>
    %9 = arith.mulf %8, %8 : vector<512x96xf32>
    %cst_5 = arith.constant dense<0.000000e+00> : vector<96xf32>
    %10 = vector.multi_reduction <add>, %9, %cst_5 [0] : vector<512x96xf32> to vector<96xf32>
    %11 = vector.shape_cast %10 : vector<96xf32> to vector<1x96xf32>
    %cst_6 = arith.constant 0.001953125 : f32
    %12 = vector.broadcast %cst_6 : f32 to vector<1x96xf32>
    %13 = arith.mulf %11, %12 : vector<1x96xf32>
    %c0_7 = arith.constant 0 : index
    %c0_8 = arith.constant 0 : index
    %14 = vector.load %arg3[%c0_7, %c0_8] : memref<1x96xf32, #tpu.memory_space<vmem>>, vector<1x96xf32>
    %cst_9 = arith.constant 1.000000e-03 : f32
    %15 = vector.broadcast %cst_9 : f32 to vector<1x96xf32>
    %16 = arith.addf %13, %15 : vector<1x96xf32>
    %17 = math.rsqrt %16 : vector<1x96xf32>
    %18 = arith.mulf %14, %17 : vector<1x96xf32>
    %19 = vector.broadcast %18 : vector<1x96xf32> to vector<512x96xf32>
    %20 = arith.mulf %8, %19 : vector<512x96xf32>
    %c0_10 = arith.constant 0 : index
    %c0_11 = arith.constant 0 : index
    %21 = vector.load %arg4[%c0_10, %c0_11] : memref<1x96xf32, #tpu.memory_space<vmem>>, vector<1x96xf32>
    %22 = vector.broadcast %21 : vector<1x96xf32> to vector<512x96xf32>
    %23 = arith.addf %20, %22 : vector<512x96xf32>
    %cst_12 = arith.constant 0.000000e+00 : f32
    %24 = vector.broadcast %cst_12 : f32 to vector<512x96xf32>
    %25 = arith.maximumf %23, %24 : vector<512x96xf32>
    %c0_13 = arith.constant 0 : index
    %c0_14 = arith.constant 0 : index
    %26 = vector.load %arg5[%c0_13, %c0_14] : memref<512x96xf32, #tpu.memory_space<vmem>>, vector<512x96xf32>
    tpu.vector_store %arg5[%c0_13, %c0_14], %25 {strides = array<i32>} : memref<512x96xf32, #tpu.memory_space<vmem>>, vector<512x96xf32>,
    return
  }
  func.func @transform_0(%arg0: i32) -> (i32, i32) {
    %c0_i32 = arith.constant 0 : i32
    %c0_i32_0 = arith.constant 0 : i32
    %c0_i32_1 = arith.constant 0 : i32
    return %c0_i32, %c0_i32_0 : i32, i32
  }
  func.func @transform_1(%arg0: i32) -> (i32, i32) {
    %c0_i32 = arith.constant 0 : i32
    %c0_i32_0 = arith.constant 0 : i32
    %c0_i32_1 = arith.constant 0 : i32
    return %c0_i32, %c0_i32_0 : i32, i32
  }
  func.func @transform_2(%arg0: i32) -> (i32, i32) {
    %c0_i32 = arith.constant 0 : i32
    %c0_i32_0 = arith.constant 0 : i32
    %c0_i32_1 = arith.constant 0 : i32
    return %c0_i32, %c0_i32_0 : i32, i32
  }
  func.func @transform_3(%arg0: i32) -> (i32, i32) {
    %c0_i32 = arith.constant 0 : i32
    %c0_i32_0 = arith.constant 0 : i32
    %c0_i32_1 = arith.constant 0 : i32
    return %c0_i32, %c0_i32_0 : i32, i32
  }
  func.func @transform_4(%arg0: i32) -> (i32, i32) {
    %c0_i32 = arith.constant 0 : i32
    %c0_i32_0 = arith.constant 0 : i32
    %c0_i32_1 = arith.constant 0 : i32
    return %c0_i32, %c0_i32_0 : i32, i32
  }
}

module attributes {stable_mosaic.version = 11 : i64} {
  func.func @_conv_bn_relu_kernel(%arg0: i32, %arg1: memref<512x864xbf16, #tpu.memory_space<vmem>>, %arg2: memref<864x96xbf16, #tpu.memory_space<vmem>>, %arg3: memref<1x96xf32, #tpu.memory_space<vmem>>, %arg4: memref<1x96xf32, #tpu.memory_space<vmem>>, %arg5: memref<512x96xf32, #tpu.memory_space<vmem>>) attributes {dimension_semantics = [#tpu.dimension_semantics<parallel>], iteration_bounds = array<i64: 1>, scalar_prefetch = 0 : i64, scratch_operands = 0 : i64, tpu.core_type = #tpu.core_type<tc>, window_params = [{pipeline_mode = #tpu.pipeline_mode<synchronous>, transform_indices = @transform_0, window_bounds = array<i64: 512, 864>}, {pipeline_mode = #tpu.pipeline_mode<synchronous>, transform_indices = @transform_1, window_bounds = array<i64: 864, 96>}, {pipeline_mode = #tpu.pipeline_mode<synchronous>, transform_indices = @transform_2, window_bounds = array<i64: 1, 96>}, {pipeline_mode = #tpu.pipeline_mode<synchronous>, transform_indices = @transform_3, window_bounds = array<i64: 1, 96>}, {pipeline_mode = #tpu.pipeline_mode<synchronous>, transform_indices = @transform_4, window_bounds = array<i64: 512, 96>}]} {
    %c0 = arith.constant 0 : index
    %c0_0 = arith.constant 0 : index
    %0 = vector.load %arg1[%c0, %c0_0] : memref<512x864xbf16, #tpu.memory_space<vmem>>, vector<512x864xbf16>
    %c0_1 = arith.constant 0 : index
    %c0_2 = arith.constant 0 : index
    %1 = vector.load %arg2[%c0_1, %c0_2] : memref<864x96xbf16, #tpu.memory_space<vmem>>, vector<864x96xbf16>
    %cst = arith.constant dense<0.000000e+00> : vector<512x96xf32>
    %2 = tpu.matmul %0, %1, %cst {dimension_numbers = #tpu.dot_dimension_numbers<[1], [0], [0], [1], [0, 0, 1, 1], [], []>} : vector<512x864xbf16>, vector<864x96xbf16>, vector<512x96xf32> -> vector<512x96xf32>
    %cst_3 = arith.constant dense<0.000000e+00> : vector<96xf32>
    %3 = vector.multi_reduction <add>, %2, %cst_3 [0] : vector<512x96xf32> to vector<96xf32>
    %4 = vector.shape_cast %3 : vector<96xf32> to vector<1x96xf32>
    %cst_4 = arith.constant 0.001953125 : f32
    %5 = vector.broadcast %cst_4 : f32 to vector<1x96xf32>
    %6 = arith.mulf %4, %5 : vector<1x96xf32>
    %7 = vector.broadcast %6 : vector<1x96xf32> to vector<512x96xf32>
    %8 = arith.subf %2, %7 : vector<512x96xf32>
    %9 = arith.mulf %8, %8 : vector<512x96xf32>
    %cst_5 = arith.constant dense<0.000000e+00> : vector<96xf32>
    %10 = vector.multi_reduction <add>, %9, %cst_5 [0] : vector<512x96xf32> to vector<96xf32>
    %11 = vector.shape_cast %10 : vector<96xf32> to vector<1x96xf32>
    %cst_6 = arith.constant 0.001953125 : f32
    %12 = vector.broadcast %cst_6 : f32 to vector<1x96xf32>
    %13 = arith.mulf %11, %12 : vector<1x96xf32>
    %c0_7 = arith.constant 0 : index
    %c0_8 = arith.constant 0 : index
    %14 = vector.load %arg3[%c0_7, %c0_8] : memref<1x96xf32, #tpu.memory_space<vmem>>, vector<1x96xf32>
    %cst_9 = arith.constant 1.000000e-03 : f32
    %15 = vector.broadcast %cst_9 : f32 to vector<1x96xf32>
    %16 = arith.addf %13, %15 : vector<1x96xf32>
    %17 = math.rsqrt %16 : vector<1x96xf32>
    %18 = arith.mulf %14, %17 : vector<1x96xf32>
    %19 = vector.broadcast %18 : vector<1x96xf32> to vector<512x96xf32>
    %20 = arith.mulf %8, %19 : vector<512x96xf32>
    %c0_10 = arith.constant 0 : index
    %c0_11 = arith.constant 0 : index
    %21 = vector.load %arg4[%c0_10, %c0_11] : memref<1x96xf32, #tpu.memory_space<vmem>>, vector<1x96xf32>
    %22 = vector.broadcast %21 : vector<1x96xf32> to vector<512x96xf32>
    %23 = arith.addf %20, %22 : vector<512x96xf32>
    %cst_12 = arith.constant 0.000000e+00 : f32
    %24 = vector.broadcast %cst_12 : f32 to vector<512x96xf32>
    %25 = arith.maximumf %23, %24 : vector<512x96xf32>
    %c0_13 = arith.constant 0 : index
    %c0_14 = arith.constant 0 : index
    %26 = vector.load %arg5[%c0_13, %c0_14] : memref<512x96xf32, #tpu.memory_space<vmem>>, vector<512x96xf32>
    tpu.vector_store %arg5[%c0_13, %c0_14], %25 {strides = array<i32>} : memref<512x96xf32, #tpu.memory_space<vmem>>, vector<512x96xf32>,
    return
  }
  func.func @transform_0(%arg0: i32) -> (i32, i32) {
    %c0_i32 = arith.constant 0 : i32
    %c0_i32_0 = arith.constant 0 : i32
    %c0_i32_1 = arith.constant 0 : i32
    return %c0_i32, %c0_i32_0 : i32, i32
  }
  func.func @transform_1(%arg0: i32) -> (i32, i32) {
    %c0_i32 = arith.constant 0 : i32
    %c0_i32_0 = arith.constant 0 : i32
    %c0_i32_1 = arith.constant 0 : i32
    return %c0_i32, %c0_i32_0 : i32, i32
  }
  func.func @transform_2(%arg0: i32) -> (i32, i32) {
    %c0_i32 = arith.constant 0 : i32
    %c0_i32_0 = arith.constant 0 : i32
    %c0_i32_1 = arith.constant 0 : i32
    return %c0_i32, %c0_i32_0 : i32, i32
  }
  func.func @transform_3(%arg0: i32) -> (i32, i32) {
    %c0_i32 = arith.constant 0 : i32
    %c0_i32_0 = arith.constant 0 : i32
    %c0_i32_1 = arith.constant 0 : i32
    return %c0_i32, %c0_i32_0 : i32, i32
  }
  func.func @transform_4(%arg0: i32) -> (i32, i32) {
    %c0_i32 = arith.constant 0 : i32
    %c0_i32_0 = arith.constant 0 : i32
    %c0_i32_1 = arith.constant 0 : i32
    return %c0_i32, %c0_i32_0 : i32, i32
  }
}

</mosaic_0001>

<llo_original>
// kernel: inception1_forward.4
$region0: #{inception1_forward.4}
  #allocation0 [shape = 'u32[]', space=smem, size = 0x4, offset = 0x4, fixed_abs, tag = 'smem constant byte address 0x4 - core index']
  #allocation1 [shape = 'u32[72,128]{1,0:T(1,128)}', space=vmem, size = 0x9000, scoped, tag = 'internal scratch']
  %s0 = inlined_call_operand.vmem [shape: bf16[512,8], index: 0, kind: input, shape index: {}]
  %s1 = inlined_call_operand.vmem [shape: bf16[8,208], index: 1, kind: input, shape index: {}]
  %s2 = inlined_call_operand.vmem [shape: f32[1,208], index: 2, kind: input, shape index: {}]
  %s3 = inlined_call_operand.vmem [shape: f32[1,208], index: 3, kind: input, shape index: {}]
  %s4 = inlined_call_operand.vmem [shape: f32[512,208], index: 4, kind: output, shape index: {}]
  %s5 = sld [smem:[#allocation0]]
  $region26: #{inception1_forward.4} parent=0
    _
  %s7 = ssub.s32 1, %s5
  %s8 = scalar_select 0, %s7, %s5
  // Predicated region
  $region2: #{inception1_forward.4} parent=0 // pred_check
    _
  $region3: #{inception1_forward.4} parent=0 // pred_check_branch
    %10 = sbr.rel (0) target = $region5
  $region4: #{inception1_forward.4} parent=0 // pred_region
    _
  $region5: #{inception1_forward.4} parent=0 // pred_fallthru
    _
  // Predicated region
  $region6: #{inception1_forward.4} parent=0 // pred_check
    _
  $region7: #{inception1_forward.4} parent=0 // pred_check_branch
    %12 = sbr.rel (0) target = $region9
  $region8: #{inception1_forward.4} parent=0 // pred_region
    _
  $region9: #{inception1_forward.4} parent=0 // pred_fallthru
    _
  // Predicated region
  $region10: #{inception1_forward.4} parent=0 // pred_check
    _
  $region11: #{inception1_forward.4} parent=0 // pred_check_branch
    %14 = sbr.rel (0) target = $region13
  $region12: #{inception1_forward.4} parent=0 // pred_region
    _
  $region13: #{inception1_forward.4} parent=0 // pred_fallthru
    _
  // Predicated region
  $region14: #{inception1_forward.4} parent=0 // pred_check
    _
  $region15: #{inception1_forward.4} parent=0 // pred_check_branch
    %16 = sbr.rel (0) target = $region17
  $region16: #{inception1_forward.4} parent=0 // pred_region
    _
  $region17: #{inception1_forward.4} parent=0 // pred_fallthru
    _
  %v18 = vld [vmem:[%s0] sm:$0xf]
  %v19 = vld [vmem:[%s0 + $0x4] sm:$0xf]
  %v20 = vld [vmem:[%s0 + $0x8] sm:$0xf]
  %v21 = vld [vmem:[%s0 + $0xc] sm:$0xf]
  %v22 = vld [vmem:[%s0 + $0x10] sm:$0xf]
  %v23 = vld [vmem:[%s0 + $0x14] sm:$0xf]
  %v24 = vld [vmem:[%s0 + $0x18] sm:$0xf]
  %v25 = vld [vmem:[%s0 + $0x1c] sm:$0xf]
  %v26 = vld [vmem:[%s0 + $0x20] sm:$0xf]
  %v27 = vld [vmem:[%s0 + $0x24] sm:$0xf]
  %v28 = vld [vmem:[%s0 + $0x28] sm:$0xf]
  %v29 = vld [vmem:[%s0 + $0x2c] sm:$0xf]
  %v30 = vld [vmem:[%s0 + $0x30] sm:$0xf]
  %v31 = vld [vmem:[%s0 + $0x34] sm:$0xf]
  %v32 = vld [vmem:[%s0 + $0x38] sm:$0xf]
  %v33 = vld [vmem:[%s0 + $0x3c] sm:$0xf]
  %v34 = vld [vmem:[%s0 + $0x40] sm:$0xf]
  %v35 = vld [vmem:[%s0 + $0x44] sm:$0xf]
  %v36 = vld [vmem:[%s0 + $0x48] sm:$0xf]
  %v37 = vld [vmem:[%s0 + $0x4c] sm:$0xf]
  %v38 = vld [vmem:[%s0 + $0x50] sm:$0xf]
  %v39 = vld [vmem:[%s0 + $0x54] sm:$0xf]
  %v40 = vld [vmem:[%s0 + $0x58] sm:$0xf]
  %v41 = vld [vmem:[%s0 + $0x5c] sm:$0xf]
  %v42 = vld [vmem:[%s0 + $0x60] sm:$0xf]
  %v43 = vld [vmem:[%s0 + $0x64] sm:$0xf]
  %v44 = vld [vmem:[%s0 + $0x68] sm:$0xf]
  %v45 = vld [vmem:[%s0 + $0x6c] sm:$0xf]
  %v46 = vld [vmem:[%s0 + $0x70] sm:$0xf]
  %v47 = vld [vmem:[%s0 + $0x74] sm:$0xf]
  %v48 = vld [vmem:[%s0 + $0x78] sm:$0xf]
  %v49 = vld [vmem:[%s0 + $0x7c] sm:$0xf]
  %v50 = vld [vmem:[%s0 + $0x80] sm:$0xf]
  %v51 = vld [vmem:[%s0 + $0x84] sm:$0xf]
  %v52 = vld [vmem:[%s0 + $0x88] sm:$0xf]
  %v53 = vld [vmem:[%s0 + $0x8c] sm:$0xf]
  %v54 = vld [vmem:[%s0 + $0x90] sm:$0xf]
  %v55 = vld [vmem:[%s0 + $0x94] sm:$0xf]
  %v56 = vld [vmem:[%s0 + $0x98] sm:$0xf]
  %v57 = vld [vmem:[%s0 + $0x9c] sm:$0xf]
  %v58 = vld [vmem:[%s0 + $0xa0] sm:$0xf]
  %v59 = vld [vmem:[%s0 + $0xa4] sm:$0xf]
  %v60 = vld [vmem:[%s0 + $0xa8] sm:$0xf]
  %v61 = vld [vmem:[%s0 + $0xac] sm:$0xf]
  %v62 = vld [vmem:[%s0 + $0xb0] sm:$0xf]
  %v63 = vld [vmem:[%s0 + $0xb4] sm:$0xf]
  %v64 = vld [vmem:[%s0 + $0xb8] sm:$0xf]
  %v65 = vld [vmem:[%s0 + $0xbc] sm:$0xf]
  %v66 = vld [vmem:[%s0 + $0xc0] sm:$0xf]
  %v67 = vld [vmem:[%s0 + $0xc4] sm:$0xf]
  %v68 = vld [vmem:[%s0 + $0xc8] sm:$0xf]
  %v69 = vld [vmem:[%s0 + $0xcc] sm:$0xf]
  %v70 = vld [vmem:[%s0 + $0xd0] sm:$0xf]
  %v71 = vld [vmem:[%s0 + $0xd4] sm:$0xf]
  %v72 = vld [vmem:[%s0 + $0xd8] sm:$0xf]
  %v73 = vld [vmem:[%s0 + $0xdc] sm:$0xf]
  %v74 = vld [vmem:[%s0 + $0xe0] sm:$0xf]
  %v75 = vld [vmem:[%s0 + $0xe4] sm:$0xf]
  %v76 = vld [vmem:[%s0 + $0xe8] sm:$0xf]
  %v77 = vld [vmem:[%s0 + $0xec] sm:$0xf]
  %v78 = vld [vmem:[%s0 + $0xf0] sm:$0xf]
  %v79 = vld [vmem:[%s0 + $0xf4] sm:$0xf]
  %v80 = vld [vmem:[%s0 + $0xf8] sm:$0xf]
  %v81 = vld [vmem:[%s0 + $0xfc] sm:$0xf]
  %v82 = vld [vmem:[%s1] sm:$0xff]
  %v147 = vunpack.c.l.b16 %v18
  %v148 = vunpack.c.l.b16 %v19
  %v149 = vunpack.c.l.b16 %v20
  %v150 = vunpack.c.l.b16 %v21
  %v151 = vunpack.c.l.b16 %v22
  %v152 = vunpack.c.l.b16 %v23
  %v153 = vunpack.c.l.b16 %v24
  %v154 = vunpack.c.l.b16 %v25
  %v155 = vunpack.c.l.b16 %v26
  %v156 = vunpack.c.l.b16 %v27
  %v157 = vunpack.c.l.b16 %v28
  %v158 = vunpack.c.l.b16 %v29
  %v159 = vunpack.c.l.b16 %v30
  %v160 = vunpack.c.l.b16 %v31
  %v161 = vunpack.c.l.b16 %v32
  %v162 = vunpack.c.l.b16 %v33
  %v163 = vunpack.c.l.b16 %v34
  %v164 = vunpack.c.l.b16 %v35
  %v165 = vunpack.c.l.b16 %v36
  %v166 = vunpack.c.l.b16 %v37
  %v167 = vunpack.c.l.b16 %v38
  %v168 = vunpack.c.l.b16 %v39
  %v169 = vunpack.c.l.b16 %v40
  %v170 = vunpack.c.l.b16 %v41
  %v171 = vunpack.c.l.b16 %v42
  %v172 = vunpack.c.l.b16 %v43
  %v173 = vunpack.c.l.b16 %v44
  %v174 = vunpack.c.l.b16 %v45
  %v175 = vunpack.c.l.b16 %v46
  %v176 = vunpack.c.l.b16 %v47
  %v177 = vunpack.c.l.b16 %v48
  %v178 = vunpack.c.l.b16 %v49
  %v179 = vunpack.c.l.b16 %v50
  %v180 = vunpack.c.l.b16 %v51
  %v181 = vunpack.c.l.b16 %v52
  %v182 = vunpack.c.l.b16 %v53
  %v183 = vunpack.c.l.b16 %v54
  %v184 = vunpack.c.l.b16 %v55
  %v185 = vunpack.c.l.b16 %v56
  %v186 = vunpack.c.l.b16 %v57
  %v187 = vunpack.c.l.b16 %v58
  %v188 = vunpack.c.l.b16 %v59
  %v189 = vunpack.c.l.b16 %v60
  %v190 = vunpack.c.l.b16 %v61
  %v191 = vunpack.c.l.b16 %v62
  %v192 = vunpack.c.l.b16 %v63
  %v193 = vunpack.c.l.b16 %v64
  %v194 = vunpack.c.l.b16 %v65
  %v195 = vunpack.c.l.b16 %v66
  %v196 = vunpack.c.l.b16 %v67
  %v197 = vunpack.c.l.b16 %v68
  %v198 = vunpack.c.l.b16 %v69
  %v199 = vunpack.c.l.b16 %v70
  %v200 = vunpack.c.l.b16 %v71
  %v201 = vunpack.c.l.b16 %v72
  %v202 = vunpack.c.l.b16 %v73
  %v203 = vunpack.c.l.b16 %v74
  %v204 = vunpack.c.l.b16 %v75
  %v205 = vunpack.c.l.b16 %v76
  %v206 = vunpack.c.l.b16 %v77
  %v207 = vunpack.c.l.b16 %v78
  %v208 = vunpack.c.l.b16 %v79
  %v209 = vunpack.c.l.b16 %v80
  %v210 = vunpack.c.l.b16 %v81
  %v211 = vpack.c.b16 %v148, %v147
  %v212 = vpack.c.b16 %v150, %v149
  %v213 = vpack.c.b16 %v152, %v151
  %v214 = vpack.c.b16 %v154, %v153
  %v215 = vpack.c.b16 %v156, %v155
  %v216 = vpack.c.b16 %v158, %v157
  %v217 = vpack.c.b16 %v160, %v159
  %v218 = vpack.c.b16 %v162, %v161
  %v219 = vpack.c.b16 %v164, %v163
  %v220 = vpack.c.b16 %v166, %v165
  %v221 = vpack.c.b16 %v168, %v167
  %v222 = vpack.c.b16 %v170, %v169
  %v223 = vpack.c.b16 %v172, %v171
  %v224 = vpack.c.b16 %v174, %v173
  %v225 = vpack.c.b16 %v176, %v175
  %v226 = vpack.c.b16 %v178, %v177
  %v227 = vpack.c.b16 %v180, %v179
  %v228 = vpack.c.b16 %v182, %v181
  %v229 = vpack.c.b16 %v184, %v183
  %v230 = vpack.c.b16 %v186, %v185
  %v231 = vpack.c.b16 %v188, %v187
  %v232 = vpack.c.b16 %v190, %v189
  %v233 = vpack.c.b16 %v192, %v191
  %v234 = vpack.c.b16 %v194, %v193
  %v235 = vpack.c.b16 %v196, %v195
  %v236 = vpack.c.b16 %v198, %v197
  %v237 = vpack.c.b16 %v200, %v199
  %v238 = vpack.c.b16 %v202, %v201
  %v239 = vpack.c.b16 %v204, %v203
  %v240 = vpack.c.b16 %v206, %v205
  %v241 = vpack.c.b16 %v208, %v207
  %v242 = vpack.c.b16 %v210, %v209
  %v244 = vunpack.c.l.b16 %v82
  %v245 = vunpack.c.h.b16 %v82
  %v246 = vpack.c.b16 %v244, %v244
  %v247 = vpack.c.b16 %v245, %v245
  %vm248 = vcmask 64512
  %v250 = vsel %vm248, %v211, 0
  %v253 = vsel %vm248, %v212, 0
  %v256 = vsel %vm248, %v213, 0
  %v259 = vsel %vm248, %v214, 0
  %v262 = vsel %vm248, %v215, 0
  %v265 = vsel %vm248, %v216, 0
  %v268 = vsel %vm248, %v217, 0
  %v271 = vsel %vm248, %v218, 0
  %v274 = vsel %vm248, %v219, 0
  %v277 = vsel %vm248, %v220, 0
  %v280 = vsel %vm248, %v221, 0
  %v283 = vsel %vm248, %v222, 0
  %v286 = vsel %vm248, %v223, 0
  %v289 = vsel %vm248, %v224, 0
  %v292 = vsel %vm248, %v225, 0
  %v295 = vsel %vm248, %v226, 0
  %v298 = vsel %vm248, %v227, 0
  %v301 = vsel %vm248, %v228, 0
  %v304 = vsel %vm248, %v229, 0
  %v307 = vsel %vm248, %v230, 0
  %v310 = vsel %vm248, %v231, 0
  %v313 = vsel %vm248, %v232, 0
  %v316 = vsel %vm248, %v233, 0
  %v319 = vsel %vm248, %v234, 0
  %v322 = vsel %vm248, %v235, 0
  %v325 = vsel %vm248, %v236, 0
  %v328 = vsel %vm248, %v237, 0
  %v331 = vsel %vm248, %v238, 0
  %v334 = vsel %vm248, %v239, 0
  %v337 = vsel %vm248, %v240, 0
  %v340 = vsel %vm248, %v241, 0
  %v343 = vsel %vm248, %v242, 0
  %vm345 = vcmask 1043456
  %v347 = vsel %vm345, %v246, 0
  %v350 = vsel %vm345, %v247, 0
  %352 = vmatpush.bf16.msra.mxu0 0
  %353 = vmatpush.bf16.msra.mxu0 0
  %354 = vmatpush.bf16.msra.mxu0 0
  %355 = vmatpush.bf16.msra.mxu0 0
  %356 = vmatpush.bf16.msra.mxu0 0
  %357 = vmatpush.bf16.msra.mxu0 0
  %358 = vmatpush.bf16.msra.mxu0 0
  %359 = vmatpush.bf16.msra.mxu0 %v347
  %360 = vmatmul.bf16.gmra.mxu0 %v250
  %v361 = vpop.f32.mrf.mxu0
  %v362 = vadd.f32 0.0, %v361
  %v363 = vpop.f32.mrf.mxu0
  %v364 = vadd.f32 0.0, %v363
  %365 = vmatmul.bf16.gmra.mxu0 %v253
  %v366 = vpop.f32.mrf.mxu0
  %v367 = vadd.f32 0.0, %v366
  %v368 = vpop.f32.mrf.mxu0
  %v369 = vadd.f32 0.0, %v368
  %370 = vmatmul.bf16.gmra.mxu0 %v256
  %v371 = vpop.f32.mrf.mxu0
  %v372 = vadd.f32 0.0, %v371
  %v373 = vpop.f32.mrf.mxu0
  %v374 = vadd.f32 0.0, %v373
  %375 = vmatmul.bf16.gmra.mxu0 %v259
  %v376 = vpop.f32.mrf.mxu0
  %v377 = vadd.f32 0.0, %v376
  %v378 = vpop.f32.mrf.mxu0
  %v379 = vadd.f32 0.0, %v378
  %380 = vmatmul.bf16.gmra.mxu0 %v262
  %v381 = vpop.f32.mrf.mxu0
  %v382 = vadd.f32 0.0, %v381
  %v383 = vpop.f32.mrf.mxu0
  %v384 = vadd.f32 0.0, %v383
  %385 = vmatmul.bf16.gmra.mxu0 %v265
  %v386 = vpop.f32.mrf.mxu0
  %v387 = vadd.f32 0.0, %v386
  %v388 = vpop.f32.mrf.mxu0
  %v389 = vadd.f32 0.0, %v388
  %390 = vmatmul.bf16.gmra.mxu0 %v268
  %v391 = vpop.f32.mrf.mxu0
  %v392 = vadd.f32 0.0, %v391
  %v393 = vpop.f32.mrf.mxu0
  %v394 = vadd.f32 0.0, %v393
  %395 = vmatmul.bf16.gmra.mxu0 %v271
  %v396 = vpop.f32.mrf.mxu0
  %v397 = vadd.f32 0.0, %v396
  %v398 = vpop.f32.mrf.mxu0
  %v399 = vadd.f32 0.0, %v398
  %400 = vmatmul.bf16.gmra.mxu0 %v274
  %v401 = vpop.f32.mrf.mxu0
  %v402 = vadd.f32 0.0, %v401
  %v403 = vpop.f32.mrf.mxu0
  %v404 = vadd.f32 0.0, %v403
  %405 = vmatmul.bf16.gmra.mxu0 %v277
  %v406 = vpop.f32.mrf.mxu0
  %v407 = vadd.f32 0.0, %v406
  %v408 = vpop.f32.mrf.mxu0
  %v409 = vadd.f32 0.0, %v408
  %410 = vmatmul.bf16.gmra.mxu0 %v280
  %v411 = vpop.f32.mrf.mxu0
  %v412 = vadd.f32 0.0, %v411
  %v413 = vpop.f32.mrf.mxu0
  %v414 = vadd.f32 0.0, %v413
  %415 = vmatmul.bf16.gmra.mxu0 %v283
  %v416 = vpop.f32.mrf.mxu0
  %v417 = vadd.f32 0.0, %v416
  %v418 = vpop.f32.mrf.mxu0
  %v419 = vadd.f32 0.0, %v418
  %420 = vmatmul.bf16.gmra.mxu0 %v286
  %v421 = vpop.f32.mrf.mxu0
  %v422 = vadd.f32 0.0, %v421
  %v423 = vpop.f32.mrf.mxu0
  %v424 = vadd.f32 0.0, %v423
  %425 = vmatmul.bf16.gmra.mxu0 %v289
  %v426 = vpop.f32.mrf.mxu0
  %v427 = vadd.f32 0.0, %v426
  %v428 = vpop.f32.mrf.mxu0
  %v429 = vadd.f32 0.0, %v428
  %430 = vmatmul.bf16.gmra.mxu0 %v292
  %v431 = vpop.f32.mrf.mxu0
  %v432 = vadd.f32 0.0, %v431
  %v433 = vpop.f32.mrf.mxu0
  %v434 = vadd.f32 0.0, %v433
  %435 = vmatmul.bf16.gmra.mxu0 %v295
  %v436 = vpop.f32.mrf.mxu0
  %v437 = vadd.f32 0.0, %v436
  %v438 = vpop.f32.mrf.mxu0
  %v439 = vadd.f32 0.0, %v438
  %440 = vmatmul.bf16.gmra.mxu0 %v298
  %v441 = vpop.f32.mrf.mxu0
  %v442 = vadd.f32 0.0, %v441
  %v443 = vpop.f32.mrf.mxu0
  %v444 = vadd.f32 0.0, %v443
  %445 = vmatmul.bf16.gmra.mxu0 %v301
  %v446 = vpop.f32.mrf.mxu0
  %v447 = vadd.f32 0.0, %v446
  %v448 = vpop.f32.mrf.mxu0
  %v449 = vadd.f32 0.0, %v448
  %450 = vmatmul.bf16.gmra.mxu0 %v304
  %v451 = vpop.f32.mrf.mxu0
  %v452 = vadd.f32 0.0, %v451
  %v453 = vpop.f32.mrf.mxu0
  %v454 = vadd.f32 0.0, %v453
  %455 = vmatmul.bf16.gmra.mxu0 %v307
  %v456 = vpop.f32.mrf.mxu0
  %v457 = vadd.f32 0.0, %v456
  %v458 = vpop.f32.mrf.mxu0
  %v459 = vadd.f32 0.0, %v458
  %460 = vmatmul.bf16.gmra.mxu0 %v310
  %v461 = vpop.f32.mrf.mxu0
  %v462 = vadd.f32 0.0, %v461
  %v463 = vpop.f32.mrf.mxu0
  %v464 = vadd.f32 0.0, %v463
  %465 = vmatmul.bf16.gmra.mxu0 %v313
  %v466 = vpop.f32.mrf.mxu0
  %v467 = vadd.f32 0.0, %v466
  %v468 = vpop.f32.mrf.mxu0
  %v469 = vadd.f32 0.0, %v468
  %470 = vmatmul.bf16.gmra.mxu0 %v316
  %v471 = vpop.f32.mrf.mxu0
  %v472 = vadd.f32 0.0, %v471
  %v473 = vpop.f32.mrf.mxu0
  %v474 = vadd.f32 0.0, %v473
  %475 = vmatmul.bf16.gmra.mxu0 %v319
  %v476 = vpop.f32.mrf.mxu0
  %v477 = vadd.f32 0.0, %v476
  %v478 = vpop.f32.mrf.mxu0
  %v479 = vadd.f32 0.0, %v478
  %480 = vmatmul.bf16.gmra.mxu0 %v322
  %v481 = vpop.f32.mrf.mxu0
  %v482 = vadd.f32 0.0, %v481
  %v483 = vpop.f32.mrf.mxu0
  %v484 = vadd.f32 0.0, %v483
  %485 = vmatmul.bf16.gmra.mxu0 %v325
  %v486 = vpop.f32.mrf.mxu0
  %v487 = vadd.f32 0.0, %v486
  %v488 = vpop.f32.mrf.mxu0
  %v489 = vadd.f32 0.0, %v488
  %490 = vmatmul.bf16.gmra.mxu0 %v328
  %v491 = vpop.f32.mrf.mxu0
  %v492 = vadd.f32 0.0, %v491
  %v493 = vpop.f32.mrf.mxu0
  %v494 = vadd.f32 0.0, %v493
  %495 = vmatmul.bf16.gmra.mxu0 %v331
  %v496 = vpop.f32.mrf.mxu0
  %v497 = vadd.f32 0.0, %v496
  %v498 = vpop.f32.mrf.mxu0
  %v499 = vadd.f32 0.0, %v498
  %500 = vmatmul.bf16.gmra.mxu0 %v334
  %v501 = vpop.f32.mrf.mxu0
  %v502 = vadd.f32 0.0, %v501
  %v503 = vpop.f32.mrf.mxu0
  %v504 = vadd.f32 0.0, %v503
  %505 = vmatmul.bf16.gmra.mxu0 %v337
  %v506 = vpop.f32.mrf.mxu0
  %v507 = vadd.f32 0.0, %v506
  %v508 = vpop.f32.mrf.mxu0
  %v509 = vadd.f32 0.0, %v508
  %510 = vmatmul.bf16.gmra.mxu0 %v340
  %v511 = vpop.f32.mrf.mxu0
  %v512 = vadd.f32 0.0, %v511
  %v513 = vpop.f32.mrf.mxu0
  %v514 = vadd.f32 0.0, %v513
  %515 = vmatmul.bf16.gmra.mxu0 %v343
  %v516 = vpop.f32.mrf.mxu0
  %v517 = vadd.f32 0.0, %v516
  %v518 = vpop.f32.mrf.mxu0
  %v519 = vadd.f32 0.0, %v518
  %520 = vdwg.mxu0
  %521 = vmatpush.bf16.msra.mxu0 0
  %522 = vmatpush.bf16.msra.mxu0 0
  %523 = vmatpush.bf16.msra.mxu0 0
  %524 = vmatpush.bf16.msra.mxu0 0
  %525 = vmatpush.bf16.msra.mxu0 0
  %526 = vmatpush.bf16.msra.mxu0 0
  %527 = vmatpush.bf16.msra.mxu0 0
  %528 = vmatpush.bf16.msra.mxu0 %v350
  %529 = vmatmul.bf16.gmra.mxu0 %v250
  %v530 = vpop.f32.mrf.mxu0
  %v531 = vadd.f32 0.0, %v530
  %v532 = vpop.f32.mrf.mxu0
  %v533 = vadd.f32 0.0, %v532
  %534 = vmatmul.bf16.gmra.mxu0 %v253
  %v535 = vpop.f32.mrf.mxu0
  %v536 = vadd.f32 0.0, %v535
  %v537 = vpop.f32.mrf.mxu0
  %v538 = vadd.f32 0.0, %v537
  %539 = vmatmul.bf16.gmra.mxu0 %v256
  %v540 = vpop.f32.mrf.mxu0
  %v541 = vadd.f32 0.0, %v540
  %v542 = vpop.f32.mrf.mxu0
  %v543 = vadd.f32 0.0, %v542
  %544 = vmatmul.bf16.gmra.mxu0 %v259
  %v545 = vpop.f32.mrf.mxu0
  %v546 = vadd.f32 0.0, %v545
  %v547 = vpop.f32.mrf.mxu0
  %v548 = vadd.f32 0.0, %v547
  %549 = vmatmul.bf16.gmra.mxu0 %v262
  %v550 = vpop.f32.mrf.mxu0
  %v551 = vadd.f32 0.0, %v550
  %v552 = vpop.f32.mrf.mxu0
  %v553 = vadd.f32 0.0, %v552
  %554 = vmatmul.bf16.gmra.mxu0 %v265
  %v555 = vpop.f32.mrf.mxu0
  %v556 = vadd.f32 0.0, %v555
  %v557 = vpop.f32.mrf.mxu0
  %v558 = vadd.f32 0.0, %v557
  %559 = vmatmul.bf16.gmra.mxu0 %v268
  %v560 = vpop.f32.mrf.mxu0
  %v561 = vadd.f32 0.0, %v560
  %v562 = vpop.f32.mrf.mxu0
  %v563 = vadd.f32 0.0, %v562
  %564 = vmatmul.bf16.gmra.mxu0 %v271
  %v565 = vpop.f32.mrf.mxu0
  %v566 = vadd.f32 0.0, %v565
  %v567 = vpop.f32.mrf.mxu0
  %v568 = vadd.f32 0.0, %v567
  %569 = vmatmul.bf16.gmra.mxu0 %v274
  %v570 = vpop.f32.mrf.mxu0
  %v571 = vadd.f32 0.0, %v570
  %v572 = vpop.f32.mrf.mxu0
  %v573 = vadd.f32 0.0, %v572
  %574 = vmatmul.bf16.gmra.mxu0 %v277
  %v575 = vpop.f32.mrf.mxu0
  %v576 = vadd.f32 0.0, %v575
  %v577 = vpop.f32.mrf.mxu0
  %v578 = vadd.f32 0.0, %v577
  %579 = vmatmul.bf16.gmra.mxu0 %v280
  %v580 = vpop.f32.mrf.mxu0
  %v581 = vadd.f32 0.0, %v580
  %v582 = vpop.f32.mrf.mxu0
  %v583 = vadd.f32 0.0, %v582
  %584 = vmatmul.bf16.gmra.mxu0 %v283
  %v585 = vpop.f32.mrf.mxu0
  %v586 = vadd.f32 0.0, %v585
  %v587 = vpop.f32.mrf.mxu0
  %v588 = vadd.f32 0.0, %v587
  %589 = vmatmul.bf16.gmra.mxu0 %v286
  %v590 = vpop.f32.mrf.mxu0
  %v591 = vadd.f32 0.0, %v590
  %v592 = vpop.f32.mrf.mxu0
  %v593 = vadd.f32 0.0, %v592
  %594 = vmatmul.bf16.gmra.mxu0 %v289
  %v595 = vpop.f32.mrf.mxu0
  %v596 = vadd.f32 0.0, %v595
  %v597 = vpop.f32.mrf.mxu0
  %v598 = vadd.f32 0.0, %v597
  %599 = vmatmul.bf16.gmra.mxu0 %v292
  %v600 = vpop.f32.mrf.mxu0
  %v601 = vadd.f32 0.0, %v600
  %v602 = vpop.f32.mrf.mxu0
  %v603 = vadd.f32 0.0, %v602
  %604 = vmatmul.bf16.gmra.mxu0 %v295
  %v605 = vpop.f32.mrf.mxu0
  %v606 = vadd.f32 0.0, %v605
  %v607 = vpop.f32.mrf.mxu0
  %v608 = vadd.f32 0.0, %v607
  %609 = vmatmul.bf16.gmra.mxu0 %v298
  %v610 = vpop.f32.mrf.mxu0
  %v611 = vadd.f32 0.0, %v610
  %v612 = vpop.f32.mrf.mxu0
  %v613 = vadd.f32 0.0, %v612
  %614 = vmatmul.bf16.gmra.mxu0 %v301
  %v615 = vpop.f32.mrf.mxu0
  %v616 = vadd.f32 0.0, %v615
  %v617 = vpop.f32.mrf.mxu0
  %v618 = vadd.f32 0.0, %v617
  %619 = vmatmul.bf16.gmra.mxu0 %v304
  %v620 = vpop.f32.mrf.mxu0
  %v621 = vadd.f32 0.0, %v620
  %v622 = vpop.f32.mrf.mxu0
  %v623 = vadd.f32 0.0, %v622
  %624 = vmatmul.bf16.gmra.mxu0 %v307
  %v625 = vpop.f32.mrf.mxu0
  %v626 = vadd.f32 0.0, %v625
  %v627 = vpop.f32.mrf.mxu0
  %v628 = vadd.f32 0.0, %v627
  %629 = vmatmul.bf16.gmra.mxu0 %v310
  %v630 = vpop.f32.mrf.mxu0
  %v631 = vadd.f32 0.0, %v630
  %v632 = vpop.f32.mrf.mxu0
  %v633 = vadd.f32 0.0, %v632
  %634 = vmatmul.bf16.gmra.mxu0 %v313
  %v635 = vpop.f32.mrf.mxu0
  %v636 = vadd.f32 0.0, %v635
  %v637 = vpop.f32.mrf.mxu0
  %v638 = vadd.f32 0.0, %v637
  %639 = vmatmul.bf16.gmra.mxu0 %v316
  %v640 = vpop.f32.mrf.mxu0
  %v641 = vadd.f32 0.0, %v640
  %v642 = vpop.f32.mrf.mxu0
  %v643 = vadd.f32 0.0, %v642
  %644 = vmatmul.bf16.gmra.mxu0 %v319
  %v645 = vpop.f32.mrf.mxu0
  %v646 = vadd.f32 0.0, %v645
  %v647 = vpop.f32.mrf.mxu0
  %v648 = vadd.f32 0.0, %v647
  %649 = vmatmul.bf16.gmra.mxu0 %v322
  %v650 = vpop.f32.mrf.mxu0
  %v651 = vadd.f32 0.0, %v650
  %v652 = vpop.f32.mrf.mxu0
  %v653 = vadd.f32 0.0, %v652
  %654 = vmatmul.bf16.gmra.mxu0 %v325
  %v655 = vpop.f32.mrf.mxu0
  %v656 = vadd.f32 0.0, %v655
  %v657 = vpop.f32.mrf.mxu0
  %v658 = vadd.f32 0.0, %v657
  %659 = vmatmul.bf16.gmra.mxu0 %v328
  %v660 = vpop.f32.mrf.mxu0
  %v661 = vadd.f32 0.0, %v660
  %v662 = vpop.f32.mrf.mxu0
  %v663 = vadd.f32 0.0, %v662
  %664 = vmatmul.bf16.gmra.mxu0 %v331
  %v665 = vpop.f32.mrf.mxu0
  %v666 = vadd.f32 0.0, %v665
  %v667 = vpop.f32.mrf.mxu0
  %v668 = vadd.f32 0.0, %v667
  %669 = vmatmul.bf16.gmra.mxu0 %v334
  %v670 = vpop.f32.mrf.mxu0
  %v671 = vadd.f32 0.0, %v670
  %v672 = vpop.f32.mrf.mxu0
  %v673 = vadd.f32 0.0, %v672
  %674 = vmatmul.bf16.gmra.mxu0 %v337
  %v675 = vpop.f32.mrf.mxu0
  %v676 = vadd.f32 0.0, %v675
  %v677 = vpop.f32.mrf.mxu0
  %v678 = vadd.f32 0.0, %v677
  %679 = vmatmul.bf16.gmra.mxu0 %v340
  %v680 = vpop.f32.mrf.mxu0
  %v681 = vadd.f32 0.0, %v680
  %v682 = vpop.f32.mrf.mxu0
  %v683 = vadd.f32 0.0, %v682
  %684 = vmatmul.bf16.gmra.mxu0 %v343
  %v685 = vpop.f32.mrf.mxu0
  %v686 = vadd.f32 0.0, %v685
  %v687 = vpop.f32.mrf.mxu0
  %v688 = vadd.f32 0.0, %v687
  %689 = vdwg.mxu0
  %v690 = vadd.f32 %v362, %v364
  %v691 = vadd.f32 %v690, %v367
  %v692 = vadd.f32 %v691, %v369
  %v693 = vadd.f32 %v692, %v372
  %v694 = vadd.f32 %v693, %v374
  %v695 = vadd.f32 %v694, %v377
  %v696 = vadd.f32 %v695, %v379
  %v697 = vadd.f32 %v696, %v382
  %v698 = vadd.f32 %v697, %v384
  %v699 = vadd.f32 %v698, %v387
  %v700 = vadd.f32 %v699, %v389
  %v701 = vadd.f32 %v700, %v392
  %v702 = vadd.f32 %v701, %v394
  %v703 = vadd.f32 %v702, %v397
  %v704 = vadd.f32 %v703, %v399
  %v705 = vadd.f32 %v704, %v402
  %v706 = vadd.f32 %v705, %v404
  %v707 = vadd.f32 %v706, %v407
  %v708 = vadd.f32 %v707, %v409
  %v709 = vadd.f32 %v708, %v412
  %v710 = vadd.f32 %v709, %v414
  %v711 = vadd.f32 %v710, %v417
  %v712 = vadd.f32 %v711, %v419
  %v713 = vadd.f32 %v712, %v422
  %v714 = vadd.f32 %v713, %v424
  %v715 = vadd.f32 %v714, %v427
  %v716 = vadd.f32 %v715, %v429
  %v717 = vadd.f32 %v716, %v432
  %v718 = vadd.f32 %v717, %v434
  %v719 = vadd.f32 %v718, %v437
  %v720 = vadd.f32 %v719, %v439
  %v721 = vadd.f32 %v720, %v442
  %v722 = vadd.f32 %v721, %v444
  %v723 = vadd.f32 %v722, %v447
  %v724 = vadd.f32 %v723, %v449
  %v725 = vadd.f32 %v724, %v452
  %v726 = vadd.f32 %v725, %v454
  %v727 = vadd.f32 %v726, %v457
  %v728 = vadd.f32 %v727, %v459
  %v729 = vadd.f32 %v728, %v462
  %v730 = vadd.f32 %v729, %v464
  %v731 = vadd.f32 %v730, %v467
  %v732 = vadd.f32 %v731, %v469
  %v733 = vadd.f32 %v732, %v472
  %v734 = vadd.f32 %v733, %v474
  %v735 = vadd.f32 %v734, %v477
  %v736 = vadd.f32 %v735, %v479
  %v737 = vadd.f32 %v736, %v482
  %v738 = vadd.f32 %v737, %v484
  %v739 = vadd.f32 %v738, %v487
  %v740 = vadd.f32 %v739, %v489
  %v741 = vadd.f32 %v740, %v492
  %v742 = vadd.f32 %v741, %v494
  %v743 = vadd.f32 %v742, %v497
  %v744 = vadd.f32 %v743, %v499
  %v745 = vadd.f32 %v744, %v502
  %v746 = vadd.f32 %v745, %v504
  %v747 = vadd.f32 %v746, %v507
  %v748 = vadd.f32 %v747, %v509
  %v749 = vadd.f32 %v748, %v512
  %v750 = vadd.f32 %v749, %v514
  %v751 = vadd.f32 %v750, %v517
  %v752 = vadd.f32 %v751, %v519
  %v753 = vrot.slane %v752, 4
  %v754 = vadd.f32 %v752, %v753
  %v755 = vrot.slane %v754, 2
  %v756 = vadd.f32 %v754, %v755
  %v757 = vrot.slane %v756, 1
  %v758 = vadd.f32 %v756, %v757
  %vm759 = vcmask 654336
  %v760 = vsel %vm759, %v531, 0.0
  %v761 = vsel %vm759, %v533, 0.0
  %v762 = vadd.f32 %v760, %v761
  %v763 = vsel %vm759, %v536, 0.0
  %v764 = vadd.f32 %v762, %v763
  %v765 = vsel %vm759, %v538, 0.0
  %v766 = vadd.f32 %v764, %v765
  %v767 = vsel %vm759, %v541, 0.0
  %v768 = vadd.f32 %v766, %v767
  %v769 = vsel %vm759, %v543, 0.0
  %v770 = vadd.f32 %v768, %v769
  %v771 = vsel %vm759, %v546, 0.0
  %v772 = vadd.f32 %v770, %v771
  %v773 = vsel %vm759, %v548, 0.0
  %v774 = vadd.f32 %v772, %v773
  %v775 = vsel %vm759, %v551, 0.0
  %v776 = vadd.f32 %v774, %v775
  %v777 = vsel %vm759, %v553, 0.0
  %v778 = vadd.f32 %v776, %v777
  %v779 = vsel %vm759, %v556, 0.0
  %v780 = vadd.f32 %v778, %v779
  %v781 = vsel %vm759, %v558, 0.0
  %v782 = vadd.f32 %v780, %v781
  %v783 = vsel %vm759, %v561, 0.0
  %v784 = vadd.f32 %v782, %v783
  %v785 = vsel %vm759, %v563, 0.0
  %v786 = vadd.f32 %v784, %v785
  %v787 = vsel %vm759, %v566, 0.0
  %v788 = vadd.f32 %v786, %v787
  %v789 = vsel %vm759, %v568, 0.0
  %v790 = vadd.f32 %v788, %v789
  %v791 = vsel %vm759, %v571, 0.0
  %v792 = vadd.f32 %v790, %v791
  %v793 = vsel %vm759, %v573, 0.0
  %v794 = vadd.f32 %v792, %v793
  %v795 = vsel %vm759, %v576, 0.0
  %v796 = vadd.f32 %v794, %v795
  %v797 = vsel %vm759, %v578, 0.0
  %v798 = vadd.f32 %v796, %v797
  %v799 = vsel %vm759, %v581, 0.0
  %v800 = vadd.f32 %v798, %v799
  %v801 = vsel %vm759, %v583, 0.0
  %v802 = vadd.f32 %v800, %v801
  %v803 = vsel %vm759, %v586, 0.0
  %v804 = vadd.f32 %v802, %v803
  %v805 = vsel %vm759, %v588, 0.0
  %v806 = vadd.f32 %v804, %v805
  %v807 = vsel %vm759, %v591, 0.0
  %v808 = vadd.f32 %v806, %v807
  %v809 = vsel %vm759, %v593, 0.0
  %v810 = vadd.f32 %v808, %v809
  %v811 = vsel %vm759, %v596, 0.0
  %v812 = vadd.f32 %v810, %v811
  %v813 = vsel %vm759, %v598, 0.0
  %v814 = vadd.f32 %v812, %v813
  %v815 = vsel %vm759, %v601, 0.0
  %v816 = vadd.f32 %v814, %v815
  %v817 = vsel %vm759, %v603, 0.0
  %v818 = vadd.f32 %v816, %v817
  %v819 = vsel %vm759, %v606, 0.0
  %v820 = vadd.f32 %v818, %v819
  %v821 = vsel %vm759, %v608, 0.0
  %v822 = vadd.f32 %v820, %v821
  %v823 = vsel %vm759, %v611, 0.0
  %v824 = vadd.f32 %v822, %v823
  %v825 = vsel %vm759, %v613, 0.0
  %v826 = vadd.f32 %v824, %v825
  %v827 = vsel %vm759, %v616, 0.0
  %v828 = vadd.f32 %v826, %v827
  %v829 = vsel %vm759, %v618, 0.0
  %v830 = vadd.f32 %v828, %v829
  %v831 = vsel %vm759, %v621, 0.0
  %v832 = vadd.f32 %v830, %v831
  %v833 = vsel %vm759, %v623, 0.0
  %v834 = vadd.f32 %v832, %v833
  %v835 = vsel %vm759, %v626, 0.0
  %v836 = vadd.f32 %v834, %v835
  %v837 = vsel %vm759, %v628, 0.0
  %v838 = vadd.f32 %v836, %v837
  %v839 = vsel %vm759, %v631, 0.0
  %v840 = vadd.f32 %v838, %v839
  %v841 = vsel %vm759, %v633, 0.0
  %v842 = vadd.f32 %v840, %v841
  %v843 = vsel %vm759, %v636, 0.0
  %v844 = vadd.f32 %v842, %v843
  %v845 = vsel %vm759, %v638, 0.0
  %v846 = vadd.f32 %v844, %v845
  %v847 = vsel %vm759, %v641, 0.0
  %v848 = vadd.f32 %v846, %v847
  %v849 = vsel %vm759, %v643, 0.0
  %v850 = vadd.f32 %v848, %v849
  %v851 = vsel %vm759, %v646, 0.0
  %v852 = vadd.f32 %v850, %v851
  %v853 = vsel %vm759, %v648, 0.0
  %v854 = vadd.f32 %v852, %v853
  %v855 = vsel %vm759, %v651, 0.0
  %v856 = vadd.f32 %v854, %v855
  %v857 = vsel %vm759, %v653, 0.0
  %v858 = vadd.f32 %v856, %v857
  %v859 = vsel %vm759, %v656, 0.0
  %v860 = vadd.f32 %v858, %v859
  %v861 = vsel %vm759, %v658, 0.0
  %v862 = vadd.f32 %v860, %v861
  %v863 = vsel %vm759, %v661, 0.0
  %v864 = vadd.f32 %v862, %v863
  %v865 = vsel %vm759, %v663, 0.0
  %v866 = vadd.f32 %v864, %v865
  %v867 = vsel %vm759, %v666, 0.0
  %v868 = vadd.f32 %v866, %v867
  %v869 = vsel %vm759, %v668, 0.0
  %v870 = vadd.f32 %v868, %v869
  %v871 = vsel %vm759, %v671, 0.0
  %v872 = vadd.f32 %v870, %v871
  %v873 = vsel %vm759, %v673, 0.0
  %v874 = vadd.f32 %v872, %v873
  %v875 = vsel %vm759, %v676, 0.0
  %v876 = vadd.f32 %v874, %v875
  %v877 = vsel %vm759, %v678, 0.0
  %v878 = vadd.f32 %v876, %v877
  %v879 = vsel %vm759, %v681, 0.0
  %v880 = vadd.f32 %v878, %v879
  %v881 = vsel %vm759, %v683, 0.0
  %v882 = vadd.f32 %v880, %v881
  %v883 = vsel %vm759, %v686, 0.0
  %v884 = vadd.f32 %v882, %v883
  %v885 = vsel %vm759, %v688, 0.0
  %v886 = vadd.f32 %v884, %v885
  %v887 = vrot.slane %v886, 4
  %v888 = vadd.f32 %v886, %v887
  %v889 = vrot.slane %v888, 2
  %v890 = vadd.f32 %v888, %v889
  %v891 = vrot.slane %v890, 1
  %v892 = vadd.f32 %v890, %v891
  %v893 = vmul.f32 %v758, 0.001953125
  %v894 = vmul.f32 %v892, 0.001953125
  %v895 = vsub.f32 %v362, %v893
  %v896 = vsub.f32 %v531, %v894
  %v897 = vsub.f32 %v364, %v893
  %v898 = vsub.f32 %v533, %v894
  %v899 = vsub.f32 %v367, %v893
  %v900 = vsub.f32 %v536, %v894
  %v901 = vsub.f32 %v369, %v893
  %v902 = vsub.f32 %v538, %v894
  %v903 = vsub.f32 %v372, %v893
  %v904 = vsub.f32 %v541, %v894
  %v905 = vsub.f32 %v374, %v893
  %v906 = vsub.f32 %v543, %v894
  %v907 = vsub.f32 %v377, %v893
  %v908 = vsub.f32 %v546, %v894
  %v909 = vsub.f32 %v379, %v893
  %v910 = vsub.f32 %v548, %v894
  %v911 = vsub.f32 %v382, %v893
  %v912 = vsub.f32 %v551, %v894
  %v913 = vsub.f32 %v384, %v893
  %v914 = vsub.f32 %v553, %v894
  %v915 = vsub.f32 %v387, %v893
  %v916 = vsub.f32 %v556, %v894
  %v917 = vsub.f32 %v389, %v893
  %v918 = vsub.f32 %v558, %v894
  %v919 = vsub.f32 %v392, %v893
  %v920 = vsub.f32 %v561, %v894
  %v921 = vsub.f32 %v394, %v893
  %v922 = vsub.f32 %v563, %v894
  %v923 = vsub.f32 %v397, %v893
  %v924 = vsub.f32 %v566, %v894
  %v925 = vsub.f32 %v399, %v893
  %v926 = vsub.f32 %v568, %v894
  %v927 = vsub.f32 %v402, %v893
  %v928 = vsub.f32 %v571, %v894
  %v929 = vsub.f32 %v404, %v893
  %v930 = vsub.f32 %v573, %v894
  %v931 = vsub.f32 %v407, %v893
  %v932 = vsub.f32 %v576, %v894
  %v933 = vsub.f32 %v409, %v893
  %v934 = vsub.f32 %v578, %v894
  %v935 = vsub.f32 %v412, %v893
  %v936 = vsub.f32 %v581, %v894
  %v937 = vsub.f32 %v414, %v893
  %v938 = vsub.f32 %v583, %v894
  %v939 = vsub.f32 %v417, %v893
  %v940 = vsub.f32 %v586, %v894
  %v941 = vsub.f32 %v419, %v893
  %v942 = vsub.f32 %v588, %v894
  %v943 = vsub.f32 %v422, %v893
  %v944 = vsub.f32 %v591, %v894
  %v945 = vsub.f32 %v424, %v893
  %v946 = vsub.f32 %v593, %v894
  %v947 = vsub.f32 %v427, %v893
  %v948 = vsub.f32 %v596, %v894
  %v949 = vsub.f32 %v429, %v893
  %v950 = vsub.f32 %v598, %v894
  %v951 = vsub.f32 %v432, %v893
  %v952 = vsub.f32 %v601, %v894
  %v953 = vsub.f32 %v434, %v893
  %v954 = vsub.f32 %v603, %v894
  %v955 = vsub.f32 %v437, %v893
  %v956 = vsub.f32 %v606, %v894
  %v957 = vsub.f32 %v439, %v893
  %v958 = vsub.f32 %v608, %v894
  %v959 = vsub.f32 %v442, %v893
  %v960 = vsub.f32 %v611, %v894
  %v961 = vsub.f32 %v444, %v893
  %v962 = vsub.f32 %v613, %v894
  %v963 = vsub.f32 %v447, %v893
  %v964 = vsub.f32 %v616, %v894
  %v965 = vsub.f32 %v449, %v893
  %v966 = vsub.f32 %v618, %v894
  %v967 = vsub.f32 %v452, %v893
  %v968 = vsub.f32 %v621, %v894
  %v969 = vsub.f32 %v454, %v893
  %v970 = vsub.f32 %v623, %v894
  %v971 = vsub.f32 %v457, %v893
  %v972 = vsub.f32 %v626, %v894
  %v973 = vsub.f32 %v459, %v893
  %v974 = vsub.f32 %v628, %v894
  %v975 = vsub.f32 %v462, %v893
  %v976 = vsub.f32 %v631, %v894
  %v977 = vsub.f32 %v464, %v893
  %v978 = vsub.f32 %v633, %v894
  %v979 = vsub.f32 %v467, %v893
  %v980 = vsub.f32 %v636, %v894
  %v981 = vsub.f32 %v469, %v893
  %v982 = vsub.f32 %v638, %v894
  %v983 = vsub.f32 %v472, %v893
  %v984 = vsub.f32 %v641, %v894
  %v985 = vsub.f32 %v474, %v893
  %v986 = vsub.f32 %v643, %v894
  %v987 = vsub.f32 %v477, %v893
  %v988 = vsub.f32 %v646, %v894
  %v989 = vsub.f32 %v479, %v893
  %v990 = vsub.f32 %v648, %v894
  %v991 = vsub.f32 %v482, %v893
  %v992 = vsub.f32 %v651, %v894
  %v993 = vsub.f32 %v484, %v893
  %v994 = vsub.f32 %v653, %v894
  %v995 = vsub.f32 %v487, %v893
  %v996 = vsub.f32 %v656, %v894
  %v997 = vsub.f32 %v489, %v893
  %v998 = vsub.f32 %v658, %v894
  %v999 = vsub.f32 %v492, %v893
  %v1000 = vsub.f32 %v661, %v894
  %v1001 = vsub.f32 %v494, %v893
  %v1002 = vsub.f32 %v663, %v894
  %v1003 = vsub.f32 %v497, %v893
  %v1004 = vsub.f32 %v666, %v894
  %v1005 = vsub.f32 %v499, %v893
  %v1006 = vsub.f32 %v668, %v894
  %v1007 = vsub.f32 %v502, %v893
  %v1008 = vsub.f32 %v671, %v894
  %v1009 = vsub.f32 %v504, %v893
  %v1010 = vsub.f32 %v673, %v894
  %v1011 = vsub.f32 %v507, %v893
  %v1012 = vsub.f32 %v676, %v894
  %v1013 = vsub.f32 %v509, %v893
  %v1014 = vsub.f32 %v678, %v894
  %v1015 = vsub.f32 %v512, %v893
  %v1016 = vsub.f32 %v681, %v894
  %v1017 = vsub.f32 %v514, %v893
  %v1018 = vsub.f32 %v683, %v894
  %v1019 = vsub.f32 %v517, %v893
  %v1020 = vsub.f32 %v686, %v894
  %v1021 = vsub.f32 %v519, %v893
  %v1022 = vsub.f32 %v688, %v894
  %v1023 = vmul.f32 %v895, %v895
  %v1024 = vmul.f32 %v896, %v896
  %v1025 = vmul.f32 %v897, %v897
  %v1026 = vmul.f32 %v898, %v898
  %v1027 = vmul.f32 %v899, %v899
  %v1028 = vmul.f32 %v900, %v900
  %v1029 = vmul.f32 %v901, %v901
  %v1030 = vmul.f32 %v902, %v902
  %v1031 = vmul.f32 %v903, %v903
  %v1032 = vmul.f32 %v904, %v904
  %v1033 = vmul.f32 %v905, %v905
  %v1034 = vmul.f32 %v906, %v906
  %v1035 = vmul.f32 %v907, %v907
  %v1036 = vmul.f32 %v908, %v908
  %v1037 = vmul.f32 %v909, %v909
  %v1038 = vmul.f32 %v910, %v910
  %v1039 = vmul.f32 %v911, %v911
  %v1040 = vmul.f32 %v912, %v912
  %v1041 = vmul.f32 %v913, %v913
  %v1042 = vmul.f32 %v914, %v914
  %v1043 = vmul.f32 %v915, %v915
  %v1044 = vmul.f32 %v916, %v916
  %v1045 = vmul.f32 %v917, %v917
  %v1046 = vmul.f32 %v918, %v918
  %v1047 = vmul.f32 %v919, %v919
  %v1048 = vmul.f32 %v920, %v920
  %v1049 = vmul.f32 %v921, %v921
  %v1050 = vmul.f32 %v922, %v922
  %v1051 = vmul.f32 %v923, %v923
  %v1052 = vmul.f32 %v924, %v924
  %v1053 = vmul.f32 %v925, %v925
  %v1054 = vmul.f32 %v926, %v926
  %v1055 = vmul.f32 %v927, %v927
  %v1056 = vmul.f32 %v928, %v928
  %v1057 = vmul.f32 %v929, %v929
  %v1058 = vmul.f32 %v930, %v930
  %v1059 = vmul.f32 %v931, %v931
  %v1060 = vmul.f32 %v932, %v932
  %v1061 = vmul.f32 %v933, %v933
  %v1062 = vmul.f32 %v934, %v934
  %v1063 = vmul.f32 %v935, %v935
  %v1064 = vmul.f32 %v936, %v936
  %v1065 = vmul.f32 %v937, %v937
  %v1066 = vmul.f32 %v938, %v938
  %v1067 = vmul.f32 %v939, %v939
  %v1068 = vmul.f32 %v940, %v940
  %v1069 = vmul.f32 %v941, %v941
  %v1070 = vmul.f32 %v942, %v942
  %v1071 = vmul.f32 %v943, %v943
  %v1072 = vmul.f32 %v944, %v944
  %v1073 = vmul.f32 %v945, %v945
  %v1074 = vmul.f32 %v946, %v946
  %v1075 = vmul.f32 %v947, %v947
  %v1076 = vmul.f32 %v948, %v948
  %v1077 = vmul.f32 %v949, %v949
  %v1078 = vmul.f32 %v950, %v950
  %v1079 = vmul.f32 %v951, %v951
  %v1080 = vmul.f32 %v952, %v952
  %v1081 = vmul.f32 %v953, %v953
  %v1082 = vmul.f32 %v954, %v954
  %v1083 = vmul.f32 %v955, %v955
  %v1084 = vmul.f32 %v956, %v956
  %v1085 = vmul.f32 %v957, %v957
  %v1086 = vmul.f32 %v958, %v958
  %v1087 = vmul.f32 %v959, %v959
  %v1088 = vmul.f32 %v960, %v960
  %v1089 = vmul.f32 %v961, %v961
  %v1090 = vmul.f32 %v962, %v962
  %v1091 = vmul.f32 %v963, %v963
  %v1092 = vmul.f32 %v964, %v964
  %v1093 = vmul.f32 %v965, %v965
  %v1094 = vmul.f32 %v966, %v966
  %v1095 = vmul.f32 %v967, %v967
  %v1096 = vmul.f32 %v968, %v968
  %v1097 = vmul.f32 %v969, %v969
  %v1098 = vmul.f32 %v970, %v970
  %v1099 = vmul.f32 %v971, %v971
  %v1100 = vmul.f32 %v972, %v972
  %v1101 = vmul.f32 %v973, %v973
  %v1102 = vmul.f32 %v974, %v974
  %v1103 = vmul.f32 %v975, %v975
  %v1104 = vmul.f32 %v976, %v976
  %v1105 = vmul.f32 %v977, %v977
  %v1106 = vmul.f32 %v978, %v978
  %v1107 = vmul.f32 %v979, %v979
  %v1108 = vmul.f32 %v980, %v980
  %v1109 = vmul.f32 %v981, %v981
  %v1110 = vmul.f32 %v982, %v982
  %v1111 = vmul.f32 %v983, %v983
  %v1112 = vmul.f32 %v984, %v984
  %v1113 = vmul.f32 %v985, %v985
  %v1114 = vmul.f32 %v986, %v986
  %v1115 = vmul.f32 %v987, %v987
  %v1116 = vmul.f32 %v988, %v988
  %v1117 = vmul.f32 %v989, %v989
  %v1118 = vmul.f32 %v990, %v990
  %v1119 = vmul.f32 %v991, %v991
  %v1120 = vmul.f32 %v992, %v992
  %v1121 = vmul.f32 %v993, %v993
  %v1122 = vmul.f32 %v994, %v994
  %v1123 = vmul.f32 %v995, %v995
  %v1124 = vmul.f32 %v996, %v996
  %v1125 = vmul.f32 %v997, %v997
  %v1126 = vmul.f32 %v998, %v998
  %v1127 = vmul.f32 %v999, %v999
  %v1128 = vmul.f32 %v1000, %v1000
  %v1129 = vmul.f32 %v1001, %v1001
  %v1130 = vmul.f32 %v1002, %v1002
  %v1131 = vmul.f32 %v1003, %v1003
  %v1132 = vmul.f32 %v1004, %v1004
  %v1133 = vmul.f32 %v1005, %v1005
  %v1134 = vmul.f32 %v1006, %v1006
  %v1135 = vmul.f32 %v1007, %v1007
  %v1136 = vmul.f32 %v1008, %v1008
  %v1137 = vmul.f32 %v1009, %v1009
  %v1138 = vmul.f32 %v1010, %v1010
  %v1139 = vmul.f32 %v1011, %v1011
  %v1140 = vmul.f32 %v1012, %v1012
  %v1141 = vmul.f32 %v1013, %v1013
  %v1142 = vmul.f32 %v1014, %v1014
  %v1143 = vmul.f32 %v1015, %v1015
  %v1144 = vmul.f32 %v1016, %v1016
  %v1145 = vmul.f32 %v1017, %v1017
  %v1146 = vmul.f32 %v1018, %v1018
  %v1147 = vmul.f32 %v1019, %v1019
  %v1148 = vmul.f32 %v1020, %v1020
  %v1149 = vmul.f32 %v1021, %v1021
  %v1150 = vmul.f32 %v1022, %v1022
  %v1151 = vadd.f32 %v1023, %v1025
  %v1152 = vadd.f32 %v1151, %v1027
  %v1153 = vadd.f32 %v1152, %v1029
  %v1154 = vadd.f32 %v1153, %v1031
  %v1155 = vadd.f32 %v1154, %v1033
  %v1156 = vadd.f32 %v1155, %v1035
  %v1157 = vadd.f32 %v1156, %v1037
  %v1158 = vadd.f32 %v1157, %v1039
  %v1159 = vadd.f32 %v1158, %v1041
  %v1160 = vadd.f32 %v1159, %v1043
  %v1161 = vadd.f32 %v1160, %v1045
  %v1162 = vadd.f32 %v1161, %v1047
  %v1163 = vadd.f32 %v1162, %v1049
  %v1164 = vadd.f32 %v1163, %v1051
  %v1165 = vadd.f32 %v1164, %v1053
  %v1166 = vadd.f32 %v1165, %v1055
  %v1167 = vadd.f32 %v1166, %v1057
  %v1168 = vadd.f32 %v1167, %v1059
  %v1169 = vadd.f32 %v1168, %v1061
  %v1170 = vadd.f32 %v1169, %v1063
  %v1171 = vadd.f32 %v1170, %v1065
  %v1172 = vadd.f32 %v1171, %v1067
  %v1173 = vadd.f32 %v1172, %v1069
  %v1174 = vadd.f32 %v1173, %v1071
  %v1175 = vadd.f32 %v1174, %v1073
  %v1176 = vadd.f32 %v1175, %v1075
  %v1177 = vadd.f32 %v1176, %v1077
  %v1178 = vadd.f32 %v1177, %v1079
  %v1179 = vadd.f32 %v1178, %v1081
  %v1180 = vadd.f32 %v1179, %v1083
  %v1181 = vadd.f32 %v1180, %v1085
  %v1182 = vadd.f32 %v1181, %v1087
  %v1183 = vadd.f32 %v1182, %v1089
  %v1184 = vadd.f32 %v1183, %v1091
  %v1185 = vadd.f32 %v1184, %v1093
  %v1186 = vadd.f32 %v1185, %v1095
  %v1187 = vadd.f32 %v1186, %v1097
  %v1188 = vadd.f32 %v1187, %v1099
  %v1189 = vadd.f32 %v1188, %v1101
  %v1190 = vadd.f32 %v1189, %v1103
  %v1191 = vadd.f32 %v1190, %v1105
  %v1192 = vadd.f32 %v1191, %v1107
  %v1193 = vadd.f32 %v1192, %v1109
  %v1194 = vadd.f32 %v1193, %v1111
  %v1195 = vadd.f32 %v1194, %v1113
  %v1196 = vadd.f32 %v1195, %v1115
  %v1197 = vadd.f32 %v1196, %v1117
  %v1198 = vadd.f32 %v1197, %v1119
  %v1199 = vadd.f32 %v1198, %v1121
  %v1200 = vadd.f32 %v1199, %v1123
  %v1201 = vadd.f32 %v1200, %v1125
  %v1202 = vadd.f32 %v1201, %v1127
  %v1203 = vadd.f32 %v1202, %v1129
  %v1204 = vadd.f32 %v1203, %v1131
  %v1205 = vadd.f32 %v1204, %v1133
  %v1206 = vadd.f32 %v1205, %v1135
  %v1207 = vadd.f32 %v1206, %v1137
  %v1208 = vadd.f32 %v1207, %v1139
  %v1209 = vadd.f32 %v1208, %v1141
  %v1210 = vadd.f32 %v1209, %v1143
  %v1211 = vadd.f32 %v1210, %v1145
  %v1212 = vadd.f32 %v1211, %v1147
  %v1213 = vadd.f32 %v1212, %v1149
  %v1214 = vrot.slane %v1213, 4
  %v1215 = vadd.f32 %v1213, %v1214
  %v1216 = vrot.slane %v1215, 2
  %v1217 = vadd.f32 %v1215, %v1216
  %v1218 = vrot.slane %v1217, 1
  %v1219 = vadd.f32 %v1217, %v1218
  %v1220 = vsel %vm759, %v1024, 0.0
  %v1221 = vsel %vm759, %v1026, 0.0
  %v1222 = vadd.f32 %v1220, %v1221
  %v1223 = vsel %vm759, %v1028, 0.0
  %v1224 = vadd.f32 %v1222, %v1223
  %v1225 = vsel %vm759, %v1030, 0.0
  %v1226 = vadd.f32 %v1224, %v1225
  %v1227 = vsel %vm759, %v1032, 0.0
  %v1228 = vadd.f32 %v1226, %v1227
  %v1229 = vsel %vm759, %v1034, 0.0
  %v1230 = vadd.f32 %v1228, %v1229
  %v1231 = vsel %vm759, %v1036, 0.0
  %v1232 = vadd.f32 %v1230, %v1231
  %v1233 = vsel %vm759, %v1038, 0.0
  %v1234 = vadd.f32 %v1232, %v1233
  %v1235 = vsel %vm759, %v1040, 0.0
  %v1236 = vadd.f32 %v1234, %v1235
  %v1237 = vsel %vm759, %v1042, 0.0
  %v1238 = vadd.f32 %v1236, %v1237
  %v1239 = vsel %vm759, %v1044, 0.0
  %v1240 = vadd.f32 %v1238, %v1239
  %v1241 = vsel %vm759, %v1046, 0.0
  %v1242 = vadd.f32 %v1240, %v1241
  %v1243 = vsel %vm759, %v1048, 0.0
  %v1244 = vadd.f32 %v1242, %v1243
  %v1245 = vsel %vm759, %v1050, 0.0
  %v1246 = vadd.f32 %v1244, %v1245
  %v1247 = vsel %vm759, %v1052, 0.0
  %v1248 = vadd.f32 %v1246, %v1247
  %v1249 = vsel %vm759, %v1054, 0.0
  %v1250 = vadd.f32 %v1248, %v1249
  %v1251 = vsel %vm759, %v1056, 0.0
  %v1252 = vadd.f32 %v1250, %v1251
  %v1253 = vsel %vm759, %v1058, 0.0
  %v1254 = vadd.f32 %v1252, %v1253
  %v1255 = vsel %vm759, %v1060, 0.0
  %v1256 = vadd.f32 %v1254, %v1255
  %v1257 = vsel %vm759, %v1062, 0.0
  %v1258 = vadd.f32 %v1256, %v1257
  %v1259 = vsel %vm759, %v1064, 0.0
  %v1260 = vadd.f32 %v1258, %v1259
  %v1261 = vsel %vm759, %v1066, 0.0
  %v1262 = vadd.f32 %v1260, %v1261
  %v1263 = vsel %vm759, %v1068, 0.0
  %v1264 = vadd.f32 %v1262, %v1263
  %v1265 = vsel %vm759, %v1070, 0.0
  %v1266 = vadd.f32 %v1264, %v1265
  %v1267 = vsel %vm759, %v1072, 0.0
  %v1268 = vadd.f32 %v1266, %v1267
  %v1269 = vsel %vm759, %v1074, 0.0
  %v1270 = vadd.f32 %v1268, %v1269
  %v1271 = vsel %vm759, %v1076, 0.0
  %v1272 = vadd.f32 %v1270, %v1271
  %v1273 = vsel %vm759, %v1078, 0.0
  %v1274 = vadd.f32 %v1272, %v1273
  %v1275 = vsel %vm759, %v1080, 0.0
  %v1276 = vadd.f32 %v1274, %v1275
  %v1277 = vsel %vm759, %v1082, 0.0
  %v1278 = vadd.f32 %v1276, %v1277
  %v1279 = vsel %vm759, %v1084, 0.0
  %v1280 = vadd.f32 %v1278, %v1279
  %v1281 = vsel %vm759, %v1086, 0.0
  %v1282 = vadd.f32 %v1280, %v1281
  %v1283 = vsel %vm759, %v1088, 0.0
  %v1284 = vadd.f32 %v1282, %v1283
  %v1285 = vsel %vm759, %v1090, 0.0
  %v1286 = vadd.f32 %v1284, %v1285
  %v1287 = vsel %vm759, %v1092, 0.0
  %v1288 = vadd.f32 %v1286, %v1287
  %v1289 = vsel %vm759, %v1094, 0.0
  %v1290 = vadd.f32 %v1288, %v1289
  %v1291 = vsel %vm759, %v1096, 0.0
  %v1292 = vadd.f32 %v1290, %v1291
  %v1293 = vsel %vm759, %v1098, 0.0
  %v1294 = vadd.f32 %v1292, %v1293
  %v1295 = vsel %vm759, %v1100, 0.0
  %v1296 = vadd.f32 %v1294, %v1295
  %v1297 = vsel %vm759, %v1102, 0.0
  %v1298 = vadd.f32 %v1296, %v1297
  %v1299 = vsel %vm759, %v1104, 0.0
  %v1300 = vadd.f32 %v1298, %v1299
  %v1301 = vsel %vm759, %v1106, 0.0
  %v1302 = vadd.f32 %v1300, %v1301
  %v1303 = vsel %vm759, %v1108, 0.0
  %v1304 = vadd.f32 %v1302, %v1303
  %v1305 = vsel %vm759, %v1110, 0.0
  %v1306 = vadd.f32 %v1304, %v1305
  %v1307 = vsel %vm759, %v1112, 0.0
  %v1308 = vadd.f32 %v1306, %v1307
  %v1309 = vsel %vm759, %v1114, 0.0
  %v1310 = vadd.f32 %v1308, %v1309
  %v1311 = vsel %vm759, %v1116, 0.0
  %v1312 = vadd.f32 %v1310, %v1311
  %v1313 = vsel %vm759, %v1118, 0.0
  %v1314 = vadd.f32 %v1312, %v1313
  %v1315 = vsel %vm759, %v1120, 0.0
  %v1316 = vadd.f32 %v1314, %v1315
  %v1317 = vsel %vm759, %v1122, 0.0
  %v1318 = vadd.f32 %v1316, %v1317
  %v1319 = vsel %vm759, %v1124, 0.0
  %v1320 = vadd.f32 %v1318, %v1319
  %v1321 = vsel %vm759, %v1126, 0.0
  %v1322 = vadd.f32 %v1320, %v1321
  %v1323 = vsel %vm759, %v1128, 0.0
  %v1324 = vadd.f32 %v1322, %v1323
  %v1325 = vsel %vm759, %v1130, 0.0
  %v1326 = vadd.f32 %v1324, %v1325
  %v1327 = vsel %vm759, %v1132, 0.0
  %v1328 = vadd.f32 %v1326, %v1327
  %v1329 = vsel %vm759, %v1134, 0.0
  %v1330 = vadd.f32 %v1328, %v1329
  %v1331 = vsel %vm759, %v1136, 0.0
  %v1332 = vadd.f32 %v1330, %v1331
  %v1333 = vsel %vm759, %v1138, 0.0
  %v1334 = vadd.f32 %v1332, %v1333
  %v1335 = vsel %vm759, %v1140, 0.0
  %v1336 = vadd.f32 %v1334, %v1335
  %v1337 = vsel %vm759, %v1142, 0.0
  %v1338 = vadd.f32 %v1336, %v1337
  %v1339 = vsel %vm759, %v1144, 0.0
  %v1340 = vadd.f32 %v1338, %v1339
  %v1341 = vsel %vm759, %v1146, 0.0
  %v1342 = vadd.f32 %v1340, %v1341
  %v1343 = vsel %vm759, %v1148, 0.0
  %v1344 = vadd.f32 %v1342, %v1343
  %v1345 = vsel %vm759, %v1150, 0.0
  %v1346 = vadd.f32 %v1344, %v1345
  %v1347 = vrot.slane %v1346, 4
  %v1348 = vadd.f32 %v1346, %v1347
  %v1349 = vrot.slane %v1348, 2
  %v1350 = vadd.f32 %v1348, %v1349
  %v1351 = vrot.slane %v1350, 1
  %v1352 = vadd.f32 %v1350, %v1351
  %v1353 = vmul.f32 %v1219, 0.001953125
  %v1354 = vmul.f32 %v1352, 0.001953125
  %v1355 = vld [vmem:[%s2] sm:$0x3]
  %v1356 = vadd.f32 %v1353, 0.001
  %v1357 = vadd.f32 %v1354, 0.001
  %v1358 = vrsqrt.pop %v1356
  %v1359 = vmul.f32 %v1358, %v1356
  %v1360 = vmul.f32 %v1359, %v1358
  %v1361 = vmul.f32 0.5, %v1360
  %v1362 = vsub.f32 1.5, %v1361
  %v1363 = vmul.f32 %v1358, %v1362
  %vm1364 = vweird.f32 %v1356
  %vm1365 = vweird.f32 %v1358
  %vm1366 = vmor %vm1364, %vm1365
  %v1367 = vsel %vm1366, %v1358, %v1363
  %v1368 = vrsqrt.pop %v1357
  %v1369 = vmul.f32 %v1368, %v1357
  %v1370 = vmul.f32 %v1369, %v1368
  %v1371 = vmul.f32 0.5, %v1370
  %v1372 = vsub.f32 1.5, %v1371
  %v1373 = vmul.f32 %v1368, %v1372
  %vm1374 = vweird.f32 %v1357
  %vm1375 = vweird.f32 %v1368
  %vm1376 = vmor %vm1374, %vm1375
  %v1377 = vsel %vm1376, %v1368, %v1373
  %v1380 = vrot.slane %v1377, 7
  %vm1381 = vcmask 1040384
  %v1382 = vsel %vm1381, %v1367, %v1380
  %v1384 = vmul.f32 %v1355, %v1382
  %v1386 = vperm.slane %v1384, 0
  %v1387 = vperm.slane %v1384, 1
  %v1390 = vmul.f32 %v895, %v1386
  %v1391 = vmul.f32 %v896, %v1387
  %v1392 = vmul.f32 %v897, %v1386
  %v1393 = vmul.f32 %v898, %v1387
  %v1394 = vmul.f32 %v899, %v1386
  %v1395 = vmul.f32 %v900, %v1387
  %v1396 = vmul.f32 %v901, %v1386
  %v1397 = vmul.f32 %v902, %v1387
  %v1398 = vmul.f32 %v903, %v1386
  %v1399 = vmul.f32 %v904, %v1387
  %v1400 = vmul.f32 %v905, %v1386
  %v1401 = vmul.f32 %v906, %v1387
  %v1402 = vmul.f32 %v907, %v1386
  %v1403 = vmul.f32 %v908, %v1387
  %v1404 = vmul.f32 %v909, %v1386
  %v1405 = vmul.f32 %v910, %v1387
  %v1406 = vmul.f32 %v911, %v1386
  %v1407 = vmul.f32 %v912, %v1387
  %v1408 = vmul.f32 %v913, %v1386
  %v1409 = vmul.f32 %v914, %v1387
  %v1410 = vmul.f32 %v915, %v1386
  %v1411 = vmul.f32 %v916, %v1387
  %v1412 = vmul.f32 %v917, %v1386
  %v1413 = vmul.f32 %v918, %v1387
  %v1414 = vmul.f32 %v919, %v1386
  %v1415 = vmul.f32 %v920, %v1387
  %v1416 = vmul.f32 %v921, %v1386
  %v1417 = vmul.f32 %v922, %v1387
  %v1418 = vmul.f32 %v923, %v1386
  %v1419 = vmul.f32 %v924, %v1387
  %v1420 = vmul.f32 %v925, %v1386
  %v1421 = vmul.f32 %v926, %v1387
  %v1422 = vmul.f32 %v927, %v1386
  %v1423 = vmul.f32 %v928, %v1387
  %v1424 = vmul.f32 %v929, %v1386
  %v1425 = vmul.f32 %v930, %v1387
  %v1426 = vmul.f32 %v931, %v1386
  %v1427 = vmul.f32 %v932, %v1387
  %v1428 = vmul.f32 %v933, %v1386
  %v1429 = vmul.f32 %v934, %v1387
  %v1430 = vmul.f32 %v935, %v1386
  %v1431 = vmul.f32 %v936, %v1387
  %v1432 = vmul.f32 %v937, %v1386
  %v1433 = vmul.f32 %v938, %v1387
  %v1434 = vmul.f32 %v939, %v1386
  %v1435 = vmul.f32 %v940, %v1387
  %v1436 = vmul.f32 %v941, %v1386
  %v1437 = vmul.f32 %v942, %v1387
  %v1438 = vmul.f32 %v943, %v1386
  %v1439 = vmul.f32 %v944, %v1387
  %v1440 = vmul.f32 %v945, %v1386
  %v1441 = vmul.f32 %v946, %v1387
  %v1442 = vmul.f32 %v947, %v1386
  %v1443 = vmul.f32 %v948, %v1387
  %v1444 = vmul.f32 %v949, %v1386
  %v1445 = vmul.f32 %v950, %v1387
  %v1446 = vmul.f32 %v951, %v1386
  %v1447 = vmul.f32 %v952, %v1387
  %v1448 = vmul.f32 %v953, %v1386
  %v1449 = vmul.f32 %v954, %v1387
  %v1450 = vmul.f32 %v955, %v1386
  %v1451 = vmul.f32 %v956, %v1387
  %v1452 = vmul.f32 %v957, %v1386
  %v1453 = vmul.f32 %v958, %v1387
  %v1454 = vmul.f32 %v959, %v1386
  %v1455 = vmul.f32 %v960, %v1387
  %v1456 = vmul.f32 %v961, %v1386
  %v1457 = vmul.f32 %v962, %v1387
  %v1458 = vmul.f32 %v963, %v1386
  %v1459 = vmul.f32 %v964, %v1387
  %v1460 = vmul.f32 %v965, %v1386
  %v1461 = vmul.f32 %v966, %v1387
  %v1462 = vmul.f32 %v967, %v1386
  %v1463 = vmul.f32 %v968, %v1387
  %v1464 = vmul.f32 %v969, %v1386
  %v1465 = vmul.f32 %v970, %v1387
  %v1466 = vmul.f32 %v971, %v1386
  %v1467 = vmul.f32 %v972, %v1387
  %v1468 = vmul.f32 %v973, %v1386
  %v1469 = vmul.f32 %v974, %v1387
  %v1470 = vmul.f32 %v975, %v1386
  %v1471 = vmul.f32 %v976, %v1387
  %v1472 = vmul.f32 %v977, %v1386
  %v1473 = vmul.f32 %v978, %v1387
  %v1474 = vmul.f32 %v979, %v1386
  %v1475 = vmul.f32 %v980, %v1387
  %v1476 = vmul.f32 %v981, %v1386
  %v1477 = vmul.f32 %v982, %v1387
  %v1478 = vmul.f32 %v983, %v1386
  %v1479 = vmul.f32 %v984, %v1387
  %v1480 = vmul.f32 %v985, %v1386
  %v1481 = vmul.f32 %v986, %v1387
  %v1482 = vmul.f32 %v987, %v1386
  %v1483 = vmul.f32 %v988, %v1387
  %v1484 = vmul.f32 %v989, %v1386
  %v1485 = vmul.f32 %v990, %v1387
  %v1486 = vmul.f32 %v991, %v1386
  %v1487 = vmul.f32 %v992, %v1387
  %v1488 = vmul.f32 %v993, %v1386
  %v1489 = vmul.f32 %v994, %v1387
  %v1490 = vmul.f32 %v995, %v1386
  %v1491 = vmul.f32 %v996, %v1387
  %v1492 = vmul.f32 %v997, %v1386
  %v1493 = vmul.f32 %v998, %v1387
  %v1494 = vmul.f32 %v999, %v1386
  %v1495 = vmul.f32 %v1000, %v1387
  %v1496 = vmul.f32 %v1001, %v1386
  %v1497 = vmul.f32 %v1002, %v1387
  %v1498 = vmul.f32 %v1003, %v1386
  %v1499 = vmul.f32 %v1004, %v1387
  %v1500 = vmul.f32 %v1005, %v1386
  %v1501 = vmul.f32 %v1006, %v1387
  %v1502 = vmul.f32 %v1007, %v1386
  %v1503 = vmul.f32 %v1008, %v1387
  %v1504 = vmul.f32 %v1009, %v1386
  %v1505 = vmul.f32 %v1010, %v1387
  %v1506 = vmul.f32 %v1011, %v1386
  %v1507 = vmul.f32 %v1012, %v1387
  %v1508 = vmul.f32 %v1013, %v1386
  %v1509 = vmul.f32 %v1014, %v1387
  %v1510 = vmul.f32 %v1015, %v1386
  %v1511 = vmul.f32 %v1016, %v1387
  %v1512 = vmul.f32 %v1017, %v1386
  %v1513 = vmul.f32 %v1018, %v1387
  %v1514 = vmul.f32 %v1019, %v1386
  %v1515 = vmul.f32 %v1020, %v1387
  %v1516 = vmul.f32 %v1021, %v1386
  %v1517 = vmul.f32 %v1022, %v1387
  %v1518 = vld [vmem:[%s3] sm:$0x3]
  %v1520 = vperm.slane %v1518, 0
  %v1521 = vperm.slane %v1518, 1
  %v1524 = vadd.f32 %v1390, %v1520
  %v1525 = vadd.f32 %v1391, %v1521
  %v1526 = vadd.f32 %v1392, %v1520
  %v1527 = vadd.f32 %v1393, %v1521
  %v1528 = vadd.f32 %v1394, %v1520
  %v1529 = vadd.f32 %v1395, %v1521
  %v1530 = vadd.f32 %v1396, %v1520
  %v1531 = vadd.f32 %v1397, %v1521
  %v1532 = vadd.f32 %v1398, %v1520
  %v1533 = vadd.f32 %v1399, %v1521
  %v1534 = vadd.f32 %v1400, %v1520
  %v1535 = vadd.f32 %v1401, %v1521
  %v1536 = vadd.f32 %v1402, %v1520
  %v1537 = vadd.f32 %v1403, %v1521
  %v1538 = vadd.f32 %v1404, %v1520
  %v1539 = vadd.f32 %v1405, %v1521
  %v1540 = vadd.f32 %v1406, %v1520
  %v1541 = vadd.f32 %v1407, %v1521
  %v1542 = vadd.f32 %v1408, %v1520
  %v1543 = vadd.f32 %v1409, %v1521
  %v1544 = vadd.f32 %v1410, %v1520
  %v1545 = vadd.f32 %v1411, %v1521
  %v1546 = vadd.f32 %v1412, %v1520
  %v1547 = vadd.f32 %v1413, %v1521
  %v1548 = vadd.f32 %v1414, %v1520
  %v1549 = vadd.f32 %v1415, %v1521
  %v1550 = vadd.f32 %v1416, %v1520
  %v1551 = vadd.f32 %v1417, %v1521
  %v1552 = vadd.f32 %v1418, %v1520
  %v1553 = vadd.f32 %v1419, %v1521
  %v1554 = vadd.f32 %v1420, %v1520
  %v1555 = vadd.f32 %v1421, %v1521
  %v1556 = vadd.f32 %v1422, %v1520
  %v1557 = vadd.f32 %v1423, %v1521
  %v1558 = vadd.f32 %v1424, %v1520
  %v1559 = vadd.f32 %v1425, %v1521
  %v1560 = vadd.f32 %v1426, %v1520
  %v1561 = vadd.f32 %v1427, %v1521
  %v1562 = vadd.f32 %v1428, %v1520
  %v1563 = vadd.f32 %v1429, %v1521
  %v1564 = vadd.f32 %v1430, %v1520
  %v1565 = vadd.f32 %v1431, %v1521
  %v1566 = vadd.f32 %v1432, %v1520
  %v1567 = vadd.f32 %v1433, %v1521
  %v1568 = vadd.f32 %v1434, %v1520
  %v1569 = vadd.f32 %v1435, %v1521
  %v1570 = vadd.f32 %v1436, %v1520
  %v1571 = vadd.f32 %v1437, %v1521
  %v1572 = vadd.f32 %v1438, %v1520
  %v1573 = vadd.f32 %v1439, %v1521
  %v1574 = vadd.f32 %v1440, %v1520
  %v1575 = vadd.f32 %v1441, %v1521
  %v1576 = vadd.f32 %v1442, %v1520
  %v1577 = vadd.f32 %v1443, %v1521
  %v1578 = vadd.f32 %v1444, %v1520
  %v1579 = vadd.f32 %v1445, %v1521
  %v1580 = vadd.f32 %v1446, %v1520
  %v1581 = vadd.f32 %v1447, %v1521
  %v1582 = vadd.f32 %v1448, %v1520
  %v1583 = vadd.f32 %v1449, %v1521
  %v1584 = vadd.f32 %v1450, %v1520
  %v1585 = vadd.f32 %v1451, %v1521
  %v1586 = vadd.f32 %v1452, %v1520
  %v1587 = vadd.f32 %v1453, %v1521
  %v1588 = vadd.f32 %v1454, %v1520
  %v1589 = vadd.f32 %v1455, %v1521
  %v1590 = vadd.f32 %v1456, %v1520
  %v1591 = vadd.f32 %v1457, %v1521
  %v1592 = vadd.f32 %v1458, %v1520
  %v1593 = vadd.f32 %v1459, %v1521
  %v1594 = vadd.f32 %v1460, %v1520
  %v1595 = vadd.f32 %v1461, %v1521
  %v1596 = vadd.f32 %v1462, %v1520
  %v1597 = vadd.f32 %v1463, %v1521
  %v1598 = vadd.f32 %v1464, %v1520
  %v1599 = vadd.f32 %v1465, %v1521
  %v1600 = vadd.f32 %v1466, %v1520
  %v1601 = vadd.f32 %v1467, %v1521
  %v1602 = vadd.f32 %v1468, %v1520
  %v1603 = vadd.f32 %v1469, %v1521
  %v1604 = vadd.f32 %v1470, %v1520
  %v1605 = vadd.f32 %v1471, %v1521
  %v1606 = vadd.f32 %v1472, %v1520
  %v1607 = vadd.f32 %v1473, %v1521
  %v1608 = vadd.f32 %v1474, %v1520
  %v1609 = vadd.f32 %v1475, %v1521
  %v1610 = vadd.f32 %v1476, %v1520
  %v1611 = vadd.f32 %v1477, %v1521
  %v1612 = vadd.f32 %v1478, %v1520
  %v1613 = vadd.f32 %v1479, %v1521
  %v1614 = vadd.f32 %v1480, %v1520
  %v1615 = vadd.f32 %v1481, %v1521
  %v1616 = vadd.f32 %v1482, %v1520
  %v1617 = vadd.f32 %v1483, %v1521
  %v1618 = vadd.f32 %v1484, %v1520
  %v1619 = vadd.f32 %v1485, %v1521
  %v1620 = vadd.f32 %v1486, %v1520
  %v1621 = vadd.f32 %v1487, %v1521
  %v1622 = vadd.f32 %v1488, %v1520
  %v1623 = vadd.f32 %v1489, %v1521
  %v1624 = vadd.f32 %v1490, %v1520
  %v1625 = vadd.f32 %v1491, %v1521
  %v1626 = vadd.f32 %v1492, %v1520
  %v1627 = vadd.f32 %v1493, %v1521
  %v1628 = vadd.f32 %v1494, %v1520
  %v1629 = vadd.f32 %v1495, %v1521
  %v1630 = vadd.f32 %v1496, %v1520
  %v1631 = vadd.f32 %v1497, %v1521
  %v1632 = vadd.f32 %v1498, %v1520
  %v1633 = vadd.f32 %v1499, %v1521
  %v1634 = vadd.f32 %v1500, %v1520
  %v1635 = vadd.f32 %v1501, %v1521
  %v1636 = vadd.f32 %v1502, %v1520
  %v1637 = vadd.f32 %v1503, %v1521
  %v1638 = vadd.f32 %v1504, %v1520
  %v1639 = vadd.f32 %v1505, %v1521
  %v1640 = vadd.f32 %v1506, %v1520
  %v1641 = vadd.f32 %v1507, %v1521
  %v1642 = vadd.f32 %v1508, %v1520
  %v1643 = vadd.f32 %v1509, %v1521
  %v1644 = vadd.f32 %v1510, %v1520
  %v1645 = vadd.f32 %v1511, %v1521
  %v1646 = vadd.f32 %v1512, %v1520
  %v1647 = vadd.f32 %v1513, %v1521
  %v1648 = vadd.f32 %v1514, %v1520
  %v1649 = vadd.f32 %v1515, %v1521
  %v1650 = vadd.f32 %v1516, %v1520
  %v1651 = vadd.f32 %v1517, %v1521
  %v1652 = vmax.f32 %v1524, 0.0
  %v1653 = vmax.f32 %v1525, 0.0
  %v1654 = vmax.f32 %v1526, 0.0
  %v1655 = vmax.f32 %v1527, 0.0
  %v1656 = vmax.f32 %v1528, 0.0
  %v1657 = vmax.f32 %v1529, 0.0
  %v1658 = vmax.f32 %v1530, 0.0
  %v1659 = vmax.f32 %v1531, 0.0
  %v1660 = vmax.f32 %v1532, 0.0
  %v1661 = vmax.f32 %v1533, 0.0
  %v1662 = vmax.f32 %v1534, 0.0
  %v1663 = vmax.f32 %v1535, 0.0
  %v1664 = vmax.f32 %v1536, 0.0
  %v1665 = vmax.f32 %v1537, 0.0
  %v1666 = vmax.f32 %v1538, 0.0
  %v1667 = vmax.f32 %v1539, 0.0
  %v1668 = vmax.f32 %v1540, 0.0
  %v1669 = vmax.f32 %v1541, 0.0
  %v1670 = vmax.f32 %v1542, 0.0
  %v1671 = vmax.f32 %v1543, 0.0
  %v1672 = vmax.f32 %v1544, 0.0
  %v1673 = vmax.f32 %v1545, 0.0
  %v1674 = vmax.f32 %v1546, 0.0
  %v1675 = vmax.f32 %v1547, 0.0
  %v1676 = vmax.f32 %v1548, 0.0
  %v1677 = vmax.f32 %v1549, 0.0
  %v1678 = vmax.f32 %v1550, 0.0
  %v1679 = vmax.f32 %v1551, 0.0
  %v1680 = vmax.f32 %v1552, 0.0
  %v1681 = vmax.f32 %v1553, 0.0
  %v1682 = vmax.f32 %v1554, 0.0
  %v1683 = vmax.f32 %v1555, 0.0
  %v1684 = vmax.f32 %v1556, 0.0
  %v1685 = vmax.f32 %v1557, 0.0
  %v1686 = vmax.f32 %v1558, 0.0
  %v1687 = vmax.f32 %v1559, 0.0
  %v1688 = vmax.f32 %v1560, 0.0
  %v1689 = vmax.f32 %v1561, 0.0
  %v1690 = vmax.f32 %v1562, 0.0
  %v1691 = vmax.f32 %v1563, 0.0
  %v1692 = vmax.f32 %v1564, 0.0
  %v1693 = vmax.f32 %v1565, 0.0
  %v1694 = vmax.f32 %v1566, 0.0
  %v1695 = vmax.f32 %v1567, 0.0
  %v1696 = vmax.f32 %v1568, 0.0
  %v1697 = vmax.f32 %v1569, 0.0
  %v1698 = vmax.f32 %v1570, 0.0
  %v1699 = vmax.f32 %v1571, 0.0
  %v1700 = vmax.f32 %v1572, 0.0
  %v1701 = vmax.f32 %v1573, 0.0
  %v1702 = vmax.f32 %v1574, 0.0
  %v1703 = vmax.f32 %v1575, 0.0
  %v1704 = vmax.f32 %v1576, 0.0
  %v1705 = vmax.f32 %v1577, 0.0
  %v1706 = vmax.f32 %v1578, 0.0
  %v1707 = vmax.f32 %v1579, 0.0
  %v1708 = vmax.f32 %v1580, 0.0
  %v1709 = vmax.f32 %v1581, 0.0
  %v1710 = vmax.f32 %v1582, 0.0
  %v1711 = vmax.f32 %v1583, 0.0
  %v1712 = vmax.f32 %v1584, 0.0
  %v1713 = vmax.f32 %v1585, 0.0
  %v1714 = vmax.f32 %v1586, 0.0
  %v1715 = vmax.f32 %v1587, 0.0
  %v1716 = vmax.f32 %v1588, 0.0
  %v1717 = vmax.f32 %v1589, 0.0
  %v1718 = vmax.f32 %v1590, 0.0
  %v1719 = vmax.f32 %v1591, 0.0
  %v1720 = vmax.f32 %v1592, 0.0
  %v1721 = vmax.f32 %v1593, 0.0
  %v1722 = vmax.f32 %v1594, 0.0
  %v1723 = vmax.f32 %v1595, 0.0
  %v1724 = vmax.f32 %v1596, 0.0
  %v1725 = vmax.f32 %v1597, 0.0
  %v1726 = vmax.f32 %v1598, 0.0
  %v1727 = vmax.f32 %v1599, 0.0
  %v1728 = vmax.f32 %v1600, 0.0
  %v1729 = vmax.f32 %v1601, 0.0
  %v1730 = vmax.f32 %v1602, 0.0
  %v1731 = vmax.f32 %v1603, 0.0
  %v1732 = vmax.f32 %v1604, 0.0
  %v1733 = vmax.f32 %v1605, 0.0
  %v1734 = vmax.f32 %v1606, 0.0
  %v1735 = vmax.f32 %v1607, 0.0
  %v1736 = vmax.f32 %v1608, 0.0
  %v1737 = vmax.f32 %v1609, 0.0
  %v1738 = vmax.f32 %v1610, 0.0
  %v1739 = vmax.f32 %v1611, 0.0
  %v1740 = vmax.f32 %v1612, 0.0
  %v1741 = vmax.f32 %v1613, 0.0
  %v1742 = vmax.f32 %v1614, 0.0
  %v1743 = vmax.f32 %v1615, 0.0
  %v1744 = vmax.f32 %v1616, 0.0
  %v1745 = vmax.f32 %v1617, 0.0
  %v1746 = vmax.f32 %v1618, 0.0
  %v1747 = vmax.f32 %v1619, 0.0
  %v1748 = vmax.f32 %v1620, 0.0
  %v1749 = vmax.f32 %v1621, 0.0
  %v1750 = vmax.f32 %v1622, 0.0
  %v1751 = vmax.f32 %v1623, 0.0
  %v1752 = vmax.f32 %v1624, 0.0
  %v1753 = vmax.f32 %v1625, 0.0
  %v1754 = vmax.f32 %v1626, 0.0
  %v1755 = vmax.f32 %v1627, 0.0
  %v1756 = vmax.f32 %v1628, 0.0
  %v1757 = vmax.f32 %v1629, 0.0
  %v1758 = vmax.f32 %v1630, 0.0
  %v1759 = vmax.f32 %v1631, 0.0
  %v1760 = vmax.f32 %v1632, 0.0
  %v1761 = vmax.f32 %v1633, 0.0
  %v1762 = vmax.f32 %v1634, 0.0
  %v1763 = vmax.f32 %v1635, 0.0
  %v1764 = vmax.f32 %v1636, 0.0
  %v1765 = vmax.f32 %v1637, 0.0
  %v1766 = vmax.f32 %v1638, 0.0
  %v1767 = vmax.f32 %v1639, 0.0
  %v1768 = vmax.f32 %v1640, 0.0
  %v1769 = vmax.f32 %v1641, 0.0
  %v1770 = vmax.f32 %v1642, 0.0
  %v1771 = vmax.f32 %v1643, 0.0
  %v1772 = vmax.f32 %v1644, 0.0
  %v1773 = vmax.f32 %v1645, 0.0
  %v1774 = vmax.f32 %v1646, 0.0
  %v1775 = vmax.f32 %v1647, 0.0
  %v1776 = vmax.f32 %v1648, 0.0
  %v1777 = vmax.f32 %v1649, 0.0
  %v1778 = vmax.f32 %v1650, 0.0
  %v1779 = vmax.f32 %v1651, 0.0
  %1780 = vst [vmem:[%s4] sm:$0xff] %v1652
  %1781 = vst.msk [vmem:[%s4 + $0x8] sm:$0xff] %vm759, %v1653
  %1782 = vst [vmem:[%s4 + $0x10] sm:$0xff] %v1654
  %1783 = vst.msk [vmem:[%s4 + $0x18] sm:$0xff] %vm759, %v1655
  %1784 = vst [vmem:[%s4 + $0x20] sm:$0xff] %v1656
  %1785 = vst.msk [vmem:[%s4 + $0x28] sm:$0xff] %vm759, %v1657
  %1786 = vst [vmem:[%s4 + $0x30] sm:$0xff] %v1658
  %1787 = vst.msk [vmem:[%s4 + $0x38] sm:$0xff] %vm759, %v1659
  %1788 = vst [vmem:[%s4 + $0x40] sm:$0xff] %v1660
  %1789 = vst.msk [vmem:[%s4 + $0x48] sm:$0xff] %vm759, %v1661
  %1790 = vst [vmem:[%s4 + $0x50] sm:$0xff] %v1662
  %1791 = vst.msk [vmem:[%s4 + $0x58] sm:$0xff] %vm759, %v1663
  %1792 = vst [vmem:[%s4 + $0x60] sm:$0xff] %v1664
  %1793 = vst.msk [vmem:[%s4 + $0x68] sm:$0xff] %vm759, %v1665
  %1794 = vst [vmem:[%s4 + $0x70] sm:$0xff] %v1666
  %1795 = vst.msk [vmem:[%s4 + $0x78] sm:$0xff] %vm759, %v1667
  %1796 = vst [vmem:[%s4 + $0x80] sm:$0xff] %v1668
  %1797 = vst.msk [vmem:[%s4 + $0x88] sm:$0xff] %vm759, %v1669
  %1798 = vst [vmem:[%s4 + $0x90] sm:$0xff] %v1670
  %1799 = vst.msk [vmem:[%s4 + $0x98] sm:$0xff] %vm759, %v1671
  %1800 = vst [vmem:[%s4 + $0xa0] sm:$0xff] %v1672
  %1801 = vst.msk [vmem:[%s4 + $0xa8] sm:$0xff] %vm759, %v1673
  %1802 = vst [vmem:[%s4 + $0xb0] sm:$0xff] %v1674
  %1803 = vst.msk [vmem:[%s4 + $0xb8] sm:$0xff] %vm759, %v1675
  %1804 = vst [vmem:[%s4 + $0xc0] sm:$0xff] %v1676
  %1805 = vst.msk [vmem:[%s4 + $0xc8] sm:$0xff] %vm759, %v1677
  %1806 = vst [vmem:[%s4 + $0xd0] sm:$0xff] %v1678
  %1807 = vst.msk [vmem:[%s4 + $0xd8] sm:$0xff] %vm759, %v1679
  %1808 = vst [vmem:[%s4 + $0xe0] sm:$0xff] %v1680
  %1809 = vst.msk [vmem:[%s4 + $0xe8] sm:$0xff] %vm759, %v1681
  %1810 = vst [vmem:[%s4 + $0xf0] sm:$0xff] %v1682
  %1811 = vst.msk [vmem:[%s4 + $0xf8] sm:$0xff] %vm759, %v1683
  %1812 = vst [vmem:[%s4 + $0x100] sm:$0xff] %v1684
  %1813 = vst.msk [vmem:[%s4 + $0x108] sm:$0xff] %vm759, %v1685
  %1814 = vst [vmem:[%s4 + $0x110] sm:$0xff] %v1686
  %1815 = vst.msk [vmem:[%s4 + $0x118] sm:$0xff] %vm759, %v1687
  %1816 = vst [vmem:[%s4 + $0x120] sm:$0xff] %v1688
  %1817 = vst.msk [vmem:[%s4 + $0x128] sm:$0xff] %vm759, %v1689
  %1818 = vst [vmem:[%s4 + $0x130] sm:$0xff] %v1690
  %1819 = vst.msk [vmem:[%s4 + $0x138] sm:$0xff] %vm759, %v1691
  %1820 = vst [vmem:[%s4 + $0x140] sm:$0xff] %v1692
  %1821 = vst.msk [vmem:[%s4 + $0x148] sm:$0xff] %vm759, %v1693
  %1822 = vst [vmem:[%s4 + $0x150] sm:$0xff] %v1694
  %1823 = vst.msk [vmem:[%s4 + $0x158] sm:$0xff] %vm759, %v1695
  %1824 = vst [vmem:[%s4 + $0x160] sm:$0xff] %v1696
  %1825 = vst.msk [vmem:[%s4 + $0x168] sm:$0xff] %vm759, %v1697
  %1826 = vst [vmem:[%s4 + $0x170] sm:$0xff] %v1698
  %1827 = vst.msk [vmem:[%s4 + $0x178] sm:$0xff] %vm759, %v1699
  %1828 = vst [vmem:[%s4 + $0x180] sm:$0xff] %v1700
  %1829 = vst.msk [vmem:[%s4 + $0x188] sm:$0xff] %vm759, %v1701
  %1830 = vst [vmem:[%s4 + $0x190] sm:$0xff] %v1702
  %1831 = vst.msk [vmem:[%s4 + $0x198] sm:$0xff] %vm759, %v1703
  %1832 = vst [vmem:[%s4 + $0x1a0] sm:$0xff] %v1704
  %1833 = vst.msk [vmem:[%s4 + $0x1a8] sm:$0xff] %vm759, %v1705
  %1834 = vst [vmem:[%s4 + $0x1b0] sm:$0xff] %v1706
  %1835 = vst.msk [vmem:[%s4 + $0x1b8] sm:$0xff] %vm759, %v1707
  %1836 = vst [vmem:[%s4 + $0x1c0] sm:$0xff] %v1708
  %1837 = vst.msk [vmem:[%s4 + $0x1c8] sm:$0xff] %vm759, %v1709
  %1838 = vst [vmem:[%s4 + $0x1d0] sm:$0xff] %v1710
  %1839 = vst.msk [vmem:[%s4 + $0x1d8] sm:$0xff] %vm759, %v1711
  %1840 = vst [vmem:[%s4 + $0x1e0] sm:$0xff] %v1712
  %1841 = vst.msk [vmem:[%s4 + $0x1e8] sm:$0xff] %vm759, %v1713
  %1842 = vst [vmem:[%s4 + $0x1f0] sm:$0xff] %v1714
  %1843 = vst.msk [vmem:[%s4 + $0x1f8] sm:$0xff] %vm759, %v1715
  %1844 = vst [vmem:[%s4 + $0x200] sm:$0xff] %v1716
  %1845 = vst.msk [vmem:[%s4 + $0x208] sm:$0xff] %vm759, %v1717
  %1846 = vst [vmem:[%s4 + $0x210] sm:$0xff] %v1718
  %1847 = vst.msk [vmem:[%s4 + $0x218] sm:$0xff] %vm759, %v1719
  %1848 = vst [vmem:[%s4 + $0x220] sm:$0xff] %v1720
  %1849 = vst.msk [vmem:[%s4 + $0x228] sm:$0xff] %vm759, %v1721
  %1850 = vst [vmem:[%s4 + $0x230] sm:$0xff] %v1722
  %1851 = vst.msk [vmem:[%s4 + $0x238] sm:$0xff] %vm759, %v1723
  %1852 = vst [vmem:[%s4 + $0x240] sm:$0xff] %v1724
  %1853 = vst.msk [vmem:[%s4 + $0x248] sm:$0xff] %vm759, %v1725
  %1854 = vst [vmem:[%s4 + $0x250] sm:$0xff] %v1726
  %1855 = vst.msk [vmem:[%s4 + $0x258] sm:$0xff] %vm759, %v1727
  %1856 = vst [vmem:[%s4 + $0x260] sm:$0xff] %v1728
  %1857 = vst.msk [vmem:[%s4 + $0x268] sm:$0xff] %vm759, %v1729
  %1858 = vst [vmem:[%s4 + $0x270] sm:$0xff] %v1730
  %1859 = vst.msk [vmem:[%s4 + $0x278] sm:$0xff] %vm759, %v1731
  %1860 = vst [vmem:[%s4 + $0x280] sm:$0xff] %v1732
  %1861 = vst.msk [vmem:[%s4 + $0x288] sm:$0xff] %vm759, %v1733
  %1862 = vst [vmem:[%s4 + $0x290] sm:$0xff] %v1734
  %1863 = vst.msk [vmem:[%s4 + $0x298] sm:$0xff] %vm759, %v1735
  %1864 = vst [vmem:[%s4 + $0x2a0] sm:$0xff] %v1736
  %1865 = vst.msk [vmem:[%s4 + $0x2a8] sm:$0xff] %vm759, %v1737
  %1866 = vst [vmem:[%s4 + $0x2b0] sm:$0xff] %v1738
  %1867 = vst.msk [vmem:[%s4 + $0x2b8] sm:$0xff] %vm759, %v1739
  %1868 = vst [vmem:[%s4 + $0x2c0] sm:$0xff] %v1740
  %1869 = vst.msk [vmem:[%s4 + $0x2c8] sm:$0xff] %vm759, %v1741
  %1870 = vst [vmem:[%s4 + $0x2d0] sm:$0xff] %v1742
  %1871 = vst.msk [vmem:[%s4 + $0x2d8] sm:$0xff] %vm759, %v1743
  %1872 = vst [vmem:[%s4 + $0x2e0] sm:$0xff] %v1744
  %1873 = vst.msk [vmem:[%s4 + $0x2e8] sm:$0xff] %vm759, %v1745
  %1874 = vst [vmem:[%s4 + $0x2f0] sm:$0xff] %v1746
  %1875 = vst.msk [vmem:[%s4 + $0x2f8] sm:$0xff] %vm759, %v1747
  %1876 = vst [vmem:[%s4 + $0x300] sm:$0xff] %v1748
  %1877 = vst.msk [vmem:[%s4 + $0x308] sm:$0xff] %vm759, %v1749
  %1878 = vst [vmem:[%s4 + $0x310] sm:$0xff] %v1750
  %1879 = vst.msk [vmem:[%s4 + $0x318] sm:$0xff] %vm759, %v1751
  %1880 = vst [vmem:[%s4 + $0x320] sm:$0xff] %v1752
  %1881 = vst.msk [vmem:[%s4 + $0x328] sm:$0xff] %vm759, %v1753
  %1882 = vst [vmem:[%s4 + $0x330] sm:$0xff] %v1754
  %1883 = vst.msk [vmem:[%s4 + $0x338] sm:$0xff] %vm759, %v1755
  %1884 = vst [vmem:[%s4 + $0x340] sm:$0xff] %v1756
  %1885 = vst.msk [vmem:[%s4 + $0x348] sm:$0xff] %vm759, %v1757
  %1886 = vst [vmem:[%s4 + $0x350] sm:$0xff] %v1758
  %1887 = vst.msk [vmem:[%s4 + $0x358] sm:$0xff] %vm759, %v1759
  %1888 = vst [vmem:[%s4 + $0x360] sm:$0xff] %v1760
  %1889 = vst.msk [vmem:[%s4 + $0x368] sm:$0xff] %vm759, %v1761
  %1890 = vst [vmem:[%s4 + $0x370] sm:$0xff] %v1762
  %1891 = vst.msk [vmem:[%s4 + $0x378] sm:$0xff] %vm759, %v1763
  %1892 = vst [vmem:[%s4 + $0x380] sm:$0xff] %v1764
  %1893 = vst.msk [vmem:[%s4 + $0x388] sm:$0xff] %vm759, %v1765
  %1894 = vst [vmem:[%s4 + $0x390] sm:$0xff] %v1766
  %1895 = vst.msk [vmem:[%s4 + $0x398] sm:$0xff] %vm759, %v1767
  %1896 = vst [vmem:[%s4 + $0x3a0] sm:$0xff] %v1768
  %1897 = vst.msk [vmem:[%s4 + $0x3a8] sm:$0xff] %vm759, %v1769
  %1898 = vst [vmem:[%s4 + $0x3b0] sm:$0xff] %v1770
  %1899 = vst.msk [vmem:[%s4 + $0x3b8] sm:$0xff] %vm759, %v1771
  %1900 = vst [vmem:[%s4 + $0x3c0] sm:$0xff] %v1772
  %1901 = vst.msk [vmem:[%s4 + $0x3c8] sm:$0xff] %vm759, %v1773
  %1902 = vst [vmem:[%s4 + $0x3d0] sm:$0xff] %v1774
  %1903 = vst.msk [vmem:[%s4 + $0x3d8] sm:$0xff] %vm759, %v1775
  %1904 = vst [vmem:[%s4 + $0x3e0] sm:$0xff] %v1776
  %1905 = vst.msk [vmem:[%s4 + $0x3e8] sm:$0xff] %vm759, %v1777
  %1906 = vst [vmem:[%s4 + $0x3f0] sm:$0xff] %v1778
  %1907 = vst.msk [vmem:[%s4 + $0x3f8] sm:$0xff] %vm759, %v1779
  // Predicated region
  $region18: #{inception1_forward.4} parent=0 // pred_check
    _
  $region19: #{inception1_forward.4} parent=0 // pred_check_branch
    %1909 = sbr.rel (0) target = $region21
  $region20: #{inception1_forward.4} parent=0 // pred_region
    _
  $region21: #{inception1_forward.4} parent=0 // pred_fallthru
    _
  // Predicated region
  $region22: #{inception1_forward.4} parent=0 // pred_check
    _
  $region23: #{inception1_forward.4} parent=0 // pred_check_branch
    %1911 = sbr.rel (0) target = $region25
  $region24: #{inception1_forward.4} parent=0 // pred_region
    _
  $region25: #{inception1_forward.4} parent=0 // pred_fallthru
    _

// kernel: inception1_forward.5
$region0: #{inception1_forward.5}
  #allocation0 [shape = 'u32[]', space=smem, size = 0x4, offset = 0x4, fixed_abs, tag = 'smem constant byte address 0x4 - core index']
  #allocation1 [shape = 'u32[72,128]{1,0:T(1,128)}', space=vmem, size = 0x9000, scoped, tag = 'internal scratch']
  %s0 = inlined_call_operand.vmem [shape: bf16[512,1200], index: 0, kind: input, shape index: {}]
  %s1 = inlined_call_operand.vmem [shape: bf16[1200,64], index: 1, kind: input, shape index: {}]
  %s2 = inlined_call_operand.vmem [shape: f32[1,64], index: 2, kind: input, shape index: {}]
  %s3 = inlined_call_operand.vmem [shape: f32[1,64], index: 3, kind: input, shape index: {}]
  %s4 = inlined_call_operand.vmem [shape: f32[512,64], index: 4, kind: output, shape index: {}]
  %s5 = sld [smem:[#allocation0]]
  $region26: #{inception1_forward.5} parent=0
    _
  %s7 = ssub.s32 1, %s5
  %s8 = scalar_select 0, %s7, %s5
  // Predicated region
  $region2: #{inception1_forward.5} parent=0 // pred_check
    _
  $region3: #{inception1_forward.5} parent=0 // pred_check_branch
    %10 = sbr.rel (0) target = $region5
  $region4: #{inception1_forward.5} parent=0 // pred_region
    _
  $region5: #{inception1_forward.5} parent=0 // pred_fallthru
    _
  // Predicated region
  $region6: #{inception1_forward.5} parent=0 // pred_check
    _
  $region7: #{inception1_forward.5} parent=0 // pred_check_branch
    %12 = sbr.rel (0) target = $region9
  $region8: #{inception1_forward.5} parent=0 // pred_region
    _
  $region9: #{inception1_forward.5} parent=0 // pred_fallthru
    _
  // Predicated region
  $region10: #{inception1_forward.5} parent=0 // pred_check
    _
  $region11: #{inception1_forward.5} parent=0 // pred_check_branch
    %14 = sbr.rel (0) target = $region13
  $region12: #{inception1_forward.5} parent=0 // pred_region
    _
  $region13: #{inception1_forward.5} parent=0 // pred_fallthru
    _
  // Predicated region
  $region14: #{inception1_forward.5} parent=0 // pred_check
    _
  $region15: #{inception1_forward.5} parent=0 // pred_check_branch
    %16 = sbr.rel (0) target = $region17
  $region16: #{inception1_forward.5} parent=0 // pred_region
    _
  $region17: #{inception1_forward.5} parent=0 // pred_fallthru
    _
  %v18 = vld [vmem:[%s0] sm:$0xff]
  %v19 = vld [vmem:[%s0 + $0x8] sm:$0xff]
  %v20 = vld [vmem:[%s0 + $0x10] sm:$0xff]
  %v21 = vld [vmem:[%s0 + $0x18] sm:$0xff]
  %v22 = vld [vmem:[%s0 + $0x20] sm:$0xff]
  %v23 = vld [vmem:[%s0 + $0x28] sm:$0xff]
  %v24 = vld [vmem:[%s0 + $0x30] sm:$0xff]
  %v25 = vld [vmem:[%s0 + $0x38] sm:$0xff]
  %v26 = vld [vmem:[%s0 + $0x40] sm:$0xff]
  %v27 = vld [vmem:[%s0 + $0x48] sm:$0xff]
  %v28 = vld [vmem:[%s0 + $0x50] sm:$0xff]
  %v29 = vld [vmem:[%s0 + $0x58] sm:$0xff]
  %v30 = vld [vmem:[%s0 + $0x60] sm:$0xff]
  %v31 = vld [vmem:[%s0 + $0x68] sm:$0xff]
  %v32 = vld [vmem:[%s0 + $0x70] sm:$0xff]
  %v33 = vld [vmem:[%s0 + $0x78] sm:$0xff]
  %v34 = vld [vmem:[%s0 + $0x80] sm:$0xff]
  %v35 = vld [vmem:[%s0 + $0x88] sm:$0xff]
  %v36 = vld [vmem:[%s0 + $0x90] sm:$0xff]
  %v37 = vld [vmem:[%s0 + $0x98] sm:$0xff]
  %v38 = vld [vmem:[%s0 + $0xa0] sm:$0xff]
  %v39 = vld [vmem:[%s0 + $0xa8] sm:$0xff]
  %v40 = vld [vmem:[%s0 + $0xb0] sm:$0xff]
  %v41 = vld [vmem:[%s0 + $0xb8] sm:$0xff]
  %v42 = vld [vmem:[%s0 + $0xc0] sm:$0xff]
  %v43 = vld [vmem:[%s0 + $0xc8] sm:$0xff]
  %v44 = vld [vmem:[%s0 + $0xd0] sm:$0xff]
  %v45 = vld [vmem:[%s0 + $0xd8] sm:$0xff]
  %v46 = vld [vmem:[%s0 + $0xe0] sm:$0xff]
  %v47 = vld [vmem:[%s0 + $0xe8] sm:$0xff]
  %v48 = vld [vmem:[%s0 + $0xf0] sm:$0xff]
  %v49 = vld [vmem:[%s0 + $0xf8] sm:$0xff]
  %v50 = vld [vmem:[%s0 + $0x100] sm:$0xff]
  %v51 = vld [vmem:[%s0 + $0x108] sm:$0xff]
  %v52 = vld [vmem:[%s0 + $0x110] sm:$0xff]
  %v53 = vld [vmem:[%s0 + $0x118] sm:$0xff]
  %v54 = vld [vmem:[%s0 + $0x120] sm:$0xff]
  %v55 = vld [vmem:[%s0 + $0x128] sm:$0xff]
  %v56 = vld [vmem:[%s0 + $0x130] sm:$0xff]
  %v57 = vld [vmem:[%s0 + $0x138] sm:$0xff]
  %v58 = vld [vmem:[%s0 + $0x140] sm:$0xff]
  %v59 = vld [vmem:[%s0 + $0x148] sm:$0xff]
  %v60 = vld [vmem:[%s0 + $0x150] sm:$0xff]
  %v61 = vld [vmem:[%s0 + $0x158] sm:$0xff]
  %v62 = vld [vmem:[%s0 + $0x160] sm:$0xff]
  %v63 = vld [vmem:[%s0 + $0x168] sm:$0xff]
  %v64 = vld [vmem:[%s0 + $0x170] sm:$0xff]
  %v65 = vld [vmem:[%s0 + $0x178] sm:$0xff]
  %v66 = vld [vmem:[%s0 + $0x180] sm:$0xff]
  %v67 = vld [vmem:[%s0 + $0x188] sm:$0xff]
  %v68 = vld [vmem:[%s0 + $0x190] sm:$0xff]
  %v69 = vld [vmem:[%s0 + $0x198] sm:$0xff]
  %v70 = vld [vmem:[%s0 + $0x1a0] sm:$0xff]
  %v71 = vld [vmem:[%s0 + $0x1a8] sm:$0xff]
  %v72 = vld [vmem:[%s0 + $0x1b0] sm:$0xff]
  %v73 = vld [vmem:[%s0 + $0x1b8] sm:$0xff]
  %v74 = vld [vmem:[%s0 + $0x1c0] sm:$0xff]
  %v75 = vld [vmem:[%s0 + $0x1c8] sm:$0xff]
  %v76 = vld [vmem:[%s0 + $0x1d0] sm:$0xff]
  %v77 = vld [vmem:[%s0 + $0x1d8] sm:$0xff]
  %v78 = vld [vmem:[%s0 + $0x1e0] sm:$0xff]
  %v79 = vld [vmem:[%s0 + $0x1e8] sm:$0xff]
  %v80 = vld [vmem:[%s0 + $0x1f0] sm:$0xff]
  %v81 = vld [vmem:[%s0 + $0x1f8] sm:$0xff]
  %v82 = vld [vmem:[%s0 + $0x200] sm:$0xff]
  %v83 = vld [vmem:[%s0 + $0x208] sm:$0xff]
  %v84 = vld [vmem:[%s0 + $0x210] sm:$0xff]
  %v85 = vld [vmem:[%s0 + $0x218] sm:$0xff]
  %v86 = vld [vmem:[%s0 + $0x220] sm:$0xff]
  %v87 = vld [vmem:[%s0 + $0x228] sm:$0xff]
  %v88 = vld [vmem:[%s0 + $0x230] sm:$0xff]
  %v89 = vld [vmem:[%s0 + $0x238] sm:$0xff]
  %v90 = vld [vmem:[%s0 + $0x240] sm:$0xff]
  %v91 = vld [vmem:[%s0 + $0x248] sm:$0xff]
  %v92 = vld [vmem:[%s0 + $0x250] sm:$0xff]
  %v93 = vld [vmem:[%s0 + $0x258] sm:$0xff]
  %v94 = vld [vmem:[%s0 + $0x260] sm:$0xff]
  %v95 = vld [vmem:[%s0 + $0x268] sm:$0xff]
  %v96 = vld [vmem:[%s0 + $0x270] sm:$0xff]
  %v97 = vld [vmem:[%s0 + $0x278] sm:$0xff]
  %v98 = vld [vmem:[%s0 + $0x280] sm:$0xff]
  %v99 = vld [vmem:[%s0 + $0x288] sm:$0xff]
  %v100 = vld [vmem:[%s0 + $0x290] sm:$0xff]
  %v101 = vld [vmem:[%s0 + $0x298] sm:$0xff]
  %v102 = vld [vmem:[%s0 + $0x2a0] sm:$0xff]
  %v103 = vld [vmem:[%s0 + $0x2a8] sm:$0xff]
  %v104 = vld [vmem:[%s0 + $0x2b0] sm:$0xff]
  %v105 = vld [vmem:[%s0 + $0x2b8] sm:$0xff]
  %v106 = vld [vmem:[%s0 + $0x2c0] sm:$0xff]
  %v107 = vld [vmem:[%s0 + $0x2c8] sm:$0xff]
  %v108 = vld [vmem:[%s0 + $0x2d0] sm:$0xff]
  %v109 = vld [vmem:[%s0 + $0x2d8] sm:$0xff]
  %v110 = vld [vmem:[%s0 + $0x2e0] sm:$0xff]
  %v111 = vld [vmem:[%s0 + $0x2e8] sm:$0xff]
  %v112 = vld [vmem:[%s0 + $0x2f0] sm:$0xff]
  %v113 = vld [vmem:[%s0 + $0x2f8] sm:$0xff]
  %v114 = vld [vmem:[%s0 + $0x300] sm:$0xff]
  %v115 = vld [vmem:[%s0 + $0x308] sm:$0xff]
  %v116 = vld [vmem:[%s0 + $0x310] sm:$0xff]
  %v117 = vld [vmem:[%s0 + $0x318] sm:$0xff]
  %v118 = vld [vmem:[%s0 + $0x320] sm:$0xff]
  %v119 = vld [vmem:[%s0 + $0x328] sm:$0xff]
  %v120 = vld [vmem:[%s0 + $0x330] sm:$0xff]
  %v121 = vld [vmem:[%s0 + $0x338] sm:$0xff]
  %v122 = vld [vmem:[%s0 + $0x340] sm:$0xff]
  %v123 = vld [vmem:[%s0 + $0x348] sm:$0xff]
  %v124 = vld [vmem:[%s0 + $0x350] sm:$0xff]
  %v125 = vld [vmem:[%s0 + $0x358] sm:$0xff]
  %v126 = vld [vmem:[%s0 + $0x360] sm:$0xff]
  %v127 = vld [vmem:[%s0 + $0x368] sm:$0xff]
  %v128 = vld [vmem:[%s0 + $0x370] sm:$0xff]
  %v129 = vld [vmem:[%s0 + $0x378] sm:$0xff]
  %v130 = vld [vmem:[%s0 + $0x380] sm:$0xff]
  %v131 = vld [vmem:[%s0 + $0x388] sm:$0xff]
  %v132 = vld [vmem:[%s0 + $0x390] sm:$0xff]
  %v133 = vld [vmem:[%s0 + $0x398] sm:$0xff]
  %v134 = vld [vmem:[%s0 + $0x3a0] sm:$0xff]
  %v135 = vld [vmem:[%s0 + $0x3a8] sm:$0xff]
  %v136 = vld [vmem:[%s0 + $0x3b0] sm:$0xff]
  %v137 = vld [vmem:[%s0 + $0x3b8] sm:$0xff]
  %v138 = vld [vmem:[%s0 + $0x3c0] sm:$0xff]
  %v139 = vld [vmem:[%s0 + $0x3c8] sm:$0xff]
  %v140 = vld [vmem:[%s0 + $0x3d0] sm:$0xff]
  %v141 = vld [vmem:[%s0 + $0x3d8] sm:$0xff]
  %v142 = vld [vmem:[%s0 + $0x3e0] sm:$0xff]
  %v143 = vld [vmem:[%s0 + $0x3e8] sm:$0xff]
  %v144 = vld [vmem:[%s0 + $0x3f0] sm:$0xff]
  %v145 = vld [vmem:[%s0 + $0x3f8] sm:$0xff]
  %v146 = vld [vmem:[%s0 + $0x400] sm:$0xff]
  %v147 = vld [vmem:[%s0 + $0x408] sm:$0xff]
  %v148 = vld [vmem:[%s0 + $0x410] sm:$0xff]
  %v149 = vld [vmem:[%s0 + $0x418] sm:$0xff]
  %v150 = vld [vmem:[%s0 + $0x420] sm:$0xff]
  %v151 = vld [vmem:[%s0 + $0x428] sm:$0xff]
  %v152 = vld [vmem:[%s0 + $0x430] sm:$0xff]
  %v153 = vld [vmem:[%s0 + $0x438] sm:$0xff]
  %v154 = vld [vmem:[%s0 + $0x440] sm:$0xff]
  %v155 = vld [vmem:[%s0 + $0x448] sm:$0xff]
  %v156 = vld [vmem:[%s0 + $0x450] sm:$0xff]
  %v157 = vld [vmem:[%s0 + $0x458] sm:$0xff]
  %v158 = vld [vmem:[%s0 + $0x460] sm:$0xff]
  %v159 = vld [vmem:[%s0 + $0x468] sm:$0xff]
  %v160 = vld [vmem:[%s0 + $0x470] sm:$0xff]
  %v161 = vld [vmem:[%s0 + $0x478] sm:$0xff]
  %v162 = vld [vmem:[%s0 + $0x480] sm:$0xff]
  %v163 = vld [vmem:[%s0 + $0x488] sm:$0xff]
  %v164 = vld [vmem:[%s0 + $0x490] sm:$0xff]
  %v165 = vld [vmem:[%s0 + $0x498] sm:$0xff]
  %v166 = vld [vmem:[%s0 + $0x4a0] sm:$0xff]
  %v167 = vld [vmem:[%s0 + $0x4a8] sm:$0xff]
  %v168 = vld [vmem:[%s0 + $0x4b0] sm:$0xff]
  %v169 = vld [vmem:[%s0 + $0x4b8] sm:$0xff]
  %v170 = vld [vmem:[%s0 + $0x4c0] sm:$0xff]
  %v171 = vld [vmem:[%s0 + $0x4c8] sm:$0xff]
  %v172 = vld [vmem:[%s0 + $0x4d0] sm:$0xff]
  %v173 = vld [vmem:[%s0 + $0x4d8] sm:$0xff]
  %v174 = vld [vmem:[%s0 + $0x4e0] sm:$0xff]
  %v175 = vld [vmem:[%s0 + $0x4e8] sm:$0xff]
  %v176 = vld [vmem:[%s0 + $0x4f0] sm:$0xff]
  %v177 = vld [vmem:[%s0 + $0x4f8] sm:$0xff]
  %v178 = vld [vmem:[%s0 + $0x500] sm:$0xff]
  %v179 = vld [vmem:[%s0 + $0x508] sm:$0xff]
  %v180 = vld [vmem:[%s0 + $0x510] sm:$0xff]
  %v181 = vld [vmem:[%s0 + $0x518] sm:$0xff]
  %v182 = vld [vmem:[%s0 + $0x520] sm:$0xff]
  %v183 = vld [vmem:[%s0 + $0x528] sm:$0xff]
  %v184 = vld [vmem:[%s0 + $0x530] sm:$0xff]
  %v185 = vld [vmem:[%s0 + $0x538] sm:$0xff]
  %v186 = vld [vmem:[%s0 + $0x540] sm:$0xff]
  %v187 = vld [vmem:[%s0 + $0x548] sm:$0xff]
  %v188 = vld [vmem:[%s0 + $0x550] sm:$0xff]
  %v189 = vld [vmem:[%s0 + $0x558] sm:$0xff]
  %v190 = vld [vmem:[%s0 + $0x560] sm:$0xff]
  %v191 = vld [vmem:[%s0 + $0x568] sm:$0xff]
  %v192 = vld [vmem:[%s0 + $0x570] sm:$0xff]
  %v193 = vld [vmem:[%s0 + $0x578] sm:$0xff]
  %v194 = vld [vmem:[%s0 + $0x580] sm:$0xff]
  %v195 = vld [vmem:[%s0 + $0x588] sm:$0xff]
  %v196 = vld [vmem:[%s0 + $0x590] sm:$0xff]
  %v197 = vld [vmem:[%s0 + $0x598] sm:$0xff]
  %v198 = vld [vmem:[%s0 + $0x5a0] sm:$0xff]
  %v199 = vld [vmem:[%s0 + $0x5a8] sm:$0xff]
  %v200 = vld [vmem:[%s0 + $0x5b0] sm:$0xff]
  %v201 = vld [vmem:[%s0 + $0x5b8] sm:$0xff]
  %v202 = vld [vmem:[%s0 + $0x5c0] sm:$0xff]
  %v203 = vld [vmem:[%s0 + $0x5c8] sm:$0xff]
  %v204 = vld [vmem:[%s0 + $0x5d0] sm:$0xff]
  %v205 = vld [vmem:[%s0 + $0x5d8] sm:$0xff]
  %v206 = vld [vmem:[%s0 + $0x5e0] sm:$0xff]
  %v207 = vld [vmem:[%s0 + $0x5e8] sm:$0xff]
  %v208 = vld [vmem:[%s0 + $0x5f0] sm:$0xff]
  %v209 = vld [vmem:[%s0 + $0x5f8] sm:$0xff]
  %v210 = vld [vmem:[%s0 + $0x600] sm:$0xff]
  %v211 = vld [vmem:[%s0 + $0x608] sm:$0xff]
  %v212 = vld [vmem:[%s0 + $0x610] sm:$0xff]
  %v213 = vld [vmem:[%s0 + $0x618] sm:$0xff]
  %v214 = vld [vmem:[%s0 + $0x620] sm:$0xff]
  %v215 = vld [vmem:[%s0 + $0x628] sm:$0xff]
  %v216 = vld [vmem:[%s0 + $0x630] sm:$0xff]
  %v217 = vld [vmem:[%s0 + $0x638] sm:$0xff]
  %v218 = vld [vmem:[%s0 + $0x640] sm:$0xff]
  %v219 = vld [vmem:[%s0 + $0x648] sm:$0xff]
  %v220 = vld [vmem:[%s0 + $0x650] sm:$0xff]
  %v221 = vld [vmem:[%s0 + $0x658] sm:$0xff]
  %v222 = vld [vmem:[%s0 + $0x660] sm:$0xff]
  %v223 = vld [vmem:[%s0 + $0x668] sm:$0xff]
  %v224 = vld [vmem:[%s0 + $0x670] sm:$0xff]
  %v225 = vld [vmem:[%s0 + $0x678] sm:$0xff]
  %v226 = vld [vmem:[%s0 + $0x680] sm:$0xff]
  %v227 = vld [vmem:[%s0 + $0x688] sm:$0xff]
  %v228 = vld [vmem:[%s0 + $0x690] sm:$0xff]
  %v229 = vld [vmem:[%s0 + $0x698] sm:$0xff]
  %v230 = vld [vmem:[%s0 + $0x6a0] sm:$0xff]
  %v231 = vld [vmem:[%s0 + $0x6a8] sm:$0xff]
  %v232 = vld [vmem:[%s0 + $0x6b0] sm:$0xff]
  %v233 = vld [vmem:[%s0 + $0x6b8] sm:$0xff]
  %v234 = vld [vmem:[%s0 + $0x6c0] sm:$0xff]
  %v235 = vld [vmem:[%s0 + $0x6c8] sm:$0xff]
  %v236 = vld [vmem:[%s0 + $0x6d0] sm:$0xff]
  %v237 = vld [vmem:[%s0 + $0x6d8] sm:$0xff]
  %v238 = vld [vmem:[%s0 + $0x6e0] sm:$0xff]
  %v239 = vld [vmem:[%s0 + $0x6e8] sm:$0xff]
  %v240 = vld [vmem:[%s0 + $0x6f0] sm:$0xff]
  %v241 = vld [vmem:[%s0 + $0x6f8] sm:$0xff]
  %v242 = vld [vmem:[%s0 + $0x700] sm:$0xff]
  %v243 = vld [vmem:[%s0 + $0x708] sm:$0xff]
  %v244 = vld [vmem:[%s0 + $0x710] sm:$0xff]
  %v245 = vld [vmem:[%s0 + $0x718] sm:$0xff]
  %v246 = vld [vmem:[%s0 + $0x720] sm:$0xff]
  %v247 = vld [vmem:[%s0 + $0x728] sm:$0xff]
  %v248 = vld [vmem:[%s0 + $0x730] sm:$0xff]
  %v249 = vld [vmem:[%s0 + $0x738] sm:$0xff]
  %v250 = vld [vmem:[%s0 + $0x740] sm:$0xff]
  %v251 = vld [vmem:[%s0 + $0x748] sm:$0xff]
  %v252 = vld [vmem:[%s0 + $0x750] sm:$0xff]
  %v253 = vld [vmem:[%s0 + $0x758] sm:$0xff]
  %v254 = vld [vmem:[%s0 + $0x760] sm:$0xff]
  %v255 = vld [vmem:[%s0 + $0x768] sm:$0xff]
  %v256 = vld [vmem:[%s0 + $0x770] sm:$0xff]
  %v257 = vld [vmem:[%s0 + $0x778] sm:$0xff]
  %v258 = vld [vmem:[%s0 + $0x780] sm:$0xff]
  %v259 = vld [vmem:[%s0 + $0x788] sm:$0xff]
  %v260 = vld [vmem:[%s0 + $0x790] sm:$0xff]
  %v261 = vld [vmem:[%s0 + $0x798] sm:$0xff]
  %v262 = vld [vmem:[%s0 + $0x7a0] sm:$0xff]
  %v263 = vld [vmem:[%s0 + $0x7a8] sm:$0xff]
  %v264 = vld [vmem:[%s0 + $0x7b0] sm:$0xff]
  %v265 = vld [vmem:[%s0 + $0x7b8] sm:$0xff]
  %v266 = vld [vmem:[%s0 + $0x7c0] sm:$0xff]
  %v267 = vld [vmem:[%s0 + $0x7c8] sm:$0xff]
  %v268 = vld [vmem:[%s0 + $0x7d0] sm:$0xff]
  %v269 = vld [vmem:[%s0 + $0x7d8] sm:$0xff]
  %v270 = vld [vmem:[%s0 + $0x7e0] sm:$0xff]
  %v271 = vld [vmem:[%s0 + $0x7e8] sm:$0xff]
  %v272 = vld [vmem:[%s0 + $0x7f0] sm:$0xff]
  %v273 = vld [vmem:[%s0 + $0x7f8] sm:$0xff]
  %v274 = vld [vmem:[%s0 + $0x800] sm:$0xff]
  %v275 = vld [vmem:[%s0 + $0x808] sm:$0xff]
  %v276 = vld [vmem:[%s0 + $0x810] sm:$0xff]
  %v277 = vld [vmem:[%s0 + $0x818] sm:$0xff]
  %v278 = vld [vmem:[%s0 + $0x820] sm:$0xff]
  %v279 = vld [vmem:[%s0 + $0x828] sm:$0xff]
  %v280 = vld [vmem:[%s0 + $0x830] sm:$0xff]
  %v281 = vld [vmem:[%s0 + $0x838] sm:$0xff]
  %v282 = vld [vmem:[%s0 + $0x840] sm:$0xff]
  %v283 = vld [vmem:[%s0 + $0x848] sm:$0xff]
  %v284 = vld [vmem:[%s0 + $0x850] sm:$0xff]
  %v285 = vld [vmem:[%s0 + $0x858] sm:$0xff]
  %v286 = vld [vmem:[%s0 + $0x860] sm:$0xff]
  %v287 = vld [vmem:[%s0 + $0x868] sm:$0xff]
  %v288 = vld [vmem:[%s0 + $0x870] sm:$0xff]
  %v289 = vld [vmem:[%s0 + $0x878] sm:$0xff]
  %v290 = vld [vmem:[%s0 + $0x880] sm:$0xff]
  %v291 = vld [vmem:[%s0 + $0x888] sm:$0xff]
  %v292 = vld [vmem:[%s0 + $0x890] sm:$0xff]
  %v293 = vld [vmem:[%s0 + $0x898] sm:$0xff]
  %v294 = vld [vmem:[%s0 + $0x8a0] sm:$0xff]
  %v295 = vld [vmem:[%s0 + $0x8a8] sm:$0xff]
  %v296 = vld [vmem:[%s0 + $0x8b0] sm:$0xff]
  %v297 = vld [vmem:[%s0 + $0x8b8] sm:$0xff]
  %v298 = vld [vmem:[%s0 + $0x8c0] sm:$0xff]
  %v299 = vld [vmem:[%s0 + $0x8c8] sm:$0xff]
  %v300 = vld [vmem:[%s0 + $0x8d0] sm:$0xff]
  %v301 = vld [vmem:[%s0 + $0x8d8] sm:$0xff]
  %v302 = vld [vmem:[%s0 + $0x8e0] sm:$0xff]
  %v303 = vld [vmem:[%s0 + $0x8e8] sm:$0xff]
  %v304 = vld [vmem:[%s0 + $0x8f0] sm:$0xff]
  %v305 = vld [vmem:[%s0 + $0x8f8] sm:$0xff]
  %v306 = vld [vmem:[%s0 + $0x900] sm:$0xff]
  %v307 = vld [vmem:[%s0 + $0x908] sm:$0xff]
  %v308 = vld [vmem:[%s0 + $0x910] sm:$0xff]
  %v309 = vld [vmem:[%s0 + $0x918] sm:$0xff]
  %v310 = vld [vmem:[%s0 + $0x920] sm:$0xff]
  %v311 = vld [vmem:[%s0 + $0x928] sm:$0xff]
  %v312 = vld [vmem:[%s0 + $0x930] sm:$0xff]
  %v313 = vld [vmem:[%s0 + $0x938] sm:$0xff]
  %v314 = vld [vmem:[%s0 + $0x940] sm:$0xff]
  %v315 = vld [vmem:[%s0 + $0x948] sm:$0xff]
  %v316 = vld [vmem:[%s0 + $0x950] sm:$0xff]
  %v317 = vld [vmem:[%s0 + $0x958] sm:$0xff]
  %v318 = vld [vmem:[%s0 + $0x960] sm:$0xff]
  %v319 = vld [vmem:[%s0 + $0x968] sm:$0xff]
  %v320 = vld [vmem:[%s0 + $0x970] sm:$0xff]
  %v321 = vld [vmem:[%s0 + $0x978] sm:$0xff]
  %v322 = vld [vmem:[%s0 + $0x980] sm:$0xff]
  %v323 = vld [vmem:[%s0 + $0x988] sm:$0xff]
  %v324 = vld [vmem:[%s0 + $0x990] sm:$0xff]
  %v325 = vld [vmem:[%s0 + $0x998] sm:$0xff]
  %v326 = vld [vmem:[%s0 + $0x9a0] sm:$0xff]
  %v327 = vld [vmem:[%s0 + $0x9a8] sm:$0xff]
  %v328 = vld [vmem:[%s0 + $0x9b0] sm:$0xff]
  %v329 = vld [vmem:[%s0 + $0x9b8] sm:$0xff]
  %v330 = vld [vmem:[%s0 + $0x9c0] sm:$0xff]
  %v331 = vld [vmem:[%s0 + $0x9c8] sm:$0xff]
  %v332 = vld [vmem:[%s0 + $0x9d0] sm:$0xff]
  %v333 = vld [vmem:[%s0 + $0x9d8] sm:$0xff]
  %v334 = vld [vmem:[%s0 + $0x9e0] sm:$0xff]
  %v335 = vld [vmem:[%s0 + $0x9e8] sm:$0xff]
  %v336 = vld [vmem:[%s0 + $0x9f0] sm:$0xff]
  %v337 = vld [vmem:[%s0 + $0x9f8] sm:$0xff]
  %v338 = vld [vmem:[%s1] sm:$0xf]
  %v339 = vld [vmem:[%s1 + $0x4] sm:$0xf]
  %v340 = vld [vmem:[%s1 + $0x8] sm:$0xf]
  %v341 = vld [vmem:[%s1 + $0xc] sm:$0xf]
  %v342 = vld [vmem:[%s1 + $0x10] sm:$0xf]
  %v343 = vld [vmem:[%s1 + $0x14] sm:$0xf]
  %v344 = vld [vmem:[%s1 + $0x18] sm:$0xf]
  %v345 = vld [vmem:[%s1 + $0x1c] sm:$0xf]
  %v346 = vld [vmem:[%s1 + $0x20] sm:$0xf]
  %v347 = vld [vmem:[%s1 + $0x24] sm:$0xf]
  %v348 = vld [vmem:[%s1 + $0x28] sm:$0xf]
  %v349 = vld [vmem:[%s1 + $0x2c] sm:$0xf]
  %v350 = vld [vmem:[%s1 + $0x30] sm:$0xf]
  %v351 = vld [vmem:[%s1 + $0x34] sm:$0xf]
  %v352 = vld [vmem:[%s1 + $0x38] sm:$0xf]
  %v353 = vld [vmem:[%s1 + $0x3c] sm:$0xf]
  %v354 = vld [vmem:[%s1 + $0x40] sm:$0xf]
  %v355 = vld [vmem:[%s1 + $0x44] sm:$0xf]
  %v356 = vld [vmem:[%s1 + $0x48] sm:$0xf]
  %v357 = vld [vmem:[%s1 + $0x4c] sm:$0xf]
  %v358 = vld [vmem:[%s1 + $0x50] sm:$0xf]
  %v359 = vld [vmem:[%s1 + $0x54] sm:$0xf]
  %v360 = vld [vmem:[%s1 + $0x58] sm:$0xf]
  %v361 = vld [vmem:[%s1 + $0x5c] sm:$0xf]
  %v362 = vld [vmem:[%s1 + $0x60] sm:$0xf]
  %v363 = vld [vmem:[%s1 + $0x64] sm:$0xf]
  %v364 = vld [vmem:[%s1 + $0x68] sm:$0xf]
  %v365 = vld [vmem:[%s1 + $0x6c] sm:$0xf]
  %v366 = vld [vmem:[%s1 + $0x70] sm:$0xf]
  %v367 = vld [vmem:[%s1 + $0x74] sm:$0xf]
  %v368 = vld [vmem:[%s1 + $0x78] sm:$0xf]
  %v369 = vld [vmem:[%s1 + $0x7c] sm:$0xf]
  %v370 = vld [vmem:[%s1 + $0x80] sm:$0xf]
  %v371 = vld [vmem:[%s1 + $0x84] sm:$0xf]
  %v372 = vld [vmem:[%s1 + $0x88] sm:$0xf]
  %v373 = vld [vmem:[%s1 + $0x8c] sm:$0xf]
  %v374 = vld [vmem:[%s1 + $0x90] sm:$0xf]
  %v375 = vld [vmem:[%s1 + $0x94] sm:$0xf]
  %v376 = vld [vmem:[%s1 + $0x98] sm:$0xf]
  %v377 = vld [vmem:[%s1 + $0x9c] sm:$0xf]
  %v378 = vld [vmem:[%s1 + $0xa0] sm:$0xf]
  %v379 = vld [vmem:[%s1 + $0xa4] sm:$0xf]
  %v380 = vld [vmem:[%s1 + $0xa8] sm:$0xf]
  %v381 = vld [vmem:[%s1 + $0xac] sm:$0xf]
  %v382 = vld [vmem:[%s1 + $0xb0] sm:$0xf]
  %v383 = vld [vmem:[%s1 + $0xb4] sm:$0xf]
  %v384 = vld [vmem:[%s1 + $0xb8] sm:$0xf]
  %v385 = vld [vmem:[%s1 + $0xbc] sm:$0xf]
  %v386 = vld [vmem:[%s1 + $0xc0] sm:$0xf]
  %v387 = vld [vmem:[%s1 + $0xc4] sm:$0xf]
  %v388 = vld [vmem:[%s1 + $0xc8] sm:$0xf]
  %v389 = vld [vmem:[%s1 + $0xcc] sm:$0xf]
  %v390 = vld [vmem:[%s1 + $0xd0] sm:$0xf]
  %v391 = vld [vmem:[%s1 + $0xd4] sm:$0xf]
  %v392 = vld [vmem:[%s1 + $0xd8] sm:$0xf]
  %v393 = vld [vmem:[%s1 + $0xdc] sm:$0xf]
  %v394 = vld [vmem:[%s1 + $0xe0] sm:$0xf]
  %v395 = vld [vmem:[%s1 + $0xe4] sm:$0xf]
  %v396 = vld [vmem:[%s1 + $0xe8] sm:$0xf]
  %v397 = vld [vmem:[%s1 + $0xec] sm:$0xf]
  %v398 = vld [vmem:[%s1 + $0xf0] sm:$0xf]
  %v399 = vld [vmem:[%s1 + $0xf4] sm:$0xf]
  %v400 = vld [vmem:[%s1 + $0xf8] sm:$0xf]
  %v401 = vld [vmem:[%s1 + $0xfc] sm:$0xf]
  %v402 = vld [vmem:[%s1 + $0x100] sm:$0xf]
  %v403 = vld [vmem:[%s1 + $0x104] sm:$0xf]
  %v404 = vld [vmem:[%s1 + $0x108] sm:$0xf]
  %v405 = vld [vmem:[%s1 + $0x10c] sm:$0xf]
  %v406 = vld [vmem:[%s1 + $0x110] sm:$0xf]
  %v407 = vld [vmem:[%s1 + $0x114] sm:$0xf]
  %v408 = vld [vmem:[%s1 + $0x118] sm:$0xf]
  %v409 = vld [vmem:[%s1 + $0x11c] sm:$0xf]
  %v410 = vld [vmem:[%s1 + $0x120] sm:$0xf]
  %v411 = vld [vmem:[%s1 + $0x124] sm:$0xf]
  %v412 = vld [vmem:[%s1 + $0x128] sm:$0xf]
  %v413 = vld [vmem:[%s1 + $0x12c] sm:$0xf]
  %v414 = vld [vmem:[%s1 + $0x130] sm:$0xf]
  %v415 = vld [vmem:[%s1 + $0x134] sm:$0xf]
  %v416 = vld [vmem:[%s1 + $0x138] sm:$0xf]
  %v417 = vld [vmem:[%s1 + $0x13c] sm:$0xf]
  %v418 = vld [vmem:[%s1 + $0x140] sm:$0xf]
  %v419 = vld [vmem:[%s1 + $0x144] sm:$0xf]
  %v420 = vld [vmem:[%s1 + $0x148] sm:$0xf]
  %v421 = vld [vmem:[%s1 + $0x14c] sm:$0xf]
  %v422 = vld [vmem:[%s1 + $0x150] sm:$0xf]
  %v423 = vld [vmem:[%s1 + $0x154] sm:$0xf]
  %v424 = vld [vmem:[%s1 + $0x158] sm:$0xf]
  %v425 = vld [vmem:[%s1 + $0x15c] sm:$0xf]
  %v426 = vld [vmem:[%s1 + $0x160] sm:$0xf]
  %v427 = vld [vmem:[%s1 + $0x164] sm:$0xf]
  %v428 = vld [vmem:[%s1 + $0x168] sm:$0xf]
  %v429 = vld [vmem:[%s1 + $0x16c] sm:$0xf]
  %v430 = vld [vmem:[%s1 + $0x170] sm:$0xf]
  %v431 = vld [vmem:[%s1 + $0x174] sm:$0xf]
  %v432 = vld [vmem:[%s1 + $0x178] sm:$0xf]
  %v433 = vld [vmem:[%s1 + $0x17c] sm:$0xf]
  %v434 = vld [vmem:[%s1 + $0x180] sm:$0xf]
  %v435 = vld [vmem:[%s1 + $0x184] sm:$0xf]
  %v436 = vld [vmem:[%s1 + $0x188] sm:$0xf]
  %v437 = vld [vmem:[%s1 + $0x18c] sm:$0xf]
  %v438 = vld [vmem:[%s1 + $0x190] sm:$0xf]
  %v439 = vld [vmem:[%s1 + $0x194] sm:$0xf]
  %v440 = vld [vmem:[%s1 + $0x198] sm:$0xf]
  %v441 = vld [vmem:[%s1 + $0x19c] sm:$0xf]
  %v442 = vld [vmem:[%s1 + $0x1a0] sm:$0xf]
  %v443 = vld [vmem:[%s1 + $0x1a4] sm:$0xf]
  %v444 = vld [vmem:[%s1 + $0x1a8] sm:$0xf]
  %v445 = vld [vmem:[%s1 + $0x1ac] sm:$0xf]
  %v446 = vld [vmem:[%s1 + $0x1b0] sm:$0xf]
  %v447 = vld [vmem:[%s1 + $0x1b4] sm:$0xf]
  %v448 = vld [vmem:[%s1 + $0x1b8] sm:$0xf]
  %v449 = vld [vmem:[%s1 + $0x1bc] sm:$0xf]
  %v450 = vld [vmem:[%s1 + $0x1c0] sm:$0xf]
  %v451 = vld [vmem:[%s1 + $0x1c4] sm:$0xf]
  %v452 = vld [vmem:[%s1 + $0x1c8] sm:$0xf]
  %v453 = vld [vmem:[%s1 + $0x1cc] sm:$0xf]
  %v454 = vld [vmem:[%s1 + $0x1d0] sm:$0xf]
  %v455 = vld [vmem:[%s1 + $0x1d4] sm:$0xf]
  %v456 = vld [vmem:[%s1 + $0x1d8] sm:$0xf]
  %v457 = vld [vmem:[%s1 + $0x1dc] sm:$0xf]
  %v458 = vld [vmem:[%s1 + $0x1e0] sm:$0xf]
  %v459 = vld [vmem:[%s1 + $0x1e4] sm:$0xf]
  %v460 = vld [vmem:[%s1 + $0x1e8] sm:$0xf]
  %v461 = vld [vmem:[%s1 + $0x1ec] sm:$0xf]
  %v462 = vld [vmem:[%s1 + $0x1f0] sm:$0xf]
  %v463 = vld [vmem:[%s1 + $0x1f4] sm:$0xf]
  %v464 = vld [vmem:[%s1 + $0x1f8] sm:$0xf]
  %v465 = vld [vmem:[%s1 + $0x1fc] sm:$0xf]
  %v466 = vld [vmem:[%s1 + $0x200] sm:$0xf]
  %v467 = vld [vmem:[%s1 + $0x204] sm:$0xf]
  %v468 = vld [vmem:[%s1 + $0x208] sm:$0xf]
  %v469 = vld [vmem:[%s1 + $0x20c] sm:$0xf]
  %v470 = vld [vmem:[%s1 + $0x210] sm:$0xf]
  %v471 = vld [vmem:[%s1 + $0x214] sm:$0xf]
  %v472 = vld [vmem:[%s1 + $0x218] sm:$0xf]
  %v473 = vld [vmem:[%s1 + $0x21c] sm:$0xf]
  %v474 = vld [vmem:[%s1 + $0x220] sm:$0xf]
  %v475 = vld [vmem:[%s1 + $0x224] sm:$0xf]
  %v476 = vld [vmem:[%s1 + $0x228] sm:$0xf]
  %v477 = vld [vmem:[%s1 + $0x22c] sm:$0xf]
  %v478 = vld [vmem:[%s1 + $0x230] sm:$0xf]
  %v479 = vld [vmem:[%s1 + $0x234] sm:$0xf]
  %v480 = vld [vmem:[%s1 + $0x238] sm:$0xf]
  %v481 = vld [vmem:[%s1 + $0x23c] sm:$0xf]
  %v482 = vld [vmem:[%s1 + $0x240] sm:$0xf]
  %v483 = vld [vmem:[%s1 + $0x244] sm:$0xf]
  %v484 = vld [vmem:[%s1 + $0x248] sm:$0xf]
  %v485 = vld [vmem:[%s1 + $0x24c] sm:$0xf]
  %v486 = vld [vmem:[%s1 + $0x250] sm:$0xf]
  %v487 = vld [vmem:[%s1 + $0x254] sm:$0xf]
  %v808 = vunpack.c.l.b16 %v18
  %v809 = vunpack.c.h.b16 %v18
  %v810 = vunpack.c.l.b16 %v19
  %v811 = vunpack.c.h.b16 %v19
  %v812 = vunpack.c.l.b16 %v20
  %v813 = vunpack.c.h.b16 %v20
  %v814 = vunpack.c.l.b16 %v21
  %v815 = vunpack.c.h.b16 %v21
  %v816 = vunpack.c.l.b16 %v22
  %v817 = vunpack.c.h.b16 %v22
  %v818 = vunpack.c.l.b16 %v23
  %v819 = vunpack.c.h.b16 %v23
  %v820 = vunpack.c.l.b16 %v24
  %v821 = vunpack.c.h.b16 %v24
  %v822 = vunpack.c.l.b16 %v25
  %v823 = vunpack.c.h.b16 %v25
  %v824 = vunpack.c.l.b16 %v26
  %v825 = vunpack.c.h.b16 %v26
  %v826 = vunpack.c.l.b16 %v27
  %v827 = vunpack.c.h.b16 %v27
  %v828 = vunpack.c.l.b16 %v28
  %v829 = vunpack.c.h.b16 %v28
  %v830 = vunpack.c.l.b16 %v29
  %v831 = vunpack.c.h.b16 %v29
  %v832 = vunpack.c.l.b16 %v30
  %v833 = vunpack.c.h.b16 %v30
  %v834 = vunpack.c.l.b16 %v31
  %v835 = vunpack.c.h.b16 %v31
  %v836 = vunpack.c.l.b16 %v32
  %v837 = vunpack.c.h.b16 %v32
  %v838 = vunpack.c.l.b16 %v33
  %v839 = vunpack.c.h.b16 %v33
  %v840 = vunpack.c.l.b16 %v34
  %v841 = vunpack.c.h.b16 %v34
  %v842 = vunpack.c.l.b16 %v35
  %v843 = vunpack.c.h.b16 %v35
  %v844 = vunpack.c.l.b16 %v36
  %v845 = vunpack.c.h.b16 %v36
  %v846 = vunpack.c.l.b16 %v37
  %v847 = vunpack.c.h.b16 %v37
  %v848 = vunpack.c.l.b16 %v38
  %v849 = vunpack.c.h.b16 %v38
  %v850 = vunpack.c.l.b16 %v39
  %v851 = vunpack.c.h.b16 %v39
  %v852 = vunpack.c.l.b16 %v40
  %v853 = vunpack.c.h.b16 %v40
  %v854 = vunpack.c.l.b16 %v41
  %v855 = vunpack.c.h.b16 %v41
  %v856 = vunpack.c.l.b16 %v42
  %v857 = vunpack.c.h.b16 %v42
  %v858 = vunpack.c.l.b16 %v43
  %v859 = vunpack.c.h.b16 %v43
  %v860 = vunpack.c.l.b16 %v44
  %v861 = vunpack.c.h.b16 %v44
  %v862 = vunpack.c.l.b16 %v45
  %v863 = vunpack.c.h.b16 %v45
  %v864 = vunpack.c.l.b16 %v46
  %v865 = vunpack.c.h.b16 %v46
  %v866 = vunpack.c.l.b16 %v47
  %v867 = vunpack.c.h.b16 %v47
  %v868 = vunpack.c.l.b16 %v48
  %v869 = vunpack.c.h.b16 %v48
  %v870 = vunpack.c.l.b16 %v49
  %v871 = vunpack.c.h.b16 %v49
  %v872 = vunpack.c.l.b16 %v50
  %v873 = vunpack.c.h.b16 %v50
  %v874 = vunpack.c.l.b16 %v51
  %v875 = vunpack.c.h.b16 %v51
  %v876 = vunpack.c.l.b16 %v52
  %v877 = vunpack.c.h.b16 %v52
  %v878 = vunpack.c.l.b16 %v53
  %v879 = vunpack.c.h.b16 %v53
  %v880 = vunpack.c.l.b16 %v54
  %v881 = vunpack.c.h.b16 %v54
  %v882 = vunpack.c.l.b16 %v55
  %v883 = vunpack.c.h.b16 %v55
  %v884 = vunpack.c.l.b16 %v56
  %v885 = vunpack.c.h.b16 %v56
  %v886 = vunpack.c.l.b16 %v57
  %v887 = vunpack.c.h.b16 %v57
  %v888 = vunpack.c.l.b16 %v58
  %v889 = vunpack.c.h.b16 %v58
  %v890 = vunpack.c.l.b16 %v59
  %v891 = vunpack.c.h.b16 %v59
  %v892 = vunpack.c.l.b16 %v60
  %v893 = vunpack.c.h.b16 %v60
  %v894 = vunpack.c.l.b16 %v61
  %v895 = vunpack.c.h.b16 %v61
  %v896 = vunpack.c.l.b16 %v62
  %v897 = vunpack.c.h.b16 %v62
  %v898 = vunpack.c.l.b16 %v63
  %v899 = vunpack.c.h.b16 %v63
  %v900 = vunpack.c.l.b16 %v64
  %v901 = vunpack.c.h.b16 %v64
  %v902 = vunpack.c.l.b16 %v65
  %v903 = vunpack.c.h.b16 %v65
  %v904 = vunpack.c.l.b16 %v66
  %v905 = vunpack.c.h.b16 %v66
  %v906 = vunpack.c.l.b16 %v67
  %v907 = vunpack.c.h.b16 %v67
  %v908 = vunpack.c.l.b16 %v68
  %v909 = vunpack.c.h.b16 %v68
  %v910 = vunpack.c.l.b16 %v69
  %v911 = vunpack.c.h.b16 %v69
  %v912 = vunpack.c.l.b16 %v70
  %v913 = vunpack.c.h.b16 %v70
  %v914 = vunpack.c.l.b16 %v71
  %v915 = vunpack.c.h.b16 %v71
  %v916 = vunpack.c.l.b16 %v72
  %v917 = vunpack.c.h.b16 %v72
  %v918 = vunpack.c.l.b16 %v73
  %v919 = vunpack.c.h.b16 %v73
  %v920 = vunpack.c.l.b16 %v74
  %v921 = vunpack.c.h.b16 %v74
  %v922 = vunpack.c.l.b16 %v75
  %v923 = vunpack.c.h.b16 %v75
  %v924 = vunpack.c.l.b16 %v76
  %v925 = vunpack.c.h.b16 %v76
  %v926 = vunpack.c.l.b16 %v77
  %v927 = vunpack.c.h.b16 %v77
  %v928 = vunpack.c.l.b16 %v78
  %v929 = vunpack.c.h.b16 %v78
  %v930 = vunpack.c.l.b16 %v79
  %v931 = vunpack.c.h.b16 %v79
  %v932 = vunpack.c.l.b16 %v80
  %v933 = vunpack.c.h.b16 %v80
  %v934 = vunpack.c.l.b16 %v81
  %v935 = vunpack.c.h.b16 %v81
  %v936 = vunpack.c.l.b16 %v82
  %v937 = vunpack.c.h.b16 %v82
  %v938 = vunpack.c.l.b16 %v83
  %v939 = vunpack.c.h.b16 %v83
  %v940 = vunpack.c.l.b16 %v84
  %v941 = vunpack.c.h.b16 %v84
  %v942 = vunpack.c.l.b16 %v85
  %v943 = vunpack.c.h.b16 %v85
  %v944 = vunpack.c.l.b16 %v86
  %v945 = vunpack.c.h.b16 %v86
  %v946 = vunpack.c.l.b16 %v87
  %v947 = vunpack.c.h.b16 %v87
  %v948 = vunpack.c.l.b16 %v88
  %v949 = vunpack.c.h.b16 %v88
  %v950 = vunpack.c.l.b16 %v89
  %v951 = vunpack.c.h.b16 %v89
  %v952 = vunpack.c.l.b16 %v90
  %v953 = vunpack.c.h.b16 %v90
  %v954 = vunpack.c.l.b16 %v91
  %v955 = vunpack.c.h.b16 %v91
  %v956 = vunpack.c.l.b16 %v92
  %v957 = vunpack.c.h.b16 %v92
  %v958 = vunpack.c.l.b16 %v93
  %v959 = vunpack.c.h.b16 %v93
  %v960 = vunpack.c.l.b16 %v94
  %v961 = vunpack.c.h.b16 %v94
  %v962 = vunpack.c.l.b16 %v95
  %v963 = vunpack.c.h.b16 %v95
  %v964 = vunpack.c.l.b16 %v96
  %v965 = vunpack.c.h.b16 %v96
  %v966 = vunpack.c.l.b16 %v97
  %v967 = vunpack.c.h.b16 %v97
  %v968 = vunpack.c.l.b16 %v98
  %v969 = vunpack.c.h.b16 %v98
  %v970 = vunpack.c.l.b16 %v99
  %v971 = vunpack.c.h.b16 %v99
  %v972 = vunpack.c.l.b16 %v100
  %v973 = vunpack.c.h.b16 %v100
  %v974 = vunpack.c.l.b16 %v101
  %v975 = vunpack.c.h.b16 %v101
  %v976 = vunpack.c.l.b16 %v102
  %v977 = vunpack.c.h.b16 %v102
  %v978 = vunpack.c.l.b16 %v103
  %v979 = vunpack.c.h.b16 %v103
  %v980 = vunpack.c.l.b16 %v104
  %v981 = vunpack.c.h.b16 %v104
  %v982 = vunpack.c.l.b16 %v105
  %v983 = vunpack.c.h.b16 %v105
  %v984 = vunpack.c.l.b16 %v106
  %v985 = vunpack.c.h.b16 %v106
  %v986 = vunpack.c.l.b16 %v107
  %v987 = vunpack.c.h.b16 %v107
  %v988 = vunpack.c.l.b16 %v108
  %v989 = vunpack.c.h.b16 %v108
  %v990 = vunpack.c.l.b16 %v109
  %v991 = vunpack.c.h.b16 %v109
  %v992 = vunpack.c.l.b16 %v110
  %v993 = vunpack.c.h.b16 %v110
  %v994 = vunpack.c.l.b16 %v111
  %v995 = vunpack.c.h.b16 %v111
  %v996 = vunpack.c.l.b16 %v112
  %v997 = vunpack.c.h.b16 %v112
  %v998 = vunpack.c.l.b16 %v113
  %v999 = vunpack.c.h.b16 %v113
  %v1000 = vunpack.c.l.b16 %v114
  %v1001 = vunpack.c.h.b16 %v114
  %v1002 = vunpack.c.l.b16 %v115
  %v1003 = vunpack.c.h.b16 %v115
  %v1004 = vunpack.c.l.b16 %v116
  %v1005 = vunpack.c.h.b16 %v116
  %v1006 = vunpack.c.l.b16 %v117
  %v1007 = vunpack.c.h.b16 %v117
  %v1008 = vunpack.c.l.b16 %v118
  %v1009 = vunpack.c.h.b16 %v118
  %v1010 = vunpack.c.l.b16 %v119
  %v1011 = vunpack.c.h.b16 %v119
  %v1012 = vunpack.c.l.b16 %v120
  %v1013 = vunpack.c.h.b16 %v120
  %v1014 = vunpack.c.l.b16 %v121
  %v1015 = vunpack.c.h.b16 %v121
  %v1016 = vunpack.c.l.b16 %v122
  %v1017 = vunpack.c.h.b16 %v122
  %v1018 = vunpack.c.l.b16 %v123
  %v1019 = vunpack.c.h.b16 %v123
  %v1020 = vunpack.c.l.b16 %v124
  %v1021 = vunpack.c.h.b16 %v124
  %v1022 = vunpack.c.l.b16 %v125
  %v1023 = vunpack.c.h.b16 %v125
  %v1024 = vunpack.c.l.b16 %v126
  %v1025 = vunpack.c.h.b16 %v126
  %v1026 = vunpack.c.l.b16 %v127
  %v1027 = vunpack.c.h.b16 %v127
  %v1028 = vunpack.c.l.b16 %v128
  %v1029 = vunpack.c.h.b16 %v128
  %v1030 = vunpack.c.l.b16 %v129
  %v1031 = vunpack.c.h.b16 %v129
  %v1032 = vunpack.c.l.b16 %v130
  %v1033 = vunpack.c.h.b16 %v130
  %v1034 = vunpack.c.l.b16 %v131
  %v1035 = vunpack.c.h.b16 %v131
  %v1036 = vunpack.c.l.b16 %v132
  %v1037 = vunpack.c.h.b16 %v132
  %v1038 = vunpack.c.l.b16 %v133
  %v1039 = vunpack.c.h.b16 %v133
  %v1040 = vunpack.c.l.b16 %v134
  %v1041 = vunpack.c.h.b16 %v134
  %v1042 = vunpack.c.l.b16 %v135
  %v1043 = vunpack.c.h.b16 %v135
  %v1044 = vunpack.c.l.b16 %v136
  %v1045 = vunpack.c.h.b16 %v136
  %v1046 = vunpack.c.l.b16 %v137
  %v1047 = vunpack.c.h.b16 %v137
  %v1048 = vunpack.c.l.b16 %v138
  %v1049 = vunpack.c.h.b16 %v138
  %v1050 = vunpack.c.l.b16 %v139
  %v1051 = vunpack.c.h.b16 %v139
  %v1052 = vunpack.c.l.b16 %v140
  %v1053 = vunpack.c.h.b16 %v140
  %v1054 = vunpack.c.l.b16 %v141
  %v1055 = vunpack.c.h.b16 %v141
  %v1056 = vunpack.c.l.b16 %v142
  %v1057 = vunpack.c.h.b16 %v142
  %v1058 = vunpack.c.l.b16 %v143
  %v1059 = vunpack.c.h.b16 %v143
  %v1060 = vunpack.c.l.b16 %v144
  %v1061 = vunpack.c.h.b16 %v144
  %v1062 = vunpack.c.l.b16 %v145
  %v1063 = vunpack.c.h.b16 %v145
  %v1064 = vunpack.c.l.b16 %v146
  %v1065 = vunpack.c.h.b16 %v146
  %v1066 = vunpack.c.l.b16 %v147
  %v1067 = vunpack.c.h.b16 %v147
  %v1068 = vunpack.c.l.b16 %v148
  %v1069 = vunpack.c.h.b16 %v148
  %v1070 = vunpack.c.l.b16 %v149
  %v1071 = vunpack.c.h.b16 %v149
  %v1072 = vunpack.c.l.b16 %v150
  %v1073 = vunpack.c.h.b16 %v150
  %v1074 = vunpack.c.l.b16 %v151
  %v1075 = vunpack.c.h.b16 %v151
  %v1076 = vunpack.c.l.b16 %v152
  %v1077 = vunpack.c.h.b16 %v152
  %v1078 = vunpack.c.l.b16 %v153
  %v1079 = vunpack.c.h.b16 %v153
  %v1080 = vunpack.c.l.b16 %v154
  %v1081 = vunpack.c.h.b16 %v154
  %v1082 = vunpack.c.l.b16 %v155
  %v1083 = vunpack.c.h.b16 %v155
  %v1084 = vunpack.c.l.b16 %v156
  %v1085 = vunpack.c.h.b16 %v156
  %v1086 = vunpack.c.l.b16 %v157
  %v1087 = vunpack.c.h.b16 %v157
  %v1088 = vunpack.c.l.b16 %v158
  %v1089 = vunpack.c.h.b16 %v158
  %v1090 = vunpack.c.l.b16 %v159
  %v1091 = vunpack.c.h.b16 %v159
  %v1092 = vunpack.c.l.b16 %v160
  %v1093 = vunpack.c.h.b16 %v160
  %v1094 = vunpack.c.l.b16 %v161
  %v1095 = vunpack.c.h.b16 %v161
  %v1096 = vunpack.c.l.b16 %v162
  %v1097 = vunpack.c.h.b16 %v162
  %v1098 = vunpack.c.l.b16 %v163
  %v1099 = vunpack.c.h.b16 %v163
  %v1100 = vunpack.c.l.b16 %v164
  %v1101 = vunpack.c.h.b16 %v164
  %v1102 = vunpack.c.l.b16 %v165
  %v1103 = vunpack.c.h.b16 %v165
  %v1104 = vunpack.c.l.b16 %v166
  %v1105 = vunpack.c.h.b16 %v166
  %v1106 = vunpack.c.l.b16 %v167
  %v1107 = vunpack.c.h.b16 %v167
  %v1108 = vunpack.c.l.b16 %v168
  %v1109 = vunpack.c.h.b16 %v168
  %v1110 = vunpack.c.l.b16 %v169
  %v1111 = vunpack.c.h.b16 %v169
  %v1112 = vunpack.c.l.b16 %v170
  %v1113 = vunpack.c.h.b16 %v170
  %v1114 = vunpack.c.l.b16 %v171
  %v1115 = vunpack.c.h.b16 %v171
  %v1116 = vunpack.c.l.b16 %v172
  %v1117 = vunpack.c.h.b16 %v172
  %v1118 = vunpack.c.l.b16 %v173
  %v1119 = vunpack.c.h.b16 %v173
  %v1120 = vunpack.c.l.b16 %v174
  %v1121 = vunpack.c.h.b16 %v174
  %v1122 = vunpack.c.l.b16 %v175
  %v1123 = vunpack.c.h.b16 %v175
  %v1124 = vunpack.c.l.b16 %v176
  %v1125 = vunpack.c.h.b16 %v176
  %v1126 = vunpack.c.l.b16 %v177
  %v1127 = vunpack.c.h.b16 %v177
  %v1128 = vunpack.c.l.b16 %v178
  %v1129 = vunpack.c.h.b16 %v178
  %v1130 = vunpack.c.l.b16 %v179
  %v1131 = vunpack.c.h.b16 %v179
  %v1132 = vunpack.c.l.b16 %v180
  %v1133 = vunpack.c.h.b16 %v180
  %v1134 = vunpack.c.l.b16 %v181
  %v1135 = vunpack.c.h.b16 %v181
  %v1136 = vunpack.c.l.b16 %v182
  %v1137 = vunpack.c.h.b16 %v182
  %v1138 = vunpack.c.l.b16 %v183
  %v1139 = vunpack.c.h.b16 %v183
  %v1140 = vunpack.c.l.b16 %v184
  %v1141 = vunpack.c.h.b16 %v184
  %v1142 = vunpack.c.l.b16 %v185
  %v1143 = vunpack.c.h.b16 %v185
  %v1144 = vunpack.c.l.b16 %v186
  %v1145 = vunpack.c.h.b16 %v186
  %v1146 = vunpack.c.l.b16 %v187
  %v1147 = vunpack.c.h.b16 %v187
  %v1148 = vunpack.c.l.b16 %v188
  %v1149 = vunpack.c.h.b16 %v188
  %v1150 = vunpack.c.l.b16 %v189
  %v1151 = vunpack.c.h.b16 %v189
  %v1152 = vunpack.c.l.b16 %v190
  %v1153 = vunpack.c.h.b16 %v190
  %v1154 = vunpack.c.l.b16 %v191
  %v1155 = vunpack.c.h.b16 %v191
  %v1156 = vunpack.c.l.b16 %v192
  %v1157 = vunpack.c.h.b16 %v192
  %v1158 = vunpack.c.l.b16 %v193
  %v1159 = vunpack.c.h.b16 %v193
  %v1160 = vunpack.c.l.b16 %v194
  %v1161 = vunpack.c.h.b16 %v194
  %v1162 = vunpack.c.l.b16 %v195
  %v1163 = vunpack.c.h.b16 %v195
  %v1164 = vunpack.c.l.b16 %v196
  %v1165 = vunpack.c.h.b16 %v196
  %v1166 = vunpack.c.l.b16 %v197
  %v1167 = vunpack.c.h.b16 %v197
  %v1168 = vunpack.c.l.b16 %v198
  %v1169 = vunpack.c.h.b16 %v198
  %v1170 = vunpack.c.l.b16 %v199
  %v1171 = vunpack.c.h.b16 %v199
  %v1172 = vunpack.c.l.b16 %v200
  %v1173 = vunpack.c.h.b16 %v200
  %v1174 = vunpack.c.l.b16 %v201
  %v1175 = vunpack.c.h.b16 %v201
  %v1176 = vunpack.c.l.b16 %v202
  %v1177 = vunpack.c.h.b16 %v202
  %v1178 = vunpack.c.l.b16 %v203
  %v1179 = vunpack.c.h.b16 %v203
  %v1180 = vunpack.c.l.b16 %v204
  %v1181 = vunpack.c.h.b16 %v204
  %v1182 = vunpack.c.l.b16 %v205
  %v1183 = vunpack.c.h.b16 %v205
  %v1184 = vunpack.c.l.b16 %v206
  %v1185 = vunpack.c.h.b16 %v206
  %v1186 = vunpack.c.l.b16 %v207
  %v1187 = vunpack.c.h.b16 %v207
  %v1188 = vunpack.c.l.b16 %v208
  %v1189 = vunpack.c.h.b16 %v208
  %v1190 = vunpack.c.l.b16 %v209
  %v1191 = vunpack.c.h.b16 %v209
  %v1192 = vunpack.c.l.b16 %v210
  %v1193 = vunpack.c.h.b16 %v210
  %v1194 = vunpack.c.l.b16 %v211
  %v1195 = vunpack.c.h.b16 %v211
  %v1196 = vunpack.c.l.b16 %v212
  %v1197 = vunpack.c.h.b16 %v212
  %v1198 = vunpack.c.l.b16 %v213
  %v1199 = vunpack.c.h.b16 %v213
  %v1200 = vunpack.c.l.b16 %v214
  %v1201 = vunpack.c.h.b16 %v214
  %v1202 = vunpack.c.l.b16 %v215
  %v1203 = vunpack.c.h.b16 %v215
  %v1204 = vunpack.c.l.b16 %v216
  %v1205 = vunpack.c.h.b16 %v216
  %v1206 = vunpack.c.l.b16 %v217
  %v1207 = vunpack.c.h.b16 %v217
  %v1208 = vunpack.c.l.b16 %v218
  %v1209 = vunpack.c.h.b16 %v218
  %v1210 = vunpack.c.l.b16 %v219
  %v1211 = vunpack.c.h.b16 %v219
  %v1212 = vunpack.c.l.b16 %v220
  %v1213 = vunpack.c.h.b16 %v220
  %v1214 = vunpack.c.l.b16 %v221
  %v1215 = vunpack.c.h.b16 %v221
  %v1216 = vunpack.c.l.b16 %v222
  %v1217 = vunpack.c.h.b16 %v222
  %v1218 = vunpack.c.l.b16 %v223
  %v1219 = vunpack.c.h.b16 %v223
  %v1220 = vunpack.c.l.b16 %v224
  %v1221 = vunpack.c.h.b16 %v224
  %v1222 = vunpack.c.l.b16 %v225
  %v1223 = vunpack.c.h.b16 %v225
  %v1224 = vunpack.c.l.b16 %v226
  %v1225 = vunpack.c.h.b16 %v226
  %v1226 = vunpack.c.l.b16 %v227
  %v1227 = vunpack.c.h.b16 %v227
  %v1228 = vunpack.c.l.b16 %v228
  %v1229 = vunpack.c.h.b16 %v228
  %v1230 = vunpack.c.l.b16 %v229
  %v1231 = vunpack.c.h.b16 %v229
  %v1232 = vunpack.c.l.b16 %v230
  %v1233 = vunpack.c.h.b16 %v230
  %v1234 = vunpack.c.l.b16 %v231
  %v1235 = vunpack.c.h.b16 %v231
  %v1236 = vunpack.c.l.b16 %v232
  %v1237 = vunpack.c.h.b16 %v232
  %v1238 = vunpack.c.l.b16 %v233
  %v1239 = vunpack.c.h.b16 %v233
  %v1240 = vunpack.c.l.b16 %v234
  %v1241 = vunpack.c.h.b16 %v234
  %v1242 = vunpack.c.l.b16 %v235
  %v1243 = vunpack.c.h.b16 %v235
  %v1244 = vunpack.c.l.b16 %v236
  %v1245 = vunpack.c.h.b16 %v236
  %v1246 = vunpack.c.l.b16 %v237
  %v1247 = vunpack.c.h.b16 %v237
  %v1248 = vunpack.c.l.b16 %v238
  %v1249 = vunpack.c.h.b16 %v238
  %v1250 = vunpack.c.l.b16 %v239
  %v1251 = vunpack.c.h.b16 %v239
  %v1252 = vunpack.c.l.b16 %v240
  %v1253 = vunpack.c.h.b16 %v240
  %v1254 = vunpack.c.l.b16 %v241
  %v1255 = vunpack.c.h.b16 %v241
  %v1256 = vunpack.c.l.b16 %v242
  %v1257 = vunpack.c.h.b16 %v242
  %v1258 = vunpack.c.l.b16 %v243
  %v1259 = vunpack.c.h.b16 %v243
  %v1260 = vunpack.c.l.b16 %v244
  %v1261 = vunpack.c.h.b16 %v244
  %v1262 = vunpack.c.l.b16 %v245
  %v1263 = vunpack.c.h.b16 %v245
  %v1264 = vunpack.c.l.b16 %v246
  %v1265 = vunpack.c.h.b16 %v246
  %v1266 = vunpack.c.l.b16 %v247
  %v1267 = vunpack.c.h.b16 %v247
  %v1268 = vunpack.c.l.b16 %v248
  %v1269 = vunpack.c.h.b16 %v248
  %v1270 = vunpack.c.l.b16 %v249
  %v1271 = vunpack.c.h.b16 %v249
  %v1272 = vunpack.c.l.b16 %v250
  %v1273 = vunpack.c.h.b16 %v250
  %v1274 = vunpack.c.l.b16 %v251
  %v1275 = vunpack.c.h.b16 %v251
  %v1276 = vunpack.c.l.b16 %v252
  %v1277 = vunpack.c.h.b16 %v252
  %v1278 = vunpack.c.l.b16 %v253
  %v1279 = vunpack.c.h.b16 %v253
  %v1280 = vunpack.c.l.b16 %v254
  %v1281 = vunpack.c.h.b16 %v254
  %v1282 = vunpack.c.l.b16 %v255
  %v1283 = vunpack.c.h.b16 %v255
  %v1284 = vunpack.c.l.b16 %v256
  %v1285 = vunpack.c.h.b16 %v256
  %v1286 = vunpack.c.l.b16 %v257
  %v1287 = vunpack.c.h.b16 %v257
  %v1288 = vunpack.c.l.b16 %v258
  %v1289 = vunpack.c.h.b16 %v258
  %v1290 = vunpack.c.l.b16 %v259
  %v1291 = vunpack.c.h.b16 %v259
  %v1292 = vunpack.c.l.b16 %v260
  %v1293 = vunpack.c.h.b16 %v260
  %v1294 = vunpack.c.l.b16 %v261
  %v1295 = vunpack.c.h.b16 %v261
  %v1296 = vunpack.c.l.b16 %v262
  %v1297 = vunpack.c.h.b16 %v262
  %v1298 = vunpack.c.l.b16 %v263
  %v1299 = vunpack.c.h.b16 %v263
  %v1300 = vunpack.c.l.b16 %v264
  %v1301 = vunpack.c.h.b16 %v264
  %v1302 = vunpack.c.l.b16 %v265
  %v1303 = vunpack.c.h.b16 %v265
  %v1304 = vunpack.c.l.b16 %v266
  %v1305 = vunpack.c.h.b16 %v266
  %v1306 = vunpack.c.l.b16 %v267
  %v1307 = vunpack.c.h.b16 %v267
  %v1308 = vunpack.c.l.b16 %v268
  %v1309 = vunpack.c.h.b16 %v268
  %v1310 = vunpack.c.l.b16 %v269
  %v1311 = vunpack.c.h.b16 %v269
  %v1312 = vunpack.c.l.b16 %v270
  %v1313 = vunpack.c.h.b16 %v270
  %v1314 = vunpack.c.l.b16 %v271
  %v1315 = vunpack.c.h.b16 %v271
  %v1316 = vunpack.c.l.b16 %v272
  %v1317 = vunpack.c.h.b16 %v272
  %v1318 = vunpack.c.l.b16 %v273
  %v1319 = vunpack.c.h.b16 %v273
  %v1320 = vunpack.c.l.b16 %v274
  %v1321 = vunpack.c.h.b16 %v274
  %v1322 = vunpack.c.l.b16 %v275
  %v1323 = vunpack.c.h.b16 %v275
  %v1324 = vunpack.c.l.b16 %v276
  %v1325 = vunpack.c.h.b16 %v276
  %v1326 = vunpack.c.l.b16 %v277
  %v1327 = vunpack.c.h.b16 %v277
  %v1328 = vunpack.c.l.b16 %v278
  %v1329 = vunpack.c.h.b16 %v278
  %v1330 = vunpack.c.l.b16 %v279
  %v1331 = vunpack.c.h.b16 %v279
  %v1332 = vunpack.c.l.b16 %v280
  %v1333 = vunpack.c.h.b16 %v280
  %v1334 = vunpack.c.l.b16 %v281
  %v1335 = vunpack.c.h.b16 %v281
  %v1336 = vunpack.c.l.b16 %v282
  %v1337 = vunpack.c.h.b16 %v282
  %v1338 = vunpack.c.l.b16 %v283
  %v1339 = vunpack.c.h.b16 %v283
  %v1340 = vunpack.c.l.b16 %v284
  %v1341 = vunpack.c.h.b16 %v284
  %v1342 = vunpack.c.l.b16 %v285
  %v1343 = vunpack.c.h.b16 %v285
  %v1344 = vunpack.c.l.b16 %v286
  %v1345 = vunpack.c.h.b16 %v286
  %v1346 = vunpack.c.l.b16 %v287
  %v1347 = vunpack.c.h.b16 %v287
  %v1348 = vunpack.c.l.b16 %v288
  %v1349 = vunpack.c.h.b16 %v288
  %v1350 = vunpack.c.l.b16 %v289
  %v1351 = vunpack.c.h.b16 %v289
  %v1352 = vunpack.c.l.b16 %v290
  %v1353 = vunpack.c.h.b16 %v290
  %v1354 = vunpack.c.l.b16 %v291
  %v1355 = vunpack.c.h.b16 %v291
  %v1356 = vunpack.c.l.b16 %v292
  %v1357 = vunpack.c.h.b16 %v292
  %v1358 = vunpack.c.l.b16 %v293
  %v1359 = vunpack.c.h.b16 %v293
  %v1360 = vunpack.c.l.b16 %v294
  %v1361 = vunpack.c.h.b16 %v294
  %v1362 = vunpack.c.l.b16 %v295
  %v1363 = vunpack.c.h.b16 %v295
  %v1364 = vunpack.c.l.b16 %v296
  %v1365 = vunpack.c.h.b16 %v296
  %v1366 = vunpack.c.l.b16 %v297
  %v1367 = vunpack.c.h.b16 %v297
  %v1368 = vunpack.c.l.b16 %v298
  %v1369 = vunpack.c.h.b16 %v298
  %v1370 = vunpack.c.l.b16 %v299
  %v1371 = vunpack.c.h.b16 %v299
  %v1372 = vunpack.c.l.b16 %v300
  %v1373 = vunpack.c.h.b16 %v300
  %v1374 = vunpack.c.l.b16 %v301
  %v1375 = vunpack.c.h.b16 %v301
  %v1376 = vunpack.c.l.b16 %v302
  %v1377 = vunpack.c.h.b16 %v302
  %v1378 = vunpack.c.l.b16 %v303
  %v1379 = vunpack.c.h.b16 %v303
  %v1380 = vunpack.c.l.b16 %v304
  %v1381 = vunpack.c.h.b16 %v304
  %v1382 = vunpack.c.l.b16 %v305
  %v1383 = vunpack.c.h.b16 %v305
  %v1384 = vunpack.c.l.b16 %v306
  %v1385 = vunpack.c.h.b16 %v306
  %v1386 = vunpack.c.l.b16 %v307
  %v1387 = vunpack.c.h.b16 %v307
  %v1388 = vunpack.c.l.b16 %v308
  %v1389 = vunpack.c.h.b16 %v308
  %v1390 = vunpack.c.l.b16 %v309
  %v1391 = vunpack.c.h.b16 %v309
  %v1392 = vunpack.c.l.b16 %v310
  %v1393 = vunpack.c.h.b16 %v310
  %v1394 = vunpack.c.l.b16 %v311
  %v1395 = vunpack.c.h.b16 %v311
  %v1396 = vunpack.c.l.b16 %v312
  %v1397 = vunpack.c.h.b16 %v312
  %v1398 = vunpack.c.l.b16 %v313
  %v1399 = vunpack.c.h.b16 %v313
  %v1400 = vunpack.c.l.b16 %v314
  %v1401 = vunpack.c.h.b16 %v314
  %v1402 = vunpack.c.l.b16 %v315
  %v1403 = vunpack.c.h.b16 %v315
  %v1404 = vunpack.c.l.b16 %v316
  %v1405 = vunpack.c.h.b16 %v316
  %v1406 = vunpack.c.l.b16 %v317
  %v1407 = vunpack.c.h.b16 %v317
  %v1408 = vunpack.c.l.b16 %v318
  %v1409 = vunpack.c.h.b16 %v318
  %v1410 = vunpack.c.l.b16 %v319
  %v1411 = vunpack.c.h.b16 %v319
  %v1412 = vunpack.c.l.b16 %v320
  %v1413 = vunpack.c.h.b16 %v320
  %v1414 = vunpack.c.l.b16 %v321
  %v1415 = vunpack.c.h.b16 %v321
  %v1416 = vunpack.c.l.b16 %v322
  %v1417 = vunpack.c.h.b16 %v322
  %v1418 = vunpack.c.l.b16 %v323
  %v1419 = vunpack.c.h.b16 %v323
  %v1420 = vunpack.c.l.b16 %v324
  %v1421 = vunpack.c.h.b16 %v324
  %v1422 = vunpack.c.l.b16 %v325
  %v1423 = vunpack.c.h.b16 %v325
  %v1424 = vunpack.c.l.b16 %v326
  %v1425 = vunpack.c.h.b16 %v326
  %v1426 = vunpack.c.l.b16 %v327
  %v1427 = vunpack.c.h.b16 %v327
  %v1428 = vunpack.c.l.b16 %v328
  %v1429 = vunpack.c.h.b16 %v328
  %v1430 = vunpack.c.l.b16 %v329
  %v1431 = vunpack.c.h.b16 %v329
  %v1432 = vunpack.c.l.b16 %v330
  %v1433 = vunpack.c.h.b16 %v330
  %v1434 = vunpack.c.l.b16 %v331
  %v1435 = vunpack.c.h.b16 %v331
  %v1436 = vunpack.c.l.b16 %v332
  %v1437 = vunpack.c.h.b16 %v332
  %v1438 = vunpack.c.l.b16 %v333
  %v1439 = vunpack.c.h.b16 %v333
  %v1440 = vunpack.c.l.b16 %v334
  %v1441 = vunpack.c.h.b16 %v334
  %v1442 = vunpack.c.l.b16 %v335
  %v1443 = vunpack.c.h.b16 %v335
  %v1444 = vunpack.c.l.b16 %v336
  %v1445 = vunpack.c.h.b16 %v336
  %v1446 = vunpack.c.l.b16 %v337
  %v1447 = vunpack.c.h.b16 %v337
  %v1448 = vpack.c.b16 %v818, %v808
  %v1449 = vpack.c.b16 %v819, %v809
  %v1450 = vpack.c.b16 %v820, %v810
  %v1451 = vpack.c.b16 %v821, %v811
  %v1452 = vpack.c.b16 %v822, %v812
  %v1453 = vpack.c.b16 %v823, %v813
  %v1454 = vpack.c.b16 %v824, %v814
  %v1455 = vpack.c.b16 %v825, %v815
  %v1456 = vpack.c.b16 %v826, %v816
  %v1457 = vpack.c.b16 %v827, %v817
  %v1458 = vpack.c.b16 %v838, %v828
  %v1459 = vpack.c.b16 %v839, %v829
  %v1460 = vpack.c.b16 %v840, %v830
  %v1461 = vpack.c.b16 %v841, %v831
  %v1462 = vpack.c.b16 %v842, %v832
  %v1463 = vpack.c.b16 %v843, %v833
  %v1464 = vpack.c.b16 %v844, %v834
  %v1465 = vpack.c.b16 %v845, %v835
  %v1466 = vpack.c.b16 %v846, %v836
  %v1467 = vpack.c.b16 %v847, %v837
  %v1468 = vpack.c.b16 %v858, %v848
  %v1469 = vpack.c.b16 %v859, %v849
  %v1470 = vpack.c.b16 %v860, %v850
  %v1471 = vpack.c.b16 %v861, %v851
  %v1472 = vpack.c.b16 %v862, %v852
  %v1473 = vpack.c.b16 %v863, %v853
  %v1474 = vpack.c.b16 %v864, %v854
  %v1475 = vpack.c.b16 %v865, %v855
  %v1476 = vpack.c.b16 %v866, %v856
  %v1477 = vpack.c.b16 %v867, %v857
  %v1478 = vpack.c.b16 %v878, %v868
  %v1479 = vpack.c.b16 %v879, %v869
  %v1480 = vpack.c.b16 %v880, %v870
  %v1481 = vpack.c.b16 %v881, %v871
  %v1482 = vpack.c.b16 %v882, %v872
  %v1483 = vpack.c.b16 %v883, %v873
  %v1484 = vpack.c.b16 %v884, %v874
  %v1485 = vpack.c.b16 %v885, %v875
  %v1486 = vpack.c.b16 %v886, %v876
  %v1487 = vpack.c.b16 %v887, %v877
  %v1488 = vpack.c.b16 %v898, %v888
  %v1489 = vpack.c.b16 %v899, %v889
  %v1490 = vpack.c.b16 %v900, %v890
  %v1491 = vpack.c.b16 %v901, %v891
  %v1492 = vpack.c.b16 %v902, %v892
  %v1493 = vpack.c.b16 %v903, %v893
  %v1494 = vpack.c.b16 %v904, %v894
  %v1495 = vpack.c.b16 %v905, %v895
  %v1496 = vpack.c.b16 %v906, %v896
  %v1497 = vpack.c.b16 %v907, %v897
  %v1498 = vpack.c.b16 %v918, %v908
  %v1499 = vpack.c.b16 %v919, %v909
  %v1500 = vpack.c.b16 %v920, %v910
  %v1501 = vpack.c.b16 %v921, %v911
  %v1502 = vpack.c.b16 %v922, %v912
  %v1503 = vpack.c.b16 %v923, %v913
  %v1504 = vpack.c.b16 %v924, %v914
  %v1505 = vpack.c.b16 %v925, %v915
  %v1506 = vpack.c.b16 %v926, %v916
  %v1507 = vpack.c.b16 %v927, %v917
  %v1508 = vpack.c.b16 %v938, %v928
  %v1509 = vpack.c.b16 %v939, %v929
  %v1510 = vpack.c.b16 %v940, %v930
  %v1511 = vpack.c.b16 %v941, %v931
  %v1512 = vpack.c.b16 %v942, %v932
  %v1513 = vpack.c.b16 %v943, %v933
  %v1514 = vpack.c.b16 %v944, %v934
  %v1515 = vpack.c.b16 %v945, %v935
  %v1516 = vpack.c.b16 %v946, %v936
  %v1517 = vpack.c.b16 %v947, %v937
  %v1518 = vpack.c.b16 %v958, %v948
  %v1519 = vpack.c.b16 %v959, %v949
  %v1520 = vpack.c.b16 %v960, %v950
  %v1521 = vpack.c.b16 %v961, %v951
  %v1522 = vpack.c.b16 %v962, %v952
  %v1523 = vpack.c.b16 %v963, %v953
  %v1524 = vpack.c.b16 %v964, %v954
  %v1525 = vpack.c.b16 %v965, %v955
  %v1526 = vpack.c.b16 %v966, %v956
  %v1527 = vpack.c.b16 %v967, %v957
  %v1528 = vpack.c.b16 %v978, %v968
  %v1529 = vpack.c.b16 %v979, %v969
  %v1530 = vpack.c.b16 %v980, %v970
  %v1531 = vpack.c.b16 %v981, %v971
  %v1532 = vpack.c.b16 %v982, %v972
  %v1533 = vpack.c.b16 %v983, %v973
  %v1534 = vpack.c.b16 %v984, %v974
  %v1535 = vpack.c.b16 %v985, %v975
  %v1536 = vpack.c.b16 %v986, %v976
  %v1537 = vpack.c.b16 %v987, %v977
  %v1538 = vpack.c.b16 %v998, %v988
  %v1539 = vpack.c.b16 %v999, %v989
  %v1540 = vpack.c.b16 %v1000, %v990
  %v1541 = vpack.c.b16 %v1001, %v991
  %v1542 = vpack.c.b16 %v1002, %v992
  %v1543 = vpack.c.b16 %v1003, %v993
  %v1544 = vpack.c.b16 %v1004, %v994
  %v1545 = vpack.c.b16 %v1005, %v995
  %v1546 = vpack.c.b16 %v1006, %v996
  %v1547 = vpack.c.b16 %v1007, %v997
  %v1548 = vpack.c.b16 %v1018, %v1008
  %v1549 = vpack.c.b16 %v1019, %v1009
  %v1550 = vpack.c.b16 %v1020, %v1010
  %v1551 = vpack.c.b16 %v1021, %v1011
  %v1552 = vpack.c.b16 %v1022, %v1012
  %v1553 = vpack.c.b16 %v1023, %v1013
  %v1554 = vpack.c.b16 %v1024, %v1014
  %v1555 = vpack.c.b16 %v1025, %v1015
  %v1556 = vpack.c.b16 %v1026, %v1016
  %v1557 = vpack.c.b16 %v1027, %v1017
  %v1558 = vpack.c.b16 %v1038, %v1028
  %v1559 = vpack.c.b16 %v1039, %v1029
  %v1560 = vpack.c.b16 %v1040, %v1030
  %v1561 = vpack.c.b16 %v1041, %v1031
  %v1562 = vpack.c.b16 %v1042, %v1032
  %v1563 = vpack.c.b16 %v1043, %v1033
  %v1564 = vpack.c.b16 %v1044, %v1034
  %v1565 = vpack.c.b16 %v1045, %v1035
  %v1566 = vpack.c.b16 %v1046, %v1036
  %v1567 = vpack.c.b16 %v1047, %v1037
  %v1568 = vpack.c.b16 %v1058, %v1048
  %v1569 = vpack.c.b16 %v1059, %v1049
  %v1570 = vpack.c.b16 %v1060, %v1050
  %v1571 = vpack.c.b16 %v1061, %v1051
  %v1572 = vpack.c.b16 %v1062, %v1052
  %v1573 = vpack.c.b16 %v1063, %v1053
  %v1574 = vpack.c.b16 %v1064, %v1054
  %v1575 = vpack.c.b16 %v1065, %v1055
  %v1576 = vpack.c.b16 %v1066, %v1056
  %v1577 = vpack.c.b16 %v1067, %v1057
  %v1578 = vpack.c.b16 %v1078, %v1068
  %v1579 = vpack.c.b16 %v1079, %v1069
  %v1580 = vpack.c.b16 %v1080, %v1070
  %v1581 = vpack.c.b16 %v1081, %v1071
  %v1582 = vpack.c.b16 %v1082, %v1072
  %v1583 = vpack.c.b16 %v1083, %v1073
  %v1584 = vpack.c.b16 %v1084, %v1074
  %v1585 = vpack.c.b16 %v1085, %v1075
  %v1586 = vpack.c.b16 %v1086, %v1076
  %v1587 = vpack.c.b16 %v1087, %v1077
  %v1588 = vpack.c.b16 %v1098, %v1088
  %v1589 = vpack.c.b16 %v1099, %v1089
  %v1590 = vpack.c.b16 %v1100, %v1090
  %v1591 = vpack.c.b16 %v1101, %v1091
  %v1592 = vpack.c.b16 %v1102, %v1092
  %v1593 = vpack.c.b16 %v1103, %v1093
  %v1594 = vpack.c.b16 %v1104, %v1094
  %v1595 = vpack.c.b16 %v1105, %v1095
  %v1596 = vpack.c.b16 %v1106, %v1096
  %v1597 = vpack.c.b16 %v1107, %v1097
  %v1598 = vpack.c.b16 %v1118, %v1108
  %v1599 = vpack.c.b16 %v1119, %v1109
  %v1600 = vpack.c.b16 %v1120, %v1110
  %v1601 = vpack.c.b16 %v1121, %v1111
  %v1602 = vpack.c.b16 %v1122, %v1112
  %v1603 = vpack.c.b16 %v1123, %v1113
  %v1604 = vpack.c.b16 %v1124, %v1114
  %v1605 = vpack.c.b16 %v1125, %v1115
  %v1606 = vpack.c.b16 %v1126, %v1116
  %v1607 = vpack.c.b16 %v1127, %v1117
  %v1608 = vpack.c.b16 %v1138, %v1128
  %v1609 = vpack.c.b16 %v1139, %v1129
  %v1610 = vpack.c.b16 %v1140, %v1130
  %v1611 = vpack.c.b16 %v1141, %v1131
  %v1612 = vpack.c.b16 %v1142, %v1132
  %v1613 = vpack.c.b16 %v1143, %v1133
  %v1614 = vpack.c.b16 %v1144, %v1134
  %v1615 = vpack.c.b16 %v1145, %v1135
  %v1616 = vpack.c.b16 %v1146, %v1136
  %v1617 = vpack.c.b16 %v1147, %v1137
  %v1618 = vpack.c.b16 %v1158, %v1148
  %v1619 = vpack.c.b16 %v1159, %v1149
  %v1620 = vpack.c.b16 %v1160, %v1150
  %v1621 = vpack.c.b16 %v1161, %v1151
  %v1622 = vpack.c.b16 %v1162, %v1152
  %v1623 = vpack.c.b16 %v1163, %v1153
  %v1624 = vpack.c.b16 %v1164, %v1154
  %v1625 = vpack.c.b16 %v1165, %v1155
  %v1626 = vpack.c.b16 %v1166, %v1156
  %v1627 = vpack.c.b16 %v1167, %v1157
  %v1628 = vpack.c.b16 %v1178, %v1168
  %v1629 = vpack.c.b16 %v1179, %v1169
  %v1630 = vpack.c.b16 %v1180, %v1170
  %v1631 = vpack.c.b16 %v1181, %v1171
  %v1632 = vpack.c.b16 %v1182, %v1172
  %v1633 = vpack.c.b16 %v1183, %v1173
  %v1634 = vpack.c.b16 %v1184, %v1174
  %v1635 = vpack.c.b16 %v1185, %v1175
  %v1636 = vpack.c.b16 %v1186, %v1176
  %v1637 = vpack.c.b16 %v1187, %v1177
  %v1638 = vpack.c.b16 %v1198, %v1188
  %v1639 = vpack.c.b16 %v1199, %v1189
  %v1640 = vpack.c.b16 %v1200, %v1190
  %v1641 = vpack.c.b16 %v1201, %v1191
  %v1642 = vpack.c.b16 %v1202, %v1192
  %v1643 = vpack.c.b16 %v1203, %v1193
  %v1644 = vpack.c.b16 %v1204, %v1194
  %v1645 = vpack.c.b16 %v1205, %v1195
  %v1646 = vpack.c.b16 %v1206, %v1196
  %v1647 = vpack.c.b16 %v1207, %v1197
  %v1648 = vpack.c.b16 %v1218, %v1208
  %v1649 = vpack.c.b16 %v1219, %v1209
  %v1650 = vpack.c.b16 %v1220, %v1210
  %v1651 = vpack.c.b16 %v1221, %v1211
  %v1652 = vpack.c.b16 %v1222, %v1212
  %v1653 = vpack.c.b16 %v1223, %v1213
  %v1654 = vpack.c.b16 %v1224, %v1214
  %v1655 = vpack.c.b16 %v1225, %v1215
  %v1656 = vpack.c.b16 %v1226, %v1216
  %v1657 = vpack.c.b16 %v1227, %v1217
  %v1658 = vpack.c.b16 %v1238, %v1228
  %v1659 = vpack.c.b16 %v1239, %v1229
  %v1660 = vpack.c.b16 %v1240, %v1230
  %v1661 = vpack.c.b16 %v1241, %v1231
  %v1662 = vpack.c.b16 %v1242, %v1232
  %v1663 = vpack.c.b16 %v1243, %v1233
  %v1664 = vpack.c.b16 %v1244, %v1234
  %v1665 = vpack.c.b16 %v1245, %v1235
  %v1666 = vpack.c.b16 %v1246, %v1236
  %v1667 = vpack.c.b16 %v1247, %v1237
  %v1668 = vpack.c.b16 %v1258, %v1248
  %v1669 = vpack.c.b16 %v1259, %v1249
  %v1670 = vpack.c.b16 %v1260, %v1250
  %v1671 = vpack.c.b16 %v1261, %v1251
  %v1672 = vpack.c.b16 %v1262, %v1252
  %v1673 = vpack.c.b16 %v1263, %v1253
  %v1674 = vpack.c.b16 %v1264, %v1254
  %v1675 = vpack.c.b16 %v1265, %v1255
  %v1676 = vpack.c.b16 %v1266, %v1256
  %v1677 = vpack.c.b16 %v1267, %v1257
  %v1678 = vpack.c.b16 %v1278, %v1268
  %v1679 = vpack.c.b16 %v1279, %v1269
  %v1680 = vpack.c.b16 %v1280, %v1270
  %v1681 = vpack.c.b16 %v1281, %v1271
  %v1682 = vpack.c.b16 %v1282, %v1272
  %v1683 = vpack.c.b16 %v1283, %v1273
  %v1684 = vpack.c.b16 %v1284, %v1274
  %v1685 = vpack.c.b16 %v1285, %v1275
  %v1686 = vpack.c.b16 %v1286, %v1276
  %v1687 = vpack.c.b16 %v1287, %v1277
  %v1688 = vpack.c.b16 %v1298, %v1288
  %v1689 = vpack.c.b16 %v1299, %v1289
  %v1690 = vpack.c.b16 %v1300, %v1290
  %v1691 = vpack.c.b16 %v1301, %v1291
  %v1692 = vpack.c.b16 %v1302, %v1292
  %v1693 = vpack.c.b16 %v1303, %v1293
  %v1694 = vpack.c.b16 %v1304, %v1294
  %v1695 = vpack.c.b16 %v1305, %v1295
  %v1696 = vpack.c.b16 %v1306, %v1296
  %v1697 = vpack.c.b16 %v1307, %v1297
  %v1698 = vpack.c.b16 %v1318, %v1308
  %v1699 = vpack.c.b16 %v1319, %v1309
  %v1700 = vpack.c.b16 %v1320, %v1310
  %v1701 = vpack.c.b16 %v1321, %v1311
  %v1702 = vpack.c.b16 %v1322, %v1312
  %v1703 = vpack.c.b16 %v1323, %v1313
  %v1704 = vpack.c.b16 %v1324, %v1314
  %v1705 = vpack.c.b16 %v1325, %v1315
  %v1706 = vpack.c.b16 %v1326, %v1316
  %v1707 = vpack.c.b16 %v1327, %v1317
  %v1708 = vpack.c.b16 %v1338, %v1328
  %v1709 = vpack.c.b16 %v1339, %v1329
  %v1710 = vpack.c.b16 %v1340, %v1330
  %v1711 = vpack.c.b16 %v1341, %v1331
  %v1712 = vpack.c.b16 %v1342, %v1332
  %v1713 = vpack.c.b16 %v1343, %v1333
  %v1714 = vpack.c.b16 %v1344, %v1334
  %v1715 = vpack.c.b16 %v1345, %v1335
  %v1716 = vpack.c.b16 %v1346, %v1336
  %v1717 = vpack.c.b16 %v1347, %v1337
  %v1718 = vpack.c.b16 %v1358, %v1348
  %v1719 = vpack.c.b16 %v1359, %v1349
  %v1720 = vpack.c.b16 %v1360, %v1350
  %v1721 = vpack.c.b16 %v1361, %v1351
  %v1722 = vpack.c.b16 %v1362, %v1352
  %v1723 = vpack.c.b16 %v1363, %v1353
  %v1724 = vpack.c.b16 %v1364, %v1354
  %v1725 = vpack.c.b16 %v1365, %v1355
  %v1726 = vpack.c.b16 %v1366, %v1356
  %v1727 = vpack.c.b16 %v1367, %v1357
  %v1728 = vpack.c.b16 %v1378, %v1368
  %v1729 = vpack.c.b16 %v1379, %v1369
  %v1730 = vpack.c.b16 %v1380, %v1370
  %v1731 = vpack.c.b16 %v1381, %v1371
  %v1732 = vpack.c.b16 %v1382, %v1372
  %v1733 = vpack.c.b16 %v1383, %v1373
  %v1734 = vpack.c.b16 %v1384, %v1374
  %v1735 = vpack.c.b16 %v1385, %v1375
  %v1736 = vpack.c.b16 %v1386, %v1376
  %v1737 = vpack.c.b16 %v1387, %v1377
  %v1738 = vpack.c.b16 %v1398, %v1388
  %v1739 = vpack.c.b16 %v1399, %v1389
  %v1740 = vpack.c.b16 %v1400, %v1390
  %v1741 = vpack.c.b16 %v1401, %v1391
  %v1742 = vpack.c.b16 %v1402, %v1392
  %v1743 = vpack.c.b16 %v1403, %v1393
  %v1744 = vpack.c.b16 %v1404, %v1394
  %v1745 = vpack.c.b16 %v1405, %v1395
  %v1746 = vpack.c.b16 %v1406, %v1396
  %v1747 = vpack.c.b16 %v1407, %v1397
  %v1748 = vpack.c.b16 %v1418, %v1408
  %v1749 = vpack.c.b16 %v1419, %v1409
  %v1750 = vpack.c.b16 %v1420, %v1410
  %v1751 = vpack.c.b16 %v1421, %v1411
  %v1752 = vpack.c.b16 %v1422, %v1412
  %v1753 = vpack.c.b16 %v1423, %v1413
  %v1754 = vpack.c.b16 %v1424, %v1414
  %v1755 = vpack.c.b16 %v1425, %v1415
  %v1756 = vpack.c.b16 %v1426, %v1416
  %v1757 = vpack.c.b16 %v1427, %v1417
  %v1758 = vpack.c.b16 %v1438, %v1428
  %v1759 = vpack.c.b16 %v1439, %v1429
  %v1760 = vpack.c.b16 %v1440, %v1430
  %v1761 = vpack.c.b16 %v1441, %v1431
  %v1762 = vpack.c.b16 %v1442, %v1432
  %v1763 = vpack.c.b16 %v1443, %v1433
  %v1764 = vpack.c.b16 %v1444, %v1434
  %v1765 = vpack.c.b16 %v1445, %v1435
  %v1766 = vpack.c.b16 %v1446, %v1436
  %v1767 = vpack.c.b16 %v1447, %v1437
  %v2206 = vunpack.c.l.b16 %v338
  %v2207 = vunpack.c.l.b16 %v339
  %v2208 = vunpack.c.l.b16 %v340
  %v2209 = vunpack.c.l.b16 %v341
  %v2210 = vunpack.c.l.b16 %v342
  %v2211 = vunpack.c.l.b16 %v343
  %v2212 = vunpack.c.l.b16 %v344
  %v2213 = vunpack.c.l.b16 %v345
  %v2214 = vunpack.c.l.b16 %v346
  %v2215 = vunpack.c.l.b16 %v347
  %v2216 = vunpack.c.l.b16 %v348
  %v2217 = vunpack.c.l.b16 %v349
  %v2218 = vunpack.c.l.b16 %v350
  %v2219 = vunpack.c.l.b16 %v351
  %v2220 = vunpack.c.l.b16 %v352
  %v2221 = vunpack.c.l.b16 %v353
  %v2222 = vunpack.c.l.b16 %v354
  %v2223 = vunpack.c.l.b16 %v355
  %v2224 = vunpack.c.l.b16 %v356
  %v2225 = vunpack.c.l.b16 %v357
  %v2226 = vunpack.c.l.b16 %v358
  %v2227 = vunpack.c.l.b16 %v359
  %v2228 = vunpack.c.l.b16 %v360
  %v2229 = vunpack.c.l.b16 %v361
  %v2230 = vunpack.c.l.b16 %v362
  %v2231 = vunpack.c.l.b16 %v363
  %v2232 = vunpack.c.l.b16 %v364
  %v2233 = vunpack.c.l.b16 %v365
  %v2234 = vunpack.c.l.b16 %v366
  %v2235 = vunpack.c.l.b16 %v367
  %v2236 = vunpack.c.l.b16 %v368
  %v2237 = vunpack.c.l.b16 %v369
  %v2238 = vunpack.c.l.b16 %v370
  %v2239 = vunpack.c.l.b16 %v371
  %v2240 = vunpack.c.l.b16 %v372
  %v2241 = vunpack.c.l.b16 %v373
  %v2242 = vunpack.c.l.b16 %v374
  %v2243 = vunpack.c.l.b16 %v375
  %v2244 = vunpack.c.l.b16 %v376
  %v2245 = vunpack.c.l.b16 %v377
  %v2246 = vunpack.c.l.b16 %v378
  %v2247 = vunpack.c.l.b16 %v379
  %v2248 = vunpack.c.l.b16 %v380
  %v2249 = vunpack.c.l.b16 %v381
  %v2250 = vunpack.c.l.b16 %v382
  %v2251 = vunpack.c.l.b16 %v383
  %v2252 = vunpack.c.l.b16 %v384
  %v2253 = vunpack.c.l.b16 %v385
  %v2254 = vunpack.c.l.b16 %v386
  %v2255 = vunpack.c.l.b16 %v387
  %v2256 = vunpack.c.l.b16 %v388
  %v2257 = vunpack.c.l.b16 %v389
  %v2258 = vunpack.c.l.b16 %v390
  %v2259 = vunpack.c.l.b16 %v391
  %v2260 = vunpack.c.l.b16 %v392
  %v2261 = vunpack.c.l.b16 %v393
  %v2262 = vunpack.c.l.b16 %v394
  %v2263 = vunpack.c.l.b16 %v395
  %v2264 = vunpack.c.l.b16 %v396
  %v2265 = vunpack.c.l.b16 %v397
  %v2266 = vunpack.c.l.b16 %v398
  %v2267 = vunpack.c.l.b16 %v399
  %v2268 = vunpack.c.l.b16 %v400
  %v2269 = vunpack.c.l.b16 %v401
  %v2270 = vunpack.c.l.b16 %v402
  %v2271 = vunpack.c.l.b16 %v403
  %v2272 = vunpack.c.l.b16 %v404
  %v2273 = vunpack.c.l.b16 %v405
  %v2274 = vunpack.c.l.b16 %v406
  %v2275 = vunpack.c.l.b16 %v407
  %v2276 = vunpack.c.l.b16 %v408
  %v2277 = vunpack.c.l.b16 %v409
  %v2278 = vunpack.c.l.b16 %v410
  %v2279 = vunpack.c.l.b16 %v411
  %v2280 = vunpack.c.l.b16 %v412
  %v2281 = vunpack.c.l.b16 %v413
  %v2282 = vunpack.c.l.b16 %v414
  %v2283 = vunpack.c.l.b16 %v415
  %v2284 = vunpack.c.l.b16 %v416
  %v2285 = vunpack.c.l.b16 %v417
  %v2286 = vunpack.c.l.b16 %v418
  %v2287 = vunpack.c.l.b16 %v419
  %v2288 = vunpack.c.l.b16 %v420
  %v2289 = vunpack.c.l.b16 %v421
  %v2290 = vunpack.c.l.b16 %v422
  %v2291 = vunpack.c.l.b16 %v423
  %v2292 = vunpack.c.l.b16 %v424
  %v2293 = vunpack.c.l.b16 %v425
  %v2294 = vunpack.c.l.b16 %v426
  %v2295 = vunpack.c.l.b16 %v427
  %v2296 = vunpack.c.l.b16 %v428
  %v2297 = vunpack.c.l.b16 %v429
  %v2298 = vunpack.c.l.b16 %v430
  %v2299 = vunpack.c.l.b16 %v431
  %v2300 = vunpack.c.l.b16 %v432
  %v2301 = vunpack.c.l.b16 %v433
  %v2302 = vunpack.c.l.b16 %v434
  %v2303 = vunpack.c.l.b16 %v435
  %v2304 = vunpack.c.l.b16 %v436
  %v2305 = vunpack.c.l.b16 %v437
  %v2306 = vunpack.c.l.b16 %v438
  %v2307 = vunpack.c.l.b16 %v439
  %v2308 = vunpack.c.l.b16 %v440
  %v2309 = vunpack.c.l.b16 %v441
  %v2310 = vunpack.c.l.b16 %v442
  %v2311 = vunpack.c.l.b16 %v443
  %v2312 = vunpack.c.l.b16 %v444
  %v2313 = vunpack.c.l.b16 %v445
  %v2314 = vunpack.c.l.b16 %v446
  %v2315 = vunpack.c.l.b16 %v447
  %v2316 = vunpack.c.l.b16 %v448
  %v2317 = vunpack.c.l.b16 %v449
  %v2318 = vunpack.c.l.b16 %v450
  %v2319 = vunpack.c.l.b16 %v451
  %v2320 = vunpack.c.l.b16 %v452
  %v2321 = vunpack.c.l.b16 %v453
  %v2322 = vunpack.c.l.b16 %v454
  %v2323 = vunpack.c.l.b16 %v455
  %v2324 = vunpack.c.l.b16 %v456
  %v2325 = vunpack.c.l.b16 %v457
  %v2326 = vunpack.c.l.b16 %v458
  %v2327 = vunpack.c.l.b16 %v459
  %v2328 = vunpack.c.l.b16 %v460
  %v2329 = vunpack.c.l.b16 %v461
  %v2330 = vunpack.c.l.b16 %v462
  %v2331 = vunpack.c.l.b16 %v463
  %v2332 = vunpack.c.l.b16 %v464
  %v2333 = vunpack.c.l.b16 %v465
  %v2334 = vunpack.c.l.b16 %v466
  %v2335 = vunpack.c.l.b16 %v467
  %v2336 = vunpack.c.l.b16 %v468
  %v2337 = vunpack.c.l.b16 %v469
  %v2338 = vunpack.c.l.b16 %v470
  %v2339 = vunpack.c.l.b16 %v471
  %v2340 = vunpack.c.l.b16 %v472
  %v2341 = vunpack.c.l.b16 %v473
  %v2342 = vunpack.c.l.b16 %v474
  %v2343 = vunpack.c.l.b16 %v475
  %v2344 = vunpack.c.l.b16 %v476
  %v2345 = vunpack.c.l.b16 %v477
  %v2346 = vunpack.c.l.b16 %v478
  %v2347 = vunpack.c.l.b16 %v479
  %v2348 = vunpack.c.l.b16 %v480
  %v2349 = vunpack.c.l.b16 %v481
  %v2350 = vunpack.c.l.b16 %v482
  %v2351 = vunpack.c.l.b16 %v483
  %v2352 = vunpack.c.l.b16 %v484
  %v2353 = vunpack.c.l.b16 %v485
  %v2354 = vunpack.c.l.b16 %v486
  %v2355 = vunpack.c.l.b16 %v487
  %v2356 = vpack.c.b16 %v2207, %v2206
  %v2357 = vpack.c.b16 %v2209, %v2208
  %v2358 = vpack.c.b16 %v2211, %v2210
  %v2359 = vpack.c.b16 %v2213, %v2212
  %v2360 = vpack.c.b16 %v2215, %v2214
  %v2361 = vpack.c.b16 %v2217, %v2216
  %v2362 = vpack.c.b16 %v2219, %v2218
  %v2363 = vpack.c.b16 %v2221, %v2220
  %v2364 = vpack.c.b16 %v2223, %v2222
  %v2365 = vpack.c.b16 %v2225, %v2224
  %v2366 = vpack.c.b16 %v2227, %v2226
  %v2367 = vpack.c.b16 %v2229, %v2228
  %v2368 = vpack.c.b16 %v2231, %v2230
  %v2369 = vpack.c.b16 %v2233, %v2232
  %v2370 = vpack.c.b16 %v2235, %v2234
  %v2371 = vpack.c.b16 %v2237, %v2236
  %v2372 = vpack.c.b16 %v2239, %v2238
  %v2373 = vpack.c.b16 %v2241, %v2240
  %v2374 = vpack.c.b16 %v2243, %v2242
  %v2375 = vpack.c.b16 %v2245, %v2244
  %v2376 = vpack.c.b16 %v2247, %v2246
  %v2377 = vpack.c.b16 %v2249, %v2248
  %v2378 = vpack.c.b16 %v2251, %v2250
  %v2379 = vpack.c.b16 %v2253, %v2252
  %v2380 = vpack.c.b16 %v2255, %v2254
  %v2381 = vpack.c.b16 %v2257, %v2256
  %v2382 = vpack.c.b16 %v2259, %v2258
  %v2383 = vpack.c.b16 %v2261, %v2260
  %v2384 = vpack.c.b16 %v2263, %v2262
  %v2385 = vpack.c.b16 %v2265, %v2264
  %v2386 = vpack.c.b16 %v2267, %v2266
  %v2387 = vpack.c.b16 %v2269, %v2268
  %v2388 = vpack.c.b16 %v2271, %v2270
  %v2389 = vpack.c.b16 %v2273, %v2272
  %v2390 = vpack.c.b16 %v2275, %v2274
  %v2391 = vpack.c.b16 %v2277, %v2276
  %v2392 = vpack.c.b16 %v2279, %v2278
  %v2393 = vpack.c.b16 %v2281, %v2280
  %v2394 = vpack.c.b16 %v2283, %v2282
  %v2395 = vpack.c.b16 %v2285, %v2284
  %v2396 = vpack.c.b16 %v2287, %v2286
  %v2397 = vpack.c.b16 %v2289, %v2288
  %v2398 = vpack.c.b16 %v2291, %v2290
  %v2399 = vpack.c.b16 %v2293, %v2292
  %v2400 = vpack.c.b16 %v2295, %v2294
  %v2401 = vpack.c.b16 %v2297, %v2296
  %v2402 = vpack.c.b16 %v2299, %v2298
  %v2403 = vpack.c.b16 %v2301, %v2300
  %v2404 = vpack.c.b16 %v2303, %v2302
  %v2405 = vpack.c.b16 %v2305, %v2304
  %v2406 = vpack.c.b16 %v2307, %v2306
  %v2407 = vpack.c.b16 %v2309, %v2308
  %v2408 = vpack.c.b16 %v2311, %v2310
  %v2409 = vpack.c.b16 %v2313, %v2312
  %v2410 = vpack.c.b16 %v2315, %v2314
  %v2411 = vpack.c.b16 %v2317, %v2316
  %v2412 = vpack.c.b16 %v2319, %v2318
  %v2413 = vpack.c.b16 %v2321, %v2320
  %v2414 = vpack.c.b16 %v2323, %v2322
  %v2415 = vpack.c.b16 %v2325, %v2324
  %v2416 = vpack.c.b16 %v2327, %v2326
  %v2417 = vpack.c.b16 %v2329, %v2328
  %v2418 = vpack.c.b16 %v2331, %v2330
  %v2419 = vpack.c.b16 %v2333, %v2332
  %v2420 = vpack.c.b16 %v2335, %v2334
  %v2421 = vpack.c.b16 %v2337, %v2336
  %v2422 = vpack.c.b16 %v2339, %v2338
  %v2423 = vpack.c.b16 %v2341, %v2340
  %v2424 = vpack.c.b16 %v2343, %v2342
  %v2425 = vpack.c.b16 %v2345, %v2344
  %v2426 = vpack.c.b16 %v2347, %v2346
  %v2427 = vpack.c.b16 %v2349, %v2348
  %v2428 = vpack.c.b16 %v2351, %v2350
  %v2429 = vpack.c.b16 %v2353, %v2352
  %v2430 = vpack.c.b16 %v2355, %v2354
  %vm2506 = vcmask 392192
  %v2508 = vsel %vm2506, %v1457, 0
  %v2511 = vsel %vm2506, %v1467, 0
  %v2514 = vsel %vm2506, %v1477, 0
  %v2517 = vsel %vm2506, %v1487, 0
  %v2520 = vsel %vm2506, %v1497, 0
  %v2523 = vsel %vm2506, %v1507, 0
  %v2526 = vsel %vm2506, %v1517, 0
  %v2529 = vsel %vm2506, %v1527, 0
  %v2532 = vsel %vm2506, %v1537, 0
  %v2535 = vsel %vm2506, %v1547, 0
  %v2538 = vsel %vm2506, %v1557, 0
  %v2541 = vsel %vm2506, %v1567, 0
  %v2544 = vsel %vm2506, %v1577, 0
  %v2547 = vsel %vm2506, %v1587, 0
  %v2550 = vsel %vm2506, %v1597, 0
  %v2553 = vsel %vm2506, %v1607, 0
  %v2556 = vsel %vm2506, %v1617, 0
  %v2559 = vsel %vm2506, %v1627, 0
  %v2562 = vsel %vm2506, %v1637, 0
  %v2565 = vsel %vm2506, %v1647, 0
  %v2568 = vsel %vm2506, %v1657, 0
  %v2571 = vsel %vm2506, %v1667, 0
  %v2574 = vsel %vm2506, %v1677, 0
  %v2577 = vsel %vm2506, %v1687, 0
  %v2580 = vsel %vm2506, %v1697, 0
  %v2583 = vsel %vm2506, %v1707, 0
  %v2586 = vsel %vm2506, %v1717, 0
  %v2589 = vsel %vm2506, %v1727, 0
  %v2592 = vsel %vm2506, %v1737, 0
  %v2595 = vsel %vm2506, %v1747, 0
  %v2598 = vsel %vm2506, %v1757, 0
  %v2601 = vsel %vm2506, %v1767, 0
  %2603 = vmatpush.bf16.msra.mxu0 %v2363
  %2604 = vmatpush.bf16.msra.mxu0 %v2362
  %2605 = vmatpush.bf16.msra.mxu0 %v2361
  %2606 = vmatpush.bf16.msra.mxu0 %v2360
  %2607 = vmatpush.bf16.msra.mxu0 %v2359
  %2608 = vmatpush.bf16.msra.mxu0 %v2358
  %2609 = vmatpush.bf16.msra.mxu0 %v2357
  %2610 = vmatpush.bf16.msra.mxu0 %v2356
  %2611 = vmatmul.bf16.gmra.mxu0 %v1448
  %v2612 = vpop.f32.mrf.mxu0
  %v2613 = vadd.f32 0.0, %v2612
  %v2614 = vpop.f32.mrf.mxu0
  %v2615 = vadd.f32 0.0, %v2614
  %2616 = vmatmul.bf16.gmra.mxu0 %v1458
  %v2617 = vpop.f32.mrf.mxu0
  %v2618 = vadd.f32 0.0, %v2617
  %v2619 = vpop.f32.mrf.mxu0
  %v2620 = vadd.f32 0.0, %v2619
  %2621 = vmatmul.bf16.gmra.mxu0 %v1468
  %v2622 = vpop.f32.mrf.mxu0
  %v2623 = vadd.f32 0.0, %v2622
  %v2624 = vpop.f32.mrf.mxu0
  %v2625 = vadd.f32 0.0, %v2624
  %2626 = vmatmul.bf16.gmra.mxu0 %v1478
  %v2627 = vpop.f32.mrf.mxu0
  %v2628 = vadd.f32 0.0, %v2627
  %v2629 = vpop.f32.mrf.mxu0
  %v2630 = vadd.f32 0.0, %v2629
  %2631 = vmatmul.bf16.gmra.mxu0 %v1488
  %v2632 = vpop.f32.mrf.mxu0
  %v2633 = vadd.f32 0.0, %v2632
  %v2634 = vpop.f32.mrf.mxu0
  %v2635 = vadd.f32 0.0, %v2634
  %2636 = vmatmul.bf16.gmra.mxu0 %v1498
  %v2637 = vpop.f32.mrf.mxu0
  %v2638 = vadd.f32 0.0, %v2637
  %v2639 = vpop.f32.mrf.mxu0
  %v2640 = vadd.f32 0.0, %v2639
  %2641 = vmatmul.bf16.gmra.mxu0 %v1508
  %v2642 = vpop.f32.mrf.mxu0
  %v2643 = vadd.f32 0.0, %v2642
  %v2644 = vpop.f32.mrf.mxu0
  %v2645 = vadd.f32 0.0, %v2644
  %2646 = vmatmul.bf16.gmra.mxu0 %v1518
  %v2647 = vpop.f32.mrf.mxu0
  %v2648 = vadd.f32 0.0, %v2647
  %v2649 = vpop.f32.mrf.mxu0
  %v2650 = vadd.f32 0.0, %v2649
  %2651 = vmatmul.bf16.gmra.mxu0 %v1528
  %v2652 = vpop.f32.mrf.mxu0
  %v2653 = vadd.f32 0.0, %v2652
  %v2654 = vpop.f32.mrf.mxu0
  %v2655 = vadd.f32 0.0, %v2654
  %2656 = vmatmul.bf16.gmra.mxu0 %v1538
  %v2657 = vpop.f32.mrf.mxu0
  %v2658 = vadd.f32 0.0, %v2657
  %v2659 = vpop.f32.mrf.mxu0
  %v2660 = vadd.f32 0.0, %v2659
  %2661 = vmatmul.bf16.gmra.mxu0 %v1548
  %v2662 = vpop.f32.mrf.mxu0
  %v2663 = vadd.f32 0.0, %v2662
  %v2664 = vpop.f32.mrf.mxu0
  %v2665 = vadd.f32 0.0, %v2664
  %2666 = vmatmul.bf16.gmra.mxu0 %v1558
  %v2667 = vpop.f32.mrf.mxu0
  %v2668 = vadd.f32 0.0, %v2667
  %v2669 = vpop.f32.mrf.mxu0
  %v2670 = vadd.f32 0.0, %v2669
  %2671 = vmatmul.bf16.gmra.mxu0 %v1568
  %v2672 = vpop.f32.mrf.mxu0
  %v2673 = vadd.f32 0.0, %v2672
  %v2674 = vpop.f32.mrf.mxu0
  %v2675 = vadd.f32 0.0, %v2674
  %2676 = vmatmul.bf16.gmra.mxu0 %v1578
  %v2677 = vpop.f32.mrf.mxu0
  %v2678 = vadd.f32 0.0, %v2677
  %v2679 = vpop.f32.mrf.mxu0
  %v2680 = vadd.f32 0.0, %v2679
  %2681 = vmatmul.bf16.gmra.mxu0 %v1588
  %v2682 = vpop.f32.mrf.mxu0
  %v2683 = vadd.f32 0.0, %v2682
  %v2684 = vpop.f32.mrf.mxu0
  %v2685 = vadd.f32 0.0, %v2684
  %2686 = vmatmul.bf16.gmra.mxu0 %v1598
  %v2687 = vpop.f32.mrf.mxu0
  %v2688 = vadd.f32 0.0, %v2687
  %v2689 = vpop.f32.mrf.mxu0
  %v2690 = vadd.f32 0.0, %v2689
  %2691 = vmatmul.bf16.gmra.mxu0 %v1608
  %v2692 = vpop.f32.mrf.mxu0
  %v2693 = vadd.f32 0.0, %v2692
  %v2694 = vpop.f32.mrf.mxu0
  %v2695 = vadd.f32 0.0, %v2694
  %2696 = vmatmul.bf16.gmra.mxu0 %v1618
  %v2697 = vpop.f32.mrf.mxu0
  %v2698 = vadd.f32 0.0, %v2697
  %v2699 = vpop.f32.mrf.mxu0
  %v2700 = vadd.f32 0.0, %v2699
  %2701 = vmatmul.bf16.gmra.mxu0 %v1628
  %v2702 = vpop.f32.mrf.mxu0
  %v2703 = vadd.f32 0.0, %v2702
  %v2704 = vpop.f32.mrf.mxu0
  %v2705 = vadd.f32 0.0, %v2704
  %2706 = vmatmul.bf16.gmra.mxu0 %v1638
  %v2707 = vpop.f32.mrf.mxu0
  %v2708 = vadd.f32 0.0, %v2707
  %v2709 = vpop.f32.mrf.mxu0
  %v2710 = vadd.f32 0.0, %v2709
  %2711 = vmatmul.bf16.gmra.mxu0 %v1648
  %v2712 = vpop.f32.mrf.mxu0
  %v2713 = vadd.f32 0.0, %v2712
  %v2714 = vpop.f32.mrf.mxu0
  %v2715 = vadd.f32 0.0, %v2714
  %2716 = vmatmul.bf16.gmra.mxu0 %v1658
  %v2717 = vpop.f32.mrf.mxu0
  %v2718 = vadd.f32 0.0, %v2717
  %v2719 = vpop.f32.mrf.mxu0
  %v2720 = vadd.f32 0.0, %v2719
  %2721 = vmatmul.bf16.gmra.mxu0 %v1668
  %v2722 = vpop.f32.mrf.mxu0
  %v2723 = vadd.f32 0.0, %v2722
  %v2724 = vpop.f32.mrf.mxu0
  %v2725 = vadd.f32 0.0, %v2724
  %2726 = vmatmul.bf16.gmra.mxu0 %v1678
  %v2727 = vpop.f32.mrf.mxu0
  %v2728 = vadd.f32 0.0, %v2727
  %v2729 = vpop.f32.mrf.mxu0
  %v2730 = vadd.f32 0.0, %v2729
  %2731 = vmatmul.bf16.gmra.mxu0 %v1688
  %v2732 = vpop.f32.mrf.mxu0
  %v2733 = vadd.f32 0.0, %v2732
  %v2734 = vpop.f32.mrf.mxu0
  %v2735 = vadd.f32 0.0, %v2734
  %2736 = vmatmul.bf16.gmra.mxu0 %v1698
  %v2737 = vpop.f32.mrf.mxu0
  %v2738 = vadd.f32 0.0, %v2737
  %v2739 = vpop.f32.mrf.mxu0
  %v2740 = vadd.f32 0.0, %v2739
  %2741 = vmatmul.bf16.gmra.mxu0 %v1708
  %v2742 = vpop.f32.mrf.mxu0
  %v2743 = vadd.f32 0.0, %v2742
  %v2744 = vpop.f32.mrf.mxu0
  %v2745 = vadd.f32 0.0, %v2744
  %2746 = vmatmul.bf16.gmra.mxu0 %v1718
  %v2747 = vpop.f32.mrf.mxu0
  %v2748 = vadd.f32 0.0, %v2747
  %v2749 = vpop.f32.mrf.mxu0
  %v2750 = vadd.f32 0.0, %v2749
  %2751 = vmatmul.bf16.gmra.mxu0 %v1728
  %v2752 = vpop.f32.mrf.mxu0
  %v2753 = vadd.f32 0.0, %v2752
  %v2754 = vpop.f32.mrf.mxu0
  %v2755 = vadd.f32 0.0, %v2754
  %2756 = vmatmul.bf16.gmra.mxu0 %v1738
  %v2757 = vpop.f32.mrf.mxu0
  %v2758 = vadd.f32 0.0, %v2757
  %v2759 = vpop.f32.mrf.mxu0
  %v2760 = vadd.f32 0.0, %v2759
  %2761 = vmatmul.bf16.gmra.mxu0 %v1748
  %v2762 = vpop.f32.mrf.mxu0
  %v2763 = vadd.f32 0.0, %v2762
  %v2764 = vpop.f32.mrf.mxu0
  %v2765 = vadd.f32 0.0, %v2764
  %2766 = vmatmul.bf16.gmra.mxu0 %v1758
  %v2767 = vpop.f32.mrf.mxu0
  %v2768 = vadd.f32 0.0, %v2767
  %v2769 = vpop.f32.mrf.mxu0
  %v2770 = vadd.f32 0.0, %v2769
  %2771 = vdwg.mxu0
  %2772 = vmatpush.bf16.msra.mxu0 %v2371
  %2773 = vmatpush.bf16.msra.mxu0 %v2370
  %2774 = vmatpush.bf16.msra.mxu0 %v2369
  %2775 = vmatpush.bf16.msra.mxu0 %v2368
  %2776 = vmatpush.bf16.msra.mxu0 %v2367
  %2777 = vmatpush.bf16.msra.mxu0 %v2366
  %2778 = vmatpush.bf16.msra.mxu0 %v2365
  %2779 = vmatpush.bf16.msra.mxu0 %v2364
  %2780 = vmatmul.bf16.gmra.mxu0 %v1449
  %v2781 = vpop.f32.mrf.mxu0
  %v2782 = vadd.f32 %v2613, %v2781
  %v2783 = vpop.f32.mrf.mxu0
  %v2784 = vadd.f32 %v2615, %v2783
  %2785 = vmatmul.bf16.gmra.mxu0 %v1459
  %v2786 = vpop.f32.mrf.mxu0
  %v2787 = vadd.f32 %v2618, %v2786
  %v2788 = vpop.f32.mrf.mxu0
  %v2789 = vadd.f32 %v2620, %v2788
  %2790 = vmatmul.bf16.gmra.mxu0 %v1469
  %v2791 = vpop.f32.mrf.mxu0
  %v2792 = vadd.f32 %v2623, %v2791
  %v2793 = vpop.f32.mrf.mxu0
  %v2794 = vadd.f32 %v2625, %v2793
  %2795 = vmatmul.bf16.gmra.mxu0 %v1479
  %v2796 = vpop.f32.mrf.mxu0
  %v2797 = vadd.f32 %v2628, %v2796
  %v2798 = vpop.f32.mrf.mxu0
  %v2799 = vadd.f32 %v2630, %v2798
  %2800 = vmatmul.bf16.gmra.mxu0 %v1489
  %v2801 = vpop.f32.mrf.mxu0
  %v2802 = vadd.f32 %v2633, %v2801
  %v2803 = vpop.f32.mrf.mxu0
  %v2804 = vadd.f32 %v2635, %v2803
  %2805 = vmatmul.bf16.gmra.mxu0 %v1499
  %v2806 = vpop.f32.mrf.mxu0
  %v2807 = vadd.f32 %v2638, %v2806
  %v2808 = vpop.f32.mrf.mxu0
  %v2809 = vadd.f32 %v2640, %v2808
  %2810 = vmatmul.bf16.gmra.mxu0 %v1509
  %v2811 = vpop.f32.mrf.mxu0
  %v2812 = vadd.f32 %v2643, %v2811
  %v2813 = vpop.f32.mrf.mxu0
  %v2814 = vadd.f32 %v2645, %v2813
  %2815 = vmatmul.bf16.gmra.mxu0 %v1519
  %v2816 = vpop.f32.mrf.mxu0
  %v2817 = vadd.f32 %v2648, %v2816
  %v2818 = vpop.f32.mrf.mxu0
  %v2819 = vadd.f32 %v2650, %v2818
  %2820 = vmatmul.bf16.gmra.mxu0 %v1529
  %v2821 = vpop.f32.mrf.mxu0
  %v2822 = vadd.f32 %v2653, %v2821
  %v2823 = vpop.f32.mrf.mxu0
  %v2824 = vadd.f32 %v2655, %v2823
  %2825 = vmatmul.bf16.gmra.mxu0 %v1539
  %v2826 = vpop.f32.mrf.mxu0
  %v2827 = vadd.f32 %v2658, %v2826
  %v2828 = vpop.f32.mrf.mxu0
  %v2829 = vadd.f32 %v2660, %v2828
  %2830 = vmatmul.bf16.gmra.mxu0 %v1549
  %v2831 = vpop.f32.mrf.mxu0
  %v2832 = vadd.f32 %v2663, %v2831
  %v2833 = vpop.f32.mrf.mxu0
  %v2834 = vadd.f32 %v2665, %v2833
  %2835 = vmatmul.bf16.gmra.mxu0 %v1559
  %v2836 = vpop.f32.mrf.mxu0
  %v2837 = vadd.f32 %v2668, %v2836
  %v2838 = vpop.f32.mrf.mxu0
  %v2839 = vadd.f32 %v2670, %v2838
  %2840 = vmatmul.bf16.gmra.mxu0 %v1569
  %v2841 = vpop.f32.mrf.mxu0
  %v2842 = vadd.f32 %v2673, %v2841
  %v2843 = vpop.f32.mrf.mxu0
  %v2844 = vadd.f32 %v2675, %v2843
  %2845 = vmatmul.bf16.gmra.mxu0 %v1579
  %v2846 = vpop.f32.mrf.mxu0
  %v2847 = vadd.f32 %v2678, %v2846
  %v2848 = vpop.f32.mrf.mxu0
  %v2849 = vadd.f32 %v2680, %v2848
  %2850 = vmatmul.bf16.gmra.mxu0 %v1589
  %v2851 = vpop.f32.mrf.mxu0
  %v2852 = vadd.f32 %v2683, %v2851
  %v2853 = vpop.f32.mrf.mxu0
  %v2854 = vadd.f32 %v2685, %v2853
  %2855 = vmatmul.bf16.gmra.mxu0 %v1599
  %v2856 = vpop.f32.mrf.mxu0
  %v2857 = vadd.f32 %v2688, %v2856
  %v2858 = vpop.f32.mrf.mxu0
  %v2859 = vadd.f32 %v2690, %v2858
  %2860 = vmatmul.bf16.gmra.mxu0 %v1609
  %v2861 = vpop.f32.mrf.mxu0
  %v2862 = vadd.f32 %v2693, %v2861
  %v2863 = vpop.f32.mrf.mxu0
  %v2864 = vadd.f32 %v2695, %v2863
  %2865 = vmatmul.bf16.gmra.mxu0 %v1619
  %v2866 = vpop.f32.mrf.mxu0
  %v2867 = vadd.f32 %v2698, %v2866
  %v2868 = vpop.f32.mrf.mxu0
  %v2869 = vadd.f32 %v2700, %v2868
  %2870 = vmatmul.bf16.gmra.mxu0 %v1629
  %v2871 = vpop.f32.mrf.mxu0
  %v2872 = vadd.f32 %v2703, %v2871
  %v2873 = vpop.f32.mrf.mxu0
  %v2874 = vadd.f32 %v2705, %v2873
  %2875 = vmatmul.bf16.gmra.mxu0 %v1639
  %v2876 = vpop.f32.mrf.mxu0
  %v2877 = vadd.f32 %v2708, %v2876
  %v2878 = vpop.f32.mrf.mxu0
  %v2879 = vadd.f32 %v2710, %v2878
  %2880 = vmatmul.bf16.gmra.mxu0 %v1649
  %v2881 = vpop.f32.mrf.mxu0
  %v2882 = vadd.f32 %v2713, %v2881
  %v2883 = vpop.f32.mrf.mxu0
  %v2884 = vadd.f32 %v2715, %v2883
  %2885 = vmatmul.bf16.gmra.mxu0 %v1659
  %v2886 = vpop.f32.mrf.mxu0
  %v2887 = vadd.f32 %v2718, %v2886
  %v2888 = vpop.f32.mrf.mxu0
  %v2889 = vadd.f32 %v2720, %v2888
  %2890 = vmatmul.bf16.gmra.mxu0 %v1669
  %v2891 = vpop.f32.mrf.mxu0
  %v2892 = vadd.f32 %v2723, %v2891
  %v2893 = vpop.f32.mrf.mxu0
  %v2894 = vadd.f32 %v2725, %v2893
  %2895 = vmatmul.bf16.gmra.mxu0 %v1679
  %v2896 = vpop.f32.mrf.mxu0
  %v2897 = vadd.f32 %v2728, %v2896
  %v2898 = vpop.f32.mrf.mxu0
  %v2899 = vadd.f32 %v2730, %v2898
  %2900 = vmatmul.bf16.gmra.mxu0 %v1689
  %v2901 = vpop.f32.mrf.mxu0
  %v2902 = vadd.f32 %v2733, %v2901
  %v2903 = vpop.f32.mrf.mxu0
  %v2904 = vadd.f32 %v2735, %v2903
  %2905 = vmatmul.bf16.gmra.mxu0 %v1699
  %v2906 = vpop.f32.mrf.mxu0
  %v2907 = vadd.f32 %v2738, %v2906
  %v2908 = vpop.f32.mrf.mxu0
  %v2909 = vadd.f32 %v2740, %v2908
  %2910 = vmatmul.bf16.gmra.mxu0 %v1709
  %v2911 = vpop.f32.mrf.mxu0
  %v2912 = vadd.f32 %v2743, %v2911
  %v2913 = vpop.f32.mrf.mxu0
  %v2914 = vadd.f32 %v2745, %v2913
  %2915 = vmatmul.bf16.gmra.mxu0 %v1719
  %v2916 = vpop.f32.mrf.mxu0
  %v2917 = vadd.f32 %v2748, %v2916
  %v2918 = vpop.f32.mrf.mxu0
  %v2919 = vadd.f32 %v2750, %v2918
  %2920 = vmatmul.bf16.gmra.mxu0 %v1729
  %v2921 = vpop.f32.mrf.mxu0
  %v2922 = vadd.f32 %v2753, %v2921
  %v2923 = vpop.f32.mrf.mxu0
  %v2924 = vadd.f32 %v2755, %v2923
  %2925 = vmatmul.bf16.gmra.mxu0 %v1739
  %v2926 = vpop.f32.mrf.mxu0
  %v2927 = vadd.f32 %v2758, %v2926
  %v2928 = vpop.f32.mrf.mxu0
  %v2929 = vadd.f32 %v2760, %v2928
  %2930 = vmatmul.bf16.gmra.mxu0 %v1749
  %v2931 = vpop.f32.mrf.mxu0
  %v2932 = vadd.f32 %v2763, %v2931
  %v2933 = vpop.f32.mrf.mxu0
  %v2934 = vadd.f32 %v2765, %v2933
  %2935 = vmatmul.bf16.gmra.mxu0 %v1759
  %v2936 = vpop.f32.mrf.mxu0
  %v2937 = vadd.f32 %v2768, %v2936
  %v2938 = vpop.f32.mrf.mxu0
  %v2939 = vadd.f32 %v2770, %v2938
  %2940 = vdwg.mxu0
  %2941 = vmatpush.bf16.msra.mxu0 %v2379
  %2942 = vmatpush.bf16.msra.mxu0 %v2378
  %2943 = vmatpush.bf16.msra.mxu0 %v2377
  %2944 = vmatpush.bf16.msra.mxu0 %v2376
  %2945 = vmatpush.bf16.msra.mxu0 %v2375
  %2946 = vmatpush.bf16.msra.mxu0 %v2374
  %2947 = vmatpush.bf16.msra.mxu0 %v2373
  %2948 = vmatpush.bf16.msra.mxu0 %v2372
  %2949 = vmatmul.bf16.gmra.mxu0 %v1450
  %v2950 = vpop.f32.mrf.mxu0
  %v2951 = vadd.f32 %v2782, %v2950
  %v2952 = vpop.f32.mrf.mxu0
  %v2953 = vadd.f32 %v2784, %v2952
  %2954 = vmatmul.bf16.gmra.mxu0 %v1460
  %v2955 = vpop.f32.mrf.mxu0
  %v2956 = vadd.f32 %v2787, %v2955
  %v2957 = vpop.f32.mrf.mxu0
  %v2958 = vadd.f32 %v2789, %v2957
  %2959 = vmatmul.bf16.gmra.mxu0 %v1470
  %v2960 = vpop.f32.mrf.mxu0
  %v2961 = vadd.f32 %v2792, %v2960
  %v2962 = vpop.f32.mrf.mxu0
  %v2963 = vadd.f32 %v2794, %v2962
  %2964 = vmatmul.bf16.gmra.mxu0 %v1480
  %v2965 = vpop.f32.mrf.mxu0
  %v2966 = vadd.f32 %v2797, %v2965
  %v2967 = vpop.f32.mrf.mxu0
  %v2968 = vadd.f32 %v2799, %v2967
  %2969 = vmatmul.bf16.gmra.mxu0 %v1490
  %v2970 = vpop.f32.mrf.mxu0
  %v2971 = vadd.f32 %v2802, %v2970
  %v2972 = vpop.f32.mrf.mxu0
  %v2973 = vadd.f32 %v2804, %v2972
  %2974 = vmatmul.bf16.gmra.mxu0 %v1500
  %v2975 = vpop.f32.mrf.mxu0
  %v2976 = vadd.f32 %v2807, %v2975
  %v2977 = vpop.f32.mrf.mxu0
  %v2978 = vadd.f32 %v2809, %v2977
  %2979 = vmatmul.bf16.gmra.mxu0 %v1510
  %v2980 = vpop.f32.mrf.mxu0
  %v2981 = vadd.f32 %v2812, %v2980
  %v2982 = vpop.f32.mrf.mxu0
  %v2983 = vadd.f32 %v2814, %v2982
  %2984 = vmatmul.bf16.gmra.mxu0 %v1520
  %v2985 = vpop.f32.mrf.mxu0
  %v2986 = vadd.f32 %v2817, %v2985
  %v2987 = vpop.f32.mrf.mxu0
  %v2988 = vadd.f32 %v2819, %v2987
  %2989 = vmatmul.bf16.gmra.mxu0 %v1530
  %v2990 = vpop.f32.mrf.mxu0
  %v2991 = vadd.f32 %v2822, %v2990
  %v2992 = vpop.f32.mrf.mxu0
  %v2993 = vadd.f32 %v2824, %v2992
  %2994 = vmatmul.bf16.gmra.mxu0 %v1540
  %v2995 = vpop.f32.mrf.mxu0
  %v2996 = vadd.f32 %v2827, %v2995
  %v2997 = vpop.f32.mrf.mxu0
  %v2998 = vadd.f32 %v2829, %v2997
  %2999 = vmatmul.bf16.gmra.mxu0 %v1550
  %v3000 = vpop.f32.mrf.mxu0
  %v3001 = vadd.f32 %v2832, %v3000
  %v3002 = vpop.f32.mrf.mxu0
  %v3003 = vadd.f32 %v2834, %v3002
  %3004 = vmatmul.bf16.gmra.mxu0 %v1560
  %v3005 = vpop.f32.mrf.mxu0
  %v3006 = vadd.f32 %v2837, %v3005
  %v3007 = vpop.f32.mrf.mxu0
  %v3008 = vadd.f32 %v2839, %v3007
  %3009 = vmatmul.bf16.gmra.mxu0 %v1570
  %v3010 = vpop.f32.mrf.mxu0
  %v3011 = vadd.f32 %v2842, %v3010
  %v3012 = vpop.f32.mrf.mxu0
  %v3013 = vadd.f32 %v2844, %v3012
  %3014 = vmatmul.bf16.gmra.mxu0 %v1580
  %v3015 = vpop.f32.mrf.mxu0
  %v3016 = vadd.f32 %v2847, %v3015
  %v3017 = vpop.f32.mrf.mxu0
  %v3018 = vadd.f32 %v2849, %v3017
  %3019 = vmatmul.bf16.gmra.mxu0 %v1590
  %v3020 = vpop.f32.mrf.mxu0
  %v3021 = vadd.f32 %v2852, %v3020
  %v3022 = vpop.f32.mrf.mxu0
  %v3023 = vadd.f32 %v2854, %v3022
  %3024 = vmatmul.bf16.gmra.mxu0 %v1600
  %v3025 = vpop.f32.mrf.mxu0
  %v3026 = vadd.f32 %v2857, %v3025
  %v3027 = vpop.f32.mrf.mxu0
  %v3028 = vadd.f32 %v2859, %v3027
  %3029 = vmatmul.bf16.gmra.mxu0 %v1610
  %v3030 = vpop.f32.mrf.mxu0
  %v3031 = vadd.f32 %v2862, %v3030
  %v3032 = vpop.f32.mrf.mxu0
  %v3033 = vadd.f32 %v2864, %v3032
  %3034 = vmatmul.bf16.gmra.mxu0 %v1620
  %v3035 = vpop.f32.mrf.mxu0
  %v3036 = vadd.f32 %v2867, %v3035
  %v3037 = vpop.f32.mrf.mxu0
  %v3038 = vadd.f32 %v2869, %v3037
  %3039 = vmatmul.bf16.gmra.mxu0 %v1630
  %v3040 = vpop.f32.mrf.mxu0
  %v3041 = vadd.f32 %v2872, %v3040
  %v3042 = vpop.f32.mrf.mxu0
  %v3043 = vadd.f32 %v2874, %v3042
  %3044 = vmatmul.bf16.gmra.mxu0 %v1640
  %v3045 = vpop.f32.mrf.mxu0
  %v3046 = vadd.f32 %v2877, %v3045
  %v3047 = vpop.f32.mrf.mxu0
  %v3048 = vadd.f32 %v2879, %v3047
  %3049 = vmatmul.bf16.gmra.mxu0 %v1650
  %v3050 = vpop.f32.mrf.mxu0
  %v3051 = vadd.f32 %v2882, %v3050
  %v3052 = vpop.f32.mrf.mxu0
  %v3053 = vadd.f32 %v2884, %v3052
  %3054 = vmatmul.bf16.gmra.mxu0 %v1660
  %v3055 = vpop.f32.mrf.mxu0
  %v3056 = vadd.f32 %v2887, %v3055
  %v3057 = vpop.f32.mrf.mxu0
  %v3058 = vadd.f32 %v2889, %v3057
  %3059 = vmatmul.bf16.gmra.mxu0 %v1670
  %v3060 = vpop.f32.mrf.mxu0
  %v3061 = vadd.f32 %v2892, %v3060
  %v3062 = vpop.f32.mrf.mxu0
  %v3063 = vadd.f32 %v2894, %v3062
  %3064 = vmatmul.bf16.gmra.mxu0 %v1680
  %v3065 = vpop.f32.mrf.mxu0
  %v3066 = vadd.f32 %v2897, %v3065
  %v3067 = vpop.f32.mrf.mxu0
  %v3068 = vadd.f32 %v2899, %v3067
  %3069 = vmatmul.bf16.gmra.mxu0 %v1690
  %v3070 = vpop.f32.mrf.mxu0
  %v3071 = vadd.f32 %v2902, %v3070
  %v3072 = vpop.f32.mrf.mxu0
  %v3073 = vadd.f32 %v2904, %v3072
  %3074 = vmatmul.bf16.gmra.mxu0 %v1700
  %v3075 = vpop.f32.mrf.mxu0
  %v3076 = vadd.f32 %v2907, %v3075
  %v3077 = vpop.f32.mrf.mxu0
  %v3078 = vadd.f32 %v2909, %v3077
  %3079 = vmatmul.bf16.gmra.mxu0 %v1710
  %v3080 = vpop.f32.mrf.mxu0
  %v3081 = vadd.f32 %v2912, %v3080
  %v3082 = vpop.f32.mrf.mxu0
  %v3083 = vadd.f32 %v2914, %v3082
  %3084 = vmatmul.bf16.gmra.mxu0 %v1720
  %v3085 = vpop.f32.mrf.mxu0
  %v3086 = vadd.f32 %v2917, %v3085
  %v3087 = vpop.f32.mrf.mxu0
  %v3088 = vadd.f32 %v2919, %v3087
  %3089 = vmatmul.bf16.gmra.mxu0 %v1730
  %v3090 = vpop.f32.mrf.mxu0
  %v3091 = vadd.f32 %v2922, %v3090
  %v3092 = vpop.f32.mrf.mxu0
  %v3093 = vadd.f32 %v2924, %v3092
  %3094 = vmatmul.bf16.gmra.mxu0 %v1740
  %v3095 = vpop.f32.mrf.mxu0
  %v3096 = vadd.f32 %v2927, %v3095
  %v3097 = vpop.f32.mrf.mxu0
  %v3098 = vadd.f32 %v2929, %v3097
  %3099 = vmatmul.bf16.gmra.mxu0 %v1750
  %v3100 = vpop.f32.mrf.mxu0
  %v3101 = vadd.f32 %v2932, %v3100
  %v3102 = vpop.f32.mrf.mxu0
  %v3103 = vadd.f32 %v2934, %v3102
  %3104 = vmatmul.bf16.gmra.mxu0 %v1760
  %v3105 = vpop.f32.mrf.mxu0
  %v3106 = vadd.f32 %v2937, %v3105
  %v3107 = vpop.f32.mrf.mxu0
  %v3108 = vadd.f32 %v2939, %v3107
  %3109 = vdwg.mxu0
  %3110 = vmatpush.bf16.msra.mxu0 %v2387
  %3111 = vmatpush.bf16.msra.mxu0 %v2386
  %3112 = vmatpush.bf16.msra.mxu0 %v2385
  %3113 = vmatpush.bf16.msra.mxu0 %v2384
  %3114 = vmatpush.bf16.msra.mxu0 %v2383
  %3115 = vmatpush.bf16.msra.mxu0 %v2382
  %3116 = vmatpush.bf16.msra.mxu0 %v2381
  %3117 = vmatpush.bf16.msra.mxu0 %v2380
  %3118 = vmatmul.bf16.gmra.mxu0 %v1451
  %v3119 = vpop.f32.mrf.mxu0
  %v3120 = vadd.f32 %v2951, %v3119
  %v3121 = vpop.f32.mrf.mxu0
  %v3122 = vadd.f32 %v2953, %v3121
  %3123 = vmatmul.bf16.gmra.mxu0 %v1461
  %v3124 = vpop.f32.mrf.mxu0
  %v3125 = vadd.f32 %v2956, %v3124
  %v3126 = vpop.f32.mrf.mxu0
  %v3127 = vadd.f32 %v2958, %v3126
  %3128 = vmatmul.bf16.gmra.mxu0 %v1471
  %v3129 = vpop.f32.mrf.mxu0
  %v3130 = vadd.f32 %v2961, %v3129
  %v3131 = vpop.f32.mrf.mxu0
  %v3132 = vadd.f32 %v2963, %v3131
  %3133 = vmatmul.bf16.gmra.mxu0 %v1481
  %v3134 = vpop.f32.mrf.mxu0
  %v3135 = vadd.f32 %v2966, %v3134
  %v3136 = vpop.f32.mrf.mxu0
  %v3137 = vadd.f32 %v2968, %v3136
  %3138 = vmatmul.bf16.gmra.mxu0 %v1491
  %v3139 = vpop.f32.mrf.mxu0
  %v3140 = vadd.f32 %v2971, %v3139
  %v3141 = vpop.f32.mrf.mxu0
  %v3142 = vadd.f32 %v2973, %v3141
  %3143 = vmatmul.bf16.gmra.mxu0 %v1501
  %v3144 = vpop.f32.mrf.mxu0
  %v3145 = vadd.f32 %v2976, %v3144
  %v3146 = vpop.f32.mrf.mxu0
  %v3147 = vadd.f32 %v2978, %v3146
  %3148 = vmatmul.bf16.gmra.mxu0 %v1511
  %v3149 = vpop.f32.mrf.mxu0
  %v3150 = vadd.f32 %v2981, %v3149
  %v3151 = vpop.f32.mrf.mxu0
  %v3152 = vadd.f32 %v2983, %v3151
  %3153 = vmatmul.bf16.gmra.mxu0 %v1521
  %v3154 = vpop.f32.mrf.mxu0
  %v3155 = vadd.f32 %v2986, %v3154
  %v3156 = vpop.f32.mrf.mxu0
  %v3157 = vadd.f32 %v2988, %v3156
  %3158 = vmatmul.bf16.gmra.mxu0 %v1531
  %v3159 = vpop.f32.mrf.mxu0
  %v3160 = vadd.f32 %v2991, %v3159
  %v3161 = vpop.f32.mrf.mxu0
  %v3162 = vadd.f32 %v2993, %v3161
  %3163 = vmatmul.bf16.gmra.mxu0 %v1541
  %v3164 = vpop.f32.mrf.mxu0
  %v3165 = vadd.f32 %v2996, %v3164
  %v3166 = vpop.f32.mrf.mxu0
  %v3167 = vadd.f32 %v2998, %v3166
  %3168 = vmatmul.bf16.gmra.mxu0 %v1551
  %v3169 = vpop.f32.mrf.mxu0
  %v3170 = vadd.f32 %v3001, %v3169
  %v3171 = vpop.f32.mrf.mxu0
  %v3172 = vadd.f32 %v3003, %v3171
  %3173 = vmatmul.bf16.gmra.mxu0 %v1561
  %v3174 = vpop.f32.mrf.mxu0
  %v3175 = vadd.f32 %v3006, %v3174
  %v3176 = vpop.f32.mrf.mxu0
  %v3177 = vadd.f32 %v3008, %v3176
  %3178 = vmatmul.bf16.gmra.mxu0 %v1571
  %v3179 = vpop.f32.mrf.mxu0
  %v3180 = vadd.f32 %v3011, %v3179
  %v3181 = vpop.f32.mrf.mxu0
  %v3182 = vadd.f32 %v3013, %v3181
  %3183 = vmatmul.bf16.gmra.mxu0 %v1581
  %v3184 = vpop.f32.mrf.mxu0
  %v3185 = vadd.f32 %v3016, %v3184
  %v3186 = vpop.f32.mrf.mxu0
  %v3187 = vadd.f32 %v3018, %v3186
  %3188 = vmatmul.bf16.gmra.mxu0 %v1591
  %v3189 = vpop.f32.mrf.mxu0
  %v3190 = vadd.f32 %v3021, %v3189
  %v3191 = vpop.f32.mrf.mxu0
  %v3192 = vadd.f32 %v3023, %v3191
  %3193 = vmatmul.bf16.gmra.mxu0 %v1601
  %v3194 = vpop.f32.mrf.mxu0
  %v3195 = vadd.f32 %v3026, %v3194
  %v3196 = vpop.f32.mrf.mxu0
  %v3197 = vadd.f32 %v3028, %v3196
  %3198 = vmatmul.bf16.gmra.mxu0 %v1611
  %v3199 = vpop.f32.mrf.mxu0
  %v3200 = vadd.f32 %v3031, %v3199
  %v3201 = vpop.f32.mrf.mxu0
  %v3202 = vadd.f32 %v3033, %v3201
  %3203 = vmatmul.bf16.gmra.mxu0 %v1621
  %v3204 = vpop.f32.mrf.mxu0
  %v3205 = vadd.f32 %v3036, %v3204
  %v3206 = vpop.f32.mrf.mxu0
  %v3207 = vadd.f32 %v3038, %v3206
  %3208 = vmatmul.bf16.gmra.mxu0 %v1631
  %v3209 = vpop.f32.mrf.mxu0
  %v3210 = vadd.f32 %v3041, %v3209
  %v3211 = vpop.f32.mrf.mxu0
  %v3212 = vadd.f32 %v3043, %v3211
  %3213 = vmatmul.bf16.gmra.mxu0 %v1641
  %v3214 = vpop.f32.mrf.mxu0
  %v3215 = vadd.f32 %v3046, %v3214
  %v3216 = vpop.f32.mrf.mxu0
  %v3217 = vadd.f32 %v3048, %v3216
  %3218 = vmatmul.bf16.gmra.mxu0 %v1651
  %v3219 = vpop.f32.mrf.mxu0
  %v3220 = vadd.f32 %v3051, %v3219
  %v3221 = vpop.f32.mrf.mxu0
  %v3222 = vadd.f32 %v3053, %v3221
  %3223 = vmatmul.bf16.gmra.mxu0 %v1661
  %v3224 = vpop.f32.mrf.mxu0
  %v3225 = vadd.f32 %v3056, %v3224
  %v3226 = vpop.f32.mrf.mxu0
  %v3227 = vadd.f32 %v3058, %v3226
  %3228 = vmatmul.bf16.gmra.mxu0 %v1671
  %v3229 = vpop.f32.mrf.mxu0
  %v3230 = vadd.f32 %v3061, %v3229
  %v3231 = vpop.f32.mrf.mxu0
  %v3232 = vadd.f32 %v3063, %v3231
  %3233 = vmatmul.bf16.gmra.mxu0 %v1681
  %v3234 = vpop.f32.mrf.mxu0
  %v3235 = vadd.f32 %v3066, %v3234
  %v3236 = vpop.f32.mrf.mxu0
  %v3237 = vadd.f32 %v3068, %v3236
  %3238 = vmatmul.bf16.gmra.mxu0 %v1691
  %v3239 = vpop.f32.mrf.mxu0
  %v3240 = vadd.f32 %v3071, %v3239
  %v3241 = vpop.f32.mrf.mxu0
  %v3242 = vadd.f32 %v3073, %v3241
  %3243 = vmatmul.bf16.gmra.mxu0 %v1701
  %v3244 = vpop.f32.mrf.mxu0
  %v3245 = vadd.f32 %v3076, %v3244
  %v3246 = vpop.f32.mrf.mxu0
  %v3247 = vadd.f32 %v3078, %v3246
  %3248 = vmatmul.bf16.gmra.mxu0 %v1711
  %v3249 = vpop.f32.mrf.mxu0
  %v3250 = vadd.f32 %v3081, %v3249
  %v3251 = vpop.f32.mrf.mxu0
  %v3252 = vadd.f32 %v3083, %v3251
  %3253 = vmatmul.bf16.gmra.mxu0 %v1721
  %v3254 = vpop.f32.mrf.mxu0
  %v3255 = vadd.f32 %v3086, %v3254
  %v3256 = vpop.f32.mrf.mxu0
  %v3257 = vadd.f32 %v3088, %v3256
  %3258 = vmatmul.bf16.gmra.mxu0 %v1731
  %v3259 = vpop.f32.mrf.mxu0
  %v3260 = vadd.f32 %v3091, %v3259
  %v3261 = vpop.f32.mrf.mxu0
  %v3262 = vadd.f32 %v3093, %v3261
  %3263 = vmatmul.bf16.gmra.mxu0 %v1741
  %v3264 = vpop.f32.mrf.mxu0
  %v3265 = vadd.f32 %v3096, %v3264
  %v3266 = vpop.f32.mrf.mxu0
  %v3267 = vadd.f32 %v3098, %v3266
  %3268 = vmatmul.bf16.gmra.mxu0 %v1751
  %v3269 = vpop.f32.mrf.mxu0
  %v3270 = vadd.f32 %v3101, %v3269
  %v3271 = vpop.f32.mrf.mxu0
  %v3272 = vadd.f32 %v3103, %v3271
  %3273 = vmatmul.bf16.gmra.mxu0 %v1761
  %v3274 = vpop.f32.mrf.mxu0
  %v3275 = vadd.f32 %v3106, %v3274
  %v3276 = vpop.f32.mrf.mxu0
  %v3277 = vadd.f32 %v3108, %v3276
  %3278 = vdwg.mxu0
  %3279 = vmatpush.bf16.msra.mxu0 %v2395
  %3280 = vmatpush.bf16.msra.mxu0 %v2394
  %3281 = vmatpush.bf16.msra.mxu0 %v2393
  %3282 = vmatpush.bf16.msra.mxu0 %v2392
  %3283 = vmatpush.bf16.msra.mxu0 %v2391
  %3284 = vmatpush.bf16.msra.mxu0 %v2390
  %3285 = vmatpush.bf16.msra.mxu0 %v2389
  %3286 = vmatpush.bf16.msra.mxu0 %v2388
  %3287 = vmatmul.bf16.gmra.mxu0 %v1452
  %v3288 = vpop.f32.mrf.mxu0
  %v3289 = vadd.f32 %v3120, %v3288
  %v3290 = vpop.f32.mrf.mxu0
  %v3291 = vadd.f32 %v3122, %v3290
  %3292 = vmatmul.bf16.gmra.mxu0 %v1462
  %v3293 = vpop.f32.mrf.mxu0
  %v3294 = vadd.f32 %v3125, %v3293
  %v3295 = vpop.f32.mrf.mxu0
  %v3296 = vadd.f32 %v3127, %v3295
  %3297 = vmatmul.bf16.gmra.mxu0 %v1472
  %v3298 = vpop.f32.mrf.mxu0
  %v3299 = vadd.f32 %v3130, %v3298
  %v3300 = vpop.f32.mrf.mxu0
  %v3301 = vadd.f32 %v3132, %v3300
  %3302 = vmatmul.bf16.gmra.mxu0 %v1482
  %v3303 = vpop.f32.mrf.mxu0
  %v3304 = vadd.f32 %v3135, %v3303
  %v3305 = vpop.f32.mrf.mxu0
  %v3306 = vadd.f32 %v3137, %v3305
  %3307 = vmatmul.bf16.gmra.mxu0 %v1492
  %v3308 = vpop.f32.mrf.mxu0
  %v3309 = vadd.f32 %v3140, %v3308
  %v3310 = vpop.f32.mrf.mxu0
  %v3311 = vadd.f32 %v3142, %v3310
  %3312 = vmatmul.bf16.gmra.mxu0 %v1502
  %v3313 = vpop.f32.mrf.mxu0
  %v3314 = vadd.f32 %v3145, %v3313
  %v3315 = vpop.f32.mrf.mxu0
  %v3316 = vadd.f32 %v3147, %v3315
  %3317 = vmatmul.bf16.gmra.mxu0 %v1512
  %v3318 = vpop.f32.mrf.mxu0
  %v3319 = vadd.f32 %v3150, %v3318
  %v3320 = vpop.f32.mrf.mxu0
  %v3321 = vadd.f32 %v3152, %v3320
  %3322 = vmatmul.bf16.gmra.mxu0 %v1522
  %v3323 = vpop.f32.mrf.mxu0
  %v3324 = vadd.f32 %v3155, %v3323
  %v3325 = vpop.f32.mrf.mxu0
  %v3326 = vadd.f32 %v3157, %v3325
  %3327 = vmatmul.bf16.gmra.mxu0 %v1532
  %v3328 = vpop.f32.mrf.mxu0
  %v3329 = vadd.f32 %v3160, %v3328
  %v3330 = vpop.f32.mrf.mxu0
  %v3331 = vadd.f32 %v3162, %v3330
  %3332 = vmatmul.bf16.gmra.mxu0 %v1542
  %v3333 = vpop.f32.mrf.mxu0
  %v3334 = vadd.f32 %v3165, %v3333
  %v3335 = vpop.f32.mrf.mxu0
  %v3336 = vadd.f32 %v3167, %v3335
  %3337 = vmatmul.bf16.gmra.mxu0 %v1552
  %v3338 = vpop.f32.mrf.mxu0
  %v3339 = vadd.f32 %v3170, %v3338
  %v3340 = vpop.f32.mrf.mxu0
  %v3341 = vadd.f32 %v3172, %v3340
  %3342 = vmatmul.bf16.gmra.mxu0 %v1562
  %v3343 = vpop.f32.mrf.mxu0
  %v3344 = vadd.f32 %v3175, %v3343
  %v3345 = vpop.f32.mrf.mxu0
  %v3346 = vadd.f32 %v3177, %v3345
  %3347 = vmatmul.bf16.gmra.mxu0 %v1572
  %v3348 = vpop.f32.mrf.mxu0
  %v3349 = vadd.f32 %v3180, %v3348
  %v3350 = vpop.f32.mrf.mxu0
  %v3351 = vadd.f32 %v3182, %v3350
  %3352 = vmatmul.bf16.gmra.mxu0 %v1582
  %v3353 = vpop.f32.mrf.mxu0
  %v3354 = vadd.f32 %v3185, %v3353
  %v3355 = vpop.f32.mrf.mxu0
  %v3356 = vadd.f32 %v3187, %v3355
  %3357 = vmatmul.bf16.gmra.mxu0 %v1592
  %v3358 = vpop.f32.mrf.mxu0
  %v3359 = vadd.f32 %v3190, %v3358
  %v3360 = vpop.f32.mrf.mxu0
  %v3361 = vadd.f32 %v3192, %v3360
  %3362 = vmatmul.bf16.gmra.mxu0 %v1602
  %v3363 = vpop.f32.mrf.mxu0
  %v3364 = vadd.f32 %v3195, %v3363
  %v3365 = vpop.f32.mrf.mxu0
  %v3366 = vadd.f32 %v3197, %v3365
  %3367 = vmatmul.bf16.gmra.mxu0 %v1612
  %v3368 = vpop.f32.mrf.mxu0
  %v3369 = vadd.f32 %v3200, %v3368
  %v3370 = vpop.f32.mrf.mxu0
  %v3371 = vadd.f32 %v3202, %v3370
  %3372 = vmatmul.bf16.gmra.mxu0 %v1622
  %v3373 = vpop.f32.mrf.mxu0
  %v3374 = vadd.f32 %v3205, %v3373
  %v3375 = vpop.f32.mrf.mxu0
  %v3376 = vadd.f32 %v3207, %v3375
  %3377 = vmatmul.bf16.gmra.mxu0 %v1632
  %v3378 = vpop.f32.mrf.mxu0
  %v3379 = vadd.f32 %v3210, %v3378
  %v3380 = vpop.f32.mrf.mxu0
  %v3381 = vadd.f32 %v3212, %v3380
  %3382 = vmatmul.bf16.gmra.mxu0 %v1642
  %v3383 = vpop.f32.mrf.mxu0
  %v3384 = vadd.f32 %v3215, %v3383
  %v3385 = vpop.f32.mrf.mxu0
  %v3386 = vadd.f32 %v3217, %v3385
  %3387 = vmatmul.bf16.gmra.mxu0 %v1652
  %v3388 = vpop.f32.mrf.mxu0
  %v3389 = vadd.f32 %v3220, %v3388
  %v3390 = vpop.f32.mrf.mxu0
  %v3391 = vadd.f32 %v3222, %v3390
  %3392 = vmatmul.bf16.gmra.mxu0 %v1662
  %v3393 = vpop.f32.mrf.mxu0
  %v3394 = vadd.f32 %v3225, %v3393
  %v3395 = vpop.f32.mrf.mxu0
  %v3396 = vadd.f32 %v3227, %v3395
  %3397 = vmatmul.bf16.gmra.mxu0 %v1672
  %v3398 = vpop.f32.mrf.mxu0
  %v3399 = vadd.f32 %v3230, %v3398
  %v3400 = vpop.f32.mrf.mxu0
  %v3401 = vadd.f32 %v3232, %v3400
  %3402 = vmatmul.bf16.gmra.mxu0 %v1682
  %v3403 = vpop.f32.mrf.mxu0
  %v3404 = vadd.f32 %v3235, %v3403
  %v3405 = vpop.f32.mrf.mxu0
  %v3406 = vadd.f32 %v3237, %v3405
  %3407 = vmatmul.bf16.gmra.mxu0 %v1692
  %v3408 = vpop.f32.mrf.mxu0
  %v3409 = vadd.f32 %v3240, %v3408
  %v3410 = vpop.f32.mrf.mxu0
  %v3411 = vadd.f32 %v3242, %v3410
  %3412 = vmatmul.bf16.gmra.mxu0 %v1702
  %v3413 = vpop.f32.mrf.mxu0
  %v3414 = vadd.f32 %v3245, %v3413
  %v3415 = vpop.f32.mrf.mxu0
  %v3416 = vadd.f32 %v3247, %v3415
  %3417 = vmatmul.bf16.gmra.mxu0 %v1712
  %v3418 = vpop.f32.mrf.mxu0
  %v3419 = vadd.f32 %v3250, %v3418
  %v3420 = vpop.f32.mrf.mxu0
  %v3421 = vadd.f32 %v3252, %v3420
  %3422 = vmatmul.bf16.gmra.mxu0 %v1722
  %v3423 = vpop.f32.mrf.mxu0
  %v3424 = vadd.f32 %v3255, %v3423
  %v3425 = vpop.f32.mrf.mxu0
  %v3426 = vadd.f32 %v3257, %v3425
  %3427 = vmatmul.bf16.gmra.mxu0 %v1732
  %v3428 = vpop.f32.mrf.mxu0
  %v3429 = vadd.f32 %v3260, %v3428
  %v3430 = vpop.f32.mrf.mxu0
  %v3431 = vadd.f32 %v3262, %v3430
  %3432 = vmatmul.bf16.gmra.mxu0 %v1742
  %v3433 = vpop.f32.mrf.mxu0
  %v3434 = vadd.f32 %v3265, %v3433
  %v3435 = vpop.f32.mrf.mxu0
  %v3436 = vadd.f32 %v3267, %v3435
  %3437 = vmatmul.bf16.gmra.mxu0 %v1752
  %v3438 = vpop.f32.mrf.mxu0
  %v3439 = vadd.f32 %v3270, %v3438
  %v3440 = vpop.f32.mrf.mxu0
  %v3441 = vadd.f32 %v3272, %v3440
  %3442 = vmatmul.bf16.gmra.mxu0 %v1762
  %v3443 = vpop.f32.mrf.mxu0
  %v3444 = vadd.f32 %v3275, %v3443
  %v3445 = vpop.f32.mrf.mxu0
  %v3446 = vadd.f32 %v3277, %v3445
  %3447 = vdwg.mxu0
  %3448 = vmatpush.bf16.msra.mxu0 %v2403
  %3449 = vmatpush.bf16.msra.mxu0 %v2402
  %3450 = vmatpush.bf16.msra.mxu0 %v2401
  %3451 = vmatpush.bf16.msra.mxu0 %v2400
  %3452 = vmatpush.bf16.msra.mxu0 %v2399
  %3453 = vmatpush.bf16.msra.mxu0 %v2398
  %3454 = vmatpush.bf16.msra.mxu0 %v2397
  %3455 = vmatpush.bf16.msra.mxu0 %v2396
  %3456 = vmatmul.bf16.gmra.mxu0 %v1453
  %v3457 = vpop.f32.mrf.mxu0
  %v3458 = vadd.f32 %v3289, %v3457
  %v3459 = vpop.f32.mrf.mxu0
  %v3460 = vadd.f32 %v3291, %v3459
  %3461 = vmatmul.bf16.gmra.mxu0 %v1463
  %v3462 = vpop.f32.mrf.mxu0
  %v3463 = vadd.f32 %v3294, %v3462
  %v3464 = vpop.f32.mrf.mxu0
  %v3465 = vadd.f32 %v3296, %v3464
  %3466 = vmatmul.bf16.gmra.mxu0 %v1473
  %v3467 = vpop.f32.mrf.mxu0
  %v3468 = vadd.f32 %v3299, %v3467
  %v3469 = vpop.f32.mrf.mxu0
  %v3470 = vadd.f32 %v3301, %v3469
  %3471 = vmatmul.bf16.gmra.mxu0 %v1483
  %v3472 = vpop.f32.mrf.mxu0
  %v3473 = vadd.f32 %v3304, %v3472
  %v3474 = vpop.f32.mrf.mxu0
  %v3475 = vadd.f32 %v3306, %v3474
  %3476 = vmatmul.bf16.gmra.mxu0 %v1493
  %v3477 = vpop.f32.mrf.mxu0
  %v3478 = vadd.f32 %v3309, %v3477
  %v3479 = vpop.f32.mrf.mxu0
  %v3480 = vadd.f32 %v3311, %v3479
  %3481 = vmatmul.bf16.gmra.mxu0 %v1503
  %v3482 = vpop.f32.mrf.mxu0
  %v3483 = vadd.f32 %v3314, %v3482
  %v3484 = vpop.f32.mrf.mxu0
  %v3485 = vadd.f32 %v3316, %v3484
  %3486 = vmatmul.bf16.gmra.mxu0 %v1513
  %v3487 = vpop.f32.mrf.mxu0
  %v3488 = vadd.f32 %v3319, %v3487
  %v3489 = vpop.f32.mrf.mxu0
  %v3490 = vadd.f32 %v3321, %v3489
  %3491 = vmatmul.bf16.gmra.mxu0 %v1523
  %v3492 = vpop.f32.mrf.mxu0
  %v3493 = vadd.f32 %v3324, %v3492
  %v3494 = vpop.f32.mrf.mxu0
  %v3495 = vadd.f32 %v3326, %v3494
  %3496 = vmatmul.bf16.gmra.mxu0 %v1533
  %v3497 = vpop.f32.mrf.mxu0
  %v3498 = vadd.f32 %v3329, %v3497
  %v3499 = vpop.f32.mrf.mxu0
  %v3500 = vadd.f32 %v3331, %v3499
  %3501 = vmatmul.bf16.gmra.mxu0 %v1543
  %v3502 = vpop.f32.mrf.mxu0
  %v3503 = vadd.f32 %v3334, %v3502
  %v3504 = vpop.f32.mrf.mxu0
  %v3505 = vadd.f32 %v3336, %v3504
  %3506 = vmatmul.bf16.gmra.mxu0 %v1553
  %v3507 = vpop.f32.mrf.mxu0
  %v3508 = vadd.f32 %v3339, %v3507
  %v3509 = vpop.f32.mrf.mxu0
  %v3510 = vadd.f32 %v3341, %v3509
  %3511 = vmatmul.bf16.gmra.mxu0 %v1563
  %v3512 = vpop.f32.mrf.mxu0
  %v3513 = vadd.f32 %v3344, %v3512
  %v3514 = vpop.f32.mrf.mxu0
  %v3515 = vadd.f32 %v3346, %v3514
  %3516 = vmatmul.bf16.gmra.mxu0 %v1573
  %v3517 = vpop.f32.mrf.mxu0
  %v3518 = vadd.f32 %v3349, %v3517
  %v3519 = vpop.f32.mrf.mxu0
  %v3520 = vadd.f32 %v3351, %v3519
  %3521 = vmatmul.bf16.gmra.mxu0 %v1583
  %v3522 = vpop.f32.mrf.mxu0
  %v3523 = vadd.f32 %v3354, %v3522
  %v3524 = vpop.f32.mrf.mxu0
  %v3525 = vadd.f32 %v3356, %v3524
  %3526 = vmatmul.bf16.gmra.mxu0 %v1593
  %v3527 = vpop.f32.mrf.mxu0
  %v3528 = vadd.f32 %v3359, %v3527
  %v3529 = vpop.f32.mrf.mxu0
  %v3530 = vadd.f32 %v3361, %v3529
  %3531 = vmatmul.bf16.gmra.mxu0 %v1603
  %v3532 = vpop.f32.mrf.mxu0
  %v3533 = vadd.f32 %v3364, %v3532
  %v3534 = vpop.f32.mrf.mxu0
  %v3535 = vadd.f32 %v3366, %v3534
  %3536 = vmatmul.bf16.gmra.mxu0 %v1613
  %v3537 = vpop.f32.mrf.mxu0
  %v3538 = vadd.f32 %v3369, %v3537
  %v3539 = vpop.f32.mrf.mxu0
  %v3540 = vadd.f32 %v3371, %v3539
  %3541 = vmatmul.bf16.gmra.mxu0 %v1623
  %v3542 = vpop.f32.mrf.mxu0
  %v3543 = vadd.f32 %v3374, %v3542
  %v3544 = vpop.f32.mrf.mxu0
  %v3545 = vadd.f32 %v3376, %v3544
  %3546 = vmatmul.bf16.gmra.mxu0 %v1633
  %v3547 = vpop.f32.mrf.mxu0
  %v3548 = vadd.f32 %v3379, %v3547
  %v3549 = vpop.f32.mrf.mxu0
  %v3550 = vadd.f32 %v3381, %v3549
  %3551 = vmatmul.bf16.gmra.mxu0 %v1643
  %v3552 = vpop.f32.mrf.mxu0
  %v3553 = vadd.f32 %v3384, %v3552
  %v3554 = vpop.f32.mrf.mxu0
  %v3555 = vadd.f32 %v3386, %v3554
  %3556 = vmatmul.bf16.gmra.mxu0 %v1653
  %v3557 = vpop.f32.mrf.mxu0
  %v3558 = vadd.f32 %v3389, %v3557
  %v3559 = vpop.f32.mrf.mxu0
  %v3560 = vadd.f32 %v3391, %v3559
  %3561 = vmatmul.bf16.gmra.mxu0 %v1663
  %v3562 = vpop.f32.mrf.mxu0
  %v3563 = vadd.f32 %v3394, %v3562
  %v3564 = vpop.f32.mrf.mxu0
  %v3565 = vadd.f32 %v3396, %v3564
  %3566 = vmatmul.bf16.gmra.mxu0 %v1673
  %v3567 = vpop.f32.mrf.mxu0
  %v3568 = vadd.f32 %v3399, %v3567
  %v3569 = vpop.f32.mrf.mxu0
  %v3570 = vadd.f32 %v3401, %v3569
  %3571 = vmatmul.bf16.gmra.mxu0 %v1683
  %v3572 = vpop.f32.mrf.mxu0
  %v3573 = vadd.f32 %v3404, %v3572
  %v3574 = vpop.f32.mrf.mxu0
  %v3575 = vadd.f32 %v3406, %v3574
  %3576 = vmatmul.bf16.gmra.mxu0 %v1693
  %v3577 = vpop.f32.mrf.mxu0
  %v3578 = vadd.f32 %v3409, %v3577
  %v3579 = vpop.f32.mrf.mxu0
  %v3580 = vadd.f32 %v3411, %v3579
  %3581 = vmatmul.bf16.gmra.mxu0 %v1703
  %v3582 = vpop.f32.mrf.mxu0
  %v3583 = vadd.f32 %v3414, %v3582
  %v3584 = vpop.f32.mrf.mxu0
  %v3585 = vadd.f32 %v3416, %v3584
  %3586 = vmatmul.bf16.gmra.mxu0 %v1713
  %v3587 = vpop.f32.mrf.mxu0
  %v3588 = vadd.f32 %v3419, %v3587
  %v3589 = vpop.f32.mrf.mxu0
  %v3590 = vadd.f32 %v3421, %v3589
  %3591 = vmatmul.bf16.gmra.mxu0 %v1723
  %v3592 = vpop.f32.mrf.mxu0
  %v3593 = vadd.f32 %v3424, %v3592
  %v3594 = vpop.f32.mrf.mxu0
  %v3595 = vadd.f32 %v3426, %v3594
  %3596 = vmatmul.bf16.gmra.mxu0 %v1733
  %v3597 = vpop.f32.mrf.mxu0
  %v3598 = vadd.f32 %v3429, %v3597
  %v3599 = vpop.f32.mrf.mxu0
  %v3600 = vadd.f32 %v3431, %v3599
  %3601 = vmatmul.bf16.gmra.mxu0 %v1743
  %v3602 = vpop.f32.mrf.mxu0
  %v3603 = vadd.f32 %v3434, %v3602
  %v3604 = vpop.f32.mrf.mxu0
  %v3605 = vadd.f32 %v3436, %v3604
  %3606 = vmatmul.bf16.gmra.mxu0 %v1753
  %v3607 = vpop.f32.mrf.mxu0
  %v3608 = vadd.f32 %v3439, %v3607
  %v3609 = vpop.f32.mrf.mxu0
  %v3610 = vadd.f32 %v3441, %v3609
  %3611 = vmatmul.bf16.gmra.mxu0 %v1763
  %v3612 = vpop.f32.mrf.mxu0
  %v3613 = vadd.f32 %v3444, %v3612
  %v3614 = vpop.f32.mrf.mxu0
  %v3615 = vadd.f32 %v3446, %v3614
  %3616 = vdwg.mxu0
  %3617 = vmatpush.bf16.msra.mxu0 %v2411
  %3618 = vmatpush.bf16.msra.mxu0 %v2410
  %3619 = vmatpush.bf16.msra.mxu0 %v2409
  %3620 = vmatpush.bf16.msra.mxu0 %v2408
  %3621 = vmatpush.bf16.msra.mxu0 %v2407
  %3622 = vmatpush.bf16.msra.mxu0 %v2406
  %3623 = vmatpush.bf16.msra.mxu0 %v2405
  %3624 = vmatpush.bf16.msra.mxu0 %v2404
  %3625 = vmatmul.bf16.gmra.mxu0 %v1454
  %v3626 = vpop.f32.mrf.mxu0
  %v3627 = vadd.f32 %v3458, %v3626
  %v3628 = vpop.f32.mrf.mxu0
  %v3629 = vadd.f32 %v3460, %v3628
  %3630 = vmatmul.bf16.gmra.mxu0 %v1464
  %v3631 = vpop.f32.mrf.mxu0
  %v3632 = vadd.f32 %v3463, %v3631
  %v3633 = vpop.f32.mrf.mxu0
  %v3634 = vadd.f32 %v3465, %v3633
  %3635 = vmatmul.bf16.gmra.mxu0 %v1474
  %v3636 = vpop.f32.mrf.mxu0
  %v3637 = vadd.f32 %v3468, %v3636
  %v3638 = vpop.f32.mrf.mxu0
  %v3639 = vadd.f32 %v3470, %v3638
  %3640 = vmatmul.bf16.gmra.mxu0 %v1484
  %v3641 = vpop.f32.mrf.mxu0
  %v3642 = vadd.f32 %v3473, %v3641
  %v3643 = vpop.f32.mrf.mxu0
  %v3644 = vadd.f32 %v3475, %v3643
  %3645 = vmatmul.bf16.gmra.mxu0 %v1494
  %v3646 = vpop.f32.mrf.mxu0
  %v3647 = vadd.f32 %v3478, %v3646
  %v3648 = vpop.f32.mrf.mxu0
  %v3649 = vadd.f32 %v3480, %v3648
  %3650 = vmatmul.bf16.gmra.mxu0 %v1504
  %v3651 = vpop.f32.mrf.mxu0
  %v3652 = vadd.f32 %v3483, %v3651
  %v3653 = vpop.f32.mrf.mxu0
  %v3654 = vadd.f32 %v3485, %v3653
  %3655 = vmatmul.bf16.gmra.mxu0 %v1514
  %v3656 = vpop.f32.mrf.mxu0
  %v3657 = vadd.f32 %v3488, %v3656
  %v3658 = vpop.f32.mrf.mxu0
  %v3659 = vadd.f32 %v3490, %v3658
  %3660 = vmatmul.bf16.gmra.mxu0 %v1524
  %v3661 = vpop.f32.mrf.mxu0
  %v3662 = vadd.f32 %v3493, %v3661
  %v3663 = vpop.f32.mrf.mxu0
  %v3664 = vadd.f32 %v3495, %v3663
  %3665 = vmatmul.bf16.gmra.mxu0 %v1534
  %v3666 = vpop.f32.mrf.mxu0
  %v3667 = vadd.f32 %v3498, %v3666
  %v3668 = vpop.f32.mrf.mxu0
  %v3669 = vadd.f32 %v3500, %v3668
  %3670 = vmatmul.bf16.gmra.mxu0 %v1544
  %v3671 = vpop.f32.mrf.mxu0
  %v3672 = vadd.f32 %v3503, %v3671
  %v3673 = vpop.f32.mrf.mxu0
  %v3674 = vadd.f32 %v3505, %v3673
  %3675 = vmatmul.bf16.gmra.mxu0 %v1554
  %v3676 = vpop.f32.mrf.mxu0
  %v3677 = vadd.f32 %v3508, %v3676
  %v3678 = vpop.f32.mrf.mxu0
  %v3679 = vadd.f32 %v3510, %v3678
  %3680 = vmatmul.bf16.gmra.mxu0 %v1564
  %v3681 = vpop.f32.mrf.mxu0
  %v3682 = vadd.f32 %v3513, %v3681
  %v3683 = vpop.f32.mrf.mxu0
  %v3684 = vadd.f32 %v3515, %v3683
  %3685 = vmatmul.bf16.gmra.mxu0 %v1574
  %v3686 = vpop.f32.mrf.mxu0
  %v3687 = vadd.f32 %v3518, %v3686
  %v3688 = vpop.f32.mrf.mxu0
  %v3689 = vadd.f32 %v3520, %v3688
  %3690 = vmatmul.bf16.gmra.mxu0 %v1584
  %v3691 = vpop.f32.mrf.mxu0
  %v3692 = vadd.f32 %v3523, %v3691
  %v3693 = vpop.f32.mrf.mxu0
  %v3694 = vadd.f32 %v3525, %v3693
  %3695 = vmatmul.bf16.gmra.mxu0 %v1594
  %v3696 = vpop.f32.mrf.mxu0
  %v3697 = vadd.f32 %v3528, %v3696
  %v3698 = vpop.f32.mrf.mxu0
  %v3699 = vadd.f32 %v3530, %v3698
  %3700 = vmatmul.bf16.gmra.mxu0 %v1604
  %v3701 = vpop.f32.mrf.mxu0
  %v3702 = vadd.f32 %v3533, %v3701
  %v3703 = vpop.f32.mrf.mxu0
  %v3704 = vadd.f32 %v3535, %v3703
  %3705 = vmatmul.bf16.gmra.mxu0 %v1614
  %v3706 = vpop.f32.mrf.mxu0
  %v3707 = vadd.f32 %v3538, %v3706
  %v3708 = vpop.f32.mrf.mxu0
  %v3709 = vadd.f32 %v3540, %v3708
  %3710 = vmatmul.bf16.gmra.mxu0 %v1624
  %v3711 = vpop.f32.mrf.mxu0
  %v3712 = vadd.f32 %v3543, %v3711
  %v3713 = vpop.f32.mrf.mxu0
  %v3714 = vadd.f32 %v3545, %v3713
  %3715 = vmatmul.bf16.gmra.mxu0 %v1634
  %v3716 = vpop.f32.mrf.mxu0
  %v3717 = vadd.f32 %v3548, %v3716
  %v3718 = vpop.f32.mrf.mxu0
  %v3719 = vadd.f32 %v3550, %v3718
  %3720 = vmatmul.bf16.gmra.mxu0 %v1644
  %v3721 = vpop.f32.mrf.mxu0
  %v3722 = vadd.f32 %v3553, %v3721
  %v3723 = vpop.f32.mrf.mxu0
  %v3724 = vadd.f32 %v3555, %v3723
  %3725 = vmatmul.bf16.gmra.mxu0 %v1654
  %v3726 = vpop.f32.mrf.mxu0
  %v3727 = vadd.f32 %v3558, %v3726
  %v3728 = vpop.f32.mrf.mxu0
  %v3729 = vadd.f32 %v3560, %v3728
  %3730 = vmatmul.bf16.gmra.mxu0 %v1664
  %v3731 = vpop.f32.mrf.mxu0
  %v3732 = vadd.f32 %v3563, %v3731
  %v3733 = vpop.f32.mrf.mxu0
  %v3734 = vadd.f32 %v3565, %v3733
  %3735 = vmatmul.bf16.gmra.mxu0 %v1674
  %v3736 = vpop.f32.mrf.mxu0
  %v3737 = vadd.f32 %v3568, %v3736
  %v3738 = vpop.f32.mrf.mxu0
  %v3739 = vadd.f32 %v3570, %v3738
  %3740 = vmatmul.bf16.gmra.mxu0 %v1684
  %v3741 = vpop.f32.mrf.mxu0
  %v3742 = vadd.f32 %v3573, %v3741
  %v3743 = vpop.f32.mrf.mxu0
  %v3744 = vadd.f32 %v3575, %v3743
  %3745 = vmatmul.bf16.gmra.mxu0 %v1694
  %v3746 = vpop.f32.mrf.mxu0
  %v3747 = vadd.f32 %v3578, %v3746
  %v3748 = vpop.f32.mrf.mxu0
  %v3749 = vadd.f32 %v3580, %v3748
  %3750 = vmatmul.bf16.gmra.mxu0 %v1704
  %v3751 = vpop.f32.mrf.mxu0
  %v3752 = vadd.f32 %v3583, %v3751
  %v3753 = vpop.f32.mrf.mxu0
  %v3754 = vadd.f32 %v3585, %v3753
  %3755 = vmatmul.bf16.gmra.mxu0 %v1714
  %v3756 = vpop.f32.mrf.mxu0
  %v3757 = vadd.f32 %v3588, %v3756
  %v3758 = vpop.f32.mrf.mxu0
  %v3759 = vadd.f32 %v3590, %v3758
  %3760 = vmatmul.bf16.gmra.mxu0 %v1724
  %v3761 = vpop.f32.mrf.mxu0
  %v3762 = vadd.f32 %v3593, %v3761
  %v3763 = vpop.f32.mrf.mxu0
  %v3764 = vadd.f32 %v3595, %v3763
  %3765 = vmatmul.bf16.gmra.mxu0 %v1734
  %v3766 = vpop.f32.mrf.mxu0
  %v3767 = vadd.f32 %v3598, %v3766
  %v3768 = vpop.f32.mrf.mxu0
  %v3769 = vadd.f32 %v3600, %v3768
  %3770 = vmatmul.bf16.gmra.mxu0 %v1744
  %v3771 = vpop.f32.mrf.mxu0
  %v3772 = vadd.f32 %v3603, %v3771
  %v3773 = vpop.f32.mrf.mxu0
  %v3774 = vadd.f32 %v3605, %v3773
  %3775 = vmatmul.bf16.gmra.mxu0 %v1754
  %v3776 = vpop.f32.mrf.mxu0
  %v3777 = vadd.f32 %v3608, %v3776
  %v3778 = vpop.f32.mrf.mxu0
  %v3779 = vadd.f32 %v3610, %v3778
  %3780 = vmatmul.bf16.gmra.mxu0 %v1764
  %v3781 = vpop.f32.mrf.mxu0
  %v3782 = vadd.f32 %v3613, %v3781
  %v3783 = vpop.f32.mrf.mxu0
  %v3784 = vadd.f32 %v3615, %v3783
  %3785 = vdwg.mxu0
  %3786 = vmatpush.bf16.msra.mxu0 %v2419
  %3787 = vmatpush.bf16.msra.mxu0 %v2418
  %3788 = vmatpush.bf16.msra.mxu0 %v2417
  %3789 = vmatpush.bf16.msra.mxu0 %v2416
  %3790 = vmatpush.bf16.msra.mxu0 %v2415
  %3791 = vmatpush.bf16.msra.mxu0 %v2414
  %3792 = vmatpush.bf16.msra.mxu0 %v2413
  %3793 = vmatpush.bf16.msra.mxu0 %v2412
  %3794 = vmatmul.bf16.gmra.mxu0 %v1455
  %v3795 = vpop.f32.mrf.mxu0
  %v3796 = vadd.f32 %v3627, %v3795
  %v3797 = vpop.f32.mrf.mxu0
  %v3798 = vadd.f32 %v3629, %v3797
  %3799 = vmatmul.bf16.gmra.mxu0 %v1465
  %v3800 = vpop.f32.mrf.mxu0
  %v3801 = vadd.f32 %v3632, %v3800
  %v3802 = vpop.f32.mrf.mxu0
  %v3803 = vadd.f32 %v3634, %v3802
  %3804 = vmatmul.bf16.gmra.mxu0 %v1475
  %v3805 = vpop.f32.mrf.mxu0
  %v3806 = vadd.f32 %v3637, %v3805
  %v3807 = vpop.f32.mrf.mxu0
  %v3808 = vadd.f32 %v3639, %v3807
  %3809 = vmatmul.bf16.gmra.mxu0 %v1485
  %v3810 = vpop.f32.mrf.mxu0
  %v3811 = vadd.f32 %v3642, %v3810
  %v3812 = vpop.f32.mrf.mxu0
  %v3813 = vadd.f32 %v3644, %v3812
  %3814 = vmatmul.bf16.gmra.mxu0 %v1495
  %v3815 = vpop.f32.mrf.mxu0
  %v3816 = vadd.f32 %v3647, %v3815
  %v3817 = vpop.f32.mrf.mxu0
  %v3818 = vadd.f32 %v3649, %v3817
  %3819 = vmatmul.bf16.gmra.mxu0 %v1505
  %v3820 = vpop.f32.mrf.mxu0
  %v3821 = vadd.f32 %v3652, %v3820
  %v3822 = vpop.f32.mrf.mxu0
  %v3823 = vadd.f32 %v3654, %v3822
  %3824 = vmatmul.bf16.gmra.mxu0 %v1515
  %v3825 = vpop.f32.mrf.mxu0
  %v3826 = vadd.f32 %v3657, %v3825
  %v3827 = vpop.f32.mrf.mxu0
  %v3828 = vadd.f32 %v3659, %v3827
  %3829 = vmatmul.bf16.gmra.mxu0 %v1525
  %v3830 = vpop.f32.mrf.mxu0
  %v3831 = vadd.f32 %v3662, %v3830
  %v3832 = vpop.f32.mrf.mxu0
  %v3833 = vadd.f32 %v3664, %v3832
  %3834 = vmatmul.bf16.gmra.mxu0 %v1535
  %v3835 = vpop.f32.mrf.mxu0
  %v3836 = vadd.f32 %v3667, %v3835
  %v3837 = vpop.f32.mrf.mxu0
  %v3838 = vadd.f32 %v3669, %v3837
  %3839 = vmatmul.bf16.gmra.mxu0 %v1545
  %v3840 = vpop.f32.mrf.mxu0
  %v3841 = vadd.f32 %v3672, %v3840
  %v3842 = vpop.f32.mrf.mxu0
  %v3843 = vadd.f32 %v3674, %v3842
  %3844 = vmatmul.bf16.gmra.mxu0 %v1555
  %v3845 = vpop.f32.mrf.mxu0
  %v3846 = vadd.f32 %v3677, %v3845
  %v3847 = vpop.f32.mrf.mxu0
  %v3848 = vadd.f32 %v3679, %v3847
  %3849 = vmatmul.bf16.gmra.mxu0 %v1565
  %v3850 = vpop.f32.mrf.mxu0
  %v3851 = vadd.f32 %v3682, %v3850
  %v3852 = vpop.f32.mrf.mxu0
  %v3853 = vadd.f32 %v3684, %v3852
  %3854 = vmatmul.bf16.gmra.mxu0 %v1575
  %v3855 = vpop.f32.mrf.mxu0
  %v3856 = vadd.f32 %v3687, %v3855
  %v3857 = vpop.f32.mrf.mxu0
  %v3858 = vadd.f32 %v3689, %v3857
  %3859 = vmatmul.bf16.gmra.mxu0 %v1585
  %v3860 = vpop.f32.mrf.mxu0
  %v3861 = vadd.f32 %v3692, %v3860
  %v3862 = vpop.f32.mrf.mxu0
  %v3863 = vadd.f32 %v3694, %v3862
  %3864 = vmatmul.bf16.gmra.mxu0 %v1595
  %v3865 = vpop.f32.mrf.mxu0
  %v3866 = vadd.f32 %v3697, %v3865
  %v3867 = vpop.f32.mrf.mxu0
  %v3868 = vadd.f32 %v3699, %v3867
  %3869 = vmatmul.bf16.gmra.mxu0 %v1605
  %v3870 = vpop.f32.mrf.mxu0
  %v3871 = vadd.f32 %v3702, %v3870
  %v3872 = vpop.f32.mrf.mxu0
  %v3873 = vadd.f32 %v3704, %v3872
  %3874 = vmatmul.bf16.gmra.mxu0 %v1615
  %v3875 = vpop.f32.mrf.mxu0
  %v3876 = vadd.f32 %v3707, %v3875
  %v3877 = vpop.f32.mrf.mxu0
  %v3878 = vadd.f32 %v3709, %v3877
  %3879 = vmatmul.bf16.gmra.mxu0 %v1625
  %v3880 = vpop.f32.mrf.mxu0
  %v3881 = vadd.f32 %v3712, %v3880
  %v3882 = vpop.f32.mrf.mxu0
  %v3883 = vadd.f32 %v3714, %v3882
  %3884 = vmatmul.bf16.gmra.mxu0 %v1635
  %v3885 = vpop.f32.mrf.mxu0
  %v3886 = vadd.f32 %v3717, %v3885
  %v3887 = vpop.f32.mrf.mxu0
  %v3888 = vadd.f32 %v3719, %v3887
  %3889 = vmatmul.bf16.gmra.mxu0 %v1645
  %v3890 = vpop.f32.mrf.mxu0
  %v3891 = vadd.f32 %v3722, %v3890
  %v3892 = vpop.f32.mrf.mxu0
  %v3893 = vadd.f32 %v3724, %v3892
  %3894 = vmatmul.bf16.gmra.mxu0 %v1655
  %v3895 = vpop.f32.mrf.mxu0
  %v3896 = vadd.f32 %v3727, %v3895
  %v3897 = vpop.f32.mrf.mxu0
  %v3898 = vadd.f32 %v3729, %v3897
  %3899 = vmatmul.bf16.gmra.mxu0 %v1665
  %v3900 = vpop.f32.mrf.mxu0
  %v3901 = vadd.f32 %v3732, %v3900
  %v3902 = vpop.f32.mrf.mxu0
  %v3903 = vadd.f32 %v3734, %v3902
  %3904 = vmatmul.bf16.gmra.mxu0 %v1675
  %v3905 = vpop.f32.mrf.mxu0
  %v3906 = vadd.f32 %v3737, %v3905
  %v3907 = vpop.f32.mrf.mxu0
  %v3908 = vadd.f32 %v3739, %v3907
  %3909 = vmatmul.bf16.gmra.mxu0 %v1685
  %v3910 = vpop.f32.mrf.mxu0
  %v3911 = vadd.f32 %v3742, %v3910
  %v3912 = vpop.f32.mrf.mxu0
  %v3913 = vadd.f32 %v3744, %v3912
  %3914 = vmatmul.bf16.gmra.mxu0 %v1695
  %v3915 = vpop.f32.mrf.mxu0
  %v3916 = vadd.f32 %v3747, %v3915
  %v3917 = vpop.f32.mrf.mxu0
  %v3918 = vadd.f32 %v3749, %v3917
  %3919 = vmatmul.bf16.gmra.mxu0 %v1705
  %v3920 = vpop.f32.mrf.mxu0
  %v3921 = vadd.f32 %v3752, %v3920
  %v3922 = vpop.f32.mrf.mxu0
  %v3923 = vadd.f32 %v3754, %v3922
  %3924 = vmatmul.bf16.gmra.mxu0 %v1715
  %v3925 = vpop.f32.mrf.mxu0
  %v3926 = vadd.f32 %v3757, %v3925
  %v3927 = vpop.f32.mrf.mxu0
  %v3928 = vadd.f32 %v3759, %v3927
  %3929 = vmatmul.bf16.gmra.mxu0 %v1725
  %v3930 = vpop.f32.mrf.mxu0
  %v3931 = vadd.f32 %v3762, %v3930
  %v3932 = vpop.f32.mrf.mxu0
  %v3933 = vadd.f32 %v3764, %v3932
  %3934 = vmatmul.bf16.gmra.mxu0 %v1735
  %v3935 = vpop.f32.mrf.mxu0
  %v3936 = vadd.f32 %v3767, %v3935
  %v3937 = vpop.f32.mrf.mxu0
  %v3938 = vadd.f32 %v3769, %v3937
  %3939 = vmatmul.bf16.gmra.mxu0 %v1745
  %v3940 = vpop.f32.mrf.mxu0
  %v3941 = vadd.f32 %v3772, %v3940
  %v3942 = vpop.f32.mrf.mxu0
  %v3943 = vadd.f32 %v3774, %v3942
  %3944 = vmatmul.bf16.gmra.mxu0 %v1755
  %v3945 = vpop.f32.mrf.mxu0
  %v3946 = vadd.f32 %v3777, %v3945
  %v3947 = vpop.f32.mrf.mxu0
  %v3948 = vadd.f32 %v3779, %v3947
  %3949 = vmatmul.bf16.gmra.mxu0 %v1765
  %v3950 = vpop.f32.mrf.mxu0
  %v3951 = vadd.f32 %v3782, %v3950
  %v3952 = vpop.f32.mrf.mxu0
  %v3953 = vadd.f32 %v3784, %v3952
  %3954 = vdwg.mxu0
  %3955 = vmatpush.bf16.msra.mxu0 %v2427
  %3956 = vmatpush.bf16.msra.mxu0 %v2426
  %3957 = vmatpush.bf16.msra.mxu0 %v2425
  %3958 = vmatpush.bf16.msra.mxu0 %v2424
  %3959 = vmatpush.bf16.msra.mxu0 %v2423
  %3960 = vmatpush.bf16.msra.mxu0 %v2422
  %3961 = vmatpush.bf16.msra.mxu0 %v2421
  %3962 = vmatpush.bf16.msra.mxu0 %v2420
  %3963 = vmatmul.bf16.gmra.mxu0 %v1456
  %v3964 = vpop.f32.mrf.mxu0
  %v3965 = vadd.f32 %v3796, %v3964
  %v3966 = vpop.f32.mrf.mxu0
  %v3967 = vadd.f32 %v3798, %v3966
  %3968 = vmatmul.bf16.gmra.mxu0 %v1466
  %v3969 = vpop.f32.mrf.mxu0
  %v3970 = vadd.f32 %v3801, %v3969
  %v3971 = vpop.f32.mrf.mxu0
  %v3972 = vadd.f32 %v3803, %v3971
  %3973 = vmatmul.bf16.gmra.mxu0 %v1476
  %v3974 = vpop.f32.mrf.mxu0
  %v3975 = vadd.f32 %v3806, %v3974
  %v3976 = vpop.f32.mrf.mxu0
  %v3977 = vadd.f32 %v3808, %v3976
  %3978 = vmatmul.bf16.gmra.mxu0 %v1486
  %v3979 = vpop.f32.mrf.mxu0
  %v3980 = vadd.f32 %v3811, %v3979
  %v3981 = vpop.f32.mrf.mxu0
  %v3982 = vadd.f32 %v3813, %v3981
  %3983 = vmatmul.bf16.gmra.mxu0 %v1496
  %v3984 = vpop.f32.mrf.mxu0
  %v3985 = vadd.f32 %v3816, %v3984
  %v3986 = vpop.f32.mrf.mxu0
  %v3987 = vadd.f32 %v3818, %v3986
  %3988 = vmatmul.bf16.gmra.mxu0 %v1506
  %v3989 = vpop.f32.mrf.mxu0
  %v3990 = vadd.f32 %v3821, %v3989
  %v3991 = vpop.f32.mrf.mxu0
  %v3992 = vadd.f32 %v3823, %v3991
  %3993 = vmatmul.bf16.gmra.mxu0 %v1516
  %v3994 = vpop.f32.mrf.mxu0
  %v3995 = vadd.f32 %v3826, %v3994
  %v3996 = vpop.f32.mrf.mxu0
  %v3997 = vadd.f32 %v3828, %v3996
  %3998 = vmatmul.bf16.gmra.mxu0 %v1526
  %v3999 = vpop.f32.mrf.mxu0
  %v4000 = vadd.f32 %v3831, %v3999
  %v4001 = vpop.f32.mrf.mxu0
  %v4002 = vadd.f32 %v3833, %v4001
  %4003 = vmatmul.bf16.gmra.mxu0 %v1536
  %v4004 = vpop.f32.mrf.mxu0
  %v4005 = vadd.f32 %v3836, %v4004
  %v4006 = vpop.f32.mrf.mxu0
  %v4007 = vadd.f32 %v3838, %v4006
  %4008 = vmatmul.bf16.gmra.mxu0 %v1546
  %v4009 = vpop.f32.mrf.mxu0
  %v4010 = vadd.f32 %v3841, %v4009
  %v4011 = vpop.f32.mrf.mxu0
  %v4012 = vadd.f32 %v3843, %v4011
  %4013 = vmatmul.bf16.gmra.mxu0 %v1556
  %v4014 = vpop.f32.mrf.mxu0
  %v4015 = vadd.f32 %v3846, %v4014
  %v4016 = vpop.f32.mrf.mxu0
  %v4017 = vadd.f32 %v3848, %v4016
  %4018 = vmatmul.bf16.gmra.mxu0 %v1566
  %v4019 = vpop.f32.mrf.mxu0
  %v4020 = vadd.f32 %v3851, %v4019
  %v4021 = vpop.f32.mrf.mxu0
  %v4022 = vadd.f32 %v3853, %v4021
  %4023 = vmatmul.bf16.gmra.mxu0 %v1576
  %v4024 = vpop.f32.mrf.mxu0
  %v4025 = vadd.f32 %v3856, %v4024
  %v4026 = vpop.f32.mrf.mxu0
  %v4027 = vadd.f32 %v3858, %v4026
  %4028 = vmatmul.bf16.gmra.mxu0 %v1586
  %v4029 = vpop.f32.mrf.mxu0
  %v4030 = vadd.f32 %v3861, %v4029
  %v4031 = vpop.f32.mrf.mxu0
  %v4032 = vadd.f32 %v3863, %v4031
  %4033 = vmatmul.bf16.gmra.mxu0 %v1596
  %v4034 = vpop.f32.mrf.mxu0
  %v4035 = vadd.f32 %v3866, %v4034
  %v4036 = vpop.f32.mrf.mxu0
  %v4037 = vadd.f32 %v3868, %v4036
  %4038 = vmatmul.bf16.gmra.mxu0 %v1606
  %v4039 = vpop.f32.mrf.mxu0
  %v4040 = vadd.f32 %v3871, %v4039
  %v4041 = vpop.f32.mrf.mxu0
  %v4042 = vadd.f32 %v3873, %v4041
  %4043 = vmatmul.bf16.gmra.mxu0 %v1616
  %v4044 = vpop.f32.mrf.mxu0
  %v4045 = vadd.f32 %v3876, %v4044
  %v4046 = vpop.f32.mrf.mxu0
  %v4047 = vadd.f32 %v3878, %v4046
  %4048 = vmatmul.bf16.gmra.mxu0 %v1626
  %v4049 = vpop.f32.mrf.mxu0
  %v4050 = vadd.f32 %v3881, %v4049
  %v4051 = vpop.f32.mrf.mxu0
  %v4052 = vadd.f32 %v3883, %v4051
  %4053 = vmatmul.bf16.gmra.mxu0 %v1636
  %v4054 = vpop.f32.mrf.mxu0
  %v4055 = vadd.f32 %v3886, %v4054
  %v4056 = vpop.f32.mrf.mxu0
  %v4057 = vadd.f32 %v3888, %v4056
  %4058 = vmatmul.bf16.gmra.mxu0 %v1646
  %v4059 = vpop.f32.mrf.mxu0
  %v4060 = vadd.f32 %v3891, %v4059
  %v4061 = vpop.f32.mrf.mxu0
  %v4062 = vadd.f32 %v3893, %v4061
  %4063 = vmatmul.bf16.gmra.mxu0 %v1656
  %v4064 = vpop.f32.mrf.mxu0
  %v4065 = vadd.f32 %v3896, %v4064
  %v4066 = vpop.f32.mrf.mxu0
  %v4067 = vadd.f32 %v3898, %v4066
  %4068 = vmatmul.bf16.gmra.mxu0 %v1666
  %v4069 = vpop.f32.mrf.mxu0
  %v4070 = vadd.f32 %v3901, %v4069
  %v4071 = vpop.f32.mrf.mxu0
  %v4072 = vadd.f32 %v3903, %v4071
  %4073 = vmatmul.bf16.gmra.mxu0 %v1676
  %v4074 = vpop.f32.mrf.mxu0
  %v4075 = vadd.f32 %v3906, %v4074
  %v4076 = vpop.f32.mrf.mxu0
  %v4077 = vadd.f32 %v3908, %v4076
  %4078 = vmatmul.bf16.gmra.mxu0 %v1686
  %v4079 = vpop.f32.mrf.mxu0
  %v4080 = vadd.f32 %v3911, %v4079
  %v4081 = vpop.f32.mrf.mxu0
  %v4082 = vadd.f32 %v3913, %v4081
  %4083 = vmatmul.bf16.gmra.mxu0 %v1696
  %v4084 = vpop.f32.mrf.mxu0
  %v4085 = vadd.f32 %v3916, %v4084
  %v4086 = vpop.f32.mrf.mxu0
  %v4087 = vadd.f32 %v3918, %v4086
  %4088 = vmatmul.bf16.gmra.mxu0 %v1706
  %v4089 = vpop.f32.mrf.mxu0
  %v4090 = vadd.f32 %v3921, %v4089
  %v4091 = vpop.f32.mrf.mxu0
  %v4092 = vadd.f32 %v3923, %v4091
  %4093 = vmatmul.bf16.gmra.mxu0 %v1716
  %v4094 = vpop.f32.mrf.mxu0
  %v4095 = vadd.f32 %v3926, %v4094
  %v4096 = vpop.f32.mrf.mxu0
  %v4097 = vadd.f32 %v3928, %v4096
  %4098 = vmatmul.bf16.gmra.mxu0 %v1726
  %v4099 = vpop.f32.mrf.mxu0
  %v4100 = vadd.f32 %v3931, %v4099
  %v4101 = vpop.f32.mrf.mxu0
  %v4102 = vadd.f32 %v3933, %v4101
  %4103 = vmatmul.bf16.gmra.mxu0 %v1736
  %v4104 = vpop.f32.mrf.mxu0
  %v4105 = vadd.f32 %v3936, %v4104
  %v4106 = vpop.f32.mrf.mxu0
  %v4107 = vadd.f32 %v3938, %v4106
  %4108 = vmatmul.bf16.gmra.mxu0 %v1746
  %v4109 = vpop.f32.mrf.mxu0
  %v4110 = vadd.f32 %v3941, %v4109
  %v4111 = vpop.f32.mrf.mxu0
  %v4112 = vadd.f32 %v3943, %v4111
  %4113 = vmatmul.bf16.gmra.mxu0 %v1756
  %v4114 = vpop.f32.mrf.mxu0
  %v4115 = vadd.f32 %v3946, %v4114
  %v4116 = vpop.f32.mrf.mxu0
  %v4117 = vadd.f32 %v3948, %v4116
  %4118 = vmatmul.bf16.gmra.mxu0 %v1766
  %v4119 = vpop.f32.mrf.mxu0
  %v4120 = vadd.f32 %v3951, %v4119
  %v4121 = vpop.f32.mrf.mxu0
  %v4122 = vadd.f32 %v3953, %v4121
  %4123 = vdwg.mxu0
  %4124 = vmatpush.bf16.msra.mxu0 0
  %4125 = vmatpush.bf16.msra.mxu0 0
  %4126 = vmatpush.bf16.msra.mxu0 0
  %4127 = vmatpush.bf16.msra.mxu0 0
  %4128 = vmatpush.bf16.msra.mxu0 0
  %4129 = vmatpush.bf16.msra.mxu0 %v2430
  %4130 = vmatpush.bf16.msra.mxu0 %v2429
  %4131 = vmatpush.bf16.msra.mxu0 %v2428
  %4132 = vmatmul.bf16.gmra.mxu0 %v2508
  %v4133 = vpop.f32.mrf.mxu0
  %v4134 = vadd.f32 %v3965, %v4133
  %v4135 = vpop.f32.mrf.mxu0
  %v4136 = vadd.f32 %v3967, %v4135
  %4137 = vmatmul.bf16.gmra.mxu0 %v2511
  %v4138 = vpop.f32.mrf.mxu0
  %v4139 = vadd.f32 %v3970, %v4138
  %v4140 = vpop.f32.mrf.mxu0
  %v4141 = vadd.f32 %v3972, %v4140
  %4142 = vmatmul.bf16.gmra.mxu0 %v2514
  %v4143 = vpop.f32.mrf.mxu0
  %v4144 = vadd.f32 %v3975, %v4143
  %v4145 = vpop.f32.mrf.mxu0
  %v4146 = vadd.f32 %v3977, %v4145
  %4147 = vmatmul.bf16.gmra.mxu0 %v2517
  %v4148 = vpop.f32.mrf.mxu0
  %v4149 = vadd.f32 %v3980, %v4148
  %v4150 = vpop.f32.mrf.mxu0
  %v4151 = vadd.f32 %v3982, %v4150
  %4152 = vmatmul.bf16.gmra.mxu0 %v2520
  %v4153 = vpop.f32.mrf.mxu0
  %v4154 = vadd.f32 %v3985, %v4153
  %v4155 = vpop.f32.mrf.mxu0
  %v4156 = vadd.f32 %v3987, %v4155
  %4157 = vmatmul.bf16.gmra.mxu0 %v2523
  %v4158 = vpop.f32.mrf.mxu0
  %v4159 = vadd.f32 %v3990, %v4158
  %v4160 = vpop.f32.mrf.mxu0
  %v4161 = vadd.f32 %v3992, %v4160
  %4162 = vmatmul.bf16.gmra.mxu0 %v2526
  %v4163 = vpop.f32.mrf.mxu0
  %v4164 = vadd.f32 %v3995, %v4163
  %v4165 = vpop.f32.mrf.mxu0
  %v4166 = vadd.f32 %v3997, %v4165
  %4167 = vmatmul.bf16.gmra.mxu0 %v2529
  %v4168 = vpop.f32.mrf.mxu0
  %v4169 = vadd.f32 %v4000, %v4168
  %v4170 = vpop.f32.mrf.mxu0
  %v4171 = vadd.f32 %v4002, %v4170
  %4172 = vmatmul.bf16.gmra.mxu0 %v2532
  %v4173 = vpop.f32.mrf.mxu0
  %v4174 = vadd.f32 %v4005, %v4173
  %v4175 = vpop.f32.mrf.mxu0
  %v4176 = vadd.f32 %v4007, %v4175
  %4177 = vmatmul.bf16.gmra.mxu0 %v2535
  %v4178 = vpop.f32.mrf.mxu0
  %v4179 = vadd.f32 %v4010, %v4178
  %v4180 = vpop.f32.mrf.mxu0
  %v4181 = vadd.f32 %v4012, %v4180
  %4182 = vmatmul.bf16.gmra.mxu0 %v2538
  %v4183 = vpop.f32.mrf.mxu0
  %v4184 = vadd.f32 %v4015, %v4183
  %v4185 = vpop.f32.mrf.mxu0
  %v4186 = vadd.f32 %v4017, %v4185
  %4187 = vmatmul.bf16.gmra.mxu0 %v2541
  %v4188 = vpop.f32.mrf.mxu0
  %v4189 = vadd.f32 %v4020, %v4188
  %v4190 = vpop.f32.mrf.mxu0
  %v4191 = vadd.f32 %v4022, %v4190
  %4192 = vmatmul.bf16.gmra.mxu0 %v2544
  %v4193 = vpop.f32.mrf.mxu0
  %v4194 = vadd.f32 %v4025, %v4193
  %v4195 = vpop.f32.mrf.mxu0
  %v4196 = vadd.f32 %v4027, %v4195
  %4197 = vmatmul.bf16.gmra.mxu0 %v2547
  %v4198 = vpop.f32.mrf.mxu0
  %v4199 = vadd.f32 %v4030, %v4198
  %v4200 = vpop.f32.mrf.mxu0
  %v4201 = vadd.f32 %v4032, %v4200
  %4202 = vmatmul.bf16.gmra.mxu0 %v2550
  %v4203 = vpop.f32.mrf.mxu0
  %v4204 = vadd.f32 %v4035, %v4203
  %v4205 = vpop.f32.mrf.mxu0
  %v4206 = vadd.f32 %v4037, %v4205
  %4207 = vmatmul.bf16.gmra.mxu0 %v2553
  %v4208 = vpop.f32.mrf.mxu0
  %v4209 = vadd.f32 %v4040, %v4208
  %v4210 = vpop.f32.mrf.mxu0
  %v4211 = vadd.f32 %v4042, %v4210
  %4212 = vmatmul.bf16.gmra.mxu0 %v2556
  %v4213 = vpop.f32.mrf.mxu0
  %v4214 = vadd.f32 %v4045, %v4213
  %v4215 = vpop.f32.mrf.mxu0
  %v4216 = vadd.f32 %v4047, %v4215
  %4217 = vmatmul.bf16.gmra.mxu0 %v2559
  %v4218 = vpop.f32.mrf.mxu0
  %v4219 = vadd.f32 %v4050, %v4218
  %v4220 = vpop.f32.mrf.mxu0
  %v4221 = vadd.f32 %v4052, %v4220
  %4222 = vmatmul.bf16.gmra.mxu0 %v2562
  %v4223 = vpop.f32.mrf.mxu0
  %v4224 = vadd.f32 %v4055, %v4223
  %v4225 = vpop.f32.mrf.mxu0
  %v4226 = vadd.f32 %v4057, %v4225
  %4227 = vmatmul.bf16.gmra.mxu0 %v2565
  %v4228 = vpop.f32.mrf.mxu0
  %v4229 = vadd.f32 %v4060, %v4228
  %v4230 = vpop.f32.mrf.mxu0
  %v4231 = vadd.f32 %v4062, %v4230
  %4232 = vmatmul.bf16.gmra.mxu0 %v2568
  %v4233 = vpop.f32.mrf.mxu0
  %v4234 = vadd.f32 %v4065, %v4233
  %v4235 = vpop.f32.mrf.mxu0
  %v4236 = vadd.f32 %v4067, %v4235
  %4237 = vmatmul.bf16.gmra.mxu0 %v2571
  %v4238 = vpop.f32.mrf.mxu0
  %v4239 = vadd.f32 %v4070, %v4238
  %v4240 = vpop.f32.mrf.mxu0
  %v4241 = vadd.f32 %v4072, %v4240
  %4242 = vmatmul.bf16.gmra.mxu0 %v2574
  %v4243 = vpop.f32.mrf.mxu0
  %v4244 = vadd.f32 %v4075, %v4243
  %v4245 = vpop.f32.mrf.mxu0
  %v4246 = vadd.f32 %v4077, %v4245
  %4247 = vmatmul.bf16.gmra.mxu0 %v2577
  %v4248 = vpop.f32.mrf.mxu0
  %v4249 = vadd.f32 %v4080, %v4248
  %v4250 = vpop.f32.mrf.mxu0
  %v4251 = vadd.f32 %v4082, %v4250
  %4252 = vmatmul.bf16.gmra.mxu0 %v2580
  %v4253 = vpop.f32.mrf.mxu0
  %v4254 = vadd.f32 %v4085, %v4253
  %v4255 = vpop.f32.mrf.mxu0
  %v4256 = vadd.f32 %v4087, %v4255
  %4257 = vmatmul.bf16.gmra.mxu0 %v2583
  %v4258 = vpop.f32.mrf.mxu0
  %v4259 = vadd.f32 %v4090, %v4258
  %v4260 = vpop.f32.mrf.mxu0
  %v4261 = vadd.f32 %v4092, %v4260
  %4262 = vmatmul.bf16.gmra.mxu0 %v2586
  %v4263 = vpop.f32.mrf.mxu0
  %v4264 = vadd.f32 %v4095, %v4263
  %v4265 = vpop.f32.mrf.mxu0
  %v4266 = vadd.f32 %v4097, %v4265
  %4267 = vmatmul.bf16.gmra.mxu0 %v2589
  %v4268 = vpop.f32.mrf.mxu0
  %v4269 = vadd.f32 %v4100, %v4268
  %v4270 = vpop.f32.mrf.mxu0
  %v4271 = vadd.f32 %v4102, %v4270
  %4272 = vmatmul.bf16.gmra.mxu0 %v2592
  %v4273 = vpop.f32.mrf.mxu0
  %v4274 = vadd.f32 %v4105, %v4273
  %v4275 = vpop.f32.mrf.mxu0
  %v4276 = vadd.f32 %v4107, %v4275
  %4277 = vmatmul.bf16.gmra.mxu0 %v2595
  %v4278 = vpop.f32.mrf.mxu0
  %v4279 = vadd.f32 %v4110, %v4278
  %v4280 = vpop.f32.mrf.mxu0
  %v4281 = vadd.f32 %v4112, %v4280
  %4282 = vmatmul.bf16.gmra.mxu0 %v2598
  %v4283 = vpop.f32.mrf.mxu0
  %v4284 = vadd.f32 %v4115, %v4283
  %v4285 = vpop.f32.mrf.mxu0
  %v4286 = vadd.f32 %v4117, %v4285
  %4287 = vmatmul.bf16.gmra.mxu0 %v2601
  %v4288 = vpop.f32.mrf.mxu0
  %v4289 = vadd.f32 %v4120, %v4288
  %v4290 = vpop.f32.mrf.mxu0
  %v4291 = vadd.f32 %v4122, %v4290
  %4292 = vdwg.mxu0
  %vm4293 = vcmask 523264
  %v4294 = vsel %vm4293, %v4134, 0.0
  %v4295 = vsel %vm4293, %v4136, 0.0
  %v4296 = vadd.f32 %v4294, %v4295
  %v4297 = vsel %vm4293, %v4139, 0.0
  %v4298 = vadd.f32 %v4296, %v4297
  %v4299 = vsel %vm4293, %v4141, 0.0
  %v4300 = vadd.f32 %v4298, %v4299
  %v4301 = vsel %vm4293, %v4144, 0.0
  %v4302 = vadd.f32 %v4300, %v4301
  %v4303 = vsel %vm4293, %v4146, 0.0
  %v4304 = vadd.f32 %v4302, %v4303
  %v4305 = vsel %vm4293, %v4149, 0.0
  %v4306 = vadd.f32 %v4304, %v4305
  %v4307 = vsel %vm4293, %v4151, 0.0
  %v4308 = vadd.f32 %v4306, %v4307
  %v4309 = vsel %vm4293, %v4154, 0.0
  %v4310 = vadd.f32 %v4308, %v4309
  %v4311 = vsel %vm4293, %v4156, 0.0
  %v4312 = vadd.f32 %v4310, %v4311
  %v4313 = vsel %vm4293, %v4159, 0.0
  %v4314 = vadd.f32 %v4312, %v4313
  %v4315 = vsel %vm4293, %v4161, 0.0
  %v4316 = vadd.f32 %v4314, %v4315
  %v4317 = vsel %vm4293, %v4164, 0.0
  %v4318 = vadd.f32 %v4316, %v4317
  %v4319 = vsel %vm4293, %v4166, 0.0
  %v4320 = vadd.f32 %v4318, %v4319
  %v4321 = vsel %vm4293, %v4169, 0.0
  %v4322 = vadd.f32 %v4320, %v4321
  %v4323 = vsel %vm4293, %v4171, 0.0
  %v4324 = vadd.f32 %v4322, %v4323
  %v4325 = vsel %vm4293, %v4174, 0.0
  %v4326 = vadd.f32 %v4324, %v4325
  %v4327 = vsel %vm4293, %v4176, 0.0
  %v4328 = vadd.f32 %v4326, %v4327
  %v4329 = vsel %vm4293, %v4179, 0.0
  %v4330 = vadd.f32 %v4328, %v4329
  %v4331 = vsel %vm4293, %v4181, 0.0
  %v4332 = vadd.f32 %v4330, %v4331
  %v4333 = vsel %vm4293, %v4184, 0.0
  %v4334 = vadd.f32 %v4332, %v4333
  %v4335 = vsel %vm4293, %v4186, 0.0
  %v4336 = vadd.f32 %v4334, %v4335
  %v4337 = vsel %vm4293, %v4189, 0.0
  %v4338 = vadd.f32 %v4336, %v4337
  %v4339 = vsel %vm4293, %v4191, 0.0
  %v4340 = vadd.f32 %v4338, %v4339
  %v4341 = vsel %vm4293, %v4194, 0.0
  %v4342 = vadd.f32 %v4340, %v4341
  %v4343 = vsel %vm4293, %v4196, 0.0
  %v4344 = vadd.f32 %v4342, %v4343
  %v4345 = vsel %vm4293, %v4199, 0.0
  %v4346 = vadd.f32 %v4344, %v4345
  %v4347 = vsel %vm4293, %v4201, 0.0
  %v4348 = vadd.f32 %v4346, %v4347
  %v4349 = vsel %vm4293, %v4204, 0.0
  %v4350 = vadd.f32 %v4348, %v4349
  %v4351 = vsel %vm4293, %v4206, 0.0
  %v4352 = vadd.f32 %v4350, %v4351
  %v4353 = vsel %vm4293, %v4209, 0.0
  %v4354 = vadd.f32 %v4352, %v4353
  %v4355 = vsel %vm4293, %v4211, 0.0
  %v4356 = vadd.f32 %v4354, %v4355
  %v4357 = vsel %vm4293, %v4214, 0.0
  %v4358 = vadd.f32 %v4356, %v4357
  %v4359 = vsel %vm4293, %v4216, 0.0
  %v4360 = vadd.f32 %v4358, %v4359
  %v4361 = vsel %vm4293, %v4219, 0.0
  %v4362 = vadd.f32 %v4360, %v4361
  %v4363 = vsel %vm4293, %v4221, 0.0
  %v4364 = vadd.f32 %v4362, %v4363
  %v4365 = vsel %vm4293, %v4224, 0.0
  %v4366 = vadd.f32 %v4364, %v4365
  %v4367 = vsel %vm4293, %v4226, 0.0
  %v4368 = vadd.f32 %v4366, %v4367
  %v4369 = vsel %vm4293, %v4229, 0.0
  %v4370 = vadd.f32 %v4368, %v4369
  %v4371 = vsel %vm4293, %v4231, 0.0
  %v4372 = vadd.f32 %v4370, %v4371
  %v4373 = vsel %vm4293, %v4234, 0.0
  %v4374 = vadd.f32 %v4372, %v4373
  %v4375 = vsel %vm4293, %v4236, 0.0
  %v4376 = vadd.f32 %v4374, %v4375
  %v4377 = vsel %vm4293, %v4239, 0.0
  %v4378 = vadd.f32 %v4376, %v4377
  %v4379 = vsel %vm4293, %v4241, 0.0
  %v4380 = vadd.f32 %v4378, %v4379
  %v4381 = vsel %vm4293, %v4244, 0.0
  %v4382 = vadd.f32 %v4380, %v4381
  %v4383 = vsel %vm4293, %v4246, 0.0
  %v4384 = vadd.f32 %v4382, %v4383
  %v4385 = vsel %vm4293, %v4249, 0.0
  %v4386 = vadd.f32 %v4384, %v4385
  %v4387 = vsel %vm4293, %v4251, 0.0
  %v4388 = vadd.f32 %v4386, %v4387
  %v4389 = vsel %vm4293, %v4254, 0.0
  %v4390 = vadd.f32 %v4388, %v4389
  %v4391 = vsel %vm4293, %v4256, 0.0
  %v4392 = vadd.f32 %v4390, %v4391
  %v4393 = vsel %vm4293, %v4259, 0.0
  %v4394 = vadd.f32 %v4392, %v4393
  %v4395 = vsel %vm4293, %v4261, 0.0
  %v4396 = vadd.f32 %v4394, %v4395
  %v4397 = vsel %vm4293, %v4264, 0.0
  %v4398 = vadd.f32 %v4396, %v4397
  %v4399 = vsel %vm4293, %v4266, 0.0
  %v4400 = vadd.f32 %v4398, %v4399
  %v4401 = vsel %vm4293, %v4269, 0.0
  %v4402 = vadd.f32 %v4400, %v4401
  %v4403 = vsel %vm4293, %v4271, 0.0
  %v4404 = vadd.f32 %v4402, %v4403
  %v4405 = vsel %vm4293, %v4274, 0.0
  %v4406 = vadd.f32 %v4404, %v4405
  %v4407 = vsel %vm4293, %v4276, 0.0
  %v4408 = vadd.f32 %v4406, %v4407
  %v4409 = vsel %vm4293, %v4279, 0.0
  %v4410 = vadd.f32 %v4408, %v4409
  %v4411 = vsel %vm4293, %v4281, 0.0
  %v4412 = vadd.f32 %v4410, %v4411
  %v4413 = vsel %vm4293, %v4284, 0.0
  %v4414 = vadd.f32 %v4412, %v4413
  %v4415 = vsel %vm4293, %v4286, 0.0
  %v4416 = vadd.f32 %v4414, %v4415
  %v4417 = vsel %vm4293, %v4289, 0.0
  %v4418 = vadd.f32 %v4416, %v4417
  %v4419 = vsel %vm4293, %v4291, 0.0
  %v4420 = vadd.f32 %v4418, %v4419
  %v4421 = vrot.slane %v4420, 4
  %v4422 = vadd.f32 %v4420, %v4421
  %v4423 = vrot.slane %v4422, 2
  %v4424 = vadd.f32 %v4422, %v4423
  %v4425 = vrot.slane %v4424, 1
  %v4426 = vadd.f32 %v4424, %v4425
  %v4427 = vmul.f32 %v4426, 0.001953125
  %v4428 = vsub.f32 %v4134, %v4427
  %v4429 = vsub.f32 %v4136, %v4427
  %v4430 = vsub.f32 %v4139, %v4427
  %v4431 = vsub.f32 %v4141, %v4427
  %v4432 = vsub.f32 %v4144, %v4427
  %v4433 = vsub.f32 %v4146, %v4427
  %v4434 = vsub.f32 %v4149, %v4427
  %v4435 = vsub.f32 %v4151, %v4427
  %v4436 = vsub.f32 %v4154, %v4427
  %v4437 = vsub.f32 %v4156, %v4427
  %v4438 = vsub.f32 %v4159, %v4427
  %v4439 = vsub.f32 %v4161, %v4427
  %v4440 = vsub.f32 %v4164, %v4427
  %v4441 = vsub.f32 %v4166, %v4427
  %v4442 = vsub.f32 %v4169, %v4427
  %v4443 = vsub.f32 %v4171, %v4427
  %v4444 = vsub.f32 %v4174, %v4427
  %v4445 = vsub.f32 %v4176, %v4427
  %v4446 = vsub.f32 %v4179, %v4427
  %v4447 = vsub.f32 %v4181, %v4427
  %v4448 = vsub.f32 %v4184, %v4427
  %v4449 = vsub.f32 %v4186, %v4427
  %v4450 = vsub.f32 %v4189, %v4427
  %v4451 = vsub.f32 %v4191, %v4427
  %v4452 = vsub.f32 %v4194, %v4427
  %v4453 = vsub.f32 %v4196, %v4427
  %v4454 = vsub.f32 %v4199, %v4427
  %v4455 = vsub.f32 %v4201, %v4427
  %v4456 = vsub.f32 %v4204, %v4427
  %v4457 = vsub.f32 %v4206, %v4427
  %v4458 = vsub.f32 %v4209, %v4427
  %v4459 = vsub.f32 %v4211, %v4427
  %v4460 = vsub.f32 %v4214, %v4427
  %v4461 = vsub.f32 %v4216, %v4427
  %v4462 = vsub.f32 %v4219, %v4427
  %v4463 = vsub.f32 %v4221, %v4427
  %v4464 = vsub.f32 %v4224, %v4427
  %v4465 = vsub.f32 %v4226, %v4427
  %v4466 = vsub.f32 %v4229, %v4427
  %v4467 = vsub.f32 %v4231, %v4427
  %v4468 = vsub.f32 %v4234, %v4427
  %v4469 = vsub.f32 %v4236, %v4427
  %v4470 = vsub.f32 %v4239, %v4427
  %v4471 = vsub.f32 %v4241, %v4427
  %v4472 = vsub.f32 %v4244, %v4427
  %v4473 = vsub.f32 %v4246, %v4427
  %v4474 = vsub.f32 %v4249, %v4427
  %v4475 = vsub.f32 %v4251, %v4427
  %v4476 = vsub.f32 %v4254, %v4427
  %v4477 = vsub.f32 %v4256, %v4427
  %v4478 = vsub.f32 %v4259, %v4427
  %v4479 = vsub.f32 %v4261, %v4427
  %v4480 = vsub.f32 %v4264, %v4427
  %v4481 = vsub.f32 %v4266, %v4427
  %v4482 = vsub.f32 %v4269, %v4427
  %v4483 = vsub.f32 %v4271, %v4427
  %v4484 = vsub.f32 %v4274, %v4427
  %v4485 = vsub.f32 %v4276, %v4427
  %v4486 = vsub.f32 %v4279, %v4427
  %v4487 = vsub.f32 %v4281, %v4427
  %v4488 = vsub.f32 %v4284, %v4427
  %v4489 = vsub.f32 %v4286, %v4427
  %v4490 = vsub.f32 %v4289, %v4427
  %v4491 = vsub.f32 %v4291, %v4427
  %v4492 = vmul.f32 %v4428, %v4428
  %v4493 = vmul.f32 %v4429, %v4429
  %v4494 = vmul.f32 %v4430, %v4430
  %v4495 = vmul.f32 %v4431, %v4431
  %v4496 = vmul.f32 %v4432, %v4432
  %v4497 = vmul.f32 %v4433, %v4433
  %v4498 = vmul.f32 %v4434, %v4434
  %v4499 = vmul.f32 %v4435, %v4435
  %v4500 = vmul.f32 %v4436, %v4436
  %v4501 = vmul.f32 %v4437, %v4437
  %v4502 = vmul.f32 %v4438, %v4438
  %v4503 = vmul.f32 %v4439, %v4439
  %v4504 = vmul.f32 %v4440, %v4440
  %v4505 = vmul.f32 %v4441, %v4441
  %v4506 = vmul.f32 %v4442, %v4442
  %v4507 = vmul.f32 %v4443, %v4443
  %v4508 = vmul.f32 %v4444, %v4444
  %v4509 = vmul.f32 %v4445, %v4445
  %v4510 = vmul.f32 %v4446, %v4446
  %v4511 = vmul.f32 %v4447, %v4447
  %v4512 = vmul.f32 %v4448, %v4448
  %v4513 = vmul.f32 %v4449, %v4449
  %v4514 = vmul.f32 %v4450, %v4450
  %v4515 = vmul.f32 %v4451, %v4451
  %v4516 = vmul.f32 %v4452, %v4452
  %v4517 = vmul.f32 %v4453, %v4453
  %v4518 = vmul.f32 %v4454, %v4454
  %v4519 = vmul.f32 %v4455, %v4455
  %v4520 = vmul.f32 %v4456, %v4456
  %v4521 = vmul.f32 %v4457, %v4457
  %v4522 = vmul.f32 %v4458, %v4458
  %v4523 = vmul.f32 %v4459, %v4459
  %v4524 = vmul.f32 %v4460, %v4460
  %v4525 = vmul.f32 %v4461, %v4461
  %v4526 = vmul.f32 %v4462, %v4462
  %v4527 = vmul.f32 %v4463, %v4463
  %v4528 = vmul.f32 %v4464, %v4464
  %v4529 = vmul.f32 %v4465, %v4465
  %v4530 = vmul.f32 %v4466, %v4466
  %v4531 = vmul.f32 %v4467, %v4467
  %v4532 = vmul.f32 %v4468, %v4468
  %v4533 = vmul.f32 %v4469, %v4469
  %v4534 = vmul.f32 %v4470, %v4470
  %v4535 = vmul.f32 %v4471, %v4471
  %v4536 = vmul.f32 %v4472, %v4472
  %v4537 = vmul.f32 %v4473, %v4473
  %v4538 = vmul.f32 %v4474, %v4474
  %v4539 = vmul.f32 %v4475, %v4475
  %v4540 = vmul.f32 %v4476, %v4476
  %v4541 = vmul.f32 %v4477, %v4477
  %v4542 = vmul.f32 %v4478, %v4478
  %v4543 = vmul.f32 %v4479, %v4479
  %v4544 = vmul.f32 %v4480, %v4480
  %v4545 = vmul.f32 %v4481, %v4481
  %v4546 = vmul.f32 %v4482, %v4482
  %v4547 = vmul.f32 %v4483, %v4483
  %v4548 = vmul.f32 %v4484, %v4484
  %v4549 = vmul.f32 %v4485, %v4485
  %v4550 = vmul.f32 %v4486, %v4486
  %v4551 = vmul.f32 %v4487, %v4487
  %v4552 = vmul.f32 %v4488, %v4488
  %v4553 = vmul.f32 %v4489, %v4489
  %v4554 = vmul.f32 %v4490, %v4490
  %v4555 = vmul.f32 %v4491, %v4491
  %v4556 = vsel %vm4293, %v4492, 0.0
  %v4557 = vsel %vm4293, %v4493, 0.0
  %v4558 = vadd.f32 %v4556, %v4557
  %v4559 = vsel %vm4293, %v4494, 0.0
  %v4560 = vadd.f32 %v4558, %v4559
  %v4561 = vsel %vm4293, %v4495, 0.0
  %v4562 = vadd.f32 %v4560, %v4561
  %v4563 = vsel %vm4293, %v4496, 0.0
  %v4564 = vadd.f32 %v4562, %v4563
  %v4565 = vsel %vm4293, %v4497, 0.0
  %v4566 = vadd.f32 %v4564, %v4565
  %v4567 = vsel %vm4293, %v4498, 0.0
  %v4568 = vadd.f32 %v4566, %v4567
  %v4569 = vsel %vm4293, %v4499, 0.0
  %v4570 = vadd.f32 %v4568, %v4569
  %v4571 = vsel %vm4293, %v4500, 0.0
  %v4572 = vadd.f32 %v4570, %v4571
  %v4573 = vsel %vm4293, %v4501, 0.0
  %v4574 = vadd.f32 %v4572, %v4573
  %v4575 = vsel %vm4293, %v4502, 0.0
  %v4576 = vadd.f32 %v4574, %v4575
  %v4577 = vsel %vm4293, %v4503, 0.0
  %v4578 = vadd.f32 %v4576, %v4577
  %v4579 = vsel %vm4293, %v4504, 0.0
  %v4580 = vadd.f32 %v4578, %v4579
  %v4581 = vsel %vm4293, %v4505, 0.0
  %v4582 = vadd.f32 %v4580, %v4581
  %v4583 = vsel %vm4293, %v4506, 0.0
  %v4584 = vadd.f32 %v4582, %v4583
  %v4585 = vsel %vm4293, %v4507, 0.0
  %v4586 = vadd.f32 %v4584, %v4585
  %v4587 = vsel %vm4293, %v4508, 0.0
  %v4588 = vadd.f32 %v4586, %v4587
  %v4589 = vsel %vm4293, %v4509, 0.0
  %v4590 = vadd.f32 %v4588, %v4589
  %v4591 = vsel %vm4293, %v4510, 0.0
  %v4592 = vadd.f32 %v4590, %v4591
  %v4593 = vsel %vm4293, %v4511, 0.0
  %v4594 = vadd.f32 %v4592, %v4593
  %v4595 = vsel %vm4293, %v4512, 0.0
  %v4596 = vadd.f32 %v4594, %v4595
  %v4597 = vsel %vm4293, %v4513, 0.0
  %v4598 = vadd.f32 %v4596, %v4597
  %v4599 = vsel %vm4293, %v4514, 0.0
  %v4600 = vadd.f32 %v4598, %v4599
  %v4601 = vsel %vm4293, %v4515, 0.0
  %v4602 = vadd.f32 %v4600, %v4601
  %v4603 = vsel %vm4293, %v4516, 0.0
  %v4604 = vadd.f32 %v4602, %v4603
  %v4605 = vsel %vm4293, %v4517, 0.0
  %v4606 = vadd.f32 %v4604, %v4605
  %v4607 = vsel %vm4293, %v4518, 0.0
  %v4608 = vadd.f32 %v4606, %v4607
  %v4609 = vsel %vm4293, %v4519, 0.0
  %v4610 = vadd.f32 %v4608, %v4609
  %v4611 = vsel %vm4293, %v4520, 0.0
  %v4612 = vadd.f32 %v4610, %v4611
  %v4613 = vsel %vm4293, %v4521, 0.0
  %v4614 = vadd.f32 %v4612, %v4613
  %v4615 = vsel %vm4293, %v4522, 0.0
  %v4616 = vadd.f32 %v4614, %v4615
  %v4617 = vsel %vm4293, %v4523, 0.0
  %v4618 = vadd.f32 %v4616, %v4617
  %v4619 = vsel %vm4293, %v4524, 0.0
  %v4620 = vadd.f32 %v4618, %v4619
  %v4621 = vsel %vm4293, %v4525, 0.0
  %v4622 = vadd.f32 %v4620, %v4621
  %v4623 = vsel %vm4293, %v4526, 0.0
  %v4624 = vadd.f32 %v4622, %v4623
  %v4625 = vsel %vm4293, %v4527, 0.0
  %v4626 = vadd.f32 %v4624, %v4625
  %v4627 = vsel %vm4293, %v4528, 0.0
  %v4628 = vadd.f32 %v4626, %v4627
  %v4629 = vsel %vm4293, %v4529, 0.0
  %v4630 = vadd.f32 %v4628, %v4629
  %v4631 = vsel %vm4293, %v4530, 0.0
  %v4632 = vadd.f32 %v4630, %v4631
  %v4633 = vsel %vm4293, %v4531, 0.0
  %v4634 = vadd.f32 %v4632, %v4633
  %v4635 = vsel %vm4293, %v4532, 0.0
  %v4636 = vadd.f32 %v4634, %v4635
  %v4637 = vsel %vm4293, %v4533, 0.0
  %v4638 = vadd.f32 %v4636, %v4637
  %v4639 = vsel %vm4293, %v4534, 0.0
  %v4640 = vadd.f32 %v4638, %v4639
  %v4641 = vsel %vm4293, %v4535, 0.0
  %v4642 = vadd.f32 %v4640, %v4641
  %v4643 = vsel %vm4293, %v4536, 0.0
  %v4644 = vadd.f32 %v4642, %v4643
  %v4645 = vsel %vm4293, %v4537, 0.0
  %v4646 = vadd.f32 %v4644, %v4645
  %v4647 = vsel %vm4293, %v4538, 0.0
  %v4648 = vadd.f32 %v4646, %v4647
  %v4649 = vsel %vm4293, %v4539, 0.0
  %v4650 = vadd.f32 %v4648, %v4649
  %v4651 = vsel %vm4293, %v4540, 0.0
  %v4652 = vadd.f32 %v4650, %v4651
  %v4653 = vsel %vm4293, %v4541, 0.0
  %v4654 = vadd.f32 %v4652, %v4653
  %v4655 = vsel %vm4293, %v4542, 0.0
  %v4656 = vadd.f32 %v4654, %v4655
  %v4657 = vsel %vm4293, %v4543, 0.0
  %v4658 = vadd.f32 %v4656, %v4657
  %v4659 = vsel %vm4293, %v4544, 0.0
  %v4660 = vadd.f32 %v4658, %v4659
  %v4661 = vsel %vm4293, %v4545, 0.0
  %v4662 = vadd.f32 %v4660, %v4661
  %v4663 = vsel %vm4293, %v4546, 0.0
  %v4664 = vadd.f32 %v4662, %v4663
  %v4665 = vsel %vm4293, %v4547, 0.0
  %v4666 = vadd.f32 %v4664, %v4665
  %v4667 = vsel %vm4293, %v4548, 0.0
  %v4668 = vadd.f32 %v4666, %v4667
  %v4669 = vsel %vm4293, %v4549, 0.0
  %v4670 = vadd.f32 %v4668, %v4669
  %v4671 = vsel %vm4293, %v4550, 0.0
  %v4672 = vadd.f32 %v4670, %v4671
  %v4673 = vsel %vm4293, %v4551, 0.0
  %v4674 = vadd.f32 %v4672, %v4673
  %v4675 = vsel %vm4293, %v4552, 0.0
  %v4676 = vadd.f32 %v4674, %v4675
  %v4677 = vsel %vm4293, %v4553, 0.0
  %v4678 = vadd.f32 %v4676, %v4677
  %v4679 = vsel %vm4293, %v4554, 0.0
  %v4680 = vadd.f32 %v4678, %v4679
  %v4681 = vsel %vm4293, %v4555, 0.0
  %v4682 = vadd.f32 %v4680, %v4681
  %v4683 = vrot.slane %v4682, 4
  %v4684 = vadd.f32 %v4682, %v4683
  %v4685 = vrot.slane %v4684, 2
  %v4686 = vadd.f32 %v4684, %v4685
  %v4687 = vrot.slane %v4686, 1
  %v4688 = vadd.f32 %v4686, %v4687
  %v4689 = vmul.f32 %v4688, 0.001953125
  %v4690 = vld [vmem:[%s2] sm:$0x1]
  %v4691 = vadd.f32 %v4689, 0.001
  %v4692 = vrsqrt.pop %v4691
  %v4693 = vmul.f32 %v4692, %v4691
  %v4694 = vmul.f32 %v4693, %v4692
  %v4695 = vmul.f32 0.5, %v4694
  %v4696 = vsub.f32 1.5, %v4695
  %v4697 = vmul.f32 %v4692, %v4696
  %vm4698 = vweird.f32 %v4691
  %vm4699 = vweird.f32 %v4692
  %vm4700 = vmor %vm4698, %vm4699
  %v4701 = vsel %vm4700, %v4692, %v4697
  %v4702 = vmul.f32 %v4690, %v4701
  %v4704 = vperm.slane %v4702, 0
  %v4706 = vmul.f32 %v4428, %v4704
  %v4707 = vmul.f32 %v4429, %v4704
  %v4708 = vmul.f32 %v4430, %v4704
  %v4709 = vmul.f32 %v4431, %v4704
  %v4710 = vmul.f32 %v4432, %v4704
  %v4711 = vmul.f32 %v4433, %v4704
  %v4712 = vmul.f32 %v4434, %v4704
  %v4713 = vmul.f32 %v4435, %v4704
  %v4714 = vmul.f32 %v4436, %v4704
  %v4715 = vmul.f32 %v4437, %v4704
  %v4716 = vmul.f32 %v4438, %v4704
  %v4717 = vmul.f32 %v4439, %v4704
  %v4718 = vmul.f32 %v4440, %v4704
  %v4719 = vmul.f32 %v4441, %v4704
  %v4720 = vmul.f32 %v4442, %v4704
  %v4721 = vmul.f32 %v4443, %v4704
  %v4722 = vmul.f32 %v4444, %v4704
  %v4723 = vmul.f32 %v4445, %v4704
  %v4724 = vmul.f32 %v4446, %v4704
  %v4725 = vmul.f32 %v4447, %v4704
  %v4726 = vmul.f32 %v4448, %v4704
  %v4727 = vmul.f32 %v4449, %v4704
  %v4728 = vmul.f32 %v4450, %v4704
  %v4729 = vmul.f32 %v4451, %v4704
  %v4730 = vmul.f32 %v4452, %v4704
  %v4731 = vmul.f32 %v4453, %v4704
  %v4732 = vmul.f32 %v4454, %v4704
  %v4733 = vmul.f32 %v4455, %v4704
  %v4734 = vmul.f32 %v4456, %v4704
  %v4735 = vmul.f32 %v4457, %v4704
  %v4736 = vmul.f32 %v4458, %v4704
  %v4737 = vmul.f32 %v4459, %v4704
  %v4738 = vmul.f32 %v4460, %v4704
  %v4739 = vmul.f32 %v4461, %v4704
  %v4740 = vmul.f32 %v4462, %v4704
  %v4741 = vmul.f32 %v4463, %v4704
  %v4742 = vmul.f32 %v4464, %v4704
  %v4743 = vmul.f32 %v4465, %v4704
  %v4744 = vmul.f32 %v4466, %v4704
  %v4745 = vmul.f32 %v4467, %v4704
  %v4746 = vmul.f32 %v4468, %v4704
  %v4747 = vmul.f32 %v4469, %v4704
  %v4748 = vmul.f32 %v4470, %v4704
  %v4749 = vmul.f32 %v4471, %v4704
  %v4750 = vmul.f32 %v4472, %v4704
  %v4751 = vmul.f32 %v4473, %v4704
  %v4752 = vmul.f32 %v4474, %v4704
  %v4753 = vmul.f32 %v4475, %v4704
  %v4754 = vmul.f32 %v4476, %v4704
  %v4755 = vmul.f32 %v4477, %v4704
  %v4756 = vmul.f32 %v4478, %v4704
  %v4757 = vmul.f32 %v4479, %v4704
  %v4758 = vmul.f32 %v4480, %v4704
  %v4759 = vmul.f32 %v4481, %v4704
  %v4760 = vmul.f32 %v4482, %v4704
  %v4761 = vmul.f32 %v4483, %v4704
  %v4762 = vmul.f32 %v4484, %v4704
  %v4763 = vmul.f32 %v4485, %v4704
  %v4764 = vmul.f32 %v4486, %v4704
  %v4765 = vmul.f32 %v4487, %v4704
  %v4766 = vmul.f32 %v4488, %v4704
  %v4767 = vmul.f32 %v4489, %v4704
  %v4768 = vmul.f32 %v4490, %v4704
  %v4769 = vmul.f32 %v4491, %v4704
  %v4770 = vld [vmem:[%s3] sm:$0x1]
  %v4772 = vperm.slane %v4770, 0
  %v4774 = vadd.f32 %v4706, %v4772
  %v4775 = vadd.f32 %v4707, %v4772
  %v4776 = vadd.f32 %v4708, %v4772
  %v4777 = vadd.f32 %v4709, %v4772
  %v4778 = vadd.f32 %v4710, %v4772
  %v4779 = vadd.f32 %v4711, %v4772
  %v4780 = vadd.f32 %v4712, %v4772
  %v4781 = vadd.f32 %v4713, %v4772
  %v4782 = vadd.f32 %v4714, %v4772
  %v4783 = vadd.f32 %v4715, %v4772
  %v4784 = vadd.f32 %v4716, %v4772
  %v4785 = vadd.f32 %v4717, %v4772
  %v4786 = vadd.f32 %v4718, %v4772
  %v4787 = vadd.f32 %v4719, %v4772
  %v4788 = vadd.f32 %v4720, %v4772
  %v4789 = vadd.f32 %v4721, %v4772
  %v4790 = vadd.f32 %v4722, %v4772
  %v4791 = vadd.f32 %v4723, %v4772
  %v4792 = vadd.f32 %v4724, %v4772
  %v4793 = vadd.f32 %v4725, %v4772
  %v4794 = vadd.f32 %v4726, %v4772
  %v4795 = vadd.f32 %v4727, %v4772
  %v4796 = vadd.f32 %v4728, %v4772
  %v4797 = vadd.f32 %v4729, %v4772
  %v4798 = vadd.f32 %v4730, %v4772
  %v4799 = vadd.f32 %v4731, %v4772
  %v4800 = vadd.f32 %v4732, %v4772
  %v4801 = vadd.f32 %v4733, %v4772
  %v4802 = vadd.f32 %v4734, %v4772
  %v4803 = vadd.f32 %v4735, %v4772
  %v4804 = vadd.f32 %v4736, %v4772
  %v4805 = vadd.f32 %v4737, %v4772
  %v4806 = vadd.f32 %v4738, %v4772
  %v4807 = vadd.f32 %v4739, %v4772
  %v4808 = vadd.f32 %v4740, %v4772
  %v4809 = vadd.f32 %v4741, %v4772
  %v4810 = vadd.f32 %v4742, %v4772
  %v4811 = vadd.f32 %v4743, %v4772
  %v4812 = vadd.f32 %v4744, %v4772
  %v4813 = vadd.f32 %v4745, %v4772
  %v4814 = vadd.f32 %v4746, %v4772
  %v4815 = vadd.f32 %v4747, %v4772
  %v4816 = vadd.f32 %v4748, %v4772
  %v4817 = vadd.f32 %v4749, %v4772
  %v4818 = vadd.f32 %v4750, %v4772
  %v4819 = vadd.f32 %v4751, %v4772
  %v4820 = vadd.f32 %v4752, %v4772
  %v4821 = vadd.f32 %v4753, %v4772
  %v4822 = vadd.f32 %v4754, %v4772
  %v4823 = vadd.f32 %v4755, %v4772
  %v4824 = vadd.f32 %v4756, %v4772
  %v4825 = vadd.f32 %v4757, %v4772
  %v4826 = vadd.f32 %v4758, %v4772
  %v4827 = vadd.f32 %v4759, %v4772
  %v4828 = vadd.f32 %v4760, %v4772
  %v4829 = vadd.f32 %v4761, %v4772
  %v4830 = vadd.f32 %v4762, %v4772
  %v4831 = vadd.f32 %v4763, %v4772
  %v4832 = vadd.f32 %v4764, %v4772
  %v4833 = vadd.f32 %v4765, %v4772
  %v4834 = vadd.f32 %v4766, %v4772
  %v4835 = vadd.f32 %v4767, %v4772
  %v4836 = vadd.f32 %v4768, %v4772
  %v4837 = vadd.f32 %v4769, %v4772
  %v4838 = vmax.f32 %v4774, 0.0
  %v4839 = vmax.f32 %v4775, 0.0
  %v4840 = vmax.f32 %v4776, 0.0
  %v4841 = vmax.f32 %v4777, 0.0
  %v4842 = vmax.f32 %v4778, 0.0
  %v4843 = vmax.f32 %v4779, 0.0
  %v4844 = vmax.f32 %v4780, 0.0
  %v4845 = vmax.f32 %v4781, 0.0
  %v4846 = vmax.f32 %v4782, 0.0
  %v4847 = vmax.f32 %v4783, 0.0
  %v4848 = vmax.f32 %v4784, 0.0
  %v4849 = vmax.f32 %v4785, 0.0
  %v4850 = vmax.f32 %v4786, 0.0
  %v4851 = vmax.f32 %v4787, 0.0
  %v4852 = vmax.f32 %v4788, 0.0
  %v4853 = vmax.f32 %v4789, 0.0
  %v4854 = vmax.f32 %v4790, 0.0
  %v4855 = vmax.f32 %v4791, 0.0
  %v4856 = vmax.f32 %v4792, 0.0
  %v4857 = vmax.f32 %v4793, 0.0
  %v4858 = vmax.f32 %v4794, 0.0
  %v4859 = vmax.f32 %v4795, 0.0
  %v4860 = vmax.f32 %v4796, 0.0
  %v4861 = vmax.f32 %v4797, 0.0
  %v4862 = vmax.f32 %v4798, 0.0
  %v4863 = vmax.f32 %v4799, 0.0
  %v4864 = vmax.f32 %v4800, 0.0
  %v4865 = vmax.f32 %v4801, 0.0
  %v4866 = vmax.f32 %v4802, 0.0
  %v4867 = vmax.f32 %v4803, 0.0
  %v4868 = vmax.f32 %v4804, 0.0
  %v4869 = vmax.f32 %v4805, 0.0
  %v4870 = vmax.f32 %v4806, 0.0
  %v4871 = vmax.f32 %v4807, 0.0
  %v4872 = vmax.f32 %v4808, 0.0
  %v4873 = vmax.f32 %v4809, 0.0
  %v4874 = vmax.f32 %v4810, 0.0
  %v4875 = vmax.f32 %v4811, 0.0
  %v4876 = vmax.f32 %v4812, 0.0
  %v4877 = vmax.f32 %v4813, 0.0
  %v4878 = vmax.f32 %v4814, 0.0
  %v4879 = vmax.f32 %v4815, 0.0
  %v4880 = vmax.f32 %v4816, 0.0
  %v4881 = vmax.f32 %v4817, 0.0
  %v4882 = vmax.f32 %v4818, 0.0
  %v4883 = vmax.f32 %v4819, 0.0
  %v4884 = vmax.f32 %v4820, 0.0
  %v4885 = vmax.f32 %v4821, 0.0
  %v4886 = vmax.f32 %v4822, 0.0
  %v4887 = vmax.f32 %v4823, 0.0
  %v4888 = vmax.f32 %v4824, 0.0
  %v4889 = vmax.f32 %v4825, 0.0
  %v4890 = vmax.f32 %v4826, 0.0
  %v4891 = vmax.f32 %v4827, 0.0
  %v4892 = vmax.f32 %v4828, 0.0
  %v4893 = vmax.f32 %v4829, 0.0
  %v4894 = vmax.f32 %v4830, 0.0
  %v4895 = vmax.f32 %v4831, 0.0
  %v4896 = vmax.f32 %v4832, 0.0
  %v4897 = vmax.f32 %v4833, 0.0
  %v4898 = vmax.f32 %v4834, 0.0
  %v4899 = vmax.f32 %v4835, 0.0
  %v4900 = vmax.f32 %v4836, 0.0
  %v4901 = vmax.f32 %v4837, 0.0
  %4902 = vst.msk [vmem:[%s4] sm:$0xff] %vm4293, %v4838
  %4903 = vst.msk [vmem:[%s4 + $0x8] sm:$0xff] %vm4293, %v4839
  %4904 = vst.msk [vmem:[%s4 + $0x10] sm:$0xff] %vm4293, %v4840
  %4905 = vst.msk [vmem:[%s4 + $0x18] sm:$0xff] %vm4293, %v4841
  %4906 = vst.msk [vmem:[%s4 + $0x20] sm:$0xff] %vm4293, %v4842
  %4907 = vst.msk [vmem:[%s4 + $0x28] sm:$0xff] %vm4293, %v4843
  %4908 = vst.msk [vmem:[%s4 + $0x30] sm:$0xff] %vm4293, %v4844
  %4909 = vst.msk [vmem:[%s4 + $0x38] sm:$0xff] %vm4293, %v4845
  %4910 = vst.msk [vmem:[%s4 + $0x40] sm:$0xff] %vm4293, %v4846
  %4911 = vst.msk [vmem:[%s4 + $0x48] sm:$0xff] %vm4293, %v4847
  %4912 = vst.msk [vmem:[%s4 + $0x50] sm:$0xff] %vm4293, %v4848
  %4913 = vst.msk [vmem:[%s4 + $0x58] sm:$0xff] %vm4293, %v4849
  %4914 = vst.msk [vmem:[%s4 + $0x60] sm:$0xff] %vm4293, %v4850
  %4915 = vst.msk [vmem:[%s4 + $0x68] sm:$0xff] %vm4293, %v4851
  %4916 = vst.msk [vmem:[%s4 + $0x70] sm:$0xff] %vm4293, %v4852
  %4917 = vst.msk [vmem:[%s4 + $0x78] sm:$0xff] %vm4293, %v4853
  %4918 = vst.msk [vmem:[%s4 + $0x80] sm:$0xff] %vm4293, %v4854
  %4919 = vst.msk [vmem:[%s4 + $0x88] sm:$0xff] %vm4293, %v4855
  %4920 = vst.msk [vmem:[%s4 + $0x90] sm:$0xff] %vm4293, %v4856
  %4921 = vst.msk [vmem:[%s4 + $0x98] sm:$0xff] %vm4293, %v4857
  %4922 = vst.msk [vmem:[%s4 + $0xa0] sm:$0xff] %vm4293, %v4858
  %4923 = vst.msk [vmem:[%s4 + $0xa8] sm:$0xff] %vm4293, %v4859
  %4924 = vst.msk [vmem:[%s4 + $0xb0] sm:$0xff] %vm4293, %v4860
  %4925 = vst.msk [vmem:[%s4 + $0xb8] sm:$0xff] %vm4293, %v4861
  %4926 = vst.msk [vmem:[%s4 + $0xc0] sm:$0xff] %vm4293, %v4862
  %4927 = vst.msk [vmem:[%s4 + $0xc8] sm:$0xff] %vm4293, %v4863
  %4928 = vst.msk [vmem:[%s4 + $0xd0] sm:$0xff] %vm4293, %v4864
  %4929 = vst.msk [vmem:[%s4 + $0xd8] sm:$0xff] %vm4293, %v4865
  %4930 = vst.msk [vmem:[%s4 + $0xe0] sm:$0xff] %vm4293, %v4866
  %4931 = vst.msk [vmem:[%s4 + $0xe8] sm:$0xff] %vm4293, %v4867
  %4932 = vst.msk [vmem:[%s4 + $0xf0] sm:$0xff] %vm4293, %v4868
  %4933 = vst.msk [vmem:[%s4 + $0xf8] sm:$0xff] %vm4293, %v4869
  %4934 = vst.msk [vmem:[%s4 + $0x100] sm:$0xff] %vm4293, %v4870
  %4935 = vst.msk [vmem:[%s4 + $0x108] sm:$0xff] %vm4293, %v4871
  %4936 = vst.msk [vmem:[%s4 + $0x110] sm:$0xff] %vm4293, %v4872
  %4937 = vst.msk [vmem:[%s4 + $0x118] sm:$0xff] %vm4293, %v4873
  %4938 = vst.msk [vmem:[%s4 + $0x120] sm:$0xff] %vm4293, %v4874
  %4939 = vst.msk [vmem:[%s4 + $0x128] sm:$0xff] %vm4293, %v4875
  %4940 = vst.msk [vmem:[%s4 + $0x130] sm:$0xff] %vm4293, %v4876
  %4941 = vst.msk [vmem:[%s4 + $0x138] sm:$0xff] %vm4293, %v4877
  %4942 = vst.msk [vmem:[%s4 + $0x140] sm:$0xff] %vm4293, %v4878
  %4943 = vst.msk [vmem:[%s4 + $0x148] sm:$0xff] %vm4293, %v4879
  %4944 = vst.msk [vmem:[%s4 + $0x150] sm:$0xff] %vm4293, %v4880
  %4945 = vst.msk [vmem:[%s4 + $0x158] sm:$0xff] %vm4293, %v4881
  %4946 = vst.msk [vmem:[%s4 + $0x160] sm:$0xff] %vm4293, %v4882
  %4947 = vst.msk [vmem:[%s4 + $0x168] sm:$0xff] %vm4293, %v4883
  %4948 = vst.msk [vmem:[%s4 + $0x170] sm:$0xff] %vm4293, %v4884
  %4949 = vst.msk [vmem:[%s4 + $0x178] sm:$0xff] %vm4293, %v4885
  %4950 = vst.msk [vmem:[%s4 + $0x180] sm:$0xff] %vm4293, %v4886
  %4951 = vst.msk [vmem:[%s4 + $0x188] sm:$0xff] %vm4293, %v4887
  %4952 = vst.msk [vmem:[%s4 + $0x190] sm:$0xff] %vm4293, %v4888
  %4953 = vst.msk [vmem:[%s4 + $0x198] sm:$0xff] %vm4293, %v4889
  %4954 = vst.msk [vmem:[%s4 + $0x1a0] sm:$0xff] %vm4293, %v4890
  %4955 = vst.msk [vmem:[%s4 + $0x1a8] sm:$0xff] %vm4293, %v4891
  %4956 = vst.msk [vmem:[%s4 + $0x1b0] sm:$0xff] %vm4293, %v4892
  %4957 = vst.msk [vmem:[%s4 + $0x1b8] sm:$0xff] %vm4293, %v4893
  %4958 = vst.msk [vmem:[%s4 + $0x1c0] sm:$0xff] %vm4293, %v4894
  %4959 = vst.msk [vmem:[%s4 + $0x1c8] sm:$0xff] %vm4293, %v4895
  %4960 = vst.msk [vmem:[%s4 + $0x1d0] sm:$0xff] %vm4293, %v4896
  %4961 = vst.msk [vmem:[%s4 + $0x1d8] sm:$0xff] %vm4293, %v4897
  %4962 = vst.msk [vmem:[%s4 + $0x1e0] sm:$0xff] %vm4293, %v4898
  %4963 = vst.msk [vmem:[%s4 + $0x1e8] sm:$0xff] %vm4293, %v4899
  %4964 = vst.msk [vmem:[%s4 + $0x1f0] sm:$0xff] %vm4293, %v4900
  %4965 = vst.msk [vmem:[%s4 + $0x1f8] sm:$0xff] %vm4293, %v4901
  // Predicated region
  $region18: #{inception1_forward.5} parent=0 // pred_check
    _
  $region19: #{inception1_forward.5} parent=0 // pred_check_branch
    %4967 = sbr.rel (0) target = $region21
  $region20: #{inception1_forward.5} parent=0 // pred_region
    _
  $region21: #{inception1_forward.5} parent=0 // pred_fallthru
    _
  // Predicated region
  $region22: #{inception1_forward.5} parent=0 // pred_check
    _
  $region23: #{inception1_forward.5} parent=0 // pred_check_branch
    %4969 = sbr.rel (0) target = $region25
  $region24: #{inception1_forward.5} parent=0 // pred_region
    _
  $region25: #{inception1_forward.5} parent=0 // pred_fallthru
    _

// kernel: inception1_forward.6
$region0: #{inception1_forward.6}
  #allocation0 [shape = 'u32[]', space=smem, size = 0x4, offset = 0x4, fixed_abs, tag = 'smem constant byte address 0x4 - core index']
  #allocation1 [shape = 'u32[72,128]{1,0:T(1,128)}', space=vmem, size = 0x9000, scoped, tag = 'internal scratch']
  %s0 = inlined_call_operand.vmem [shape: bf16[512,576], index: 0, kind: input, shape index: {}]
  %s1 = inlined_call_operand.vmem [shape: bf16[576,96], index: 1, kind: input, shape index: {}]
  %s2 = inlined_call_operand.vmem [shape: f32[1,96], index: 2, kind: input, shape index: {}]
  %s3 = inlined_call_operand.vmem [shape: f32[1,96], index: 3, kind: input, shape index: {}]
  %s4 = inlined_call_operand.vmem [shape: f32[512,96], index: 4, kind: output, shape index: {}]
  %s5 = sld [smem:[#allocation0]]
  $region26: #{inception1_forward.6} parent=0
    _
  %s7 = ssub.s32 1, %s5
  %s8 = scalar_select 0, %s7, %s5
  // Predicated region
  $region2: #{inception1_forward.6} parent=0 // pred_check
    _
  $region3: #{inception1_forward.6} parent=0 // pred_check_branch
    %10 = sbr.rel (0) target = $region5
  $region4: #{inception1_forward.6} parent=0 // pred_region
    _
  $region5: #{inception1_forward.6} parent=0 // pred_fallthru
    _
  // Predicated region
  $region6: #{inception1_forward.6} parent=0 // pred_check
    _
  $region7: #{inception1_forward.6} parent=0 // pred_check_branch
    %12 = sbr.rel (0) target = $region9
  $region8: #{inception1_forward.6} parent=0 // pred_region
    _
  $region9: #{inception1_forward.6} parent=0 // pred_fallthru
    _
  // Predicated region
  $region10: #{inception1_forward.6} parent=0 // pred_check
    _
  $region11: #{inception1_forward.6} parent=0 // pred_check_branch
    %14 = sbr.rel (0) target = $region13
  $region12: #{inception1_forward.6} parent=0 // pred_region
    _
  $region13: #{inception1_forward.6} parent=0 // pred_fallthru
    _
  // Predicated region
  $region14: #{inception1_forward.6} parent=0 // pred_check
    _
  $region15: #{inception1_forward.6} parent=0 // pred_check_branch
    %16 = sbr.rel (0) target = $region17
  $region16: #{inception1_forward.6} parent=0 // pred_region
    _
  $region17: #{inception1_forward.6} parent=0 // pred_fallthru
    _
  %v18 = vld [vmem:[%s0] sm:$0xff]
  %v19 = vld [vmem:[%s0 + $0x8] sm:$0xff]
  %v20 = vld [vmem:[%s0 + $0x10] sm:$0xf]
  %v21 = vld [vmem:[%s0 + $0x14] sm:$0xff]
  %v22 = vld [vmem:[%s0 + $0x1c] sm:$0xff]
  %v23 = vld [vmem:[%s0 + $0x24] sm:$0xf]
  %v24 = vld [vmem:[%s0 + $0x28] sm:$0xff]
  %v25 = vld [vmem:[%s0 + $0x30] sm:$0xff]
  %v26 = vld [vmem:[%s0 + $0x38] sm:$0xf]
  %v27 = vld [vmem:[%s0 + $0x3c] sm:$0xff]
  %v28 = vld [vmem:[%s0 + $0x44] sm:$0xff]
  %v29 = vld [vmem:[%s0 + $0x4c] sm:$0xf]
  %v30 = vld [vmem:[%s0 + $0x50] sm:$0xff]
  %v31 = vld [vmem:[%s0 + $0x58] sm:$0xff]
  %v32 = vld [vmem:[%s0 + $0x60] sm:$0xf]
  %v33 = vld [vmem:[%s0 + $0x64] sm:$0xff]
  %v34 = vld [vmem:[%s0 + $0x6c] sm:$0xff]
  %v35 = vld [vmem:[%s0 + $0x74] sm:$0xf]
  %v36 = vld [vmem:[%s0 + $0x78] sm:$0xff]
  %v37 = vld [vmem:[%s0 + $0x80] sm:$0xff]
  %v38 = vld [vmem:[%s0 + $0x88] sm:$0xf]
  %v39 = vld [vmem:[%s0 + $0x8c] sm:$0xff]
  %v40 = vld [vmem:[%s0 + $0x94] sm:$0xff]
  %v41 = vld [vmem:[%s0 + $0x9c] sm:$0xf]
  %v42 = vld [vmem:[%s0 + $0xa0] sm:$0xff]
  %v43 = vld [vmem:[%s0 + $0xa8] sm:$0xff]
  %v44 = vld [vmem:[%s0 + $0xb0] sm:$0xf]
  %v45 = vld [vmem:[%s0 + $0xb4] sm:$0xff]
  %v46 = vld [vmem:[%s0 + $0xbc] sm:$0xff]
  %v47 = vld [vmem:[%s0 + $0xc4] sm:$0xf]
  %v48 = vld [vmem:[%s0 + $0xc8] sm:$0xff]
  %v49 = vld [vmem:[%s0 + $0xd0] sm:$0xff]
  %v50 = vld [vmem:[%s0 + $0xd8] sm:$0xf]
  %v51 = vld [vmem:[%s0 + $0xdc] sm:$0xff]
  %v52 = vld [vmem:[%s0 + $0xe4] sm:$0xff]
  %v53 = vld [vmem:[%s0 + $0xec] sm:$0xf]
  %v54 = vld [vmem:[%s0 + $0xf0] sm:$0xff]
  %v55 = vld [vmem:[%s0 + $0xf8] sm:$0xff]
  %v56 = vld [vmem:[%s0 + $0x100] sm:$0xf]
  %v57 = vld [vmem:[%s0 + $0x104] sm:$0xff]
  %v58 = vld [vmem:[%s0 + $0x10c] sm:$0xff]
  %v59 = vld [vmem:[%s0 + $0x114] sm:$0xf]
  %v60 = vld [vmem:[%s0 + $0x118] sm:$0xff]
  %v61 = vld [vmem:[%s0 + $0x120] sm:$0xff]
  %v62 = vld [vmem:[%s0 + $0x128] sm:$0xf]
  %v63 = vld [vmem:[%s0 + $0x12c] sm:$0xff]
  %v64 = vld [vmem:[%s0 + $0x134] sm:$0xff]
  %v65 = vld [vmem:[%s0 + $0x13c] sm:$0xf]
  %v66 = vld [vmem:[%s0 + $0x140] sm:$0xff]
  %v67 = vld [vmem:[%s0 + $0x148] sm:$0xff]
  %v68 = vld [vmem:[%s0 + $0x150] sm:$0xf]
  %v69 = vld [vmem:[%s0 + $0x154] sm:$0xff]
  %v70 = vld [vmem:[%s0 + $0x15c] sm:$0xff]
  %v71 = vld [vmem:[%s0 + $0x164] sm:$0xf]
  %v72 = vld [vmem:[%s0 + $0x168] sm:$0xff]
  %v73 = vld [vmem:[%s0 + $0x170] sm:$0xff]
  %v74 = vld [vmem:[%s0 + $0x178] sm:$0xf]
  %v75 = vld [vmem:[%s0 + $0x17c] sm:$0xff]
  %v76 = vld [vmem:[%s0 + $0x184] sm:$0xff]
  %v77 = vld [vmem:[%s0 + $0x18c] sm:$0xf]
  %v78 = vld [vmem:[%s0 + $0x190] sm:$0xff]
  %v79 = vld [vmem:[%s0 + $0x198] sm:$0xff]
  %v80 = vld [vmem:[%s0 + $0x1a0] sm:$0xf]
  %v81 = vld [vmem:[%s0 + $0x1a4] sm:$0xff]
  %v82 = vld [vmem:[%s0 + $0x1ac] sm:$0xff]
  %v83 = vld [vmem:[%s0 + $0x1b4] sm:$0xf]
  %v84 = vld [vmem:[%s0 + $0x1b8] sm:$0xff]
  %v85 = vld [vmem:[%s0 + $0x1c0] sm:$0xff]
  %v86 = vld [vmem:[%s0 + $0x1c8] sm:$0xf]
  %v87 = vld [vmem:[%s0 + $0x1cc] sm:$0xff]
  %v88 = vld [vmem:[%s0 + $0x1d4] sm:$0xff]
  %v89 = vld [vmem:[%s0 + $0x1dc] sm:$0xf]
  %v90 = vld [vmem:[%s0 + $0x1e0] sm:$0xff]
  %v91 = vld [vmem:[%s0 + $0x1e8] sm:$0xff]
  %v92 = vld [vmem:[%s0 + $0x1f0] sm:$0xf]
  %v93 = vld [vmem:[%s0 + $0x1f4] sm:$0xff]
  %v94 = vld [vmem:[%s0 + $0x1fc] sm:$0xff]
  %v95 = vld [vmem:[%s0 + $0x204] sm:$0xf]
  %v96 = vld [vmem:[%s0 + $0x208] sm:$0xff]
  %v97 = vld [vmem:[%s0 + $0x210] sm:$0xff]
  %v98 = vld [vmem:[%s0 + $0x218] sm:$0xf]
  %v99 = vld [vmem:[%s0 + $0x21c] sm:$0xff]
  %v100 = vld [vmem:[%s0 + $0x224] sm:$0xff]
  %v101 = vld [vmem:[%s0 + $0x22c] sm:$0xf]
  %v102 = vld [vmem:[%s0 + $0x230] sm:$0xff]
  %v103 = vld [vmem:[%s0 + $0x238] sm:$0xff]
  %v104 = vld [vmem:[%s0 + $0x240] sm:$0xf]
  %v105 = vld [vmem:[%s0 + $0x244] sm:$0xff]
  %v106 = vld [vmem:[%s0 + $0x24c] sm:$0xff]
  %v107 = vld [vmem:[%s0 + $0x254] sm:$0xf]
  %v108 = vld [vmem:[%s0 + $0x258] sm:$0xff]
  %v109 = vld [vmem:[%s0 + $0x260] sm:$0xff]
  %v110 = vld [vmem:[%s0 + $0x268] sm:$0xf]
  %v111 = vld [vmem:[%s0 + $0x26c] sm:$0xff]
  %v112 = vld [vmem:[%s0 + $0x274] sm:$0xff]
  %v113 = vld [vmem:[%s0 + $0x27c] sm:$0xf]
  %v114 = vld [vmem:[%s0 + $0x280] sm:$0xff]
  %v115 = vld [vmem:[%s0 + $0x288] sm:$0xff]
  %v116 = vld [vmem:[%s0 + $0x290] sm:$0xf]
  %v117 = vld [vmem:[%s0 + $0x294] sm:$0xff]
  %v118 = vld [vmem:[%s0 + $0x29c] sm:$0xff]
  %v119 = vld [vmem:[%s0 + $0x2a4] sm:$0xf]
  %v120 = vld [vmem:[%s0 + $0x2a8] sm:$0xff]
  %v121 = vld [vmem:[%s0 + $0x2b0] sm:$0xff]
  %v122 = vld [vmem:[%s0 + $0x2b8] sm:$0xf]
  %v123 = vld [vmem:[%s0 + $0x2bc] sm:$0xff]
  %v124 = vld [vmem:[%s0 + $0x2c4] sm:$0xff]
  %v125 = vld [vmem:[%s0 + $0x2cc] sm:$0xf]
  %v126 = vld [vmem:[%s0 + $0x2d0] sm:$0xff]
  %v127 = vld [vmem:[%s0 + $0x2d8] sm:$0xff]
  %v128 = vld [vmem:[%s0 + $0x2e0] sm:$0xf]
  %v129 = vld [vmem:[%s0 + $0x2e4] sm:$0xff]
  %v130 = vld [vmem:[%s0 + $0x2ec] sm:$0xff]
  %v131 = vld [vmem:[%s0 + $0x2f4] sm:$0xf]
  %v132 = vld [vmem:[%s0 + $0x2f8] sm:$0xff]
  %v133 = vld [vmem:[%s0 + $0x300] sm:$0xff]
  %v134 = vld [vmem:[%s0 + $0x308] sm:$0xf]
  %v135 = vld [vmem:[%s0 + $0x30c] sm:$0xff]
  %v136 = vld [vmem:[%s0 + $0x314] sm:$0xff]
  %v137 = vld [vmem:[%s0 + $0x31c] sm:$0xf]
  %v138 = vld [vmem:[%s0 + $0x320] sm:$0xff]
  %v139 = vld [vmem:[%s0 + $0x328] sm:$0xff]
  %v140 = vld [vmem:[%s0 + $0x330] sm:$0xf]
  %v141 = vld [vmem:[%s0 + $0x334] sm:$0xff]
  %v142 = vld [vmem:[%s0 + $0x33c] sm:$0xff]
  %v143 = vld [vmem:[%s0 + $0x344] sm:$0xf]
  %v144 = vld [vmem:[%s0 + $0x348] sm:$0xff]
  %v145 = vld [vmem:[%s0 + $0x350] sm:$0xff]
  %v146 = vld [vmem:[%s0 + $0x358] sm:$0xf]
  %v147 = vld [vmem:[%s0 + $0x35c] sm:$0xff]
  %v148 = vld [vmem:[%s0 + $0x364] sm:$0xff]
  %v149 = vld [vmem:[%s0 + $0x36c] sm:$0xf]
  %v150 = vld [vmem:[%s0 + $0x370] sm:$0xff]
  %v151 = vld [vmem:[%s0 + $0x378] sm:$0xff]
  %v152 = vld [vmem:[%s0 + $0x380] sm:$0xf]
  %v153 = vld [vmem:[%s0 + $0x384] sm:$0xff]
  %v154 = vld [vmem:[%s0 + $0x38c] sm:$0xff]
  %v155 = vld [vmem:[%s0 + $0x394] sm:$0xf]
  %v156 = vld [vmem:[%s0 + $0x398] sm:$0xff]
  %v157 = vld [vmem:[%s0 + $0x3a0] sm:$0xff]
  %v158 = vld [vmem:[%s0 + $0x3a8] sm:$0xf]
  %v159 = vld [vmem:[%s0 + $0x3ac] sm:$0xff]
  %v160 = vld [vmem:[%s0 + $0x3b4] sm:$0xff]
  %v161 = vld [vmem:[%s0 + $0x3bc] sm:$0xf]
  %v162 = vld [vmem:[%s0 + $0x3c0] sm:$0xff]
  %v163 = vld [vmem:[%s0 + $0x3c8] sm:$0xff]
  %v164 = vld [vmem:[%s0 + $0x3d0] sm:$0xf]
  %v165 = vld [vmem:[%s0 + $0x3d4] sm:$0xff]
  %v166 = vld [vmem:[%s0 + $0x3dc] sm:$0xff]
  %v167 = vld [vmem:[%s0 + $0x3e4] sm:$0xf]
  %v168 = vld [vmem:[%s0 + $0x3e8] sm:$0xff]
  %v169 = vld [vmem:[%s0 + $0x3f0] sm:$0xff]
  %v170 = vld [vmem:[%s0 + $0x3f8] sm:$0xf]
  %v171 = vld [vmem:[%s0 + $0x3fc] sm:$0xff]
  %v172 = vld [vmem:[%s0 + $0x404] sm:$0xff]
  %v173 = vld [vmem:[%s0 + $0x40c] sm:$0xf]
  %v174 = vld [vmem:[%s0 + $0x410] sm:$0xff]
  %v175 = vld [vmem:[%s0 + $0x418] sm:$0xff]
  %v176 = vld [vmem:[%s0 + $0x420] sm:$0xf]
  %v177 = vld [vmem:[%s0 + $0x424] sm:$0xff]
  %v178 = vld [vmem:[%s0 + $0x42c] sm:$0xff]
  %v179 = vld [vmem:[%s0 + $0x434] sm:$0xf]
  %v180 = vld [vmem:[%s0 + $0x438] sm:$0xff]
  %v181 = vld [vmem:[%s0 + $0x440] sm:$0xff]
  %v182 = vld [vmem:[%s0 + $0x448] sm:$0xf]
  %v183 = vld [vmem:[%s0 + $0x44c] sm:$0xff]
  %v184 = vld [vmem:[%s0 + $0x454] sm:$0xff]
  %v185 = vld [vmem:[%s0 + $0x45c] sm:$0xf]
  %v186 = vld [vmem:[%s0 + $0x460] sm:$0xff]
  %v187 = vld [vmem:[%s0 + $0x468] sm:$0xff]
  %v188 = vld [vmem:[%s0 + $0x470] sm:$0xf]
  %v189 = vld [vmem:[%s0 + $0x474] sm:$0xff]
  %v190 = vld [vmem:[%s0 + $0x47c] sm:$0xff]
  %v191 = vld [vmem:[%s0 + $0x484] sm:$0xf]
  %v192 = vld [vmem:[%s0 + $0x488] sm:$0xff]
  %v193 = vld [vmem:[%s0 + $0x490] sm:$0xff]
  %v194 = vld [vmem:[%s0 + $0x498] sm:$0xf]
  %v195 = vld [vmem:[%s0 + $0x49c] sm:$0xff]
  %v196 = vld [vmem:[%s0 + $0x4a4] sm:$0xff]
  %v197 = vld [vmem:[%s0 + $0x4ac] sm:$0xf]
  %v198 = vld [vmem:[%s0 + $0x4b0] sm:$0xff]
  %v199 = vld [vmem:[%s0 + $0x4b8] sm:$0xff]
  %v200 = vld [vmem:[%s0 + $0x4c0] sm:$0xf]
  %v201 = vld [vmem:[%s0 + $0x4c4] sm:$0xff]
  %v202 = vld [vmem:[%s0 + $0x4cc] sm:$0xff]
  %v203 = vld [vmem:[%s0 + $0x4d4] sm:$0xf]
  %v204 = vld [vmem:[%s0 + $0x4d8] sm:$0xff]
  %v205 = vld [vmem:[%s0 + $0x4e0] sm:$0xff]
  %v206 = vld [vmem:[%s0 + $0x4e8] sm:$0xf]
  %v207 = vld [vmem:[%s0 + $0x4ec] sm:$0xff]
  %v208 = vld [vmem:[%s0 + $0x4f4] sm:$0xff]
  %v209 = vld [vmem:[%s0 + $0x4fc] sm:$0xf]
  %v210 = vld [vmem:[%s1] sm:$0xf]
  %v211 = vld [vmem:[%s1 + $0x4] sm:$0xf]
  %v212 = vld [vmem:[%s1 + $0x8] sm:$0xf]
  %v213 = vld [vmem:[%s1 + $0xc] sm:$0xf]
  %v214 = vld [vmem:[%s1 + $0x10] sm:$0xf]
  %v215 = vld [vmem:[%s1 + $0x14] sm:$0xf]
  %v216 = vld [vmem:[%s1 + $0x18] sm:$0xf]
  %v217 = vld [vmem:[%s1 + $0x1c] sm:$0xf]
  %v218 = vld [vmem:[%s1 + $0x20] sm:$0xf]
  %v219 = vld [vmem:[%s1 + $0x24] sm:$0xf]
  %v220 = vld [vmem:[%s1 + $0x28] sm:$0xf]
  %v221 = vld [vmem:[%s1 + $0x2c] sm:$0xf]
  %v222 = vld [vmem:[%s1 + $0x30] sm:$0xf]
  %v223 = vld [vmem:[%s1 + $0x34] sm:$0xf]
  %v224 = vld [vmem:[%s1 + $0x38] sm:$0xf]
  %v225 = vld [vmem:[%s1 + $0x3c] sm:$0xf]
  %v226 = vld [vmem:[%s1 + $0x40] sm:$0xf]
  %v227 = vld [vmem:[%s1 + $0x44] sm:$0xf]
  %v228 = vld [vmem:[%s1 + $0x48] sm:$0xf]
  %v229 = vld [vmem:[%s1 + $0x4c] sm:$0xf]
  %v230 = vld [vmem:[%s1 + $0x50] sm:$0xf]
  %v231 = vld [vmem:[%s1 + $0x54] sm:$0xf]
  %v232 = vld [vmem:[%s1 + $0x58] sm:$0xf]
  %v233 = vld [vmem:[%s1 + $0x5c] sm:$0xf]
  %v234 = vld [vmem:[%s1 + $0x60] sm:$0xf]
  %v235 = vld [vmem:[%s1 + $0x64] sm:$0xf]
  %v236 = vld [vmem:[%s1 + $0x68] sm:$0xf]
  %v237 = vld [vmem:[%s1 + $0x6c] sm:$0xf]
  %v238 = vld [vmem:[%s1 + $0x70] sm:$0xf]
  %v239 = vld [vmem:[%s1 + $0x74] sm:$0xf]
  %v240 = vld [vmem:[%s1 + $0x78] sm:$0xf]
  %v241 = vld [vmem:[%s1 + $0x7c] sm:$0xf]
  %v242 = vld [vmem:[%s1 + $0x80] sm:$0xf]
  %v243 = vld [vmem:[%s1 + $0x84] sm:$0xf]
  %v244 = vld [vmem:[%s1 + $0x88] sm:$0xf]
  %v245 = vld [vmem:[%s1 + $0x8c] sm:$0xf]
  %v246 = vld [vmem:[%s1 + $0x90] sm:$0xf]
  %v247 = vld [vmem:[%s1 + $0x94] sm:$0xf]
  %v248 = vld [vmem:[%s1 + $0x98] sm:$0xf]
  %v249 = vld [vmem:[%s1 + $0x9c] sm:$0xf]
  %v250 = vld [vmem:[%s1 + $0xa0] sm:$0xf]
  %v251 = vld [vmem:[%s1 + $0xa4] sm:$0xf]
  %v252 = vld [vmem:[%s1 + $0xa8] sm:$0xf]
  %v253 = vld [vmem:[%s1 + $0xac] sm:$0xf]
  %v254 = vld [vmem:[%s1 + $0xb0] sm:$0xf]
  %v255 = vld [vmem:[%s1 + $0xb4] sm:$0xf]
  %v256 = vld [vmem:[%s1 + $0xb8] sm:$0xf]
  %v257 = vld [vmem:[%s1 + $0xbc] sm:$0xf]
  %v258 = vld [vmem:[%s1 + $0xc0] sm:$0xf]
  %v259 = vld [vmem:[%s1 + $0xc4] sm:$0xf]
  %v260 = vld [vmem:[%s1 + $0xc8] sm:$0xf]
  %v261 = vld [vmem:[%s1 + $0xcc] sm:$0xf]
  %v262 = vld [vmem:[%s1 + $0xd0] sm:$0xf]
  %v263 = vld [vmem:[%s1 + $0xd4] sm:$0xf]
  %v264 = vld [vmem:[%s1 + $0xd8] sm:$0xf]
  %v265 = vld [vmem:[%s1 + $0xdc] sm:$0xf]
  %v266 = vld [vmem:[%s1 + $0xe0] sm:$0xf]
  %v267 = vld [vmem:[%s1 + $0xe4] sm:$0xf]
  %v268 = vld [vmem:[%s1 + $0xe8] sm:$0xf]
  %v269 = vld [vmem:[%s1 + $0xec] sm:$0xf]
  %v270 = vld [vmem:[%s1 + $0xf0] sm:$0xf]
  %v271 = vld [vmem:[%s1 + $0xf4] sm:$0xf]
  %v272 = vld [vmem:[%s1 + $0xf8] sm:$0xf]
  %v273 = vld [vmem:[%s1 + $0xfc] sm:$0xf]
  %v274 = vld [vmem:[%s1 + $0x100] sm:$0xf]
  %v275 = vld [vmem:[%s1 + $0x104] sm:$0xf]
  %v276 = vld [vmem:[%s1 + $0x108] sm:$0xf]
  %v277 = vld [vmem:[%s1 + $0x10c] sm:$0xf]
  %v278 = vld [vmem:[%s1 + $0x110] sm:$0xf]
  %v279 = vld [vmem:[%s1 + $0x114] sm:$0xf]
  %v280 = vld [vmem:[%s1 + $0x118] sm:$0xf]
  %v281 = vld [vmem:[%s1 + $0x11c] sm:$0xf]
  %v474 = vunpack.c.l.b16 %v18
  %v475 = vunpack.c.h.b16 %v18
  %v476 = vunpack.c.l.b16 %v19
  %v477 = vunpack.c.h.b16 %v19
  %v478 = vunpack.c.l.b16 %v20
  %v479 = vunpack.c.l.b16 %v21
  %v480 = vunpack.c.h.b16 %v21
  %v481 = vunpack.c.l.b16 %v22
  %v482 = vunpack.c.h.b16 %v22
  %v483 = vunpack.c.l.b16 %v23
  %v484 = vunpack.c.l.b16 %v24
  %v485 = vunpack.c.h.b16 %v24
  %v486 = vunpack.c.l.b16 %v25
  %v487 = vunpack.c.h.b16 %v25
  %v488 = vunpack.c.l.b16 %v26
  %v489 = vunpack.c.l.b16 %v27
  %v490 = vunpack.c.h.b16 %v27
  %v491 = vunpack.c.l.b16 %v28
  %v492 = vunpack.c.h.b16 %v28
  %v493 = vunpack.c.l.b16 %v29
  %v494 = vunpack.c.l.b16 %v30
  %v495 = vunpack.c.h.b16 %v30
  %v496 = vunpack.c.l.b16 %v31
  %v497 = vunpack.c.h.b16 %v31
  %v498 = vunpack.c.l.b16 %v32
  %v499 = vunpack.c.l.b16 %v33
  %v500 = vunpack.c.h.b16 %v33
  %v501 = vunpack.c.l.b16 %v34
  %v502 = vunpack.c.h.b16 %v34
  %v503 = vunpack.c.l.b16 %v35
  %v504 = vunpack.c.l.b16 %v36
  %v505 = vunpack.c.h.b16 %v36
  %v506 = vunpack.c.l.b16 %v37
  %v507 = vunpack.c.h.b16 %v37
  %v508 = vunpack.c.l.b16 %v38
  %v509 = vunpack.c.l.b16 %v39
  %v510 = vunpack.c.h.b16 %v39
  %v511 = vunpack.c.l.b16 %v40
  %v512 = vunpack.c.h.b16 %v40
  %v513 = vunpack.c.l.b16 %v41
  %v514 = vunpack.c.l.b16 %v42
  %v515 = vunpack.c.h.b16 %v42
  %v516 = vunpack.c.l.b16 %v43
  %v517 = vunpack.c.h.b16 %v43
  %v518 = vunpack.c.l.b16 %v44
  %v519 = vunpack.c.l.b16 %v45
  %v520 = vunpack.c.h.b16 %v45
  %v521 = vunpack.c.l.b16 %v46
  %v522 = vunpack.c.h.b16 %v46
  %v523 = vunpack.c.l.b16 %v47
  %v524 = vunpack.c.l.b16 %v48
  %v525 = vunpack.c.h.b16 %v48
  %v526 = vunpack.c.l.b16 %v49
  %v527 = vunpack.c.h.b16 %v49
  %v528 = vunpack.c.l.b16 %v50
  %v529 = vunpack.c.l.b16 %v51
  %v530 = vunpack.c.h.b16 %v51
  %v531 = vunpack.c.l.b16 %v52
  %v532 = vunpack.c.h.b16 %v52
  %v533 = vunpack.c.l.b16 %v53
  %v534 = vunpack.c.l.b16 %v54
  %v535 = vunpack.c.h.b16 %v54
  %v536 = vunpack.c.l.b16 %v55
  %v537 = vunpack.c.h.b16 %v55
  %v538 = vunpack.c.l.b16 %v56
  %v539 = vunpack.c.l.b16 %v57
  %v540 = vunpack.c.h.b16 %v57
  %v541 = vunpack.c.l.b16 %v58
  %v542 = vunpack.c.h.b16 %v58
  %v543 = vunpack.c.l.b16 %v59
  %v544 = vunpack.c.l.b16 %v60
  %v545 = vunpack.c.h.b16 %v60
  %v546 = vunpack.c.l.b16 %v61
  %v547 = vunpack.c.h.b16 %v61
  %v548 = vunpack.c.l.b16 %v62
  %v549 = vunpack.c.l.b16 %v63
  %v550 = vunpack.c.h.b16 %v63
  %v551 = vunpack.c.l.b16 %v64
  %v552 = vunpack.c.h.b16 %v64
  %v553 = vunpack.c.l.b16 %v65
  %v554 = vunpack.c.l.b16 %v66
  %v555 = vunpack.c.h.b16 %v66
  %v556 = vunpack.c.l.b16 %v67
  %v557 = vunpack.c.h.b16 %v67
  %v558 = vunpack.c.l.b16 %v68
  %v559 = vunpack.c.l.b16 %v69
  %v560 = vunpack.c.h.b16 %v69
  %v561 = vunpack.c.l.b16 %v70
  %v562 = vunpack.c.h.b16 %v70
  %v563 = vunpack.c.l.b16 %v71
  %v564 = vunpack.c.l.b16 %v72
  %v565 = vunpack.c.h.b16 %v72
  %v566 = vunpack.c.l.b16 %v73
  %v567 = vunpack.c.h.b16 %v73
  %v568 = vunpack.c.l.b16 %v74
  %v569 = vunpack.c.l.b16 %v75
  %v570 = vunpack.c.h.b16 %v75
  %v571 = vunpack.c.l.b16 %v76
  %v572 = vunpack.c.h.b16 %v76
  %v573 = vunpack.c.l.b16 %v77
  %v574 = vunpack.c.l.b16 %v78
  %v575 = vunpack.c.h.b16 %v78
  %v576 = vunpack.c.l.b16 %v79
  %v577 = vunpack.c.h.b16 %v79
  %v578 = vunpack.c.l.b16 %v80
  %v579 = vunpack.c.l.b16 %v81
  %v580 = vunpack.c.h.b16 %v81
  %v581 = vunpack.c.l.b16 %v82
  %v582 = vunpack.c.h.b16 %v82
  %v583 = vunpack.c.l.b16 %v83
  %v584 = vunpack.c.l.b16 %v84
  %v585 = vunpack.c.h.b16 %v84
  %v586 = vunpack.c.l.b16 %v85
  %v587 = vunpack.c.h.b16 %v85
  %v588 = vunpack.c.l.b16 %v86
  %v589 = vunpack.c.l.b16 %v87
  %v590 = vunpack.c.h.b16 %v87
  %v591 = vunpack.c.l.b16 %v88
  %v592 = vunpack.c.h.b16 %v88
  %v593 = vunpack.c.l.b16 %v89
  %v594 = vunpack.c.l.b16 %v90
  %v595 = vunpack.c.h.b16 %v90
  %v596 = vunpack.c.l.b16 %v91
  %v597 = vunpack.c.h.b16 %v91
  %v598 = vunpack.c.l.b16 %v92
  %v599 = vunpack.c.l.b16 %v93
  %v600 = vunpack.c.h.b16 %v93
  %v601 = vunpack.c.l.b16 %v94
  %v602 = vunpack.c.h.b16 %v94
  %v603 = vunpack.c.l.b16 %v95
  %v604 = vunpack.c.l.b16 %v96
  %v605 = vunpack.c.h.b16 %v96
  %v606 = vunpack.c.l.b16 %v97
  %v607 = vunpack.c.h.b16 %v97
  %v608 = vunpack.c.l.b16 %v98
  %v609 = vunpack.c.l.b16 %v99
  %v610 = vunpack.c.h.b16 %v99
  %v611 = vunpack.c.l.b16 %v100
  %v612 = vunpack.c.h.b16 %v100
  %v613 = vunpack.c.l.b16 %v101
  %v614 = vunpack.c.l.b16 %v102
  %v615 = vunpack.c.h.b16 %v102
  %v616 = vunpack.c.l.b16 %v103
  %v617 = vunpack.c.h.b16 %v103
  %v618 = vunpack.c.l.b16 %v104
  %v619 = vunpack.c.l.b16 %v105
  %v620 = vunpack.c.h.b16 %v105
  %v621 = vunpack.c.l.b16 %v106
  %v622 = vunpack.c.h.b16 %v106
  %v623 = vunpack.c.l.b16 %v107
  %v624 = vunpack.c.l.b16 %v108
  %v625 = vunpack.c.h.b16 %v108
  %v626 = vunpack.c.l.b16 %v109
  %v627 = vunpack.c.h.b16 %v109
  %v628 = vunpack.c.l.b16 %v110
  %v629 = vunpack.c.l.b16 %v111
  %v630 = vunpack.c.h.b16 %v111
  %v631 = vunpack.c.l.b16 %v112
  %v632 = vunpack.c.h.b16 %v112
  %v633 = vunpack.c.l.b16 %v113
  %v634 = vunpack.c.l.b16 %v114
  %v635 = vunpack.c.h.b16 %v114
  %v636 = vunpack.c.l.b16 %v115
  %v637 = vunpack.c.h.b16 %v115
  %v638 = vunpack.c.l.b16 %v116
  %v639 = vunpack.c.l.b16 %v117
  %v640 = vunpack.c.h.b16 %v117
  %v641 = vunpack.c.l.b16 %v118
  %v642 = vunpack.c.h.b16 %v118
  %v643 = vunpack.c.l.b16 %v119
  %v644 = vunpack.c.l.b16 %v120
  %v645 = vunpack.c.h.b16 %v120
  %v646 = vunpack.c.l.b16 %v121
  %v647 = vunpack.c.h.b16 %v121
  %v648 = vunpack.c.l.b16 %v122
  %v649 = vunpack.c.l.b16 %v123
  %v650 = vunpack.c.h.b16 %v123
  %v651 = vunpack.c.l.b16 %v124
  %v652 = vunpack.c.h.b16 %v124
  %v653 = vunpack.c.l.b16 %v125
  %v654 = vunpack.c.l.b16 %v126
  %v655 = vunpack.c.h.b16 %v126
  %v656 = vunpack.c.l.b16 %v127
  %v657 = vunpack.c.h.b16 %v127
  %v658 = vunpack.c.l.b16 %v128
  %v659 = vunpack.c.l.b16 %v129
  %v660 = vunpack.c.h.b16 %v129
  %v661 = vunpack.c.l.b16 %v130
  %v662 = vunpack.c.h.b16 %v130
  %v663 = vunpack.c.l.b16 %v131
  %v664 = vunpack.c.l.b16 %v132
  %v665 = vunpack.c.h.b16 %v132
  %v666 = vunpack.c.l.b16 %v133
  %v667 = vunpack.c.h.b16 %v133
  %v668 = vunpack.c.l.b16 %v134
  %v669 = vunpack.c.l.b16 %v135
  %v670 = vunpack.c.h.b16 %v135
  %v671 = vunpack.c.l.b16 %v136
  %v672 = vunpack.c.h.b16 %v136
  %v673 = vunpack.c.l.b16 %v137
  %v674 = vunpack.c.l.b16 %v138
  %v675 = vunpack.c.h.b16 %v138
  %v676 = vunpack.c.l.b16 %v139
  %v677 = vunpack.c.h.b16 %v139
  %v678 = vunpack.c.l.b16 %v140
  %v679 = vunpack.c.l.b16 %v141
  %v680 = vunpack.c.h.b16 %v141
  %v681 = vunpack.c.l.b16 %v142
  %v682 = vunpack.c.h.b16 %v142
  %v683 = vunpack.c.l.b16 %v143
  %v684 = vunpack.c.l.b16 %v144
  %v685 = vunpack.c.h.b16 %v144
  %v686 = vunpack.c.l.b16 %v145
  %v687 = vunpack.c.h.b16 %v145
  %v688 = vunpack.c.l.b16 %v146
  %v689 = vunpack.c.l.b16 %v147
  %v690 = vunpack.c.h.b16 %v147
  %v691 = vunpack.c.l.b16 %v148
  %v692 = vunpack.c.h.b16 %v148
  %v693 = vunpack.c.l.b16 %v149
  %v694 = vunpack.c.l.b16 %v150
  %v695 = vunpack.c.h.b16 %v150
  %v696 = vunpack.c.l.b16 %v151
  %v697 = vunpack.c.h.b16 %v151
  %v698 = vunpack.c.l.b16 %v152
  %v699 = vunpack.c.l.b16 %v153
  %v700 = vunpack.c.h.b16 %v153
  %v701 = vunpack.c.l.b16 %v154
  %v702 = vunpack.c.h.b16 %v154
  %v703 = vunpack.c.l.b16 %v155
  %v704 = vunpack.c.l.b16 %v156
  %v705 = vunpack.c.h.b16 %v156
  %v706 = vunpack.c.l.b16 %v157
  %v707 = vunpack.c.h.b16 %v157
  %v708 = vunpack.c.l.b16 %v158
  %v709 = vunpack.c.l.b16 %v159
  %v710 = vunpack.c.h.b16 %v159
  %v711 = vunpack.c.l.b16 %v160
  %v712 = vunpack.c.h.b16 %v160
  %v713 = vunpack.c.l.b16 %v161
  %v714 = vunpack.c.l.b16 %v162
  %v715 = vunpack.c.h.b16 %v162
  %v716 = vunpack.c.l.b16 %v163
  %v717 = vunpack.c.h.b16 %v163
  %v718 = vunpack.c.l.b16 %v164
  %v719 = vunpack.c.l.b16 %v165
  %v720 = vunpack.c.h.b16 %v165
  %v721 = vunpack.c.l.b16 %v166
  %v722 = vunpack.c.h.b16 %v166
  %v723 = vunpack.c.l.b16 %v167
  %v724 = vunpack.c.l.b16 %v168
  %v725 = vunpack.c.h.b16 %v168
  %v726 = vunpack.c.l.b16 %v169
  %v727 = vunpack.c.h.b16 %v169
  %v728 = vunpack.c.l.b16 %v170
  %v729 = vunpack.c.l.b16 %v171
  %v730 = vunpack.c.h.b16 %v171
  %v731 = vunpack.c.l.b16 %v172
  %v732 = vunpack.c.h.b16 %v172
  %v733 = vunpack.c.l.b16 %v173
  %v734 = vunpack.c.l.b16 %v174
  %v735 = vunpack.c.h.b16 %v174
  %v736 = vunpack.c.l.b16 %v175
  %v737 = vunpack.c.h.b16 %v175
  %v738 = vunpack.c.l.b16 %v176
  %v739 = vunpack.c.l.b16 %v177
  %v740 = vunpack.c.h.b16 %v177
  %v741 = vunpack.c.l.b16 %v178
  %v742 = vunpack.c.h.b16 %v178
  %v743 = vunpack.c.l.b16 %v179
  %v744 = vunpack.c.l.b16 %v180
  %v745 = vunpack.c.h.b16 %v180
  %v746 = vunpack.c.l.b16 %v181
  %v747 = vunpack.c.h.b16 %v181
  %v748 = vunpack.c.l.b16 %v182
  %v749 = vunpack.c.l.b16 %v183
  %v750 = vunpack.c.h.b16 %v183
  %v751 = vunpack.c.l.b16 %v184
  %v752 = vunpack.c.h.b16 %v184
  %v753 = vunpack.c.l.b16 %v185
  %v754 = vunpack.c.l.b16 %v186
  %v755 = vunpack.c.h.b16 %v186
  %v756 = vunpack.c.l.b16 %v187
  %v757 = vunpack.c.h.b16 %v187
  %v758 = vunpack.c.l.b16 %v188
  %v759 = vunpack.c.l.b16 %v189
  %v760 = vunpack.c.h.b16 %v189
  %v761 = vunpack.c.l.b16 %v190
  %v762 = vunpack.c.h.b16 %v190
  %v763 = vunpack.c.l.b16 %v191
  %v764 = vunpack.c.l.b16 %v192
  %v765 = vunpack.c.h.b16 %v192
  %v766 = vunpack.c.l.b16 %v193
  %v767 = vunpack.c.h.b16 %v193
  %v768 = vunpack.c.l.b16 %v194
  %v769 = vunpack.c.l.b16 %v195
  %v770 = vunpack.c.h.b16 %v195
  %v771 = vunpack.c.l.b16 %v196
  %v772 = vunpack.c.h.b16 %v196
  %v773 = vunpack.c.l.b16 %v197
  %v774 = vunpack.c.l.b16 %v198
  %v775 = vunpack.c.h.b16 %v198
  %v776 = vunpack.c.l.b16 %v199
  %v777 = vunpack.c.h.b16 %v199
  %v778 = vunpack.c.l.b16 %v200
  %v779 = vunpack.c.l.b16 %v201
  %v780 = vunpack.c.h.b16 %v201
  %v781 = vunpack.c.l.b16 %v202
  %v782 = vunpack.c.h.b16 %v202
  %v783 = vunpack.c.l.b16 %v203
  %v784 = vunpack.c.l.b16 %v204
  %v785 = vunpack.c.h.b16 %v204
  %v786 = vunpack.c.l.b16 %v205
  %v787 = vunpack.c.h.b16 %v205
  %v788 = vunpack.c.l.b16 %v206
  %v789 = vunpack.c.l.b16 %v207
  %v790 = vunpack.c.h.b16 %v207
  %v791 = vunpack.c.l.b16 %v208
  %v792 = vunpack.c.h.b16 %v208
  %v793 = vunpack.c.l.b16 %v209
  %v794 = vpack.c.b16 %v479, %v474
  %v795 = vpack.c.b16 %v480, %v475
  %v796 = vpack.c.b16 %v481, %v476
  %v797 = vpack.c.b16 %v482, %v477
  %v798 = vpack.c.b16 %v483, %v478
  %v799 = vpack.c.b16 %v489, %v484
  %v800 = vpack.c.b16 %v490, %v485
  %v801 = vpack.c.b16 %v491, %v486
  %v802 = vpack.c.b16 %v492, %v487
  %v803 = vpack.c.b16 %v493, %v488
  %v804 = vpack.c.b16 %v499, %v494
  %v805 = vpack.c.b16 %v500, %v495
  %v806 = vpack.c.b16 %v501, %v496
  %v807 = vpack.c.b16 %v502, %v497
  %v808 = vpack.c.b16 %v503, %v498
  %v809 = vpack.c.b16 %v509, %v504
  %v810 = vpack.c.b16 %v510, %v505
  %v811 = vpack.c.b16 %v511, %v506
  %v812 = vpack.c.b16 %v512, %v507
  %v813 = vpack.c.b16 %v513, %v508
  %v814 = vpack.c.b16 %v519, %v514
  %v815 = vpack.c.b16 %v520, %v515
  %v816 = vpack.c.b16 %v521, %v516
  %v817 = vpack.c.b16 %v522, %v517
  %v818 = vpack.c.b16 %v523, %v518
  %v819 = vpack.c.b16 %v529, %v524
  %v820 = vpack.c.b16 %v530, %v525
  %v821 = vpack.c.b16 %v531, %v526
  %v822 = vpack.c.b16 %v532, %v527
  %v823 = vpack.c.b16 %v533, %v528
  %v824 = vpack.c.b16 %v539, %v534
  %v825 = vpack.c.b16 %v540, %v535
  %v826 = vpack.c.b16 %v541, %v536
  %v827 = vpack.c.b16 %v542, %v537
  %v828 = vpack.c.b16 %v543, %v538
  %v829 = vpack.c.b16 %v549, %v544
  %v830 = vpack.c.b16 %v550, %v545
  %v831 = vpack.c.b16 %v551, %v546
  %v832 = vpack.c.b16 %v552, %v547
  %v833 = vpack.c.b16 %v553, %v548
  %v834 = vpack.c.b16 %v559, %v554
  %v835 = vpack.c.b16 %v560, %v555
  %v836 = vpack.c.b16 %v561, %v556
  %v837 = vpack.c.b16 %v562, %v557
  %v838 = vpack.c.b16 %v563, %v558
  %v839 = vpack.c.b16 %v569, %v564
  %v840 = vpack.c.b16 %v570, %v565
  %v841 = vpack.c.b16 %v571, %v566
  %v842 = vpack.c.b16 %v572, %v567
  %v843 = vpack.c.b16 %v573, %v568
  %v844 = vpack.c.b16 %v579, %v574
  %v845 = vpack.c.b16 %v580, %v575
  %v846 = vpack.c.b16 %v581, %v576
  %v847 = vpack.c.b16 %v582, %v577
  %v848 = vpack.c.b16 %v583, %v578
  %v849 = vpack.c.b16 %v589, %v584
  %v850 = vpack.c.b16 %v590, %v585
  %v851 = vpack.c.b16 %v591, %v586
  %v852 = vpack.c.b16 %v592, %v587
  %v853 = vpack.c.b16 %v593, %v588
  %v854 = vpack.c.b16 %v599, %v594
  %v855 = vpack.c.b16 %v600, %v595
  %v856 = vpack.c.b16 %v601, %v596
  %v857 = vpack.c.b16 %v602, %v597
  %v858 = vpack.c.b16 %v603, %v598
  %v859 = vpack.c.b16 %v609, %v604
  %v860 = vpack.c.b16 %v610, %v605
  %v861 = vpack.c.b16 %v611, %v606
  %v862 = vpack.c.b16 %v612, %v607
  %v863 = vpack.c.b16 %v613, %v608
  %v864 = vpack.c.b16 %v619, %v614
  %v865 = vpack.c.b16 %v620, %v615
  %v866 = vpack.c.b16 %v621, %v616
  %v867 = vpack.c.b16 %v622, %v617
  %v868 = vpack.c.b16 %v623, %v618
  %v869 = vpack.c.b16 %v629, %v624
  %v870 = vpack.c.b16 %v630, %v625
  %v871 = vpack.c.b16 %v631, %v626
  %v872 = vpack.c.b16 %v632, %v627
  %v873 = vpack.c.b16 %v633, %v628
  %v874 = vpack.c.b16 %v639, %v634
  %v875 = vpack.c.b16 %v640, %v635
  %v876 = vpack.c.b16 %v641, %v636
  %v877 = vpack.c.b16 %v642, %v637
  %v878 = vpack.c.b16 %v643, %v638
  %v879 = vpack.c.b16 %v649, %v644
  %v880 = vpack.c.b16 %v650, %v645
  %v881 = vpack.c.b16 %v651, %v646
  %v882 = vpack.c.b16 %v652, %v647
  %v883 = vpack.c.b16 %v653, %v648
  %v884 = vpack.c.b16 %v659, %v654
  %v885 = vpack.c.b16 %v660, %v655
  %v886 = vpack.c.b16 %v661, %v656
  %v887 = vpack.c.b16 %v662, %v657
  %v888 = vpack.c.b16 %v663, %v658
  %v889 = vpack.c.b16 %v669, %v664
  %v890 = vpack.c.b16 %v670, %v665
  %v891 = vpack.c.b16 %v671, %v666
  %v892 = vpack.c.b16 %v672, %v667
  %v893 = vpack.c.b16 %v673, %v668
  %v894 = vpack.c.b16 %v679, %v674
  %v895 = vpack.c.b16 %v680, %v675
  %v896 = vpack.c.b16 %v681, %v676
  %v897 = vpack.c.b16 %v682, %v677
  %v898 = vpack.c.b16 %v683, %v678
  %v899 = vpack.c.b16 %v689, %v684
  %v900 = vpack.c.b16 %v690, %v685
  %v901 = vpack.c.b16 %v691, %v686
  %v902 = vpack.c.b16 %v692, %v687
  %v903 = vpack.c.b16 %v693, %v688
  %v904 = vpack.c.b16 %v699, %v694
  %v905 = vpack.c.b16 %v700, %v695
  %v906 = vpack.c.b16 %v701, %v696
  %v907 = vpack.c.b16 %v702, %v697
  %v908 = vpack.c.b16 %v703, %v698
  %v909 = vpack.c.b16 %v709, %v704
  %v910 = vpack.c.b16 %v710, %v705
  %v911 = vpack.c.b16 %v711, %v706
  %v912 = vpack.c.b16 %v712, %v707
  %v913 = vpack.c.b16 %v713, %v708
  %v914 = vpack.c.b16 %v719, %v714
  %v915 = vpack.c.b16 %v720, %v715
  %v916 = vpack.c.b16 %v721, %v716
  %v917 = vpack.c.b16 %v722, %v717
  %v918 = vpack.c.b16 %v723, %v718
  %v919 = vpack.c.b16 %v729, %v724
  %v920 = vpack.c.b16 %v730, %v725
  %v921 = vpack.c.b16 %v731, %v726
  %v922 = vpack.c.b16 %v732, %v727
  %v923 = vpack.c.b16 %v733, %v728
  %v924 = vpack.c.b16 %v739, %v734
  %v925 = vpack.c.b16 %v740, %v735
  %v926 = vpack.c.b16 %v741, %v736
  %v927 = vpack.c.b16 %v742, %v737
  %v928 = vpack.c.b16 %v743, %v738
  %v929 = vpack.c.b16 %v749, %v744
  %v930 = vpack.c.b16 %v750, %v745
  %v931 = vpack.c.b16 %v751, %v746
  %v932 = vpack.c.b16 %v752, %v747
  %v933 = vpack.c.b16 %v753, %v748
  %v934 = vpack.c.b16 %v759, %v754
  %v935 = vpack.c.b16 %v760, %v755
  %v936 = vpack.c.b16 %v761, %v756
  %v937 = vpack.c.b16 %v762, %v757
  %v938 = vpack.c.b16 %v763, %v758
  %v939 = vpack.c.b16 %v769, %v764
  %v940 = vpack.c.b16 %v770, %v765
  %v941 = vpack.c.b16 %v771, %v766
  %v942 = vpack.c.b16 %v772, %v767
  %v943 = vpack.c.b16 %v773, %v768
  %v944 = vpack.c.b16 %v779, %v774
  %v945 = vpack.c.b16 %v780, %v775
  %v946 = vpack.c.b16 %v781, %v776
  %v947 = vpack.c.b16 %v782, %v777
  %v948 = vpack.c.b16 %v783, %v778
  %v949 = vpack.c.b16 %v789, %v784
  %v950 = vpack.c.b16 %v790, %v785
  %v951 = vpack.c.b16 %v791, %v786
  %v952 = vpack.c.b16 %v792, %v787
  %v953 = vpack.c.b16 %v793, %v788
  %v1154 = vunpack.c.l.b16 %v210
  %v1155 = vunpack.c.l.b16 %v211
  %v1156 = vunpack.c.l.b16 %v212
  %v1157 = vunpack.c.l.b16 %v213
  %v1158 = vunpack.c.l.b16 %v214
  %v1159 = vunpack.c.l.b16 %v215
  %v1160 = vunpack.c.l.b16 %v216
  %v1161 = vunpack.c.l.b16 %v217
  %v1162 = vunpack.c.l.b16 %v218
  %v1163 = vunpack.c.l.b16 %v219
  %v1164 = vunpack.c.l.b16 %v220
  %v1165 = vunpack.c.l.b16 %v221
  %v1166 = vunpack.c.l.b16 %v222
  %v1167 = vunpack.c.l.b16 %v223
  %v1168 = vunpack.c.l.b16 %v224
  %v1169 = vunpack.c.l.b16 %v225
  %v1170 = vunpack.c.l.b16 %v226
  %v1171 = vunpack.c.l.b16 %v227
  %v1172 = vunpack.c.l.b16 %v228
  %v1173 = vunpack.c.l.b16 %v229
  %v1174 = vunpack.c.l.b16 %v230
  %v1175 = vunpack.c.l.b16 %v231
  %v1176 = vunpack.c.l.b16 %v232
  %v1177 = vunpack.c.l.b16 %v233
  %v1178 = vunpack.c.l.b16 %v234
  %v1179 = vunpack.c.l.b16 %v235
  %v1180 = vunpack.c.l.b16 %v236
  %v1181 = vunpack.c.l.b16 %v237
  %v1182 = vunpack.c.l.b16 %v238
  %v1183 = vunpack.c.l.b16 %v239
  %v1184 = vunpack.c.l.b16 %v240
  %v1185 = vunpack.c.l.b16 %v241
  %v1186 = vunpack.c.l.b16 %v242
  %v1187 = vunpack.c.l.b16 %v243
  %v1188 = vunpack.c.l.b16 %v244
  %v1189 = vunpack.c.l.b16 %v245
  %v1190 = vunpack.c.l.b16 %v246
  %v1191 = vunpack.c.l.b16 %v247
  %v1192 = vunpack.c.l.b16 %v248
  %v1193 = vunpack.c.l.b16 %v249
  %v1194 = vunpack.c.l.b16 %v250
  %v1195 = vunpack.c.l.b16 %v251
  %v1196 = vunpack.c.l.b16 %v252
  %v1197 = vunpack.c.l.b16 %v253
  %v1198 = vunpack.c.l.b16 %v254
  %v1199 = vunpack.c.l.b16 %v255
  %v1200 = vunpack.c.l.b16 %v256
  %v1201 = vunpack.c.l.b16 %v257
  %v1202 = vunpack.c.l.b16 %v258
  %v1203 = vunpack.c.l.b16 %v259
  %v1204 = vunpack.c.l.b16 %v260
  %v1205 = vunpack.c.l.b16 %v261
  %v1206 = vunpack.c.l.b16 %v262
  %v1207 = vunpack.c.l.b16 %v263
  %v1208 = vunpack.c.l.b16 %v264
  %v1209 = vunpack.c.l.b16 %v265
  %v1210 = vunpack.c.l.b16 %v266
  %v1211 = vunpack.c.l.b16 %v267
  %v1212 = vunpack.c.l.b16 %v268
  %v1213 = vunpack.c.l.b16 %v269
  %v1214 = vunpack.c.l.b16 %v270
  %v1215 = vunpack.c.l.b16 %v271
  %v1216 = vunpack.c.l.b16 %v272
  %v1217 = vunpack.c.l.b16 %v273
  %v1218 = vunpack.c.l.b16 %v274
  %v1219 = vunpack.c.l.b16 %v275
  %v1220 = vunpack.c.l.b16 %v276
  %v1221 = vunpack.c.l.b16 %v277
  %v1222 = vunpack.c.l.b16 %v278
  %v1223 = vunpack.c.l.b16 %v279
  %v1224 = vunpack.c.l.b16 %v280
  %v1225 = vunpack.c.l.b16 %v281
  %v1226 = vpack.c.b16 %v1155, %v1154
  %v1227 = vpack.c.b16 %v1157, %v1156
  %v1228 = vpack.c.b16 %v1159, %v1158
  %v1229 = vpack.c.b16 %v1161, %v1160
  %v1230 = vpack.c.b16 %v1163, %v1162
  %v1231 = vpack.c.b16 %v1165, %v1164
  %v1232 = vpack.c.b16 %v1167, %v1166
  %v1233 = vpack.c.b16 %v1169, %v1168
  %v1234 = vpack.c.b16 %v1171, %v1170
  %v1235 = vpack.c.b16 %v1173, %v1172
  %v1236 = vpack.c.b16 %v1175, %v1174
  %v1237 = vpack.c.b16 %v1177, %v1176
  %v1238 = vpack.c.b16 %v1179, %v1178
  %v1239 = vpack.c.b16 %v1181, %v1180
  %v1240 = vpack.c.b16 %v1183, %v1182
  %v1241 = vpack.c.b16 %v1185, %v1184
  %v1242 = vpack.c.b16 %v1187, %v1186
  %v1243 = vpack.c.b16 %v1189, %v1188
  %v1244 = vpack.c.b16 %v1191, %v1190
  %v1245 = vpack.c.b16 %v1193, %v1192
  %v1246 = vpack.c.b16 %v1195, %v1194
  %v1247 = vpack.c.b16 %v1197, %v1196
  %v1248 = vpack.c.b16 %v1199, %v1198
  %v1249 = vpack.c.b16 %v1201, %v1200
  %v1250 = vpack.c.b16 %v1203, %v1202
  %v1251 = vpack.c.b16 %v1205, %v1204
  %v1252 = vpack.c.b16 %v1207, %v1206
  %v1253 = vpack.c.b16 %v1209, %v1208
  %v1254 = vpack.c.b16 %v1211, %v1210
  %v1255 = vpack.c.b16 %v1213, %v1212
  %v1256 = vpack.c.b16 %v1215, %v1214
  %v1257 = vpack.c.b16 %v1217, %v1216
  %v1258 = vpack.c.b16 %v1219, %v1218
  %v1259 = vpack.c.b16 %v1221, %v1220
  %v1260 = vpack.c.b16 %v1223, %v1222
  %v1261 = vpack.c.b16 %v1225, %v1224
  %vm1298 = vcmask 523264
  %v1300 = vsel %vm1298, %v798, 0
  %v1303 = vsel %vm1298, %v803, 0
  %v1306 = vsel %vm1298, %v808, 0
  %v1309 = vsel %vm1298, %v813, 0
  %v1312 = vsel %vm1298, %v818, 0
  %v1315 = vsel %vm1298, %v823, 0
  %v1318 = vsel %vm1298, %v828, 0
  %v1321 = vsel %vm1298, %v833, 0
  %v1324 = vsel %vm1298, %v838, 0
  %v1327 = vsel %vm1298, %v843, 0
  %v1330 = vsel %vm1298, %v848, 0
  %v1333 = vsel %vm1298, %v853, 0
  %v1336 = vsel %vm1298, %v858, 0
  %v1339 = vsel %vm1298, %v863, 0
  %v1342 = vsel %vm1298, %v868, 0
  %v1345 = vsel %vm1298, %v873, 0
  %v1348 = vsel %vm1298, %v878, 0
  %v1351 = vsel %vm1298, %v883, 0
  %v1354 = vsel %vm1298, %v888, 0
  %v1357 = vsel %vm1298, %v893, 0
  %v1360 = vsel %vm1298, %v898, 0
  %v1363 = vsel %vm1298, %v903, 0
  %v1366 = vsel %vm1298, %v908, 0
  %v1369 = vsel %vm1298, %v913, 0
  %v1372 = vsel %vm1298, %v918, 0
  %v1375 = vsel %vm1298, %v923, 0
  %v1378 = vsel %vm1298, %v928, 0
  %v1381 = vsel %vm1298, %v933, 0
  %v1384 = vsel %vm1298, %v938, 0
  %v1387 = vsel %vm1298, %v943, 0
  %v1390 = vsel %vm1298, %v948, 0
  %v1393 = vsel %vm1298, %v953, 0
  %1395 = vmatpush.bf16.msra.mxu0 %v1233
  %1396 = vmatpush.bf16.msra.mxu0 %v1232
  %1397 = vmatpush.bf16.msra.mxu0 %v1231
  %1398 = vmatpush.bf16.msra.mxu0 %v1230
  %1399 = vmatpush.bf16.msra.mxu0 %v1229
  %1400 = vmatpush.bf16.msra.mxu0 %v1228
  %1401 = vmatpush.bf16.msra.mxu0 %v1227
  %1402 = vmatpush.bf16.msra.mxu0 %v1226
  %1403 = vmatmul.bf16.gmra.mxu0 %v794
  %v1404 = vpop.f32.mrf.mxu0
  %v1405 = vadd.f32 0.0, %v1404
  %v1406 = vpop.f32.mrf.mxu0
  %v1407 = vadd.f32 0.0, %v1406
  %1408 = vmatmul.bf16.gmra.mxu0 %v799
  %v1409 = vpop.f32.mrf.mxu0
  %v1410 = vadd.f32 0.0, %v1409
  %v1411 = vpop.f32.mrf.mxu0
  %v1412 = vadd.f32 0.0, %v1411
  %1413 = vmatmul.bf16.gmra.mxu0 %v804
  %v1414 = vpop.f32.mrf.mxu0
  %v1415 = vadd.f32 0.0, %v1414
  %v1416 = vpop.f32.mrf.mxu0
  %v1417 = vadd.f32 0.0, %v1416
  %1418 = vmatmul.bf16.gmra.mxu0 %v809
  %v1419 = vpop.f32.mrf.mxu0
  %v1420 = vadd.f32 0.0, %v1419
  %v1421 = vpop.f32.mrf.mxu0
  %v1422 = vadd.f32 0.0, %v1421
  %1423 = vmatmul.bf16.gmra.mxu0 %v814
  %v1424 = vpop.f32.mrf.mxu0
  %v1425 = vadd.f32 0.0, %v1424
  %v1426 = vpop.f32.mrf.mxu0
  %v1427 = vadd.f32 0.0, %v1426
  %1428 = vmatmul.bf16.gmra.mxu0 %v819
  %v1429 = vpop.f32.mrf.mxu0
  %v1430 = vadd.f32 0.0, %v1429
  %v1431 = vpop.f32.mrf.mxu0
  %v1432 = vadd.f32 0.0, %v1431
  %1433 = vmatmul.bf16.gmra.mxu0 %v824
  %v1434 = vpop.f32.mrf.mxu0
  %v1435 = vadd.f32 0.0, %v1434
  %v1436 = vpop.f32.mrf.mxu0
  %v1437 = vadd.f32 0.0, %v1436
  %1438 = vmatmul.bf16.gmra.mxu0 %v829
  %v1439 = vpop.f32.mrf.mxu0
  %v1440 = vadd.f32 0.0, %v1439
  %v1441 = vpop.f32.mrf.mxu0
  %v1442 = vadd.f32 0.0, %v1441
  %1443 = vmatmul.bf16.gmra.mxu0 %v834
  %v1444 = vpop.f32.mrf.mxu0
  %v1445 = vadd.f32 0.0, %v1444
  %v1446 = vpop.f32.mrf.mxu0
  %v1447 = vadd.f32 0.0, %v1446
  %1448 = vmatmul.bf16.gmra.mxu0 %v839
  %v1449 = vpop.f32.mrf.mxu0
  %v1450 = vadd.f32 0.0, %v1449
  %v1451 = vpop.f32.mrf.mxu0
  %v1452 = vadd.f32 0.0, %v1451
  %1453 = vmatmul.bf16.gmra.mxu0 %v844
  %v1454 = vpop.f32.mrf.mxu0
  %v1455 = vadd.f32 0.0, %v1454
  %v1456 = vpop.f32.mrf.mxu0
  %v1457 = vadd.f32 0.0, %v1456
  %1458 = vmatmul.bf16.gmra.mxu0 %v849
  %v1459 = vpop.f32.mrf.mxu0
  %v1460 = vadd.f32 0.0, %v1459
  %v1461 = vpop.f32.mrf.mxu0
  %v1462 = vadd.f32 0.0, %v1461
  %1463 = vmatmul.bf16.gmra.mxu0 %v854
  %v1464 = vpop.f32.mrf.mxu0
  %v1465 = vadd.f32 0.0, %v1464
  %v1466 = vpop.f32.mrf.mxu0
  %v1467 = vadd.f32 0.0, %v1466
  %1468 = vmatmul.bf16.gmra.mxu0 %v859
  %v1469 = vpop.f32.mrf.mxu0
  %v1470 = vadd.f32 0.0, %v1469
  %v1471 = vpop.f32.mrf.mxu0
  %v1472 = vadd.f32 0.0, %v1471
  %1473 = vmatmul.bf16.gmra.mxu0 %v864
  %v1474 = vpop.f32.mrf.mxu0
  %v1475 = vadd.f32 0.0, %v1474
  %v1476 = vpop.f32.mrf.mxu0
  %v1477 = vadd.f32 0.0, %v1476
  %1478 = vmatmul.bf16.gmra.mxu0 %v869
  %v1479 = vpop.f32.mrf.mxu0
  %v1480 = vadd.f32 0.0, %v1479
  %v1481 = vpop.f32.mrf.mxu0
  %v1482 = vadd.f32 0.0, %v1481
  %1483 = vmatmul.bf16.gmra.mxu0 %v874
  %v1484 = vpop.f32.mrf.mxu0
  %v1485 = vadd.f32 0.0, %v1484
  %v1486 = vpop.f32.mrf.mxu0
  %v1487 = vadd.f32 0.0, %v1486
  %1488 = vmatmul.bf16.gmra.mxu0 %v879
  %v1489 = vpop.f32.mrf.mxu0
  %v1490 = vadd.f32 0.0, %v1489
  %v1491 = vpop.f32.mrf.mxu0
  %v1492 = vadd.f32 0.0, %v1491
  %1493 = vmatmul.bf16.gmra.mxu0 %v884
  %v1494 = vpop.f32.mrf.mxu0
  %v1495 = vadd.f32 0.0, %v1494
  %v1496 = vpop.f32.mrf.mxu0
  %v1497 = vadd.f32 0.0, %v1496
  %1498 = vmatmul.bf16.gmra.mxu0 %v889
  %v1499 = vpop.f32.mrf.mxu0
  %v1500 = vadd.f32 0.0, %v1499
  %v1501 = vpop.f32.mrf.mxu0
  %v1502 = vadd.f32 0.0, %v1501
  %1503 = vmatmul.bf16.gmra.mxu0 %v894
  %v1504 = vpop.f32.mrf.mxu0
  %v1505 = vadd.f32 0.0, %v1504
  %v1506 = vpop.f32.mrf.mxu0
  %v1507 = vadd.f32 0.0, %v1506
  %1508 = vmatmul.bf16.gmra.mxu0 %v899
  %v1509 = vpop.f32.mrf.mxu0
  %v1510 = vadd.f32 0.0, %v1509
  %v1511 = vpop.f32.mrf.mxu0
  %v1512 = vadd.f32 0.0, %v1511
  %1513 = vmatmul.bf16.gmra.mxu0 %v904
  %v1514 = vpop.f32.mrf.mxu0
  %v1515 = vadd.f32 0.0, %v1514
  %v1516 = vpop.f32.mrf.mxu0
  %v1517 = vadd.f32 0.0, %v1516
  %1518 = vmatmul.bf16.gmra.mxu0 %v909
  %v1519 = vpop.f32.mrf.mxu0
  %v1520 = vadd.f32 0.0, %v1519
  %v1521 = vpop.f32.mrf.mxu0
  %v1522 = vadd.f32 0.0, %v1521
  %1523 = vmatmul.bf16.gmra.mxu0 %v914
  %v1524 = vpop.f32.mrf.mxu0
  %v1525 = vadd.f32 0.0, %v1524
  %v1526 = vpop.f32.mrf.mxu0
  %v1527 = vadd.f32 0.0, %v1526
  %1528 = vmatmul.bf16.gmra.mxu0 %v919
  %v1529 = vpop.f32.mrf.mxu0
  %v1530 = vadd.f32 0.0, %v1529
  %v1531 = vpop.f32.mrf.mxu0
  %v1532 = vadd.f32 0.0, %v1531
  %1533 = vmatmul.bf16.gmra.mxu0 %v924
  %v1534 = vpop.f32.mrf.mxu0
  %v1535 = vadd.f32 0.0, %v1534
  %v1536 = vpop.f32.mrf.mxu0
  %v1537 = vadd.f32 0.0, %v1536
  %1538 = vmatmul.bf16.gmra.mxu0 %v929
  %v1539 = vpop.f32.mrf.mxu0
  %v1540 = vadd.f32 0.0, %v1539
  %v1541 = vpop.f32.mrf.mxu0
  %v1542 = vadd.f32 0.0, %v1541
  %1543 = vmatmul.bf16.gmra.mxu0 %v934
  %v1544 = vpop.f32.mrf.mxu0
  %v1545 = vadd.f32 0.0, %v1544
  %v1546 = vpop.f32.mrf.mxu0
  %v1547 = vadd.f32 0.0, %v1546
  %1548 = vmatmul.bf16.gmra.mxu0 %v939
  %v1549 = vpop.f32.mrf.mxu0
  %v1550 = vadd.f32 0.0, %v1549
  %v1551 = vpop.f32.mrf.mxu0
  %v1552 = vadd.f32 0.0, %v1551
  %1553 = vmatmul.bf16.gmra.mxu0 %v944
  %v1554 = vpop.f32.mrf.mxu0
  %v1555 = vadd.f32 0.0, %v1554
  %v1556 = vpop.f32.mrf.mxu0
  %v1557 = vadd.f32 0.0, %v1556
  %1558 = vmatmul.bf16.gmra.mxu0 %v949
  %v1559 = vpop.f32.mrf.mxu0
  %v1560 = vadd.f32 0.0, %v1559
  %v1561 = vpop.f32.mrf.mxu0
  %v1562 = vadd.f32 0.0, %v1561
  %1563 = vdwg.mxu0
  %1564 = vmatpush.bf16.msra.mxu0 %v1241
  %1565 = vmatpush.bf16.msra.mxu0 %v1240
  %1566 = vmatpush.bf16.msra.mxu0 %v1239
  %1567 = vmatpush.bf16.msra.mxu0 %v1238
  %1568 = vmatpush.bf16.msra.mxu0 %v1237
  %1569 = vmatpush.bf16.msra.mxu0 %v1236
  %1570 = vmatpush.bf16.msra.mxu0 %v1235
  %1571 = vmatpush.bf16.msra.mxu0 %v1234
  %1572 = vmatmul.bf16.gmra.mxu0 %v795
  %v1573 = vpop.f32.mrf.mxu0
  %v1574 = vadd.f32 %v1405, %v1573
  %v1575 = vpop.f32.mrf.mxu0
  %v1576 = vadd.f32 %v1407, %v1575
  %1577 = vmatmul.bf16.gmra.mxu0 %v800
  %v1578 = vpop.f32.mrf.mxu0
  %v1579 = vadd.f32 %v1410, %v1578
  %v1580 = vpop.f32.mrf.mxu0
  %v1581 = vadd.f32 %v1412, %v1580
  %1582 = vmatmul.bf16.gmra.mxu0 %v805
  %v1583 = vpop.f32.mrf.mxu0
  %v1584 = vadd.f32 %v1415, %v1583
  %v1585 = vpop.f32.mrf.mxu0
  %v1586 = vadd.f32 %v1417, %v1585
  %1587 = vmatmul.bf16.gmra.mxu0 %v810
  %v1588 = vpop.f32.mrf.mxu0
  %v1589 = vadd.f32 %v1420, %v1588
  %v1590 = vpop.f32.mrf.mxu0
  %v1591 = vadd.f32 %v1422, %v1590
  %1592 = vmatmul.bf16.gmra.mxu0 %v815
  %v1593 = vpop.f32.mrf.mxu0
  %v1594 = vadd.f32 %v1425, %v1593
  %v1595 = vpop.f32.mrf.mxu0
  %v1596 = vadd.f32 %v1427, %v1595
  %1597 = vmatmul.bf16.gmra.mxu0 %v820
  %v1598 = vpop.f32.mrf.mxu0
  %v1599 = vadd.f32 %v1430, %v1598
  %v1600 = vpop.f32.mrf.mxu0
  %v1601 = vadd.f32 %v1432, %v1600
  %1602 = vmatmul.bf16.gmra.mxu0 %v825
  %v1603 = vpop.f32.mrf.mxu0
  %v1604 = vadd.f32 %v1435, %v1603
  %v1605 = vpop.f32.mrf.mxu0
  %v1606 = vadd.f32 %v1437, %v1605
  %1607 = vmatmul.bf16.gmra.mxu0 %v830
  %v1608 = vpop.f32.mrf.mxu0
  %v1609 = vadd.f32 %v1440, %v1608
  %v1610 = vpop.f32.mrf.mxu0
  %v1611 = vadd.f32 %v1442, %v1610
  %1612 = vmatmul.bf16.gmra.mxu0 %v835
  %v1613 = vpop.f32.mrf.mxu0
  %v1614 = vadd.f32 %v1445, %v1613
  %v1615 = vpop.f32.mrf.mxu0
  %v1616 = vadd.f32 %v1447, %v1615
  %1617 = vmatmul.bf16.gmra.mxu0 %v840
  %v1618 = vpop.f32.mrf.mxu0
  %v1619 = vadd.f32 %v1450, %v1618
  %v1620 = vpop.f32.mrf.mxu0
  %v1621 = vadd.f32 %v1452, %v1620
  %1622 = vmatmul.bf16.gmra.mxu0 %v845
  %v1623 = vpop.f32.mrf.mxu0
  %v1624 = vadd.f32 %v1455, %v1623
  %v1625 = vpop.f32.mrf.mxu0
  %v1626 = vadd.f32 %v1457, %v1625
  %1627 = vmatmul.bf16.gmra.mxu0 %v850
  %v1628 = vpop.f32.mrf.mxu0
  %v1629 = vadd.f32 %v1460, %v1628
  %v1630 = vpop.f32.mrf.mxu0
  %v1631 = vadd.f32 %v1462, %v1630
  %1632 = vmatmul.bf16.gmra.mxu0 %v855
  %v1633 = vpop.f32.mrf.mxu0
  %v1634 = vadd.f32 %v1465, %v1633
  %v1635 = vpop.f32.mrf.mxu0
  %v1636 = vadd.f32 %v1467, %v1635
  %1637 = vmatmul.bf16.gmra.mxu0 %v860
  %v1638 = vpop.f32.mrf.mxu0
  %v1639 = vadd.f32 %v1470, %v1638
  %v1640 = vpop.f32.mrf.mxu0
  %v1641 = vadd.f32 %v1472, %v1640
  %1642 = vmatmul.bf16.gmra.mxu0 %v865
  %v1643 = vpop.f32.mrf.mxu0
  %v1644 = vadd.f32 %v1475, %v1643
  %v1645 = vpop.f32.mrf.mxu0
  %v1646 = vadd.f32 %v1477, %v1645
  %1647 = vmatmul.bf16.gmra.mxu0 %v870
  %v1648 = vpop.f32.mrf.mxu0
  %v1649 = vadd.f32 %v1480, %v1648
  %v1650 = vpop.f32.mrf.mxu0
  %v1651 = vadd.f32 %v1482, %v1650
  %1652 = vmatmul.bf16.gmra.mxu0 %v875
  %v1653 = vpop.f32.mrf.mxu0
  %v1654 = vadd.f32 %v1485, %v1653
  %v1655 = vpop.f32.mrf.mxu0
  %v1656 = vadd.f32 %v1487, %v1655
  %1657 = vmatmul.bf16.gmra.mxu0 %v880
  %v1658 = vpop.f32.mrf.mxu0
  %v1659 = vadd.f32 %v1490, %v1658
  %v1660 = vpop.f32.mrf.mxu0
  %v1661 = vadd.f32 %v1492, %v1660
  %1662 = vmatmul.bf16.gmra.mxu0 %v885
  %v1663 = vpop.f32.mrf.mxu0
  %v1664 = vadd.f32 %v1495, %v1663
  %v1665 = vpop.f32.mrf.mxu0
  %v1666 = vadd.f32 %v1497, %v1665
  %1667 = vmatmul.bf16.gmra.mxu0 %v890
  %v1668 = vpop.f32.mrf.mxu0
  %v1669 = vadd.f32 %v1500, %v1668
  %v1670 = vpop.f32.mrf.mxu0
  %v1671 = vadd.f32 %v1502, %v1670
  %1672 = vmatmul.bf16.gmra.mxu0 %v895
  %v1673 = vpop.f32.mrf.mxu0
  %v1674 = vadd.f32 %v1505, %v1673
  %v1675 = vpop.f32.mrf.mxu0
  %v1676 = vadd.f32 %v1507, %v1675
  %1677 = vmatmul.bf16.gmra.mxu0 %v900
  %v1678 = vpop.f32.mrf.mxu0
  %v1679 = vadd.f32 %v1510, %v1678
  %v1680 = vpop.f32.mrf.mxu0
  %v1681 = vadd.f32 %v1512, %v1680
  %1682 = vmatmul.bf16.gmra.mxu0 %v905
  %v1683 = vpop.f32.mrf.mxu0
  %v1684 = vadd.f32 %v1515, %v1683
  %v1685 = vpop.f32.mrf.mxu0
  %v1686 = vadd.f32 %v1517, %v1685
  %1687 = vmatmul.bf16.gmra.mxu0 %v910
  %v1688 = vpop.f32.mrf.mxu0
  %v1689 = vadd.f32 %v1520, %v1688
  %v1690 = vpop.f32.mrf.mxu0
  %v1691 = vadd.f32 %v1522, %v1690
  %1692 = vmatmul.bf16.gmra.mxu0 %v915
  %v1693 = vpop.f32.mrf.mxu0
  %v1694 = vadd.f32 %v1525, %v1693
  %v1695 = vpop.f32.mrf.mxu0
  %v1696 = vadd.f32 %v1527, %v1695
  %1697 = vmatmul.bf16.gmra.mxu0 %v920
  %v1698 = vpop.f32.mrf.mxu0
  %v1699 = vadd.f32 %v1530, %v1698
  %v1700 = vpop.f32.mrf.mxu0
  %v1701 = vadd.f32 %v1532, %v1700
  %1702 = vmatmul.bf16.gmra.mxu0 %v925
  %v1703 = vpop.f32.mrf.mxu0
  %v1704 = vadd.f32 %v1535, %v1703
  %v1705 = vpop.f32.mrf.mxu0
  %v1706 = vadd.f32 %v1537, %v1705
  %1707 = vmatmul.bf16.gmra.mxu0 %v930
  %v1708 = vpop.f32.mrf.mxu0
  %v1709 = vadd.f32 %v1540, %v1708
  %v1710 = vpop.f32.mrf.mxu0
  %v1711 = vadd.f32 %v1542, %v1710
  %1712 = vmatmul.bf16.gmra.mxu0 %v935
  %v1713 = vpop.f32.mrf.mxu0
  %v1714 = vadd.f32 %v1545, %v1713
  %v1715 = vpop.f32.mrf.mxu0
  %v1716 = vadd.f32 %v1547, %v1715
  %1717 = vmatmul.bf16.gmra.mxu0 %v940
  %v1718 = vpop.f32.mrf.mxu0
  %v1719 = vadd.f32 %v1550, %v1718
  %v1720 = vpop.f32.mrf.mxu0
  %v1721 = vadd.f32 %v1552, %v1720
  %1722 = vmatmul.bf16.gmra.mxu0 %v945
  %v1723 = vpop.f32.mrf.mxu0
  %v1724 = vadd.f32 %v1555, %v1723
  %v1725 = vpop.f32.mrf.mxu0
  %v1726 = vadd.f32 %v1557, %v1725
  %1727 = vmatmul.bf16.gmra.mxu0 %v950
  %v1728 = vpop.f32.mrf.mxu0
  %v1729 = vadd.f32 %v1560, %v1728
  %v1730 = vpop.f32.mrf.mxu0
  %v1731 = vadd.f32 %v1562, %v1730
  %1732 = vdwg.mxu0
  %1733 = vmatpush.bf16.msra.mxu0 %v1249
  %1734 = vmatpush.bf16.msra.mxu0 %v1248
  %1735 = vmatpush.bf16.msra.mxu0 %v1247
  %1736 = vmatpush.bf16.msra.mxu0 %v1246
  %1737 = vmatpush.bf16.msra.mxu0 %v1245
  %1738 = vmatpush.bf16.msra.mxu0 %v1244
  %1739 = vmatpush.bf16.msra.mxu0 %v1243
  %1740 = vmatpush.bf16.msra.mxu0 %v1242
  %1741 = vmatmul.bf16.gmra.mxu0 %v796
  %v1742 = vpop.f32.mrf.mxu0
  %v1743 = vadd.f32 %v1574, %v1742
  %v1744 = vpop.f32.mrf.mxu0
  %v1745 = vadd.f32 %v1576, %v1744
  %1746 = vmatmul.bf16.gmra.mxu0 %v801
  %v1747 = vpop.f32.mrf.mxu0
  %v1748 = vadd.f32 %v1579, %v1747
  %v1749 = vpop.f32.mrf.mxu0
  %v1750 = vadd.f32 %v1581, %v1749
  %1751 = vmatmul.bf16.gmra.mxu0 %v806
  %v1752 = vpop.f32.mrf.mxu0
  %v1753 = vadd.f32 %v1584, %v1752
  %v1754 = vpop.f32.mrf.mxu0
  %v1755 = vadd.f32 %v1586, %v1754
  %1756 = vmatmul.bf16.gmra.mxu0 %v811
  %v1757 = vpop.f32.mrf.mxu0
  %v1758 = vadd.f32 %v1589, %v1757
  %v1759 = vpop.f32.mrf.mxu0
  %v1760 = vadd.f32 %v1591, %v1759
  %1761 = vmatmul.bf16.gmra.mxu0 %v816
  %v1762 = vpop.f32.mrf.mxu0
  %v1763 = vadd.f32 %v1594, %v1762
  %v1764 = vpop.f32.mrf.mxu0
  %v1765 = vadd.f32 %v1596, %v1764
  %1766 = vmatmul.bf16.gmra.mxu0 %v821
  %v1767 = vpop.f32.mrf.mxu0
  %v1768 = vadd.f32 %v1599, %v1767
  %v1769 = vpop.f32.mrf.mxu0
  %v1770 = vadd.f32 %v1601, %v1769
  %1771 = vmatmul.bf16.gmra.mxu0 %v826
  %v1772 = vpop.f32.mrf.mxu0
  %v1773 = vadd.f32 %v1604, %v1772
  %v1774 = vpop.f32.mrf.mxu0
  %v1775 = vadd.f32 %v1606, %v1774
  %1776 = vmatmul.bf16.gmra.mxu0 %v831
  %v1777 = vpop.f32.mrf.mxu0
  %v1778 = vadd.f32 %v1609, %v1777
  %v1779 = vpop.f32.mrf.mxu0
  %v1780 = vadd.f32 %v1611, %v1779
  %1781 = vmatmul.bf16.gmra.mxu0 %v836
  %v1782 = vpop.f32.mrf.mxu0
  %v1783 = vadd.f32 %v1614, %v1782
  %v1784 = vpop.f32.mrf.mxu0
  %v1785 = vadd.f32 %v1616, %v1784
  %1786 = vmatmul.bf16.gmra.mxu0 %v841
  %v1787 = vpop.f32.mrf.mxu0
  %v1788 = vadd.f32 %v1619, %v1787
  %v1789 = vpop.f32.mrf.mxu0
  %v1790 = vadd.f32 %v1621, %v1789
  %1791 = vmatmul.bf16.gmra.mxu0 %v846
  %v1792 = vpop.f32.mrf.mxu0
  %v1793 = vadd.f32 %v1624, %v1792
  %v1794 = vpop.f32.mrf.mxu0
  %v1795 = vadd.f32 %v1626, %v1794
  %1796 = vmatmul.bf16.gmra.mxu0 %v851
  %v1797 = vpop.f32.mrf.mxu0
  %v1798 = vadd.f32 %v1629, %v1797
  %v1799 = vpop.f32.mrf.mxu0
  %v1800 = vadd.f32 %v1631, %v1799
  %1801 = vmatmul.bf16.gmra.mxu0 %v856
  %v1802 = vpop.f32.mrf.mxu0
  %v1803 = vadd.f32 %v1634, %v1802
  %v1804 = vpop.f32.mrf.mxu0
  %v1805 = vadd.f32 %v1636, %v1804
  %1806 = vmatmul.bf16.gmra.mxu0 %v861
  %v1807 = vpop.f32.mrf.mxu0
  %v1808 = vadd.f32 %v1639, %v1807
  %v1809 = vpop.f32.mrf.mxu0
  %v1810 = vadd.f32 %v1641, %v1809
  %1811 = vmatmul.bf16.gmra.mxu0 %v866
  %v1812 = vpop.f32.mrf.mxu0
  %v1813 = vadd.f32 %v1644, %v1812
  %v1814 = vpop.f32.mrf.mxu0
  %v1815 = vadd.f32 %v1646, %v1814
  %1816 = vmatmul.bf16.gmra.mxu0 %v871
  %v1817 = vpop.f32.mrf.mxu0
  %v1818 = vadd.f32 %v1649, %v1817
  %v1819 = vpop.f32.mrf.mxu0
  %v1820 = vadd.f32 %v1651, %v1819
  %1821 = vmatmul.bf16.gmra.mxu0 %v876
  %v1822 = vpop.f32.mrf.mxu0
  %v1823 = vadd.f32 %v1654, %v1822
  %v1824 = vpop.f32.mrf.mxu0
  %v1825 = vadd.f32 %v1656, %v1824
  %1826 = vmatmul.bf16.gmra.mxu0 %v881
  %v1827 = vpop.f32.mrf.mxu0
  %v1828 = vadd.f32 %v1659, %v1827
  %v1829 = vpop.f32.mrf.mxu0
  %v1830 = vadd.f32 %v1661, %v1829
  %1831 = vmatmul.bf16.gmra.mxu0 %v886
  %v1832 = vpop.f32.mrf.mxu0
  %v1833 = vadd.f32 %v1664, %v1832
  %v1834 = vpop.f32.mrf.mxu0
  %v1835 = vadd.f32 %v1666, %v1834
  %1836 = vmatmul.bf16.gmra.mxu0 %v891
  %v1837 = vpop.f32.mrf.mxu0
  %v1838 = vadd.f32 %v1669, %v1837
  %v1839 = vpop.f32.mrf.mxu0
  %v1840 = vadd.f32 %v1671, %v1839
  %1841 = vmatmul.bf16.gmra.mxu0 %v896
  %v1842 = vpop.f32.mrf.mxu0
  %v1843 = vadd.f32 %v1674, %v1842
  %v1844 = vpop.f32.mrf.mxu0
  %v1845 = vadd.f32 %v1676, %v1844
  %1846 = vmatmul.bf16.gmra.mxu0 %v901
  %v1847 = vpop.f32.mrf.mxu0
  %v1848 = vadd.f32 %v1679, %v1847
  %v1849 = vpop.f32.mrf.mxu0
  %v1850 = vadd.f32 %v1681, %v1849
  %1851 = vmatmul.bf16.gmra.mxu0 %v906
  %v1852 = vpop.f32.mrf.mxu0
  %v1853 = vadd.f32 %v1684, %v1852
  %v1854 = vpop.f32.mrf.mxu0
  %v1855 = vadd.f32 %v1686, %v1854
  %1856 = vmatmul.bf16.gmra.mxu0 %v911
  %v1857 = vpop.f32.mrf.mxu0
  %v1858 = vadd.f32 %v1689, %v1857
  %v1859 = vpop.f32.mrf.mxu0
  %v1860 = vadd.f32 %v1691, %v1859
  %1861 = vmatmul.bf16.gmra.mxu0 %v916
  %v1862 = vpop.f32.mrf.mxu0
  %v1863 = vadd.f32 %v1694, %v1862
  %v1864 = vpop.f32.mrf.mxu0
  %v1865 = vadd.f32 %v1696, %v1864
  %1866 = vmatmul.bf16.gmra.mxu0 %v921
  %v1867 = vpop.f32.mrf.mxu0
  %v1868 = vadd.f32 %v1699, %v1867
  %v1869 = vpop.f32.mrf.mxu0
  %v1870 = vadd.f32 %v1701, %v1869
  %1871 = vmatmul.bf16.gmra.mxu0 %v926
  %v1872 = vpop.f32.mrf.mxu0
  %v1873 = vadd.f32 %v1704, %v1872
  %v1874 = vpop.f32.mrf.mxu0
  %v1875 = vadd.f32 %v1706, %v1874
  %1876 = vmatmul.bf16.gmra.mxu0 %v931
  %v1877 = vpop.f32.mrf.mxu0
  %v1878 = vadd.f32 %v1709, %v1877
  %v1879 = vpop.f32.mrf.mxu0
  %v1880 = vadd.f32 %v1711, %v1879
  %1881 = vmatmul.bf16.gmra.mxu0 %v936
  %v1882 = vpop.f32.mrf.mxu0
  %v1883 = vadd.f32 %v1714, %v1882
  %v1884 = vpop.f32.mrf.mxu0
  %v1885 = vadd.f32 %v1716, %v1884
  %1886 = vmatmul.bf16.gmra.mxu0 %v941
  %v1887 = vpop.f32.mrf.mxu0
  %v1888 = vadd.f32 %v1719, %v1887
  %v1889 = vpop.f32.mrf.mxu0
  %v1890 = vadd.f32 %v1721, %v1889
  %1891 = vmatmul.bf16.gmra.mxu0 %v946
  %v1892 = vpop.f32.mrf.mxu0
  %v1893 = vadd.f32 %v1724, %v1892
  %v1894 = vpop.f32.mrf.mxu0
  %v1895 = vadd.f32 %v1726, %v1894
  %1896 = vmatmul.bf16.gmra.mxu0 %v951
  %v1897 = vpop.f32.mrf.mxu0
  %v1898 = vadd.f32 %v1729, %v1897
  %v1899 = vpop.f32.mrf.mxu0
  %v1900 = vadd.f32 %v1731, %v1899
  %1901 = vdwg.mxu0
  %1902 = vmatpush.bf16.msra.mxu0 %v1257
  %1903 = vmatpush.bf16.msra.mxu0 %v1256
  %1904 = vmatpush.bf16.msra.mxu0 %v1255
  %1905 = vmatpush.bf16.msra.mxu0 %v1254
  %1906 = vmatpush.bf16.msra.mxu0 %v1253
  %1907 = vmatpush.bf16.msra.mxu0 %v1252
  %1908 = vmatpush.bf16.msra.mxu0 %v1251
  %1909 = vmatpush.bf16.msra.mxu0 %v1250
  %1910 = vmatmul.bf16.gmra.mxu0 %v797
  %v1911 = vpop.f32.mrf.mxu0
  %v1912 = vadd.f32 %v1743, %v1911
  %v1913 = vpop.f32.mrf.mxu0
  %v1914 = vadd.f32 %v1745, %v1913
  %1915 = vmatmul.bf16.gmra.mxu0 %v802
  %v1916 = vpop.f32.mrf.mxu0
  %v1917 = vadd.f32 %v1748, %v1916
  %v1918 = vpop.f32.mrf.mxu0
  %v1919 = vadd.f32 %v1750, %v1918
  %1920 = vmatmul.bf16.gmra.mxu0 %v807
  %v1921 = vpop.f32.mrf.mxu0
  %v1922 = vadd.f32 %v1753, %v1921
  %v1923 = vpop.f32.mrf.mxu0
  %v1924 = vadd.f32 %v1755, %v1923
  %1925 = vmatmul.bf16.gmra.mxu0 %v812
  %v1926 = vpop.f32.mrf.mxu0
  %v1927 = vadd.f32 %v1758, %v1926
  %v1928 = vpop.f32.mrf.mxu0
  %v1929 = vadd.f32 %v1760, %v1928
  %1930 = vmatmul.bf16.gmra.mxu0 %v817
  %v1931 = vpop.f32.mrf.mxu0
  %v1932 = vadd.f32 %v1763, %v1931
  %v1933 = vpop.f32.mrf.mxu0
  %v1934 = vadd.f32 %v1765, %v1933
  %1935 = vmatmul.bf16.gmra.mxu0 %v822
  %v1936 = vpop.f32.mrf.mxu0
  %v1937 = vadd.f32 %v1768, %v1936
  %v1938 = vpop.f32.mrf.mxu0
  %v1939 = vadd.f32 %v1770, %v1938
  %1940 = vmatmul.bf16.gmra.mxu0 %v827
  %v1941 = vpop.f32.mrf.mxu0
  %v1942 = vadd.f32 %v1773, %v1941
  %v1943 = vpop.f32.mrf.mxu0
  %v1944 = vadd.f32 %v1775, %v1943
  %1945 = vmatmul.bf16.gmra.mxu0 %v832
  %v1946 = vpop.f32.mrf.mxu0
  %v1947 = vadd.f32 %v1778, %v1946
  %v1948 = vpop.f32.mrf.mxu0
  %v1949 = vadd.f32 %v1780, %v1948
  %1950 = vmatmul.bf16.gmra.mxu0 %v837
  %v1951 = vpop.f32.mrf.mxu0
  %v1952 = vadd.f32 %v1783, %v1951
  %v1953 = vpop.f32.mrf.mxu0
  %v1954 = vadd.f32 %v1785, %v1953
  %1955 = vmatmul.bf16.gmra.mxu0 %v842
  %v1956 = vpop.f32.mrf.mxu0
  %v1957 = vadd.f32 %v1788, %v1956
  %v1958 = vpop.f32.mrf.mxu0
  %v1959 = vadd.f32 %v1790, %v1958
  %1960 = vmatmul.bf16.gmra.mxu0 %v847
  %v1961 = vpop.f32.mrf.mxu0
  %v1962 = vadd.f32 %v1793, %v1961
  %v1963 = vpop.f32.mrf.mxu0
  %v1964 = vadd.f32 %v1795, %v1963
  %1965 = vmatmul.bf16.gmra.mxu0 %v852
  %v1966 = vpop.f32.mrf.mxu0
  %v1967 = vadd.f32 %v1798, %v1966
  %v1968 = vpop.f32.mrf.mxu0
  %v1969 = vadd.f32 %v1800, %v1968
  %1970 = vmatmul.bf16.gmra.mxu0 %v857
  %v1971 = vpop.f32.mrf.mxu0
  %v1972 = vadd.f32 %v1803, %v1971
  %v1973 = vpop.f32.mrf.mxu0
  %v1974 = vadd.f32 %v1805, %v1973
  %1975 = vmatmul.bf16.gmra.mxu0 %v862
  %v1976 = vpop.f32.mrf.mxu0
  %v1977 = vadd.f32 %v1808, %v1976
  %v1978 = vpop.f32.mrf.mxu0
  %v1979 = vadd.f32 %v1810, %v1978
  %1980 = vmatmul.bf16.gmra.mxu0 %v867
  %v1981 = vpop.f32.mrf.mxu0
  %v1982 = vadd.f32 %v1813, %v1981
  %v1983 = vpop.f32.mrf.mxu0
  %v1984 = vadd.f32 %v1815, %v1983
  %1985 = vmatmul.bf16.gmra.mxu0 %v872
  %v1986 = vpop.f32.mrf.mxu0
  %v1987 = vadd.f32 %v1818, %v1986
  %v1988 = vpop.f32.mrf.mxu0
  %v1989 = vadd.f32 %v1820, %v1988
  %1990 = vmatmul.bf16.gmra.mxu0 %v877
  %v1991 = vpop.f32.mrf.mxu0
  %v1992 = vadd.f32 %v1823, %v1991
  %v1993 = vpop.f32.mrf.mxu0
  %v1994 = vadd.f32 %v1825, %v1993
  %1995 = vmatmul.bf16.gmra.mxu0 %v882
  %v1996 = vpop.f32.mrf.mxu0
  %v1997 = vadd.f32 %v1828, %v1996
  %v1998 = vpop.f32.mrf.mxu0
  %v1999 = vadd.f32 %v1830, %v1998
  %2000 = vmatmul.bf16.gmra.mxu0 %v887
  %v2001 = vpop.f32.mrf.mxu0
  %v2002 = vadd.f32 %v1833, %v2001
  %v2003 = vpop.f32.mrf.mxu0
  %v2004 = vadd.f32 %v1835, %v2003
  %2005 = vmatmul.bf16.gmra.mxu0 %v892
  %v2006 = vpop.f32.mrf.mxu0
  %v2007 = vadd.f32 %v1838, %v2006
  %v2008 = vpop.f32.mrf.mxu0
  %v2009 = vadd.f32 %v1840, %v2008
  %2010 = vmatmul.bf16.gmra.mxu0 %v897
  %v2011 = vpop.f32.mrf.mxu0
  %v2012 = vadd.f32 %v1843, %v2011
  %v2013 = vpop.f32.mrf.mxu0
  %v2014 = vadd.f32 %v1845, %v2013
  %2015 = vmatmul.bf16.gmra.mxu0 %v902
  %v2016 = vpop.f32.mrf.mxu0
  %v2017 = vadd.f32 %v1848, %v2016
  %v2018 = vpop.f32.mrf.mxu0
  %v2019 = vadd.f32 %v1850, %v2018
  %2020 = vmatmul.bf16.gmra.mxu0 %v907
  %v2021 = vpop.f32.mrf.mxu0
  %v2022 = vadd.f32 %v1853, %v2021
  %v2023 = vpop.f32.mrf.mxu0
  %v2024 = vadd.f32 %v1855, %v2023
  %2025 = vmatmul.bf16.gmra.mxu0 %v912
  %v2026 = vpop.f32.mrf.mxu0
  %v2027 = vadd.f32 %v1858, %v2026
  %v2028 = vpop.f32.mrf.mxu0
  %v2029 = vadd.f32 %v1860, %v2028
  %2030 = vmatmul.bf16.gmra.mxu0 %v917
  %v2031 = vpop.f32.mrf.mxu0
  %v2032 = vadd.f32 %v1863, %v2031
  %v2033 = vpop.f32.mrf.mxu0
  %v2034 = vadd.f32 %v1865, %v2033
  %2035 = vmatmul.bf16.gmra.mxu0 %v922
  %v2036 = vpop.f32.mrf.mxu0
  %v2037 = vadd.f32 %v1868, %v2036
  %v2038 = vpop.f32.mrf.mxu0
  %v2039 = vadd.f32 %v1870, %v2038
  %2040 = vmatmul.bf16.gmra.mxu0 %v927
  %v2041 = vpop.f32.mrf.mxu0
  %v2042 = vadd.f32 %v1873, %v2041
  %v2043 = vpop.f32.mrf.mxu0
  %v2044 = vadd.f32 %v1875, %v2043
  %2045 = vmatmul.bf16.gmra.mxu0 %v932
  %v2046 = vpop.f32.mrf.mxu0
  %v2047 = vadd.f32 %v1878, %v2046
  %v2048 = vpop.f32.mrf.mxu0
  %v2049 = vadd.f32 %v1880, %v2048
  %2050 = vmatmul.bf16.gmra.mxu0 %v937
  %v2051 = vpop.f32.mrf.mxu0
  %v2052 = vadd.f32 %v1883, %v2051
  %v2053 = vpop.f32.mrf.mxu0
  %v2054 = vadd.f32 %v1885, %v2053
  %2055 = vmatmul.bf16.gmra.mxu0 %v942
  %v2056 = vpop.f32.mrf.mxu0
  %v2057 = vadd.f32 %v1888, %v2056
  %v2058 = vpop.f32.mrf.mxu0
  %v2059 = vadd.f32 %v1890, %v2058
  %2060 = vmatmul.bf16.gmra.mxu0 %v947
  %v2061 = vpop.f32.mrf.mxu0
  %v2062 = vadd.f32 %v1893, %v2061
  %v2063 = vpop.f32.mrf.mxu0
  %v2064 = vadd.f32 %v1895, %v2063
  %2065 = vmatmul.bf16.gmra.mxu0 %v952
  %v2066 = vpop.f32.mrf.mxu0
  %v2067 = vadd.f32 %v1898, %v2066
  %v2068 = vpop.f32.mrf.mxu0
  %v2069 = vadd.f32 %v1900, %v2068
  %2070 = vdwg.mxu0
  %2071 = vmatpush.bf16.msra.mxu0 0
  %2072 = vmatpush.bf16.msra.mxu0 0
  %2073 = vmatpush.bf16.msra.mxu0 0
  %2074 = vmatpush.bf16.msra.mxu0 0
  %2075 = vmatpush.bf16.msra.mxu0 %v1261
  %2076 = vmatpush.bf16.msra.mxu0 %v1260
  %2077 = vmatpush.bf16.msra.mxu0 %v1259
  %2078 = vmatpush.bf16.msra.mxu0 %v1258
  %2079 = vmatmul.bf16.gmra.mxu0 %v1300
  %v2080 = vpop.f32.mrf.mxu0
  %v2081 = vadd.f32 %v1912, %v2080
  %v2082 = vpop.f32.mrf.mxu0
  %v2083 = vadd.f32 %v1914, %v2082
  %2084 = vmatmul.bf16.gmra.mxu0 %v1303
  %v2085 = vpop.f32.mrf.mxu0
  %v2086 = vadd.f32 %v1917, %v2085
  %v2087 = vpop.f32.mrf.mxu0
  %v2088 = vadd.f32 %v1919, %v2087
  %2089 = vmatmul.bf16.gmra.mxu0 %v1306
  %v2090 = vpop.f32.mrf.mxu0
  %v2091 = vadd.f32 %v1922, %v2090
  %v2092 = vpop.f32.mrf.mxu0
  %v2093 = vadd.f32 %v1924, %v2092
  %2094 = vmatmul.bf16.gmra.mxu0 %v1309
  %v2095 = vpop.f32.mrf.mxu0
  %v2096 = vadd.f32 %v1927, %v2095
  %v2097 = vpop.f32.mrf.mxu0
  %v2098 = vadd.f32 %v1929, %v2097
  %2099 = vmatmul.bf16.gmra.mxu0 %v1312
  %v2100 = vpop.f32.mrf.mxu0
  %v2101 = vadd.f32 %v1932, %v2100
  %v2102 = vpop.f32.mrf.mxu0
  %v2103 = vadd.f32 %v1934, %v2102
  %2104 = vmatmul.bf16.gmra.mxu0 %v1315
  %v2105 = vpop.f32.mrf.mxu0
  %v2106 = vadd.f32 %v1937, %v2105
  %v2107 = vpop.f32.mrf.mxu0
  %v2108 = vadd.f32 %v1939, %v2107
  %2109 = vmatmul.bf16.gmra.mxu0 %v1318
  %v2110 = vpop.f32.mrf.mxu0
  %v2111 = vadd.f32 %v1942, %v2110
  %v2112 = vpop.f32.mrf.mxu0
  %v2113 = vadd.f32 %v1944, %v2112
  %2114 = vmatmul.bf16.gmra.mxu0 %v1321
  %v2115 = vpop.f32.mrf.mxu0
  %v2116 = vadd.f32 %v1947, %v2115
  %v2117 = vpop.f32.mrf.mxu0
  %v2118 = vadd.f32 %v1949, %v2117
  %2119 = vmatmul.bf16.gmra.mxu0 %v1324
  %v2120 = vpop.f32.mrf.mxu0
  %v2121 = vadd.f32 %v1952, %v2120
  %v2122 = vpop.f32.mrf.mxu0
  %v2123 = vadd.f32 %v1954, %v2122
  %2124 = vmatmul.bf16.gmra.mxu0 %v1327
  %v2125 = vpop.f32.mrf.mxu0
  %v2126 = vadd.f32 %v1957, %v2125
  %v2127 = vpop.f32.mrf.mxu0
  %v2128 = vadd.f32 %v1959, %v2127
  %2129 = vmatmul.bf16.gmra.mxu0 %v1330
  %v2130 = vpop.f32.mrf.mxu0
  %v2131 = vadd.f32 %v1962, %v2130
  %v2132 = vpop.f32.mrf.mxu0
  %v2133 = vadd.f32 %v1964, %v2132
  %2134 = vmatmul.bf16.gmra.mxu0 %v1333
  %v2135 = vpop.f32.mrf.mxu0
  %v2136 = vadd.f32 %v1967, %v2135
  %v2137 = vpop.f32.mrf.mxu0
  %v2138 = vadd.f32 %v1969, %v2137
  %2139 = vmatmul.bf16.gmra.mxu0 %v1336
  %v2140 = vpop.f32.mrf.mxu0
  %v2141 = vadd.f32 %v1972, %v2140
  %v2142 = vpop.f32.mrf.mxu0
  %v2143 = vadd.f32 %v1974, %v2142
  %2144 = vmatmul.bf16.gmra.mxu0 %v1339
  %v2145 = vpop.f32.mrf.mxu0
  %v2146 = vadd.f32 %v1977, %v2145
  %v2147 = vpop.f32.mrf.mxu0
  %v2148 = vadd.f32 %v1979, %v2147
  %2149 = vmatmul.bf16.gmra.mxu0 %v1342
  %v2150 = vpop.f32.mrf.mxu0
  %v2151 = vadd.f32 %v1982, %v2150
  %v2152 = vpop.f32.mrf.mxu0
  %v2153 = vadd.f32 %v1984, %v2152
  %2154 = vmatmul.bf16.gmra.mxu0 %v1345
  %v2155 = vpop.f32.mrf.mxu0
  %v2156 = vadd.f32 %v1987, %v2155
  %v2157 = vpop.f32.mrf.mxu0
  %v2158 = vadd.f32 %v1989, %v2157
  %2159 = vmatmul.bf16.gmra.mxu0 %v1348
  %v2160 = vpop.f32.mrf.mxu0
  %v2161 = vadd.f32 %v1992, %v2160
  %v2162 = vpop.f32.mrf.mxu0
  %v2163 = vadd.f32 %v1994, %v2162
  %2164 = vmatmul.bf16.gmra.mxu0 %v1351
  %v2165 = vpop.f32.mrf.mxu0
  %v2166 = vadd.f32 %v1997, %v2165
  %v2167 = vpop.f32.mrf.mxu0
  %v2168 = vadd.f32 %v1999, %v2167
  %2169 = vmatmul.bf16.gmra.mxu0 %v1354
  %v2170 = vpop.f32.mrf.mxu0
  %v2171 = vadd.f32 %v2002, %v2170
  %v2172 = vpop.f32.mrf.mxu0
  %v2173 = vadd.f32 %v2004, %v2172
  %2174 = vmatmul.bf16.gmra.mxu0 %v1357
  %v2175 = vpop.f32.mrf.mxu0
  %v2176 = vadd.f32 %v2007, %v2175
  %v2177 = vpop.f32.mrf.mxu0
  %v2178 = vadd.f32 %v2009, %v2177
  %2179 = vmatmul.bf16.gmra.mxu0 %v1360
  %v2180 = vpop.f32.mrf.mxu0
  %v2181 = vadd.f32 %v2012, %v2180
  %v2182 = vpop.f32.mrf.mxu0
  %v2183 = vadd.f32 %v2014, %v2182
  %2184 = vmatmul.bf16.gmra.mxu0 %v1363
  %v2185 = vpop.f32.mrf.mxu0
  %v2186 = vadd.f32 %v2017, %v2185
  %v2187 = vpop.f32.mrf.mxu0
  %v2188 = vadd.f32 %v2019, %v2187
  %2189 = vmatmul.bf16.gmra.mxu0 %v1366
  %v2190 = vpop.f32.mrf.mxu0
  %v2191 = vadd.f32 %v2022, %v2190
  %v2192 = vpop.f32.mrf.mxu0
  %v2193 = vadd.f32 %v2024, %v2192
  %2194 = vmatmul.bf16.gmra.mxu0 %v1369
  %v2195 = vpop.f32.mrf.mxu0
  %v2196 = vadd.f32 %v2027, %v2195
  %v2197 = vpop.f32.mrf.mxu0
  %v2198 = vadd.f32 %v2029, %v2197
  %2199 = vmatmul.bf16.gmra.mxu0 %v1372
  %v2200 = vpop.f32.mrf.mxu0
  %v2201 = vadd.f32 %v2032, %v2200
  %v2202 = vpop.f32.mrf.mxu0
  %v2203 = vadd.f32 %v2034, %v2202
  %2204 = vmatmul.bf16.gmra.mxu0 %v1375
  %v2205 = vpop.f32.mrf.mxu0
  %v2206 = vadd.f32 %v2037, %v2205
  %v2207 = vpop.f32.mrf.mxu0
  %v2208 = vadd.f32 %v2039, %v2207
  %2209 = vmatmul.bf16.gmra.mxu0 %v1378
  %v2210 = vpop.f32.mrf.mxu0
  %v2211 = vadd.f32 %v2042, %v2210
  %v2212 = vpop.f32.mrf.mxu0
  %v2213 = vadd.f32 %v2044, %v2212
  %2214 = vmatmul.bf16.gmra.mxu0 %v1381
  %v2215 = vpop.f32.mrf.mxu0
  %v2216 = vadd.f32 %v2047, %v2215
  %v2217 = vpop.f32.mrf.mxu0
  %v2218 = vadd.f32 %v2049, %v2217
  %2219 = vmatmul.bf16.gmra.mxu0 %v1384
  %v2220 = vpop.f32.mrf.mxu0
  %v2221 = vadd.f32 %v2052, %v2220
  %v2222 = vpop.f32.mrf.mxu0
  %v2223 = vadd.f32 %v2054, %v2222
  %2224 = vmatmul.bf16.gmra.mxu0 %v1387
  %v2225 = vpop.f32.mrf.mxu0
  %v2226 = vadd.f32 %v2057, %v2225
  %v2227 = vpop.f32.mrf.mxu0
  %v2228 = vadd.f32 %v2059, %v2227
  %2229 = vmatmul.bf16.gmra.mxu0 %v1390
  %v2230 = vpop.f32.mrf.mxu0
  %v2231 = vadd.f32 %v2062, %v2230
  %v2232 = vpop.f32.mrf.mxu0
  %v2233 = vadd.f32 %v2064, %v2232
  %2234 = vmatmul.bf16.gmra.mxu0 %v1393
  %v2235 = vpop.f32.mrf.mxu0
  %v2236 = vadd.f32 %v2067, %v2235
  %v2237 = vpop.f32.mrf.mxu0
  %v2238 = vadd.f32 %v2069, %v2237
  %2239 = vdwg.mxu0
  %vm2240 = vcmask 785408
  %v2241 = vsel %vm2240, %v2081, 0.0
  %v2242 = vsel %vm2240, %v2083, 0.0
  %v2243 = vadd.f32 %v2241, %v2242
  %v2244 = vsel %vm2240, %v2086, 0.0
  %v2245 = vadd.f32 %v2243, %v2244
  %v2246 = vsel %vm2240, %v2088, 0.0
  %v2247 = vadd.f32 %v2245, %v2246
  %v2248 = vsel %vm2240, %v2091, 0.0
  %v2249 = vadd.f32 %v2247, %v2248
  %v2250 = vsel %vm2240, %v2093, 0.0
  %v2251 = vadd.f32 %v2249, %v2250
  %v2252 = vsel %vm2240, %v2096, 0.0
  %v2253 = vadd.f32 %v2251, %v2252
  %v2254 = vsel %vm2240, %v2098, 0.0
  %v2255 = vadd.f32 %v2253, %v2254
  %v2256 = vsel %vm2240, %v2101, 0.0
  %v2257 = vadd.f32 %v2255, %v2256
  %v2258 = vsel %vm2240, %v2103, 0.0
  %v2259 = vadd.f32 %v2257, %v2258
  %v2260 = vsel %vm2240, %v2106, 0.0
  %v2261 = vadd.f32 %v2259, %v2260
  %v2262 = vsel %vm2240, %v2108, 0.0
  %v2263 = vadd.f32 %v2261, %v2262
  %v2264 = vsel %vm2240, %v2111, 0.0
  %v2265 = vadd.f32 %v2263, %v2264
  %v2266 = vsel %vm2240, %v2113, 0.0
  %v2267 = vadd.f32 %v2265, %v2266
  %v2268 = vsel %vm2240, %v2116, 0.0
  %v2269 = vadd.f32 %v2267, %v2268
  %v2270 = vsel %vm2240, %v2118, 0.0
  %v2271 = vadd.f32 %v2269, %v2270
  %v2272 = vsel %vm2240, %v2121, 0.0
  %v2273 = vadd.f32 %v2271, %v2272
  %v2274 = vsel %vm2240, %v2123, 0.0
  %v2275 = vadd.f32 %v2273, %v2274
  %v2276 = vsel %vm2240, %v2126, 0.0
  %v2277 = vadd.f32 %v2275, %v2276
  %v2278 = vsel %vm2240, %v2128, 0.0
  %v2279 = vadd.f32 %v2277, %v2278
  %v2280 = vsel %vm2240, %v2131, 0.0
  %v2281 = vadd.f32 %v2279, %v2280
  %v2282 = vsel %vm2240, %v2133, 0.0
  %v2283 = vadd.f32 %v2281, %v2282
  %v2284 = vsel %vm2240, %v2136, 0.0
  %v2285 = vadd.f32 %v2283, %v2284
  %v2286 = vsel %vm2240, %v2138, 0.0
  %v2287 = vadd.f32 %v2285, %v2286
  %v2288 = vsel %vm2240, %v2141, 0.0
  %v2289 = vadd.f32 %v2287, %v2288
  %v2290 = vsel %vm2240, %v2143, 0.0
  %v2291 = vadd.f32 %v2289, %v2290
  %v2292 = vsel %vm2240, %v2146, 0.0
  %v2293 = vadd.f32 %v2291, %v2292
  %v2294 = vsel %vm2240, %v2148, 0.0
  %v2295 = vadd.f32 %v2293, %v2294
  %v2296 = vsel %vm2240, %v2151, 0.0
  %v2297 = vadd.f32 %v2295, %v2296
  %v2298 = vsel %vm2240, %v2153, 0.0
  %v2299 = vadd.f32 %v2297, %v2298
  %v2300 = vsel %vm2240, %v2156, 0.0
  %v2301 = vadd.f32 %v2299, %v2300
  %v2302 = vsel %vm2240, %v2158, 0.0
  %v2303 = vadd.f32 %v2301, %v2302
  %v2304 = vsel %vm2240, %v2161, 0.0
  %v2305 = vadd.f32 %v2303, %v2304
  %v2306 = vsel %vm2240, %v2163, 0.0
  %v2307 = vadd.f32 %v2305, %v2306
  %v2308 = vsel %vm2240, %v2166, 0.0
  %v2309 = vadd.f32 %v2307, %v2308
  %v2310 = vsel %vm2240, %v2168, 0.0
  %v2311 = vadd.f32 %v2309, %v2310
  %v2312 = vsel %vm2240, %v2171, 0.0
  %v2313 = vadd.f32 %v2311, %v2312
  %v2314 = vsel %vm2240, %v2173, 0.0
  %v2315 = vadd.f32 %v2313, %v2314
  %v2316 = vsel %vm2240, %v2176, 0.0
  %v2317 = vadd.f32 %v2315, %v2316
  %v2318 = vsel %vm2240, %v2178, 0.0
  %v2319 = vadd.f32 %v2317, %v2318
  %v2320 = vsel %vm2240, %v2181, 0.0
  %v2321 = vadd.f32 %v2319, %v2320
  %v2322 = vsel %vm2240, %v2183, 0.0
  %v2323 = vadd.f32 %v2321, %v2322
  %v2324 = vsel %vm2240, %v2186, 0.0
  %v2325 = vadd.f32 %v2323, %v2324
  %v2326 = vsel %vm2240, %v2188, 0.0
  %v2327 = vadd.f32 %v2325, %v2326
  %v2328 = vsel %vm2240, %v2191, 0.0
  %v2329 = vadd.f32 %v2327, %v2328
  %v2330 = vsel %vm2240, %v2193, 0.0
  %v2331 = vadd.f32 %v2329, %v2330
  %v2332 = vsel %vm2240, %v2196, 0.0
  %v2333 = vadd.f32 %v2331, %v2332
  %v2334 = vsel %vm2240, %v2198, 0.0
  %v2335 = vadd.f32 %v2333, %v2334
  %v2336 = vsel %vm2240, %v2201, 0.0
  %v2337 = vadd.f32 %v2335, %v2336
  %v2338 = vsel %vm2240, %v2203, 0.0
  %v2339 = vadd.f32 %v2337, %v2338
  %v2340 = vsel %vm2240, %v2206, 0.0
  %v2341 = vadd.f32 %v2339, %v2340
  %v2342 = vsel %vm2240, %v2208, 0.0
  %v2343 = vadd.f32 %v2341, %v2342
  %v2344 = vsel %vm2240, %v2211, 0.0
  %v2345 = vadd.f32 %v2343, %v2344
  %v2346 = vsel %vm2240, %v2213, 0.0
  %v2347 = vadd.f32 %v2345, %v2346
  %v2348 = vsel %vm2240, %v2216, 0.0
  %v2349 = vadd.f32 %v2347, %v2348
  %v2350 = vsel %vm2240, %v2218, 0.0
  %v2351 = vadd.f32 %v2349, %v2350
  %v2352 = vsel %vm2240, %v2221, 0.0
  %v2353 = vadd.f32 %v2351, %v2352
  %v2354 = vsel %vm2240, %v2223, 0.0
  %v2355 = vadd.f32 %v2353, %v2354
  %v2356 = vsel %vm2240, %v2226, 0.0
  %v2357 = vadd.f32 %v2355, %v2356
  %v2358 = vsel %vm2240, %v2228, 0.0
  %v2359 = vadd.f32 %v2357, %v2358
  %v2360 = vsel %vm2240, %v2231, 0.0
  %v2361 = vadd.f32 %v2359, %v2360
  %v2362 = vsel %vm2240, %v2233, 0.0
  %v2363 = vadd.f32 %v2361, %v2362
  %v2364 = vsel %vm2240, %v2236, 0.0
  %v2365 = vadd.f32 %v2363, %v2364
  %v2366 = vsel %vm2240, %v2238, 0.0
  %v2367 = vadd.f32 %v2365, %v2366
  %v2368 = vrot.slane %v2367, 4
  %v2369 = vadd.f32 %v2367, %v2368
  %v2370 = vrot.slane %v2369, 2
  %v2371 = vadd.f32 %v2369, %v2370
  %v2372 = vrot.slane %v2371, 1
  %v2373 = vadd.f32 %v2371, %v2372
  %v2374 = vmul.f32 %v2373, 0.001953125
  %v2375 = vsub.f32 %v2081, %v2374
  %v2376 = vsub.f32 %v2083, %v2374
  %v2377 = vsub.f32 %v2086, %v2374
  %v2378 = vsub.f32 %v2088, %v2374
  %v2379 = vsub.f32 %v2091, %v2374
  %v2380 = vsub.f32 %v2093, %v2374
  %v2381 = vsub.f32 %v2096, %v2374
  %v2382 = vsub.f32 %v2098, %v2374
  %v2383 = vsub.f32 %v2101, %v2374
  %v2384 = vsub.f32 %v2103, %v2374
  %v2385 = vsub.f32 %v2106, %v2374
  %v2386 = vsub.f32 %v2108, %v2374
  %v2387 = vsub.f32 %v2111, %v2374
  %v2388 = vsub.f32 %v2113, %v2374
  %v2389 = vsub.f32 %v2116, %v2374
  %v2390 = vsub.f32 %v2118, %v2374
  %v2391 = vsub.f32 %v2121, %v2374
  %v2392 = vsub.f32 %v2123, %v2374
  %v2393 = vsub.f32 %v2126, %v2374
  %v2394 = vsub.f32 %v2128, %v2374
  %v2395 = vsub.f32 %v2131, %v2374
  %v2396 = vsub.f32 %v2133, %v2374
  %v2397 = vsub.f32 %v2136, %v2374
  %v2398 = vsub.f32 %v2138, %v2374
  %v2399 = vsub.f32 %v2141, %v2374
  %v2400 = vsub.f32 %v2143, %v2374
  %v2401 = vsub.f32 %v2146, %v2374
  %v2402 = vsub.f32 %v2148, %v2374
  %v2403 = vsub.f32 %v2151, %v2374
  %v2404 = vsub.f32 %v2153, %v2374
  %v2405 = vsub.f32 %v2156, %v2374
  %v2406 = vsub.f32 %v2158, %v2374
  %v2407 = vsub.f32 %v2161, %v2374
  %v2408 = vsub.f32 %v2163, %v2374
  %v2409 = vsub.f32 %v2166, %v2374
  %v2410 = vsub.f32 %v2168, %v2374
  %v2411 = vsub.f32 %v2171, %v2374
  %v2412 = vsub.f32 %v2173, %v2374
  %v2413 = vsub.f32 %v2176, %v2374
  %v2414 = vsub.f32 %v2178, %v2374
  %v2415 = vsub.f32 %v2181, %v2374
  %v2416 = vsub.f32 %v2183, %v2374
  %v2417 = vsub.f32 %v2186, %v2374
  %v2418 = vsub.f32 %v2188, %v2374
  %v2419 = vsub.f32 %v2191, %v2374
  %v2420 = vsub.f32 %v2193, %v2374
  %v2421 = vsub.f32 %v2196, %v2374
  %v2422 = vsub.f32 %v2198, %v2374
  %v2423 = vsub.f32 %v2201, %v2374
  %v2424 = vsub.f32 %v2203, %v2374
  %v2425 = vsub.f32 %v2206, %v2374
  %v2426 = vsub.f32 %v2208, %v2374
  %v2427 = vsub.f32 %v2211, %v2374
  %v2428 = vsub.f32 %v2213, %v2374
  %v2429 = vsub.f32 %v2216, %v2374
  %v2430 = vsub.f32 %v2218, %v2374
  %v2431 = vsub.f32 %v2221, %v2374
  %v2432 = vsub.f32 %v2223, %v2374
  %v2433 = vsub.f32 %v2226, %v2374
  %v2434 = vsub.f32 %v2228, %v2374
  %v2435 = vsub.f32 %v2231, %v2374
  %v2436 = vsub.f32 %v2233, %v2374
  %v2437 = vsub.f32 %v2236, %v2374
  %v2438 = vsub.f32 %v2238, %v2374
  %v2439 = vmul.f32 %v2375, %v2375
  %v2440 = vmul.f32 %v2376, %v2376
  %v2441 = vmul.f32 %v2377, %v2377
  %v2442 = vmul.f32 %v2378, %v2378
  %v2443 = vmul.f32 %v2379, %v2379
  %v2444 = vmul.f32 %v2380, %v2380
  %v2445 = vmul.f32 %v2381, %v2381
  %v2446 = vmul.f32 %v2382, %v2382
  %v2447 = vmul.f32 %v2383, %v2383
  %v2448 = vmul.f32 %v2384, %v2384
  %v2449 = vmul.f32 %v2385, %v2385
  %v2450 = vmul.f32 %v2386, %v2386
  %v2451 = vmul.f32 %v2387, %v2387
  %v2452 = vmul.f32 %v2388, %v2388
  %v2453 = vmul.f32 %v2389, %v2389
  %v2454 = vmul.f32 %v2390, %v2390
  %v2455 = vmul.f32 %v2391, %v2391
  %v2456 = vmul.f32 %v2392, %v2392
  %v2457 = vmul.f32 %v2393, %v2393
  %v2458 = vmul.f32 %v2394, %v2394
  %v2459 = vmul.f32 %v2395, %v2395
  %v2460 = vmul.f32 %v2396, %v2396
  %v2461 = vmul.f32 %v2397, %v2397
  %v2462 = vmul.f32 %v2398, %v2398
  %v2463 = vmul.f32 %v2399, %v2399
  %v2464 = vmul.f32 %v2400, %v2400
  %v2465 = vmul.f32 %v2401, %v2401
  %v2466 = vmul.f32 %v2402, %v2402
  %v2467 = vmul.f32 %v2403, %v2403
  %v2468 = vmul.f32 %v2404, %v2404
  %v2469 = vmul.f32 %v2405, %v2405
  %v2470 = vmul.f32 %v2406, %v2406
  %v2471 = vmul.f32 %v2407, %v2407
  %v2472 = vmul.f32 %v2408, %v2408
  %v2473 = vmul.f32 %v2409, %v2409
  %v2474 = vmul.f32 %v2410, %v2410
  %v2475 = vmul.f32 %v2411, %v2411
  %v2476 = vmul.f32 %v2412, %v2412
  %v2477 = vmul.f32 %v2413, %v2413
  %v2478 = vmul.f32 %v2414, %v2414
  %v2479 = vmul.f32 %v2415, %v2415
  %v2480 = vmul.f32 %v2416, %v2416
  %v2481 = vmul.f32 %v2417, %v2417
  %v2482 = vmul.f32 %v2418, %v2418
  %v2483 = vmul.f32 %v2419, %v2419
  %v2484 = vmul.f32 %v2420, %v2420
  %v2485 = vmul.f32 %v2421, %v2421
  %v2486 = vmul.f32 %v2422, %v2422
  %v2487 = vmul.f32 %v2423, %v2423
  %v2488 = vmul.f32 %v2424, %v2424
  %v2489 = vmul.f32 %v2425, %v2425
  %v2490 = vmul.f32 %v2426, %v2426
  %v2491 = vmul.f32 %v2427, %v2427
  %v2492 = vmul.f32 %v2428, %v2428
  %v2493 = vmul.f32 %v2429, %v2429
  %v2494 = vmul.f32 %v2430, %v2430
  %v2495 = vmul.f32 %v2431, %v2431
  %v2496 = vmul.f32 %v2432, %v2432
  %v2497 = vmul.f32 %v2433, %v2433
  %v2498 = vmul.f32 %v2434, %v2434
  %v2499 = vmul.f32 %v2435, %v2435
  %v2500 = vmul.f32 %v2436, %v2436
  %v2501 = vmul.f32 %v2437, %v2437
  %v2502 = vmul.f32 %v2438, %v2438
  %v2503 = vsel %vm2240, %v2439, 0.0
  %v2504 = vsel %vm2240, %v2440, 0.0
  %v2505 = vadd.f32 %v2503, %v2504
  %v2506 = vsel %vm2240, %v2441, 0.0
  %v2507 = vadd.f32 %v2505, %v2506
  %v2508 = vsel %vm2240, %v2442, 0.0
  %v2509 = vadd.f32 %v2507, %v2508
  %v2510 = vsel %vm2240, %v2443, 0.0
  %v2511 = vadd.f32 %v2509, %v2510
  %v2512 = vsel %vm2240, %v2444, 0.0
  %v2513 = vadd.f32 %v2511, %v2512
  %v2514 = vsel %vm2240, %v2445, 0.0
  %v2515 = vadd.f32 %v2513, %v2514
  %v2516 = vsel %vm2240, %v2446, 0.0
  %v2517 = vadd.f32 %v2515, %v2516
  %v2518 = vsel %vm2240, %v2447, 0.0
  %v2519 = vadd.f32 %v2517, %v2518
  %v2520 = vsel %vm2240, %v2448, 0.0
  %v2521 = vadd.f32 %v2519, %v2520
  %v2522 = vsel %vm2240, %v2449, 0.0
  %v2523 = vadd.f32 %v2521, %v2522
  %v2524 = vsel %vm2240, %v2450, 0.0
  %v2525 = vadd.f32 %v2523, %v2524
  %v2526 = vsel %vm2240, %v2451, 0.0
  %v2527 = vadd.f32 %v2525, %v2526
  %v2528 = vsel %vm2240, %v2452, 0.0
  %v2529 = vadd.f32 %v2527, %v2528
  %v2530 = vsel %vm2240, %v2453, 0.0
  %v2531 = vadd.f32 %v2529, %v2530
  %v2532 = vsel %vm2240, %v2454, 0.0
  %v2533 = vadd.f32 %v2531, %v2532
  %v2534 = vsel %vm2240, %v2455, 0.0
  %v2535 = vadd.f32 %v2533, %v2534
  %v2536 = vsel %vm2240, %v2456, 0.0
  %v2537 = vadd.f32 %v2535, %v2536
  %v2538 = vsel %vm2240, %v2457, 0.0
  %v2539 = vadd.f32 %v2537, %v2538
  %v2540 = vsel %vm2240, %v2458, 0.0
  %v2541 = vadd.f32 %v2539, %v2540
  %v2542 = vsel %vm2240, %v2459, 0.0
  %v2543 = vadd.f32 %v2541, %v2542
  %v2544 = vsel %vm2240, %v2460, 0.0
  %v2545 = vadd.f32 %v2543, %v2544
  %v2546 = vsel %vm2240, %v2461, 0.0
  %v2547 = vadd.f32 %v2545, %v2546
  %v2548 = vsel %vm2240, %v2462, 0.0
  %v2549 = vadd.f32 %v2547, %v2548
  %v2550 = vsel %vm2240, %v2463, 0.0
  %v2551 = vadd.f32 %v2549, %v2550
  %v2552 = vsel %vm2240, %v2464, 0.0
  %v2553 = vadd.f32 %v2551, %v2552
  %v2554 = vsel %vm2240, %v2465, 0.0
  %v2555 = vadd.f32 %v2553, %v2554
  %v2556 = vsel %vm2240, %v2466, 0.0
  %v2557 = vadd.f32 %v2555, %v2556
  %v2558 = vsel %vm2240, %v2467, 0.0
  %v2559 = vadd.f32 %v2557, %v2558
  %v2560 = vsel %vm2240, %v2468, 0.0
  %v2561 = vadd.f32 %v2559, %v2560
  %v2562 = vsel %vm2240, %v2469, 0.0
  %v2563 = vadd.f32 %v2561, %v2562
  %v2564 = vsel %vm2240, %v2470, 0.0
  %v2565 = vadd.f32 %v2563, %v2564
  %v2566 = vsel %vm2240, %v2471, 0.0
  %v2567 = vadd.f32 %v2565, %v2566
  %v2568 = vsel %vm2240, %v2472, 0.0
  %v2569 = vadd.f32 %v2567, %v2568
  %v2570 = vsel %vm2240, %v2473, 0.0
  %v2571 = vadd.f32 %v2569, %v2570
  %v2572 = vsel %vm2240, %v2474, 0.0
  %v2573 = vadd.f32 %v2571, %v2572
  %v2574 = vsel %vm2240, %v2475, 0.0
  %v2575 = vadd.f32 %v2573, %v2574
  %v2576 = vsel %vm2240, %v2476, 0.0
  %v2577 = vadd.f32 %v2575, %v2576
  %v2578 = vsel %vm2240, %v2477, 0.0
  %v2579 = vadd.f32 %v2577, %v2578
  %v2580 = vsel %vm2240, %v2478, 0.0
  %v2581 = vadd.f32 %v2579, %v2580
  %v2582 = vsel %vm2240, %v2479, 0.0
  %v2583 = vadd.f32 %v2581, %v2582
  %v2584 = vsel %vm2240, %v2480, 0.0
  %v2585 = vadd.f32 %v2583, %v2584
  %v2586 = vsel %vm2240, %v2481, 0.0
  %v2587 = vadd.f32 %v2585, %v2586
  %v2588 = vsel %vm2240, %v2482, 0.0
  %v2589 = vadd.f32 %v2587, %v2588
  %v2590 = vsel %vm2240, %v2483, 0.0
  %v2591 = vadd.f32 %v2589, %v2590
  %v2592 = vsel %vm2240, %v2484, 0.0
  %v2593 = vadd.f32 %v2591, %v2592
  %v2594 = vsel %vm2240, %v2485, 0.0
  %v2595 = vadd.f32 %v2593, %v2594
  %v2596 = vsel %vm2240, %v2486, 0.0
  %v2597 = vadd.f32 %v2595, %v2596
  %v2598 = vsel %vm2240, %v2487, 0.0
  %v2599 = vadd.f32 %v2597, %v2598
  %v2600 = vsel %vm2240, %v2488, 0.0
  %v2601 = vadd.f32 %v2599, %v2600
  %v2602 = vsel %vm2240, %v2489, 0.0
  %v2603 = vadd.f32 %v2601, %v2602
  %v2604 = vsel %vm2240, %v2490, 0.0
  %v2605 = vadd.f32 %v2603, %v2604
  %v2606 = vsel %vm2240, %v2491, 0.0
  %v2607 = vadd.f32 %v2605, %v2606
  %v2608 = vsel %vm2240, %v2492, 0.0
  %v2609 = vadd.f32 %v2607, %v2608
  %v2610 = vsel %vm2240, %v2493, 0.0
  %v2611 = vadd.f32 %v2609, %v2610
  %v2612 = vsel %vm2240, %v2494, 0.0
  %v2613 = vadd.f32 %v2611, %v2612
  %v2614 = vsel %vm2240, %v2495, 0.0
  %v2615 = vadd.f32 %v2613, %v2614
  %v2616 = vsel %vm2240, %v2496, 0.0
  %v2617 = vadd.f32 %v2615, %v2616
  %v2618 = vsel %vm2240, %v2497, 0.0
  %v2619 = vadd.f32 %v2617, %v2618
  %v2620 = vsel %vm2240, %v2498, 0.0
  %v2621 = vadd.f32 %v2619, %v2620
  %v2622 = vsel %vm2240, %v2499, 0.0
  %v2623 = vadd.f32 %v2621, %v2622
  %v2624 = vsel %vm2240, %v2500, 0.0
  %v2625 = vadd.f32 %v2623, %v2624
  %v2626 = vsel %vm2240, %v2501, 0.0
  %v2627 = vadd.f32 %v2625, %v2626
  %v2628 = vsel %vm2240, %v2502, 0.0
  %v2629 = vadd.f32 %v2627, %v2628
  %v2630 = vrot.slane %v2629, 4
  %v2631 = vadd.f32 %v2629, %v2630
  %v2632 = vrot.slane %v2631, 2
  %v2633 = vadd.f32 %v2631, %v2632
  %v2634 = vrot.slane %v2633, 1
  %v2635 = vadd.f32 %v2633, %v2634
  %v2636 = vmul.f32 %v2635, 0.001953125
  %v2637 = vld [vmem:[%s2] sm:$0x1]
  %v2638 = vadd.f32 %v2636, 0.001
  %v2639 = vrsqrt.pop %v2638
  %v2640 = vmul.f32 %v2639, %v2638
  %v2641 = vmul.f32 %v2640, %v2639
  %v2642 = vmul.f32 0.5, %v2641
  %v2643 = vsub.f32 1.5, %v2642
  %v2644 = vmul.f32 %v2639, %v2643
  %vm2645 = vweird.f32 %v2638
  %vm2646 = vweird.f32 %v2639
  %vm2647 = vmor %vm2645, %vm2646
  %v2648 = vsel %vm2647, %v2639, %v2644
  %v2649 = vmul.f32 %v2637, %v2648
  %v2651 = vperm.slane %v2649, 0
  %v2653 = vmul.f32 %v2375, %v2651
  %v2654 = vmul.f32 %v2376, %v2651
  %v2655 = vmul.f32 %v2377, %v2651
  %v2656 = vmul.f32 %v2378, %v2651
  %v2657 = vmul.f32 %v2379, %v2651
  %v2658 = vmul.f32 %v2380, %v2651
  %v2659 = vmul.f32 %v2381, %v2651
  %v2660 = vmul.f32 %v2382, %v2651
  %v2661 = vmul.f32 %v2383, %v2651
  %v2662 = vmul.f32 %v2384, %v2651
  %v2663 = vmul.f32 %v2385, %v2651
  %v2664 = vmul.f32 %v2386, %v2651
  %v2665 = vmul.f32 %v2387, %v2651
  %v2666 = vmul.f32 %v2388, %v2651
  %v2667 = vmul.f32 %v2389, %v2651
  %v2668 = vmul.f32 %v2390, %v2651
  %v2669 = vmul.f32 %v2391, %v2651
  %v2670 = vmul.f32 %v2392, %v2651
  %v2671 = vmul.f32 %v2393, %v2651
  %v2672 = vmul.f32 %v2394, %v2651
  %v2673 = vmul.f32 %v2395, %v2651
  %v2674 = vmul.f32 %v2396, %v2651
  %v2675 = vmul.f32 %v2397, %v2651
  %v2676 = vmul.f32 %v2398, %v2651
  %v2677 = vmul.f32 %v2399, %v2651
  %v2678 = vmul.f32 %v2400, %v2651
  %v2679 = vmul.f32 %v2401, %v2651
  %v2680 = vmul.f32 %v2402, %v2651
  %v2681 = vmul.f32 %v2403, %v2651
  %v2682 = vmul.f32 %v2404, %v2651
  %v2683 = vmul.f32 %v2405, %v2651
  %v2684 = vmul.f32 %v2406, %v2651
  %v2685 = vmul.f32 %v2407, %v2651
  %v2686 = vmul.f32 %v2408, %v2651
  %v2687 = vmul.f32 %v2409, %v2651
  %v2688 = vmul.f32 %v2410, %v2651
  %v2689 = vmul.f32 %v2411, %v2651
  %v2690 = vmul.f32 %v2412, %v2651
  %v2691 = vmul.f32 %v2413, %v2651
  %v2692 = vmul.f32 %v2414, %v2651
  %v2693 = vmul.f32 %v2415, %v2651
  %v2694 = vmul.f32 %v2416, %v2651
  %v2695 = vmul.f32 %v2417, %v2651
  %v2696 = vmul.f32 %v2418, %v2651
  %v2697 = vmul.f32 %v2419, %v2651
  %v2698 = vmul.f32 %v2420, %v2651
  %v2699 = vmul.f32 %v2421, %v2651
  %v2700 = vmul.f32 %v2422, %v2651
  %v2701 = vmul.f32 %v2423, %v2651
  %v2702 = vmul.f32 %v2424, %v2651
  %v2703 = vmul.f32 %v2425, %v2651
  %v2704 = vmul.f32 %v2426, %v2651
  %v2705 = vmul.f32 %v2427, %v2651
  %v2706 = vmul.f32 %v2428, %v2651
  %v2707 = vmul.f32 %v2429, %v2651
  %v2708 = vmul.f32 %v2430, %v2651
  %v2709 = vmul.f32 %v2431, %v2651
  %v2710 = vmul.f32 %v2432, %v2651
  %v2711 = vmul.f32 %v2433, %v2651
  %v2712 = vmul.f32 %v2434, %v2651
  %v2713 = vmul.f32 %v2435, %v2651
  %v2714 = vmul.f32 %v2436, %v2651
  %v2715 = vmul.f32 %v2437, %v2651
  %v2716 = vmul.f32 %v2438, %v2651
  %v2717 = vld [vmem:[%s3] sm:$0x1]
  %v2719 = vperm.slane %v2717, 0
  %v2721 = vadd.f32 %v2653, %v2719
  %v2722 = vadd.f32 %v2654, %v2719
  %v2723 = vadd.f32 %v2655, %v2719
  %v2724 = vadd.f32 %v2656, %v2719
  %v2725 = vadd.f32 %v2657, %v2719
  %v2726 = vadd.f32 %v2658, %v2719
  %v2727 = vadd.f32 %v2659, %v2719
  %v2728 = vadd.f32 %v2660, %v2719
  %v2729 = vadd.f32 %v2661, %v2719
  %v2730 = vadd.f32 %v2662, %v2719
  %v2731 = vadd.f32 %v2663, %v2719
  %v2732 = vadd.f32 %v2664, %v2719
  %v2733 = vadd.f32 %v2665, %v2719
  %v2734 = vadd.f32 %v2666, %v2719
  %v2735 = vadd.f32 %v2667, %v2719
  %v2736 = vadd.f32 %v2668, %v2719
  %v2737 = vadd.f32 %v2669, %v2719
  %v2738 = vadd.f32 %v2670, %v2719
  %v2739 = vadd.f32 %v2671, %v2719
  %v2740 = vadd.f32 %v2672, %v2719
  %v2741 = vadd.f32 %v2673, %v2719
  %v2742 = vadd.f32 %v2674, %v2719
  %v2743 = vadd.f32 %v2675, %v2719
  %v2744 = vadd.f32 %v2676, %v2719
  %v2745 = vadd.f32 %v2677, %v2719
  %v2746 = vadd.f32 %v2678, %v2719
  %v2747 = vadd.f32 %v2679, %v2719
  %v2748 = vadd.f32 %v2680, %v2719
  %v2749 = vadd.f32 %v2681, %v2719
  %v2750 = vadd.f32 %v2682, %v2719
  %v2751 = vadd.f32 %v2683, %v2719
  %v2752 = vadd.f32 %v2684, %v2719
  %v2753 = vadd.f32 %v2685, %v2719
  %v2754 = vadd.f32 %v2686, %v2719
  %v2755 = vadd.f32 %v2687, %v2719
  %v2756 = vadd.f32 %v2688, %v2719
  %v2757 = vadd.f32 %v2689, %v2719
  %v2758 = vadd.f32 %v2690, %v2719
  %v2759 = vadd.f32 %v2691, %v2719
  %v2760 = vadd.f32 %v2692, %v2719
  %v2761 = vadd.f32 %v2693, %v2719
  %v2762 = vadd.f32 %v2694, %v2719
  %v2763 = vadd.f32 %v2695, %v2719
  %v2764 = vadd.f32 %v2696, %v2719
  %v2765 = vadd.f32 %v2697, %v2719
  %v2766 = vadd.f32 %v2698, %v2719
  %v2767 = vadd.f32 %v2699, %v2719
  %v2768 = vadd.f32 %v2700, %v2719
  %v2769 = vadd.f32 %v2701, %v2719
  %v2770 = vadd.f32 %v2702, %v2719
  %v2771 = vadd.f32 %v2703, %v2719
  %v2772 = vadd.f32 %v2704, %v2719
  %v2773 = vadd.f32 %v2705, %v2719
  %v2774 = vadd.f32 %v2706, %v2719
  %v2775 = vadd.f32 %v2707, %v2719
  %v2776 = vadd.f32 %v2708, %v2719
  %v2777 = vadd.f32 %v2709, %v2719
  %v2778 = vadd.f32 %v2710, %v2719
  %v2779 = vadd.f32 %v2711, %v2719
  %v2780 = vadd.f32 %v2712, %v2719
  %v2781 = vadd.f32 %v2713, %v2719
  %v2782 = vadd.f32 %v2714, %v2719
  %v2783 = vadd.f32 %v2715, %v2719
  %v2784 = vadd.f32 %v2716, %v2719
  %v2785 = vmax.f32 %v2721, 0.0
  %v2786 = vmax.f32 %v2722, 0.0
  %v2787 = vmax.f32 %v2723, 0.0
  %v2788 = vmax.f32 %v2724, 0.0
  %v2789 = vmax.f32 %v2725, 0.0
  %v2790 = vmax.f32 %v2726, 0.0
  %v2791 = vmax.f32 %v2727, 0.0
  %v2792 = vmax.f32 %v2728, 0.0
  %v2793 = vmax.f32 %v2729, 0.0
  %v2794 = vmax.f32 %v2730, 0.0
  %v2795 = vmax.f32 %v2731, 0.0
  %v2796 = vmax.f32 %v2732, 0.0
  %v2797 = vmax.f32 %v2733, 0.0
  %v2798 = vmax.f32 %v2734, 0.0
  %v2799 = vmax.f32 %v2735, 0.0
  %v2800 = vmax.f32 %v2736, 0.0
  %v2801 = vmax.f32 %v2737, 0.0
  %v2802 = vmax.f32 %v2738, 0.0
  %v2803 = vmax.f32 %v2739, 0.0
  %v2804 = vmax.f32 %v2740, 0.0
  %v2805 = vmax.f32 %v2741, 0.0
  %v2806 = vmax.f32 %v2742, 0.0
  %v2807 = vmax.f32 %v2743, 0.0
  %v2808 = vmax.f32 %v2744, 0.0
  %v2809 = vmax.f32 %v2745, 0.0
  %v2810 = vmax.f32 %v2746, 0.0
  %v2811 = vmax.f32 %v2747, 0.0
  %v2812 = vmax.f32 %v2748, 0.0
  %v2813 = vmax.f32 %v2749, 0.0
  %v2814 = vmax.f32 %v2750, 0.0
  %v2815 = vmax.f32 %v2751, 0.0
  %v2816 = vmax.f32 %v2752, 0.0
  %v2817 = vmax.f32 %v2753, 0.0
  %v2818 = vmax.f32 %v2754, 0.0
  %v2819 = vmax.f32 %v2755, 0.0
  %v2820 = vmax.f32 %v2756, 0.0
  %v2821 = vmax.f32 %v2757, 0.0
  %v2822 = vmax.f32 %v2758, 0.0
  %v2823 = vmax.f32 %v2759, 0.0
  %v2824 = vmax.f32 %v2760, 0.0
  %v2825 = vmax.f32 %v2761, 0.0
  %v2826 = vmax.f32 %v2762, 0.0
  %v2827 = vmax.f32 %v2763, 0.0
  %v2828 = vmax.f32 %v2764, 0.0
  %v2829 = vmax.f32 %v2765, 0.0
  %v2830 = vmax.f32 %v2766, 0.0
  %v2831 = vmax.f32 %v2767, 0.0
  %v2832 = vmax.f32 %v2768, 0.0
  %v2833 = vmax.f32 %v2769, 0.0
  %v2834 = vmax.f32 %v2770, 0.0
  %v2835 = vmax.f32 %v2771, 0.0
  %v2836 = vmax.f32 %v2772, 0.0
  %v2837 = vmax.f32 %v2773, 0.0
  %v2838 = vmax.f32 %v2774, 0.0
  %v2839 = vmax.f32 %v2775, 0.0
  %v2840 = vmax.f32 %v2776, 0.0
  %v2841 = vmax.f32 %v2777, 0.0
  %v2842 = vmax.f32 %v2778, 0.0
  %v2843 = vmax.f32 %v2779, 0.0
  %v2844 = vmax.f32 %v2780, 0.0
  %v2845 = vmax.f32 %v2781, 0.0
  %v2846 = vmax.f32 %v2782, 0.0
  %v2847 = vmax.f32 %v2783, 0.0
  %v2848 = vmax.f32 %v2784, 0.0
  %2849 = vst.msk [vmem:[%s4] sm:$0xff] %vm2240, %v2785
  %2850 = vst.msk [vmem:[%s4 + $0x8] sm:$0xff] %vm2240, %v2786
  %2851 = vst.msk [vmem:[%s4 + $0x10] sm:$0xff] %vm2240, %v2787
  %2852 = vst.msk [vmem:[%s4 + $0x18] sm:$0xff] %vm2240, %v2788
  %2853 = vst.msk [vmem:[%s4 + $0x20] sm:$0xff] %vm2240, %v2789
  %2854 = vst.msk [vmem:[%s4 + $0x28] sm:$0xff] %vm2240, %v2790
  %2855 = vst.msk [vmem:[%s4 + $0x30] sm:$0xff] %vm2240, %v2791
  %2856 = vst.msk [vmem:[%s4 + $0x38] sm:$0xff] %vm2240, %v2792
  %2857 = vst.msk [vmem:[%s4 + $0x40] sm:$0xff] %vm2240, %v2793
  %2858 = vst.msk [vmem:[%s4 + $0x48] sm:$0xff] %vm2240, %v2794
  %2859 = vst.msk [vmem:[%s4 + $0x50] sm:$0xff] %vm2240, %v2795
  %2860 = vst.msk [vmem:[%s4 + $0x58] sm:$0xff] %vm2240, %v2796
  %2861 = vst.msk [vmem:[%s4 + $0x60] sm:$0xff] %vm2240, %v2797
  %2862 = vst.msk [vmem:[%s4 + $0x68] sm:$0xff] %vm2240, %v2798
  %2863 = vst.msk [vmem:[%s4 + $0x70] sm:$0xff] %vm2240, %v2799
  %2864 = vst.msk [vmem:[%s4 + $0x78] sm:$0xff] %vm2240, %v2800
  %2865 = vst.msk [vmem:[%s4 + $0x80] sm:$0xff] %vm2240, %v2801
  %2866 = vst.msk [vmem:[%s4 + $0x88] sm:$0xff] %vm2240, %v2802
  %2867 = vst.msk [vmem:[%s4 + $0x90] sm:$0xff] %vm2240, %v2803
  %2868 = vst.msk [vmem:[%s4 + $0x98] sm:$0xff] %vm2240, %v2804
  %2869 = vst.msk [vmem:[%s4 + $0xa0] sm:$0xff] %vm2240, %v2805
  %2870 = vst.msk [vmem:[%s4 + $0xa8] sm:$0xff] %vm2240, %v2806
  %2871 = vst.msk [vmem:[%s4 + $0xb0] sm:$0xff] %vm2240, %v2807
  %2872 = vst.msk [vmem:[%s4 + $0xb8] sm:$0xff] %vm2240, %v2808
  %2873 = vst.msk [vmem:[%s4 + $0xc0] sm:$0xff] %vm2240, %v2809
  %2874 = vst.msk [vmem:[%s4 + $0xc8] sm:$0xff] %vm2240, %v2810
  %2875 = vst.msk [vmem:[%s4 + $0xd0] sm:$0xff] %vm2240, %v2811
  %2876 = vst.msk [vmem:[%s4 + $0xd8] sm:$0xff] %vm2240, %v2812
  %2877 = vst.msk [vmem:[%s4 + $0xe0] sm:$0xff] %vm2240, %v2813
  %2878 = vst.msk [vmem:[%s4 + $0xe8] sm:$0xff] %vm2240, %v2814
  %2879 = vst.msk [vmem:[%s4 + $0xf0] sm:$0xff] %vm2240, %v2815
  %2880 = vst.msk [vmem:[%s4 + $0xf8] sm:$0xff] %vm2240, %v2816
  %2881 = vst.msk [vmem:[%s4 + $0x100] sm:$0xff] %vm2240, %v2817
  %2882 = vst.msk [vmem:[%s4 + $0x108] sm:$0xff] %vm2240, %v2818
  %2883 = vst.msk [vmem:[%s4 + $0x110] sm:$0xff] %vm2240, %v2819
  %2884 = vst.msk [vmem:[%s4 + $0x118] sm:$0xff] %vm2240, %v2820
  %2885 = vst.msk [vmem:[%s4 + $0x120] sm:$0xff] %vm2240, %v2821
  %2886 = vst.msk [vmem:[%s4 + $0x128] sm:$0xff] %vm2240, %v2822
  %2887 = vst.msk [vmem:[%s4 + $0x130] sm:$0xff] %vm2240, %v2823
  %2888 = vst.msk [vmem:[%s4 + $0x138] sm:$0xff] %vm2240, %v2824
  %2889 = vst.msk [vmem:[%s4 + $0x140] sm:$0xff] %vm2240, %v2825
  %2890 = vst.msk [vmem:[%s4 + $0x148] sm:$0xff] %vm2240, %v2826
  %2891 = vst.msk [vmem:[%s4 + $0x150] sm:$0xff] %vm2240, %v2827
  %2892 = vst.msk [vmem:[%s4 + $0x158] sm:$0xff] %vm2240, %v2828
  %2893 = vst.msk [vmem:[%s4 + $0x160] sm:$0xff] %vm2240, %v2829
  %2894 = vst.msk [vmem:[%s4 + $0x168] sm:$0xff] %vm2240, %v2830
  %2895 = vst.msk [vmem:[%s4 + $0x170] sm:$0xff] %vm2240, %v2831
  %2896 = vst.msk [vmem:[%s4 + $0x178] sm:$0xff] %vm2240, %v2832
  %2897 = vst.msk [vmem:[%s4 + $0x180] sm:$0xff] %vm2240, %v2833
  %2898 = vst.msk [vmem:[%s4 + $0x188] sm:$0xff] %vm2240, %v2834
  %2899 = vst.msk [vmem:[%s4 + $0x190] sm:$0xff] %vm2240, %v2835
  %2900 = vst.msk [vmem:[%s4 + $0x198] sm:$0xff] %vm2240, %v2836
  %2901 = vst.msk [vmem:[%s4 + $0x1a0] sm:$0xff] %vm2240, %v2837
  %2902 = vst.msk [vmem:[%s4 + $0x1a8] sm:$0xff] %vm2240, %v2838
  %2903 = vst.msk [vmem:[%s4 + $0x1b0] sm:$0xff] %vm2240, %v2839
  %2904 = vst.msk [vmem:[%s4 + $0x1b8] sm:$0xff] %vm2240, %v2840
  %2905 = vst.msk [vmem:[%s4 + $0x1c0] sm:$0xff] %vm2240, %v2841
  %2906 = vst.msk [vmem:[%s4 + $0x1c8] sm:$0xff] %vm2240, %v2842
  %2907 = vst.msk [vmem:[%s4 + $0x1d0] sm:$0xff] %vm2240, %v2843
  %2908 = vst.msk [vmem:[%s4 + $0x1d8] sm:$0xff] %vm2240, %v2844
  %2909 = vst.msk [vmem:[%s4 + $0x1e0] sm:$0xff] %vm2240, %v2845
  %2910 = vst.msk [vmem:[%s4 + $0x1e8] sm:$0xff] %vm2240, %v2846
  %2911 = vst.msk [vmem:[%s4 + $0x1f0] sm:$0xff] %vm2240, %v2847
  %2912 = vst.msk [vmem:[%s4 + $0x1f8] sm:$0xff] %vm2240, %v2848
  // Predicated region
  $region18: #{inception1_forward.6} parent=0 // pred_check
    _
  $region19: #{inception1_forward.6} parent=0 // pred_check_branch
    %2914 = sbr.rel (0) target = $region21
  $region20: #{inception1_forward.6} parent=0 // pred_region
    _
  $region21: #{inception1_forward.6} parent=0 // pred_fallthru
    _
  // Predicated region
  $region22: #{inception1_forward.6} parent=0 // pred_check
    _
  $region23: #{inception1_forward.6} parent=0 // pred_check_branch
    %2916 = sbr.rel (0) target = $region25
  $region24: #{inception1_forward.6} parent=0 // pred_region
    _
  $region25: #{inception1_forward.6} parent=0 // pred_fallthru
    _

// kernel: inception1_forward.7
$region0: #{inception1_forward.7}
  #allocation0 [shape = 'u32[]', space=smem, size = 0x4, offset = 0x4, fixed_abs, tag = 'smem constant byte address 0x4 - core index']
  #allocation1 [shape = 'u32[72,128]{1,0:T(1,128)}', space=vmem, size = 0x9000, scoped, tag = 'internal scratch']
  %s0 = inlined_call_operand.vmem [shape: bf16[512,864], index: 0, kind: input, shape index: {}]
  %s1 = inlined_call_operand.vmem [shape: bf16[864,96], index: 1, kind: input, shape index: {}]
  %s2 = inlined_call_operand.vmem [shape: f32[1,96], index: 2, kind: input, shape index: {}]
  %s3 = inlined_call_operand.vmem [shape: f32[1,96], index: 3, kind: input, shape index: {}]
  %s4 = inlined_call_operand.vmem [shape: f32[512,96], index: 4, kind: output, shape index: {}]
  %s5 = sld [smem:[#allocation0]]
  $region26: #{inception1_forward.7} parent=0
    _
  %s7 = ssub.s32 1, %s5
  %s8 = scalar_select 0, %s7, %s5
  // Predicated region
  $region2: #{inception1_forward.7} parent=0 // pred_check
    _
  $region3: #{inception1_forward.7} parent=0 // pred_check_branch
    %10 = sbr.rel (0) target = $region5
  $region4: #{inception1_forward.7} parent=0 // pred_region
    _
  $region5: #{inception1_forward.7} parent=0 // pred_fallthru
    _
  // Predicated region
  $region6: #{inception1_forward.7} parent=0 // pred_check
    _
  $region7: #{inception1_forward.7} parent=0 // pred_check_branch
    %12 = sbr.rel (0) target = $region9
  $region8: #{inception1_forward.7} parent=0 // pred_region
    _
  $region9: #{inception1_forward.7} parent=0 // pred_fallthru
    _
  // Predicated region
  $region10: #{inception1_forward.7} parent=0 // pred_check
    _
  $region11: #{inception1_forward.7} parent=0 // pred_check_branch
    %14 = sbr.rel (0) target = $region13
  $region12: #{inception1_forward.7} parent=0 // pred_region
    _
  $region13: #{inception1_forward.7} parent=0 // pred_fallthru
    _
  // Predicated region
  $region14: #{inception1_forward.7} parent=0 // pred_check
    _
  $region15: #{inception1_forward.7} parent=0 // pred_check_branch
    %16 = sbr.rel (0) target = $region17
  $region16: #{inception1_forward.7} parent=0 // pred_region
    _
  $region17: #{inception1_forward.7} parent=0 // pred_fallthru
    _
  %v18 = vld [vmem:[%s0] sm:$0xff]
  %v19 = vld [vmem:[%s0 + $0x8] sm:$0xff]
  %v20 = vld [vmem:[%s0 + $0x10] sm:$0xff]
  %v21 = vld [vmem:[%s0 + $0x18] sm:$0xf]
  %v22 = vld [vmem:[%s0 + $0x1c] sm:$0xff]
  %v23 = vld [vmem:[%s0 + $0x24] sm:$0xff]
  %v24 = vld [vmem:[%s0 + $0x2c] sm:$0xff]
  %v25 = vld [vmem:[%s0 + $0x34] sm:$0xf]
  %v26 = vld [vmem:[%s0 + $0x38] sm:$0xff]
  %v27 = vld [vmem:[%s0 + $0x40] sm:$0xff]
  %v28 = vld [vmem:[%s0 + $0x48] sm:$0xff]
  %v29 = vld [vmem:[%s0 + $0x50] sm:$0xf]
  %v30 = vld [vmem:[%s0 + $0x54] sm:$0xff]
  %v31 = vld [vmem:[%s0 + $0x5c] sm:$0xff]
  %v32 = vld [vmem:[%s0 + $0x64] sm:$0xff]
  %v33 = vld [vmem:[%s0 + $0x6c] sm:$0xf]
  %v34 = vld [vmem:[%s0 + $0x70] sm:$0xff]
  %v35 = vld [vmem:[%s0 + $0x78] sm:$0xff]
  %v36 = vld [vmem:[%s0 + $0x80] sm:$0xff]
  %v37 = vld [vmem:[%s0 + $0x88] sm:$0xf]
  %v38 = vld [vmem:[%s0 + $0x8c] sm:$0xff]
  %v39 = vld [vmem:[%s0 + $0x94] sm:$0xff]
  %v40 = vld [vmem:[%s0 + $0x9c] sm:$0xff]
  %v41 = vld [vmem:[%s0 + $0xa4] sm:$0xf]
  %v42 = vld [vmem:[%s0 + $0xa8] sm:$0xff]
  %v43 = vld [vmem:[%s0 + $0xb0] sm:$0xff]
  %v44 = vld [vmem:[%s0 + $0xb8] sm:$0xff]
  %v45 = vld [vmem:[%s0 + $0xc0] sm:$0xf]
  %v46 = vld [vmem:[%s0 + $0xc4] sm:$0xff]
  %v47 = vld [vmem:[%s0 + $0xcc] sm:$0xff]
  %v48 = vld [vmem:[%s0 + $0xd4] sm:$0xff]
  %v49 = vld [vmem:[%s0 + $0xdc] sm:$0xf]
  %v50 = vld [vmem:[%s0 + $0xe0] sm:$0xff]
  %v51 = vld [vmem:[%s0 + $0xe8] sm:$0xff]
  %v52 = vld [vmem:[%s0 + $0xf0] sm:$0xff]
  %v53 = vld [vmem:[%s0 + $0xf8] sm:$0xf]
  %v54 = vld [vmem:[%s0 + $0xfc] sm:$0xff]
  %v55 = vld [vmem:[%s0 + $0x104] sm:$0xff]
  %v56 = vld [vmem:[%s0 + $0x10c] sm:$0xff]
  %v57 = vld [vmem:[%s0 + $0x114] sm:$0xf]
  %v58 = vld [vmem:[%s0 + $0x118] sm:$0xff]
  %v59 = vld [vmem:[%s0 + $0x120] sm:$0xff]
  %v60 = vld [vmem:[%s0 + $0x128] sm:$0xff]
  %v61 = vld [vmem:[%s0 + $0x130] sm:$0xf]
  %v62 = vld [vmem:[%s0 + $0x134] sm:$0xff]
  %v63 = vld [vmem:[%s0 + $0x13c] sm:$0xff]
  %v64 = vld [vmem:[%s0 + $0x144] sm:$0xff]
  %v65 = vld [vmem:[%s0 + $0x14c] sm:$0xf]
  %v66 = vld [vmem:[%s0 + $0x150] sm:$0xff]
  %v67 = vld [vmem:[%s0 + $0x158] sm:$0xff]
  %v68 = vld [vmem:[%s0 + $0x160] sm:$0xff]
  %v69 = vld [vmem:[%s0 + $0x168] sm:$0xf]
  %v70 = vld [vmem:[%s0 + $0x16c] sm:$0xff]
  %v71 = vld [vmem:[%s0 + $0x174] sm:$0xff]
  %v72 = vld [vmem:[%s0 + $0x17c] sm:$0xff]
  %v73 = vld [vmem:[%s0 + $0x184] sm:$0xf]
  %v74 = vld [vmem:[%s0 + $0x188] sm:$0xff]
  %v75 = vld [vmem:[%s0 + $0x190] sm:$0xff]
  %v76 = vld [vmem:[%s0 + $0x198] sm:$0xff]
  %v77 = vld [vmem:[%s0 + $0x1a0] sm:$0xf]
  %v78 = vld [vmem:[%s0 + $0x1a4] sm:$0xff]
  %v79 = vld [vmem:[%s0 + $0x1ac] sm:$0xff]
  %v80 = vld [vmem:[%s0 + $0x1b4] sm:$0xff]
  %v81 = vld [vmem:[%s0 + $0x1bc] sm:$0xf]
  %v82 = vld [vmem:[%s0 + $0x1c0] sm:$0xff]
  %v83 = vld [vmem:[%s0 + $0x1c8] sm:$0xff]
  %v84 = vld [vmem:[%s0 + $0x1d0] sm:$0xff]
  %v85 = vld [vmem:[%s0 + $0x1d8] sm:$0xf]
  %v86 = vld [vmem:[%s0 + $0x1dc] sm:$0xff]
  %v87 = vld [vmem:[%s0 + $0x1e4] sm:$0xff]
  %v88 = vld [vmem:[%s0 + $0x1ec] sm:$0xff]
  %v89 = vld [vmem:[%s0 + $0x1f4] sm:$0xf]
  %v90 = vld [vmem:[%s0 + $0x1f8] sm:$0xff]
  %v91 = vld [vmem:[%s0 + $0x200] sm:$0xff]
  %v92 = vld [vmem:[%s0 + $0x208] sm:$0xff]
  %v93 = vld [vmem:[%s0 + $0x210] sm:$0xf]
  %v94 = vld [vmem:[%s0 + $0x214] sm:$0xff]
  %v95 = vld [vmem:[%s0 + $0x21c] sm:$0xff]
  %v96 = vld [vmem:[%s0 + $0x224] sm:$0xff]
  %v97 = vld [vmem:[%s0 + $0x22c] sm:$0xf]
  %v98 = vld [vmem:[%s0 + $0x230] sm:$0xff]
  %v99 = vld [vmem:[%s0 + $0x238] sm:$0xff]
  %v100 = vld [vmem:[%s0 + $0x240] sm:$0xff]
  %v101 = vld [vmem:[%s0 + $0x248] sm:$0xf]
  %v102 = vld [vmem:[%s0 + $0x24c] sm:$0xff]
  %v103 = vld [vmem:[%s0 + $0x254] sm:$0xff]
  %v104 = vld [vmem:[%s0 + $0x25c] sm:$0xff]
  %v105 = vld [vmem:[%s0 + $0x264] sm:$0xf]
  %v106 = vld [vmem:[%s0 + $0x268] sm:$0xff]
  %v107 = vld [vmem:[%s0 + $0x270] sm:$0xff]
  %v108 = vld [vmem:[%s0 + $0x278] sm:$0xff]
  %v109 = vld [vmem:[%s0 + $0x280] sm:$0xf]
  %v110 = vld [vmem:[%s0 + $0x284] sm:$0xff]
  %v111 = vld [vmem:[%s0 + $0x28c] sm:$0xff]
  %v112 = vld [vmem:[%s0 + $0x294] sm:$0xff]
  %v113 = vld [vmem:[%s0 + $0x29c] sm:$0xf]
  %v114 = vld [vmem:[%s0 + $0x2a0] sm:$0xff]
  %v115 = vld [vmem:[%s0 + $0x2a8] sm:$0xff]
  %v116 = vld [vmem:[%s0 + $0x2b0] sm:$0xff]
  %v117 = vld [vmem:[%s0 + $0x2b8] sm:$0xf]
  %v118 = vld [vmem:[%s0 + $0x2bc] sm:$0xff]
  %v119 = vld [vmem:[%s0 + $0x2c4] sm:$0xff]
  %v120 = vld [vmem:[%s0 + $0x2cc] sm:$0xff]
  %v121 = vld [vmem:[%s0 + $0x2d4] sm:$0xf]
  %v122 = vld [vmem:[%s0 + $0x2d8] sm:$0xff]
  %v123 = vld [vmem:[%s0 + $0x2e0] sm:$0xff]
  %v124 = vld [vmem:[%s0 + $0x2e8] sm:$0xff]
  %v125 = vld [vmem:[%s0 + $0x2f0] sm:$0xf]
  %v126 = vld [vmem:[%s0 + $0x2f4] sm:$0xff]
  %v127 = vld [vmem:[%s0 + $0x2fc] sm:$0xff]
  %v128 = vld [vmem:[%s0 + $0x304] sm:$0xff]
  %v129 = vld [vmem:[%s0 + $0x30c] sm:$0xf]
  %v130 = vld [vmem:[%s0 + $0x310] sm:$0xff]
  %v131 = vld [vmem:[%s0 + $0x318] sm:$0xff]
  %v132 = vld [vmem:[%s0 + $0x320] sm:$0xff]
  %v133 = vld [vmem:[%s0 + $0x328] sm:$0xf]
  %v134 = vld [vmem:[%s0 + $0x32c] sm:$0xff]
  %v135 = vld [vmem:[%s0 + $0x334] sm:$0xff]
  %v136 = vld [vmem:[%s0 + $0x33c] sm:$0xff]
  %v137 = vld [vmem:[%s0 + $0x344] sm:$0xf]
  %v138 = vld [vmem:[%s0 + $0x348] sm:$0xff]
  %v139 = vld [vmem:[%s0 + $0x350] sm:$0xff]
  %v140 = vld [vmem:[%s0 + $0x358] sm:$0xff]
  %v141 = vld [vmem:[%s0 + $0x360] sm:$0xf]
  %v142 = vld [vmem:[%s0 + $0x364] sm:$0xff]
  %v143 = vld [vmem:[%s0 + $0x36c] sm:$0xff]
  %v144 = vld [vmem:[%s0 + $0x374] sm:$0xff]
  %v145 = vld [vmem:[%s0 + $0x37c] sm:$0xf]
  %v146 = vld [vmem:[%s0 + $0x380] sm:$0xff]
  %v147 = vld [vmem:[%s0 + $0x388] sm:$0xff]
  %v148 = vld [vmem:[%s0 + $0x390] sm:$0xff]
  %v149 = vld [vmem:[%s0 + $0x398] sm:$0xf]
  %v150 = vld [vmem:[%s0 + $0x39c] sm:$0xff]
  %v151 = vld [vmem:[%s0 + $0x3a4] sm:$0xff]
  %v152 = vld [vmem:[%s0 + $0x3ac] sm:$0xff]
  %v153 = vld [vmem:[%s0 + $0x3b4] sm:$0xf]
  %v154 = vld [vmem:[%s0 + $0x3b8] sm:$0xff]
  %v155 = vld [vmem:[%s0 + $0x3c0] sm:$0xff]
  %v156 = vld [vmem:[%s0 + $0x3c8] sm:$0xff]
  %v157 = vld [vmem:[%s0 + $0x3d0] sm:$0xf]
  %v158 = vld [vmem:[%s0 + $0x3d4] sm:$0xff]
  %v159 = vld [vmem:[%s0 + $0x3dc] sm:$0xff]
  %v160 = vld [vmem:[%s0 + $0x3e4] sm:$0xff]
  %v161 = vld [vmem:[%s0 + $0x3ec] sm:$0xf]
  %v162 = vld [vmem:[%s0 + $0x3f0] sm:$0xff]
  %v163 = vld [vmem:[%s0 + $0x3f8] sm:$0xff]
  %v164 = vld [vmem:[%s0 + $0x400] sm:$0xff]
  %v165 = vld [vmem:[%s0 + $0x408] sm:$0xf]
  %v166 = vld [vmem:[%s0 + $0x40c] sm:$0xff]
  %v167 = vld [vmem:[%s0 + $0x414] sm:$0xff]
  %v168 = vld [vmem:[%s0 + $0x41c] sm:$0xff]
  %v169 = vld [vmem:[%s0 + $0x424] sm:$0xf]
  %v170 = vld [vmem:[%s0 + $0x428] sm:$0xff]
  %v171 = vld [vmem:[%s0 + $0x430] sm:$0xff]
  %v172 = vld [vmem:[%s0 + $0x438] sm:$0xff]
  %v173 = vld [vmem:[%s0 + $0x440] sm:$0xf]
  %v174 = vld [vmem:[%s0 + $0x444] sm:$0xff]
  %v175 = vld [vmem:[%s0 + $0x44c] sm:$0xff]
  %v176 = vld [vmem:[%s0 + $0x454] sm:$0xff]
  %v177 = vld [vmem:[%s0 + $0x45c] sm:$0xf]
  %v178 = vld [vmem:[%s0 + $0x460] sm:$0xff]
  %v179 = vld [vmem:[%s0 + $0x468] sm:$0xff]
  %v180 = vld [vmem:[%s0 + $0x470] sm:$0xff]
  %v181 = vld [vmem:[%s0 + $0x478] sm:$0xf]
  %v182 = vld [vmem:[%s0 + $0x47c] sm:$0xff]
  %v183 = vld [vmem:[%s0 + $0x484] sm:$0xff]
  %v184 = vld [vmem:[%s0 + $0x48c] sm:$0xff]
  %v185 = vld [vmem:[%s0 + $0x494] sm:$0xf]
  %v186 = vld [vmem:[%s0 + $0x498] sm:$0xff]
  %v187 = vld [vmem:[%s0 + $0x4a0] sm:$0xff]
  %v188 = vld [vmem:[%s0 + $0x4a8] sm:$0xff]
  %v189 = vld [vmem:[%s0 + $0x4b0] sm:$0xf]
  %v190 = vld [vmem:[%s0 + $0x4b4] sm:$0xff]
  %v191 = vld [vmem:[%s0 + $0x4bc] sm:$0xff]
  %v192 = vld [vmem:[%s0 + $0x4c4] sm:$0xff]
  %v193 = vld [vmem:[%s0 + $0x4cc] sm:$0xf]
  %v194 = vld [vmem:[%s0 + $0x4d0] sm:$0xff]
  %v195 = vld [vmem:[%s0 + $0x4d8] sm:$0xff]
  %v196 = vld [vmem:[%s0 + $0x4e0] sm:$0xff]
  %v197 = vld [vmem:[%s0 + $0x4e8] sm:$0xf]
  %v198 = vld [vmem:[%s0 + $0x4ec] sm:$0xff]
  %v199 = vld [vmem:[%s0 + $0x4f4] sm:$0xff]
  %v200 = vld [vmem:[%s0 + $0x4fc] sm:$0xff]
  %v201 = vld [vmem:[%s0 + $0x504] sm:$0xf]
  %v202 = vld [vmem:[%s0 + $0x508] sm:$0xff]
  %v203 = vld [vmem:[%s0 + $0x510] sm:$0xff]
  %v204 = vld [vmem:[%s0 + $0x518] sm:$0xff]
  %v205 = vld [vmem:[%s0 + $0x520] sm:$0xf]
  %v206 = vld [vmem:[%s0 + $0x524] sm:$0xff]
  %v207 = vld [vmem:[%s0 + $0x52c] sm:$0xff]
  %v208 = vld [vmem:[%s0 + $0x534] sm:$0xff]
  %v209 = vld [vmem:[%s0 + $0x53c] sm:$0xf]
  %v210 = vld [vmem:[%s0 + $0x540] sm:$0xff]
  %v211 = vld [vmem:[%s0 + $0x548] sm:$0xff]
  %v212 = vld [vmem:[%s0 + $0x550] sm:$0xff]
  %v213 = vld [vmem:[%s0 + $0x558] sm:$0xf]
  %v214 = vld [vmem:[%s0 + $0x55c] sm:$0xff]
  %v215 = vld [vmem:[%s0 + $0x564] sm:$0xff]
  %v216 = vld [vmem:[%s0 + $0x56c] sm:$0xff]
  %v217 = vld [vmem:[%s0 + $0x574] sm:$0xf]
  %v218 = vld [vmem:[%s0 + $0x578] sm:$0xff]
  %v219 = vld [vmem:[%s0 + $0x580] sm:$0xff]
  %v220 = vld [vmem:[%s0 + $0x588] sm:$0xff]
  %v221 = vld [vmem:[%s0 + $0x590] sm:$0xf]
  %v222 = vld [vmem:[%s0 + $0x594] sm:$0xff]
  %v223 = vld [vmem:[%s0 + $0x59c] sm:$0xff]
  %v224 = vld [vmem:[%s0 + $0x5a4] sm:$0xff]
  %v225 = vld [vmem:[%s0 + $0x5ac] sm:$0xf]
  %v226 = vld [vmem:[%s0 + $0x5b0] sm:$0xff]
  %v227 = vld [vmem:[%s0 + $0x5b8] sm:$0xff]
  %v228 = vld [vmem:[%s0 + $0x5c0] sm:$0xff]
  %v229 = vld [vmem:[%s0 + $0x5c8] sm:$0xf]
  %v230 = vld [vmem:[%s0 + $0x5cc] sm:$0xff]
  %v231 = vld [vmem:[%s0 + $0x5d4] sm:$0xff]
  %v232 = vld [vmem:[%s0 + $0x5dc] sm:$0xff]
  %v233 = vld [vmem:[%s0 + $0x5e4] sm:$0xf]
  %v234 = vld [vmem:[%s0 + $0x5e8] sm:$0xff]
  %v235 = vld [vmem:[%s0 + $0x5f0] sm:$0xff]
  %v236 = vld [vmem:[%s0 + $0x5f8] sm:$0xff]
  %v237 = vld [vmem:[%s0 + $0x600] sm:$0xf]
  %v238 = vld [vmem:[%s0 + $0x604] sm:$0xff]
  %v239 = vld [vmem:[%s0 + $0x60c] sm:$0xff]
  %v240 = vld [vmem:[%s0 + $0x614] sm:$0xff]
  %v241 = vld [vmem:[%s0 + $0x61c] sm:$0xf]
  %v242 = vld [vmem:[%s0 + $0x620] sm:$0xff]
  %v243 = vld [vmem:[%s0 + $0x628] sm:$0xff]
  %v244 = vld [vmem:[%s0 + $0x630] sm:$0xff]
  %v245 = vld [vmem:[%s0 + $0x638] sm:$0xf]
  %v246 = vld [vmem:[%s0 + $0x63c] sm:$0xff]
  %v247 = vld [vmem:[%s0 + $0x644] sm:$0xff]
  %v248 = vld [vmem:[%s0 + $0x64c] sm:$0xff]
  %v249 = vld [vmem:[%s0 + $0x654] sm:$0xf]
  %v250 = vld [vmem:[%s0 + $0x658] sm:$0xff]
  %v251 = vld [vmem:[%s0 + $0x660] sm:$0xff]
  %v252 = vld [vmem:[%s0 + $0x668] sm:$0xff]
  %v253 = vld [vmem:[%s0 + $0x670] sm:$0xf]
  %v254 = vld [vmem:[%s0 + $0x674] sm:$0xff]
  %v255 = vld [vmem:[%s0 + $0x67c] sm:$0xff]
  %v256 = vld [vmem:[%s0 + $0x684] sm:$0xff]
  %v257 = vld [vmem:[%s0 + $0x68c] sm:$0xf]
  %v258 = vld [vmem:[%s0 + $0x690] sm:$0xff]
  %v259 = vld [vmem:[%s0 + $0x698] sm:$0xff]
  %v260 = vld [vmem:[%s0 + $0x6a0] sm:$0xff]
  %v261 = vld [vmem:[%s0 + $0x6a8] sm:$0xf]
  %v262 = vld [vmem:[%s0 + $0x6ac] sm:$0xff]
  %v263 = vld [vmem:[%s0 + $0x6b4] sm:$0xff]
  %v264 = vld [vmem:[%s0 + $0x6bc] sm:$0xff]
  %v265 = vld [vmem:[%s0 + $0x6c4] sm:$0xf]
  %v266 = vld [vmem:[%s0 + $0x6c8] sm:$0xff]
  %v267 = vld [vmem:[%s0 + $0x6d0] sm:$0xff]
  %v268 = vld [vmem:[%s0 + $0x6d8] sm:$0xff]
  %v269 = vld [vmem:[%s0 + $0x6e0] sm:$0xf]
  %v270 = vld [vmem:[%s0 + $0x6e4] sm:$0xff]
  %v271 = vld [vmem:[%s0 + $0x6ec] sm:$0xff]
  %v272 = vld [vmem:[%s0 + $0x6f4] sm:$0xff]
  %v273 = vld [vmem:[%s0 + $0x6fc] sm:$0xf]
  %v274 = vld [vmem:[%s1] sm:$0xf]
  %v275 = vld [vmem:[%s1 + $0x4] sm:$0xf]
  %v276 = vld [vmem:[%s1 + $0x8] sm:$0xf]
  %v277 = vld [vmem:[%s1 + $0xc] sm:$0xf]
  %v278 = vld [vmem:[%s1 + $0x10] sm:$0xf]
  %v279 = vld [vmem:[%s1 + $0x14] sm:$0xf]
  %v280 = vld [vmem:[%s1 + $0x18] sm:$0xf]
  %v281 = vld [vmem:[%s1 + $0x1c] sm:$0xf]
  %v282 = vld [vmem:[%s1 + $0x20] sm:$0xf]
  %v283 = vld [vmem:[%s1 + $0x24] sm:$0xf]
  %v284 = vld [vmem:[%s1 + $0x28] sm:$0xf]
  %v285 = vld [vmem:[%s1 + $0x2c] sm:$0xf]
  %v286 = vld [vmem:[%s1 + $0x30] sm:$0xf]
  %v287 = vld [vmem:[%s1 + $0x34] sm:$0xf]
  %v288 = vld [vmem:[%s1 + $0x38] sm:$0xf]
  %v289 = vld [vmem:[%s1 + $0x3c] sm:$0xf]
  %v290 = vld [vmem:[%s1 + $0x40] sm:$0xf]
  %v291 = vld [vmem:[%s1 + $0x44] sm:$0xf]
  %v292 = vld [vmem:[%s1 + $0x48] sm:$0xf]
  %v293 = vld [vmem:[%s1 + $0x4c] sm:$0xf]
  %v294 = vld [vmem:[%s1 + $0x50] sm:$0xf]
  %v295 = vld [vmem:[%s1 + $0x54] sm:$0xf]
  %v296 = vld [vmem:[%s1 + $0x58] sm:$0xf]
  %v297 = vld [vmem:[%s1 + $0x5c] sm:$0xf]
  %v298 = vld [vmem:[%s1 + $0x60] sm:$0xf]
  %v299 = vld [vmem:[%s1 + $0x64] sm:$0xf]
  %v300 = vld [vmem:[%s1 + $0x68] sm:$0xf]
  %v301 = vld [vmem:[%s1 + $0x6c] sm:$0xf]
  %v302 = vld [vmem:[%s1 + $0x70] sm:$0xf]
  %v303 = vld [vmem:[%s1 + $0x74] sm:$0xf]
  %v304 = vld [vmem:[%s1 + $0x78] sm:$0xf]
  %v305 = vld [vmem:[%s1 + $0x7c] sm:$0xf]
  %v306 = vld [vmem:[%s1 + $0x80] sm:$0xf]
  %v307 = vld [vmem:[%s1 + $0x84] sm:$0xf]
  %v308 = vld [vmem:[%s1 + $0x88] sm:$0xf]
  %v309 = vld [vmem:[%s1 + $0x8c] sm:$0xf]
  %v310 = vld [vmem:[%s1 + $0x90] sm:$0xf]
  %v311 = vld [vmem:[%s1 + $0x94] sm:$0xf]
  %v312 = vld [vmem:[%s1 + $0x98] sm:$0xf]
  %v313 = vld [vmem:[%s1 + $0x9c] sm:$0xf]
  %v314 = vld [vmem:[%s1 + $0xa0] sm:$0xf]
  %v315 = vld [vmem:[%s1 + $0xa4] sm:$0xf]
  %v316 = vld [vmem:[%s1 + $0xa8] sm:$0xf]
  %v317 = vld [vmem:[%s1 + $0xac] sm:$0xf]
  %v318 = vld [vmem:[%s1 + $0xb0] sm:$0xf]
  %v319 = vld [vmem:[%s1 + $0xb4] sm:$0xf]
  %v320 = vld [vmem:[%s1 + $0xb8] sm:$0xf]
  %v321 = vld [vmem:[%s1 + $0xbc] sm:$0xf]
  %v322 = vld [vmem:[%s1 + $0xc0] sm:$0xf]
  %v323 = vld [vmem:[%s1 + $0xc4] sm:$0xf]
  %v324 = vld [vmem:[%s1 + $0xc8] sm:$0xf]
  %v325 = vld [vmem:[%s1 + $0xcc] sm:$0xf]
  %v326 = vld [vmem:[%s1 + $0xd0] sm:$0xf]
  %v327 = vld [vmem:[%s1 + $0xd4] sm:$0xf]
  %v328 = vld [vmem:[%s1 + $0xd8] sm:$0xf]
  %v329 = vld [vmem:[%s1 + $0xdc] sm:$0xf]
  %v330 = vld [vmem:[%s1 + $0xe0] sm:$0xf]
  %v331 = vld [vmem:[%s1 + $0xe4] sm:$0xf]
  %v332 = vld [vmem:[%s1 + $0xe8] sm:$0xf]
  %v333 = vld [vmem:[%s1 + $0xec] sm:$0xf]
  %v334 = vld [vmem:[%s1 + $0xf0] sm:$0xf]
  %v335 = vld [vmem:[%s1 + $0xf4] sm:$0xf]
  %v336 = vld [vmem:[%s1 + $0xf8] sm:$0xf]
  %v337 = vld [vmem:[%s1 + $0xfc] sm:$0xf]
  %v338 = vld [vmem:[%s1 + $0x100] sm:$0xf]
  %v339 = vld [vmem:[%s1 + $0x104] sm:$0xf]
  %v340 = vld [vmem:[%s1 + $0x108] sm:$0xf]
  %v341 = vld [vmem:[%s1 + $0x10c] sm:$0xf]
  %v342 = vld [vmem:[%s1 + $0x110] sm:$0xf]
  %v343 = vld [vmem:[%s1 + $0x114] sm:$0xf]
  %v344 = vld [vmem:[%s1 + $0x118] sm:$0xf]
  %v345 = vld [vmem:[%s1 + $0x11c] sm:$0xf]
  %v346 = vld [vmem:[%s1 + $0x120] sm:$0xf]
  %v347 = vld [vmem:[%s1 + $0x124] sm:$0xf]
  %v348 = vld [vmem:[%s1 + $0x128] sm:$0xf]
  %v349 = vld [vmem:[%s1 + $0x12c] sm:$0xf]
  %v350 = vld [vmem:[%s1 + $0x130] sm:$0xf]
  %v351 = vld [vmem:[%s1 + $0x134] sm:$0xf]
  %v352 = vld [vmem:[%s1 + $0x138] sm:$0xf]
  %v353 = vld [vmem:[%s1 + $0x13c] sm:$0xf]
  %v354 = vld [vmem:[%s1 + $0x140] sm:$0xf]
  %v355 = vld [vmem:[%s1 + $0x144] sm:$0xf]
  %v356 = vld [vmem:[%s1 + $0x148] sm:$0xf]
  %v357 = vld [vmem:[%s1 + $0x14c] sm:$0xf]
  %v358 = vld [vmem:[%s1 + $0x150] sm:$0xf]
  %v359 = vld [vmem:[%s1 + $0x154] sm:$0xf]
  %v360 = vld [vmem:[%s1 + $0x158] sm:$0xf]
  %v361 = vld [vmem:[%s1 + $0x15c] sm:$0xf]
  %v362 = vld [vmem:[%s1 + $0x160] sm:$0xf]
  %v363 = vld [vmem:[%s1 + $0x164] sm:$0xf]
  %v364 = vld [vmem:[%s1 + $0x168] sm:$0xf]
  %v365 = vld [vmem:[%s1 + $0x16c] sm:$0xf]
  %v366 = vld [vmem:[%s1 + $0x170] sm:$0xf]
  %v367 = vld [vmem:[%s1 + $0x174] sm:$0xf]
  %v368 = vld [vmem:[%s1 + $0x178] sm:$0xf]
  %v369 = vld [vmem:[%s1 + $0x17c] sm:$0xf]
  %v370 = vld [vmem:[%s1 + $0x180] sm:$0xf]
  %v371 = vld [vmem:[%s1 + $0x184] sm:$0xf]
  %v372 = vld [vmem:[%s1 + $0x188] sm:$0xf]
  %v373 = vld [vmem:[%s1 + $0x18c] sm:$0xf]
  %v374 = vld [vmem:[%s1 + $0x190] sm:$0xf]
  %v375 = vld [vmem:[%s1 + $0x194] sm:$0xf]
  %v376 = vld [vmem:[%s1 + $0x198] sm:$0xf]
  %v377 = vld [vmem:[%s1 + $0x19c] sm:$0xf]
  %v378 = vld [vmem:[%s1 + $0x1a0] sm:$0xf]
  %v379 = vld [vmem:[%s1 + $0x1a4] sm:$0xf]
  %v380 = vld [vmem:[%s1 + $0x1a8] sm:$0xf]
  %v381 = vld [vmem:[%s1 + $0x1ac] sm:$0xf]
  %v638 = vunpack.c.l.b16 %v18
  %v639 = vunpack.c.h.b16 %v18
  %v640 = vunpack.c.l.b16 %v19
  %v641 = vunpack.c.h.b16 %v19
  %v642 = vunpack.c.l.b16 %v20
  %v643 = vunpack.c.h.b16 %v20
  %v644 = vunpack.c.l.b16 %v21
  %v645 = vunpack.c.l.b16 %v22
  %v646 = vunpack.c.h.b16 %v22
  %v647 = vunpack.c.l.b16 %v23
  %v648 = vunpack.c.h.b16 %v23
  %v649 = vunpack.c.l.b16 %v24
  %v650 = vunpack.c.h.b16 %v24
  %v651 = vunpack.c.l.b16 %v25
  %v652 = vunpack.c.l.b16 %v26
  %v653 = vunpack.c.h.b16 %v26
  %v654 = vunpack.c.l.b16 %v27
  %v655 = vunpack.c.h.b16 %v27
  %v656 = vunpack.c.l.b16 %v28
  %v657 = vunpack.c.h.b16 %v28
  %v658 = vunpack.c.l.b16 %v29
  %v659 = vunpack.c.l.b16 %v30
  %v660 = vunpack.c.h.b16 %v30
  %v661 = vunpack.c.l.b16 %v31
  %v662 = vunpack.c.h.b16 %v31
  %v663 = vunpack.c.l.b16 %v32
  %v664 = vunpack.c.h.b16 %v32
  %v665 = vunpack.c.l.b16 %v33
  %v666 = vunpack.c.l.b16 %v34
  %v667 = vunpack.c.h.b16 %v34
  %v668 = vunpack.c.l.b16 %v35
  %v669 = vunpack.c.h.b16 %v35
  %v670 = vunpack.c.l.b16 %v36
  %v671 = vunpack.c.h.b16 %v36
  %v672 = vunpack.c.l.b16 %v37
  %v673 = vunpack.c.l.b16 %v38
  %v674 = vunpack.c.h.b16 %v38
  %v675 = vunpack.c.l.b16 %v39
  %v676 = vunpack.c.h.b16 %v39
  %v677 = vunpack.c.l.b16 %v40
  %v678 = vunpack.c.h.b16 %v40
  %v679 = vunpack.c.l.b16 %v41
  %v680 = vunpack.c.l.b16 %v42
  %v681 = vunpack.c.h.b16 %v42
  %v682 = vunpack.c.l.b16 %v43
  %v683 = vunpack.c.h.b16 %v43
  %v684 = vunpack.c.l.b16 %v44
  %v685 = vunpack.c.h.b16 %v44
  %v686 = vunpack.c.l.b16 %v45
  %v687 = vunpack.c.l.b16 %v46
  %v688 = vunpack.c.h.b16 %v46
  %v689 = vunpack.c.l.b16 %v47
  %v690 = vunpack.c.h.b16 %v47
  %v691 = vunpack.c.l.b16 %v48
  %v692 = vunpack.c.h.b16 %v48
  %v693 = vunpack.c.l.b16 %v49
  %v694 = vunpack.c.l.b16 %v50
  %v695 = vunpack.c.h.b16 %v50
  %v696 = vunpack.c.l.b16 %v51
  %v697 = vunpack.c.h.b16 %v51
  %v698 = vunpack.c.l.b16 %v52
  %v699 = vunpack.c.h.b16 %v52
  %v700 = vunpack.c.l.b16 %v53
  %v701 = vunpack.c.l.b16 %v54
  %v702 = vunpack.c.h.b16 %v54
  %v703 = vunpack.c.l.b16 %v55
  %v704 = vunpack.c.h.b16 %v55
  %v705 = vunpack.c.l.b16 %v56
  %v706 = vunpack.c.h.b16 %v56
  %v707 = vunpack.c.l.b16 %v57
  %v708 = vunpack.c.l.b16 %v58
  %v709 = vunpack.c.h.b16 %v58
  %v710 = vunpack.c.l.b16 %v59
  %v711 = vunpack.c.h.b16 %v59
  %v712 = vunpack.c.l.b16 %v60
  %v713 = vunpack.c.h.b16 %v60
  %v714 = vunpack.c.l.b16 %v61
  %v715 = vunpack.c.l.b16 %v62
  %v716 = vunpack.c.h.b16 %v62
  %v717 = vunpack.c.l.b16 %v63
  %v718 = vunpack.c.h.b16 %v63
  %v719 = vunpack.c.l.b16 %v64
  %v720 = vunpack.c.h.b16 %v64
  %v721 = vunpack.c.l.b16 %v65
  %v722 = vunpack.c.l.b16 %v66
  %v723 = vunpack.c.h.b16 %v66
  %v724 = vunpack.c.l.b16 %v67
  %v725 = vunpack.c.h.b16 %v67
  %v726 = vunpack.c.l.b16 %v68
  %v727 = vunpack.c.h.b16 %v68
  %v728 = vunpack.c.l.b16 %v69
  %v729 = vunpack.c.l.b16 %v70
  %v730 = vunpack.c.h.b16 %v70
  %v731 = vunpack.c.l.b16 %v71
  %v732 = vunpack.c.h.b16 %v71
  %v733 = vunpack.c.l.b16 %v72
  %v734 = vunpack.c.h.b16 %v72
  %v735 = vunpack.c.l.b16 %v73
  %v736 = vunpack.c.l.b16 %v74
  %v737 = vunpack.c.h.b16 %v74
  %v738 = vunpack.c.l.b16 %v75
  %v739 = vunpack.c.h.b16 %v75
  %v740 = vunpack.c.l.b16 %v76
  %v741 = vunpack.c.h.b16 %v76
  %v742 = vunpack.c.l.b16 %v77
  %v743 = vunpack.c.l.b16 %v78
  %v744 = vunpack.c.h.b16 %v78
  %v745 = vunpack.c.l.b16 %v79
  %v746 = vunpack.c.h.b16 %v79
  %v747 = vunpack.c.l.b16 %v80
  %v748 = vunpack.c.h.b16 %v80
  %v749 = vunpack.c.l.b16 %v81
  %v750 = vunpack.c.l.b16 %v82
  %v751 = vunpack.c.h.b16 %v82
  %v752 = vunpack.c.l.b16 %v83
  %v753 = vunpack.c.h.b16 %v83
  %v754 = vunpack.c.l.b16 %v84
  %v755 = vunpack.c.h.b16 %v84
  %v756 = vunpack.c.l.b16 %v85
  %v757 = vunpack.c.l.b16 %v86
  %v758 = vunpack.c.h.b16 %v86
  %v759 = vunpack.c.l.b16 %v87
  %v760 = vunpack.c.h.b16 %v87
  %v761 = vunpack.c.l.b16 %v88
  %v762 = vunpack.c.h.b16 %v88
  %v763 = vunpack.c.l.b16 %v89
  %v764 = vunpack.c.l.b16 %v90
  %v765 = vunpack.c.h.b16 %v90
  %v766 = vunpack.c.l.b16 %v91
  %v767 = vunpack.c.h.b16 %v91
  %v768 = vunpack.c.l.b16 %v92
  %v769 = vunpack.c.h.b16 %v92
  %v770 = vunpack.c.l.b16 %v93
  %v771 = vunpack.c.l.b16 %v94
  %v772 = vunpack.c.h.b16 %v94
  %v773 = vunpack.c.l.b16 %v95
  %v774 = vunpack.c.h.b16 %v95
  %v775 = vunpack.c.l.b16 %v96
  %v776 = vunpack.c.h.b16 %v96
  %v777 = vunpack.c.l.b16 %v97
  %v778 = vunpack.c.l.b16 %v98
  %v779 = vunpack.c.h.b16 %v98
  %v780 = vunpack.c.l.b16 %v99
  %v781 = vunpack.c.h.b16 %v99
  %v782 = vunpack.c.l.b16 %v100
  %v783 = vunpack.c.h.b16 %v100
  %v784 = vunpack.c.l.b16 %v101
  %v785 = vunpack.c.l.b16 %v102
  %v786 = vunpack.c.h.b16 %v102
  %v787 = vunpack.c.l.b16 %v103
  %v788 = vunpack.c.h.b16 %v103
  %v789 = vunpack.c.l.b16 %v104
  %v790 = vunpack.c.h.b16 %v104
  %v791 = vunpack.c.l.b16 %v105
  %v792 = vunpack.c.l.b16 %v106
  %v793 = vunpack.c.h.b16 %v106
  %v794 = vunpack.c.l.b16 %v107
  %v795 = vunpack.c.h.b16 %v107
  %v796 = vunpack.c.l.b16 %v108
  %v797 = vunpack.c.h.b16 %v108
  %v798 = vunpack.c.l.b16 %v109
  %v799 = vunpack.c.l.b16 %v110
  %v800 = vunpack.c.h.b16 %v110
  %v801 = vunpack.c.l.b16 %v111
  %v802 = vunpack.c.h.b16 %v111
  %v803 = vunpack.c.l.b16 %v112
  %v804 = vunpack.c.h.b16 %v112
  %v805 = vunpack.c.l.b16 %v113
  %v806 = vunpack.c.l.b16 %v114
  %v807 = vunpack.c.h.b16 %v114
  %v808 = vunpack.c.l.b16 %v115
  %v809 = vunpack.c.h.b16 %v115
  %v810 = vunpack.c.l.b16 %v116
  %v811 = vunpack.c.h.b16 %v116
  %v812 = vunpack.c.l.b16 %v117
  %v813 = vunpack.c.l.b16 %v118
  %v814 = vunpack.c.h.b16 %v118
  %v815 = vunpack.c.l.b16 %v119
  %v816 = vunpack.c.h.b16 %v119
  %v817 = vunpack.c.l.b16 %v120
  %v818 = vunpack.c.h.b16 %v120
  %v819 = vunpack.c.l.b16 %v121
  %v820 = vunpack.c.l.b16 %v122
  %v821 = vunpack.c.h.b16 %v122
  %v822 = vunpack.c.l.b16 %v123
  %v823 = vunpack.c.h.b16 %v123
  %v824 = vunpack.c.l.b16 %v124
  %v825 = vunpack.c.h.b16 %v124
  %v826 = vunpack.c.l.b16 %v125
  %v827 = vunpack.c.l.b16 %v126
  %v828 = vunpack.c.h.b16 %v126
  %v829 = vunpack.c.l.b16 %v127
  %v830 = vunpack.c.h.b16 %v127
  %v831 = vunpack.c.l.b16 %v128
  %v832 = vunpack.c.h.b16 %v128
  %v833 = vunpack.c.l.b16 %v129
  %v834 = vunpack.c.l.b16 %v130
  %v835 = vunpack.c.h.b16 %v130
  %v836 = vunpack.c.l.b16 %v131
  %v837 = vunpack.c.h.b16 %v131
  %v838 = vunpack.c.l.b16 %v132
  %v839 = vunpack.c.h.b16 %v132
  %v840 = vunpack.c.l.b16 %v133
  %v841 = vunpack.c.l.b16 %v134
  %v842 = vunpack.c.h.b16 %v134
  %v843 = vunpack.c.l.b16 %v135
  %v844 = vunpack.c.h.b16 %v135
  %v845 = vunpack.c.l.b16 %v136
  %v846 = vunpack.c.h.b16 %v136
  %v847 = vunpack.c.l.b16 %v137
  %v848 = vunpack.c.l.b16 %v138
  %v849 = vunpack.c.h.b16 %v138
  %v850 = vunpack.c.l.b16 %v139
  %v851 = vunpack.c.h.b16 %v139
  %v852 = vunpack.c.l.b16 %v140
  %v853 = vunpack.c.h.b16 %v140
  %v854 = vunpack.c.l.b16 %v141
  %v855 = vunpack.c.l.b16 %v142
  %v856 = vunpack.c.h.b16 %v142
  %v857 = vunpack.c.l.b16 %v143
  %v858 = vunpack.c.h.b16 %v143
  %v859 = vunpack.c.l.b16 %v144
  %v860 = vunpack.c.h.b16 %v144
  %v861 = vunpack.c.l.b16 %v145
  %v862 = vunpack.c.l.b16 %v146
  %v863 = vunpack.c.h.b16 %v146
  %v864 = vunpack.c.l.b16 %v147
  %v865 = vunpack.c.h.b16 %v147
  %v866 = vunpack.c.l.b16 %v148
  %v867 = vunpack.c.h.b16 %v148
  %v868 = vunpack.c.l.b16 %v149
  %v869 = vunpack.c.l.b16 %v150
  %v870 = vunpack.c.h.b16 %v150
  %v871 = vunpack.c.l.b16 %v151
  %v872 = vunpack.c.h.b16 %v151
  %v873 = vunpack.c.l.b16 %v152
  %v874 = vunpack.c.h.b16 %v152
  %v875 = vunpack.c.l.b16 %v153
  %v876 = vunpack.c.l.b16 %v154
  %v877 = vunpack.c.h.b16 %v154
  %v878 = vunpack.c.l.b16 %v155
  %v879 = vunpack.c.h.b16 %v155
  %v880 = vunpack.c.l.b16 %v156
  %v881 = vunpack.c.h.b16 %v156
  %v882 = vunpack.c.l.b16 %v157
  %v883 = vunpack.c.l.b16 %v158
  %v884 = vunpack.c.h.b16 %v158
  %v885 = vunpack.c.l.b16 %v159
  %v886 = vunpack.c.h.b16 %v159
  %v887 = vunpack.c.l.b16 %v160
  %v888 = vunpack.c.h.b16 %v160
  %v889 = vunpack.c.l.b16 %v161
  %v890 = vunpack.c.l.b16 %v162
  %v891 = vunpack.c.h.b16 %v162
  %v892 = vunpack.c.l.b16 %v163
  %v893 = vunpack.c.h.b16 %v163
  %v894 = vunpack.c.l.b16 %v164
  %v895 = vunpack.c.h.b16 %v164
  %v896 = vunpack.c.l.b16 %v165
  %v897 = vunpack.c.l.b16 %v166
  %v898 = vunpack.c.h.b16 %v166
  %v899 = vunpack.c.l.b16 %v167
  %v900 = vunpack.c.h.b16 %v167
  %v901 = vunpack.c.l.b16 %v168
  %v902 = vunpack.c.h.b16 %v168
  %v903 = vunpack.c.l.b16 %v169
  %v904 = vunpack.c.l.b16 %v170
  %v905 = vunpack.c.h.b16 %v170
  %v906 = vunpack.c.l.b16 %v171
  %v907 = vunpack.c.h.b16 %v171
  %v908 = vunpack.c.l.b16 %v172
  %v909 = vunpack.c.h.b16 %v172
  %v910 = vunpack.c.l.b16 %v173
  %v911 = vunpack.c.l.b16 %v174
  %v912 = vunpack.c.h.b16 %v174
  %v913 = vunpack.c.l.b16 %v175
  %v914 = vunpack.c.h.b16 %v175
  %v915 = vunpack.c.l.b16 %v176
  %v916 = vunpack.c.h.b16 %v176
  %v917 = vunpack.c.l.b16 %v177
  %v918 = vunpack.c.l.b16 %v178
  %v919 = vunpack.c.h.b16 %v178
  %v920 = vunpack.c.l.b16 %v179
  %v921 = vunpack.c.h.b16 %v179
  %v922 = vunpack.c.l.b16 %v180
  %v923 = vunpack.c.h.b16 %v180
  %v924 = vunpack.c.l.b16 %v181
  %v925 = vunpack.c.l.b16 %v182
  %v926 = vunpack.c.h.b16 %v182
  %v927 = vunpack.c.l.b16 %v183
  %v928 = vunpack.c.h.b16 %v183
  %v929 = vunpack.c.l.b16 %v184
  %v930 = vunpack.c.h.b16 %v184
  %v931 = vunpack.c.l.b16 %v185
  %v932 = vunpack.c.l.b16 %v186
  %v933 = vunpack.c.h.b16 %v186
  %v934 = vunpack.c.l.b16 %v187
  %v935 = vunpack.c.h.b16 %v187
  %v936 = vunpack.c.l.b16 %v188
  %v937 = vunpack.c.h.b16 %v188
  %v938 = vunpack.c.l.b16 %v189
  %v939 = vunpack.c.l.b16 %v190
  %v940 = vunpack.c.h.b16 %v190
  %v941 = vunpack.c.l.b16 %v191
  %v942 = vunpack.c.h.b16 %v191
  %v943 = vunpack.c.l.b16 %v192
  %v944 = vunpack.c.h.b16 %v192
  %v945 = vunpack.c.l.b16 %v193
  %v946 = vunpack.c.l.b16 %v194
  %v947 = vunpack.c.h.b16 %v194
  %v948 = vunpack.c.l.b16 %v195
  %v949 = vunpack.c.h.b16 %v195
  %v950 = vunpack.c.l.b16 %v196
  %v951 = vunpack.c.h.b16 %v196
  %v952 = vunpack.c.l.b16 %v197
  %v953 = vunpack.c.l.b16 %v198
  %v954 = vunpack.c.h.b16 %v198
  %v955 = vunpack.c.l.b16 %v199
  %v956 = vunpack.c.h.b16 %v199
  %v957 = vunpack.c.l.b16 %v200
  %v958 = vunpack.c.h.b16 %v200
  %v959 = vunpack.c.l.b16 %v201
  %v960 = vunpack.c.l.b16 %v202
  %v961 = vunpack.c.h.b16 %v202
  %v962 = vunpack.c.l.b16 %v203
  %v963 = vunpack.c.h.b16 %v203
  %v964 = vunpack.c.l.b16 %v204
  %v965 = vunpack.c.h.b16 %v204
  %v966 = vunpack.c.l.b16 %v205
  %v967 = vunpack.c.l.b16 %v206
  %v968 = vunpack.c.h.b16 %v206
  %v969 = vunpack.c.l.b16 %v207
  %v970 = vunpack.c.h.b16 %v207
  %v971 = vunpack.c.l.b16 %v208
  %v972 = vunpack.c.h.b16 %v208
  %v973 = vunpack.c.l.b16 %v209
  %v974 = vunpack.c.l.b16 %v210
  %v975 = vunpack.c.h.b16 %v210
  %v976 = vunpack.c.l.b16 %v211
  %v977 = vunpack.c.h.b16 %v211
  %v978 = vunpack.c.l.b16 %v212
  %v979 = vunpack.c.h.b16 %v212
  %v980 = vunpack.c.l.b16 %v213
  %v981 = vunpack.c.l.b16 %v214
  %v982 = vunpack.c.h.b16 %v214
  %v983 = vunpack.c.l.b16 %v215
  %v984 = vunpack.c.h.b16 %v215
  %v985 = vunpack.c.l.b16 %v216
  %v986 = vunpack.c.h.b16 %v216
  %v987 = vunpack.c.l.b16 %v217
  %v988 = vunpack.c.l.b16 %v218
  %v989 = vunpack.c.h.b16 %v218
  %v990 = vunpack.c.l.b16 %v219
  %v991 = vunpack.c.h.b16 %v219
  %v992 = vunpack.c.l.b16 %v220
  %v993 = vunpack.c.h.b16 %v220
  %v994 = vunpack.c.l.b16 %v221
  %v995 = vunpack.c.l.b16 %v222
  %v996 = vunpack.c.h.b16 %v222
  %v997 = vunpack.c.l.b16 %v223
  %v998 = vunpack.c.h.b16 %v223
  %v999 = vunpack.c.l.b16 %v224
  %v1000 = vunpack.c.h.b16 %v224
  %v1001 = vunpack.c.l.b16 %v225
  %v1002 = vunpack.c.l.b16 %v226
  %v1003 = vunpack.c.h.b16 %v226
  %v1004 = vunpack.c.l.b16 %v227
  %v1005 = vunpack.c.h.b16 %v227
  %v1006 = vunpack.c.l.b16 %v228
  %v1007 = vunpack.c.h.b16 %v228
  %v1008 = vunpack.c.l.b16 %v229
  %v1009 = vunpack.c.l.b16 %v230
  %v1010 = vunpack.c.h.b16 %v230
  %v1011 = vunpack.c.l.b16 %v231
  %v1012 = vunpack.c.h.b16 %v231
  %v1013 = vunpack.c.l.b16 %v232
  %v1014 = vunpack.c.h.b16 %v232
  %v1015 = vunpack.c.l.b16 %v233
  %v1016 = vunpack.c.l.b16 %v234
  %v1017 = vunpack.c.h.b16 %v234
  %v1018 = vunpack.c.l.b16 %v235
  %v1019 = vunpack.c.h.b16 %v235
  %v1020 = vunpack.c.l.b16 %v236
  %v1021 = vunpack.c.h.b16 %v236
  %v1022 = vunpack.c.l.b16 %v237
  %v1023 = vunpack.c.l.b16 %v238
  %v1024 = vunpack.c.h.b16 %v238
  %v1025 = vunpack.c.l.b16 %v239
  %v1026 = vunpack.c.h.b16 %v239
  %v1027 = vunpack.c.l.b16 %v240
  %v1028 = vunpack.c.h.b16 %v240
  %v1029 = vunpack.c.l.b16 %v241
  %v1030 = vunpack.c.l.b16 %v242
  %v1031 = vunpack.c.h.b16 %v242
  %v1032 = vunpack.c.l.b16 %v243
  %v1033 = vunpack.c.h.b16 %v243
  %v1034 = vunpack.c.l.b16 %v244
  %v1035 = vunpack.c.h.b16 %v244
  %v1036 = vunpack.c.l.b16 %v245
  %v1037 = vunpack.c.l.b16 %v246
  %v1038 = vunpack.c.h.b16 %v246
  %v1039 = vunpack.c.l.b16 %v247
  %v1040 = vunpack.c.h.b16 %v247
  %v1041 = vunpack.c.l.b16 %v248
  %v1042 = vunpack.c.h.b16 %v248
  %v1043 = vunpack.c.l.b16 %v249
  %v1044 = vunpack.c.l.b16 %v250
  %v1045 = vunpack.c.h.b16 %v250
  %v1046 = vunpack.c.l.b16 %v251
  %v1047 = vunpack.c.h.b16 %v251
  %v1048 = vunpack.c.l.b16 %v252
  %v1049 = vunpack.c.h.b16 %v252
  %v1050 = vunpack.c.l.b16 %v253
  %v1051 = vunpack.c.l.b16 %v254
  %v1052 = vunpack.c.h.b16 %v254
  %v1053 = vunpack.c.l.b16 %v255
  %v1054 = vunpack.c.h.b16 %v255
  %v1055 = vunpack.c.l.b16 %v256
  %v1056 = vunpack.c.h.b16 %v256
  %v1057 = vunpack.c.l.b16 %v257
  %v1058 = vunpack.c.l.b16 %v258
  %v1059 = vunpack.c.h.b16 %v258
  %v1060 = vunpack.c.l.b16 %v259
  %v1061 = vunpack.c.h.b16 %v259
  %v1062 = vunpack.c.l.b16 %v260
  %v1063 = vunpack.c.h.b16 %v260
  %v1064 = vunpack.c.l.b16 %v261
  %v1065 = vunpack.c.l.b16 %v262
  %v1066 = vunpack.c.h.b16 %v262
  %v1067 = vunpack.c.l.b16 %v263
  %v1068 = vunpack.c.h.b16 %v263
  %v1069 = vunpack.c.l.b16 %v264
  %v1070 = vunpack.c.h.b16 %v264
  %v1071 = vunpack.c.l.b16 %v265
  %v1072 = vunpack.c.l.b16 %v266
  %v1073 = vunpack.c.h.b16 %v266
  %v1074 = vunpack.c.l.b16 %v267
  %v1075 = vunpack.c.h.b16 %v267
  %v1076 = vunpack.c.l.b16 %v268
  %v1077 = vunpack.c.h.b16 %v268
  %v1078 = vunpack.c.l.b16 %v269
  %v1079 = vunpack.c.l.b16 %v270
  %v1080 = vunpack.c.h.b16 %v270
  %v1081 = vunpack.c.l.b16 %v271
  %v1082 = vunpack.c.h.b16 %v271
  %v1083 = vunpack.c.l.b16 %v272
  %v1084 = vunpack.c.h.b16 %v272
  %v1085 = vunpack.c.l.b16 %v273
  %v1086 = vpack.c.b16 %v645, %v638
  %v1087 = vpack.c.b16 %v646, %v639
  %v1088 = vpack.c.b16 %v647, %v640
  %v1089 = vpack.c.b16 %v648, %v641
  %v1090 = vpack.c.b16 %v649, %v642
  %v1091 = vpack.c.b16 %v650, %v643
  %v1092 = vpack.c.b16 %v651, %v644
  %v1093 = vpack.c.b16 %v659, %v652
  %v1094 = vpack.c.b16 %v660, %v653
  %v1095 = vpack.c.b16 %v661, %v654
  %v1096 = vpack.c.b16 %v662, %v655
  %v1097 = vpack.c.b16 %v663, %v656
  %v1098 = vpack.c.b16 %v664, %v657
  %v1099 = vpack.c.b16 %v665, %v658
  %v1100 = vpack.c.b16 %v673, %v666
  %v1101 = vpack.c.b16 %v674, %v667
  %v1102 = vpack.c.b16 %v675, %v668
  %v1103 = vpack.c.b16 %v676, %v669
  %v1104 = vpack.c.b16 %v677, %v670
  %v1105 = vpack.c.b16 %v678, %v671
  %v1106 = vpack.c.b16 %v679, %v672
  %v1107 = vpack.c.b16 %v687, %v680
  %v1108 = vpack.c.b16 %v688, %v681
  %v1109 = vpack.c.b16 %v689, %v682
  %v1110 = vpack.c.b16 %v690, %v683
  %v1111 = vpack.c.b16 %v691, %v684
  %v1112 = vpack.c.b16 %v692, %v685
  %v1113 = vpack.c.b16 %v693, %v686
  %v1114 = vpack.c.b16 %v701, %v694
  %v1115 = vpack.c.b16 %v702, %v695
  %v1116 = vpack.c.b16 %v703, %v696
  %v1117 = vpack.c.b16 %v704, %v697
  %v1118 = vpack.c.b16 %v705, %v698
  %v1119 = vpack.c.b16 %v706, %v699
  %v1120 = vpack.c.b16 %v707, %v700
  %v1121 = vpack.c.b16 %v715, %v708
  %v1122 = vpack.c.b16 %v716, %v709
  %v1123 = vpack.c.b16 %v717, %v710
  %v1124 = vpack.c.b16 %v718, %v711
  %v1125 = vpack.c.b16 %v719, %v712
  %v1126 = vpack.c.b16 %v720, %v713
  %v1127 = vpack.c.b16 %v721, %v714
  %v1128 = vpack.c.b16 %v729, %v722
  %v1129 = vpack.c.b16 %v730, %v723
  %v1130 = vpack.c.b16 %v731, %v724
  %v1131 = vpack.c.b16 %v732, %v725
  %v1132 = vpack.c.b16 %v733, %v726
  %v1133 = vpack.c.b16 %v734, %v727
  %v1134 = vpack.c.b16 %v735, %v728
  %v1135 = vpack.c.b16 %v743, %v736
  %v1136 = vpack.c.b16 %v744, %v737
  %v1137 = vpack.c.b16 %v745, %v738
  %v1138 = vpack.c.b16 %v746, %v739
  %v1139 = vpack.c.b16 %v747, %v740
  %v1140 = vpack.c.b16 %v748, %v741
  %v1141 = vpack.c.b16 %v749, %v742
  %v1142 = vpack.c.b16 %v757, %v750
  %v1143 = vpack.c.b16 %v758, %v751
  %v1144 = vpack.c.b16 %v759, %v752
  %v1145 = vpack.c.b16 %v760, %v753
  %v1146 = vpack.c.b16 %v761, %v754
  %v1147 = vpack.c.b16 %v762, %v755
  %v1148 = vpack.c.b16 %v763, %v756
  %v1149 = vpack.c.b16 %v771, %v764
  %v1150 = vpack.c.b16 %v772, %v765
  %v1151 = vpack.c.b16 %v773, %v766
  %v1152 = vpack.c.b16 %v774, %v767
  %v1153 = vpack.c.b16 %v775, %v768
  %v1154 = vpack.c.b16 %v776, %v769
  %v1155 = vpack.c.b16 %v777, %v770
  %v1156 = vpack.c.b16 %v785, %v778
  %v1157 = vpack.c.b16 %v786, %v779
  %v1158 = vpack.c.b16 %v787, %v780
  %v1159 = vpack.c.b16 %v788, %v781
  %v1160 = vpack.c.b16 %v789, %v782
  %v1161 = vpack.c.b16 %v790, %v783
  %v1162 = vpack.c.b16 %v791, %v784
  %v1163 = vpack.c.b16 %v799, %v792
  %v1164 = vpack.c.b16 %v800, %v793
  %v1165 = vpack.c.b16 %v801, %v794
  %v1166 = vpack.c.b16 %v802, %v795
  %v1167 = vpack.c.b16 %v803, %v796
  %v1168 = vpack.c.b16 %v804, %v797
  %v1169 = vpack.c.b16 %v805, %v798
  %v1170 = vpack.c.b16 %v813, %v806
  %v1171 = vpack.c.b16 %v814, %v807
  %v1172 = vpack.c.b16 %v815, %v808
  %v1173 = vpack.c.b16 %v816, %v809
  %v1174 = vpack.c.b16 %v817, %v810
  %v1175 = vpack.c.b16 %v818, %v811
  %v1176 = vpack.c.b16 %v819, %v812
  %v1177 = vpack.c.b16 %v827, %v820
  %v1178 = vpack.c.b16 %v828, %v821
  %v1179 = vpack.c.b16 %v829, %v822
  %v1180 = vpack.c.b16 %v830, %v823
  %v1181 = vpack.c.b16 %v831, %v824
  %v1182 = vpack.c.b16 %v832, %v825
  %v1183 = vpack.c.b16 %v833, %v826
  %v1184 = vpack.c.b16 %v841, %v834
  %v1185 = vpack.c.b16 %v842, %v835
  %v1186 = vpack.c.b16 %v843, %v836
  %v1187 = vpack.c.b16 %v844, %v837
  %v1188 = vpack.c.b16 %v845, %v838
  %v1189 = vpack.c.b16 %v846, %v839
  %v1190 = vpack.c.b16 %v847, %v840
  %v1191 = vpack.c.b16 %v855, %v848
  %v1192 = vpack.c.b16 %v856, %v849
  %v1193 = vpack.c.b16 %v857, %v850
  %v1194 = vpack.c.b16 %v858, %v851
  %v1195 = vpack.c.b16 %v859, %v852
  %v1196 = vpack.c.b16 %v860, %v853
  %v1197 = vpack.c.b16 %v861, %v854
  %v1198 = vpack.c.b16 %v869, %v862
  %v1199 = vpack.c.b16 %v870, %v863
  %v1200 = vpack.c.b16 %v871, %v864
  %v1201 = vpack.c.b16 %v872, %v865
  %v1202 = vpack.c.b16 %v873, %v866
  %v1203 = vpack.c.b16 %v874, %v867
  %v1204 = vpack.c.b16 %v875, %v868
  %v1205 = vpack.c.b16 %v883, %v876
  %v1206 = vpack.c.b16 %v884, %v877
  %v1207 = vpack.c.b16 %v885, %v878
  %v1208 = vpack.c.b16 %v886, %v879
  %v1209 = vpack.c.b16 %v887, %v880
  %v1210 = vpack.c.b16 %v888, %v881
  %v1211 = vpack.c.b16 %v889, %v882
  %v1212 = vpack.c.b16 %v897, %v890
  %v1213 = vpack.c.b16 %v898, %v891
  %v1214 = vpack.c.b16 %v899, %v892
  %v1215 = vpack.c.b16 %v900, %v893
  %v1216 = vpack.c.b16 %v901, %v894
  %v1217 = vpack.c.b16 %v902, %v895
  %v1218 = vpack.c.b16 %v903, %v896
  %v1219 = vpack.c.b16 %v911, %v904
  %v1220 = vpack.c.b16 %v912, %v905
  %v1221 = vpack.c.b16 %v913, %v906
  %v1222 = vpack.c.b16 %v914, %v907
  %v1223 = vpack.c.b16 %v915, %v908
  %v1224 = vpack.c.b16 %v916, %v909
  %v1225 = vpack.c.b16 %v917, %v910
  %v1226 = vpack.c.b16 %v925, %v918
  %v1227 = vpack.c.b16 %v926, %v919
  %v1228 = vpack.c.b16 %v927, %v920
  %v1229 = vpack.c.b16 %v928, %v921
  %v1230 = vpack.c.b16 %v929, %v922
  %v1231 = vpack.c.b16 %v930, %v923
  %v1232 = vpack.c.b16 %v931, %v924
  %v1233 = vpack.c.b16 %v939, %v932
  %v1234 = vpack.c.b16 %v940, %v933
  %v1235 = vpack.c.b16 %v941, %v934
  %v1236 = vpack.c.b16 %v942, %v935
  %v1237 = vpack.c.b16 %v943, %v936
  %v1238 = vpack.c.b16 %v944, %v937
  %v1239 = vpack.c.b16 %v945, %v938
  %v1240 = vpack.c.b16 %v953, %v946
  %v1241 = vpack.c.b16 %v954, %v947
  %v1242 = vpack.c.b16 %v955, %v948
  %v1243 = vpack.c.b16 %v956, %v949
  %v1244 = vpack.c.b16 %v957, %v950
  %v1245 = vpack.c.b16 %v958, %v951
  %v1246 = vpack.c.b16 %v959, %v952
  %v1247 = vpack.c.b16 %v967, %v960
  %v1248 = vpack.c.b16 %v968, %v961
  %v1249 = vpack.c.b16 %v969, %v962
  %v1250 = vpack.c.b16 %v970, %v963
  %v1251 = vpack.c.b16 %v971, %v964
  %v1252 = vpack.c.b16 %v972, %v965
  %v1253 = vpack.c.b16 %v973, %v966
  %v1254 = vpack.c.b16 %v981, %v974
  %v1255 = vpack.c.b16 %v982, %v975
  %v1256 = vpack.c.b16 %v983, %v976
  %v1257 = vpack.c.b16 %v984, %v977
  %v1258 = vpack.c.b16 %v985, %v978
  %v1259 = vpack.c.b16 %v986, %v979
  %v1260 = vpack.c.b16 %v987, %v980
  %v1261 = vpack.c.b16 %v995, %v988
  %v1262 = vpack.c.b16 %v996, %v989
  %v1263 = vpack.c.b16 %v997, %v990
  %v1264 = vpack.c.b16 %v998, %v991
  %v1265 = vpack.c.b16 %v999, %v992
  %v1266 = vpack.c.b16 %v1000, %v993
  %v1267 = vpack.c.b16 %v1001, %v994
  %v1268 = vpack.c.b16 %v1009, %v1002
  %v1269 = vpack.c.b16 %v1010, %v1003
  %v1270 = vpack.c.b16 %v1011, %v1004
  %v1271 = vpack.c.b16 %v1012, %v1005
  %v1272 = vpack.c.b16 %v1013, %v1006
  %v1273 = vpack.c.b16 %v1014, %v1007
  %v1274 = vpack.c.b16 %v1015, %v1008
  %v1275 = vpack.c.b16 %v1023, %v1016
  %v1276 = vpack.c.b16 %v1024, %v1017
  %v1277 = vpack.c.b16 %v1025, %v1018
  %v1278 = vpack.c.b16 %v1026, %v1019
  %v1279 = vpack.c.b16 %v1027, %v1020
  %v1280 = vpack.c.b16 %v1028, %v1021
  %v1281 = vpack.c.b16 %v1029, %v1022
  %v1282 = vpack.c.b16 %v1037, %v1030
  %v1283 = vpack.c.b16 %v1038, %v1031
  %v1284 = vpack.c.b16 %v1039, %v1032
  %v1285 = vpack.c.b16 %v1040, %v1033
  %v1286 = vpack.c.b16 %v1041, %v1034
  %v1287 = vpack.c.b16 %v1042, %v1035
  %v1288 = vpack.c.b16 %v1043, %v1036
  %v1289 = vpack.c.b16 %v1051, %v1044
  %v1290 = vpack.c.b16 %v1052, %v1045
  %v1291 = vpack.c.b16 %v1053, %v1046
  %v1292 = vpack.c.b16 %v1054, %v1047
  %v1293 = vpack.c.b16 %v1055, %v1048
  %v1294 = vpack.c.b16 %v1056, %v1049
  %v1295 = vpack.c.b16 %v1057, %v1050
  %v1296 = vpack.c.b16 %v1065, %v1058
  %v1297 = vpack.c.b16 %v1066, %v1059
  %v1298 = vpack.c.b16 %v1067, %v1060
  %v1299 = vpack.c.b16 %v1068, %v1061
  %v1300 = vpack.c.b16 %v1069, %v1062
  %v1301 = vpack.c.b16 %v1070, %v1063
  %v1302 = vpack.c.b16 %v1071, %v1064
  %v1303 = vpack.c.b16 %v1079, %v1072
  %v1304 = vpack.c.b16 %v1080, %v1073
  %v1305 = vpack.c.b16 %v1081, %v1074
  %v1306 = vpack.c.b16 %v1082, %v1075
  %v1307 = vpack.c.b16 %v1083, %v1076
  %v1308 = vpack.c.b16 %v1084, %v1077
  %v1309 = vpack.c.b16 %v1085, %v1078
  %v1610 = vunpack.c.l.b16 %v274
  %v1611 = vunpack.c.l.b16 %v275
  %v1612 = vunpack.c.l.b16 %v276
  %v1613 = vunpack.c.l.b16 %v277
  %v1614 = vunpack.c.l.b16 %v278
  %v1615 = vunpack.c.l.b16 %v279
  %v1616 = vunpack.c.l.b16 %v280
  %v1617 = vunpack.c.l.b16 %v281
  %v1618 = vunpack.c.l.b16 %v282
  %v1619 = vunpack.c.l.b16 %v283
  %v1620 = vunpack.c.l.b16 %v284
  %v1621 = vunpack.c.l.b16 %v285
  %v1622 = vunpack.c.l.b16 %v286
  %v1623 = vunpack.c.l.b16 %v287
  %v1624 = vunpack.c.l.b16 %v288
  %v1625 = vunpack.c.l.b16 %v289
  %v1626 = vunpack.c.l.b16 %v290
  %v1627 = vunpack.c.l.b16 %v291
  %v1628 = vunpack.c.l.b16 %v292
  %v1629 = vunpack.c.l.b16 %v293
  %v1630 = vunpack.c.l.b16 %v294
  %v1631 = vunpack.c.l.b16 %v295
  %v1632 = vunpack.c.l.b16 %v296
  %v1633 = vunpack.c.l.b16 %v297
  %v1634 = vunpack.c.l.b16 %v298
  %v1635 = vunpack.c.l.b16 %v299
  %v1636 = vunpack.c.l.b16 %v300
  %v1637 = vunpack.c.l.b16 %v301
  %v1638 = vunpack.c.l.b16 %v302
  %v1639 = vunpack.c.l.b16 %v303
  %v1640 = vunpack.c.l.b16 %v304
  %v1641 = vunpack.c.l.b16 %v305
  %v1642 = vunpack.c.l.b16 %v306
  %v1643 = vunpack.c.l.b16 %v307
  %v1644 = vunpack.c.l.b16 %v308
  %v1645 = vunpack.c.l.b16 %v309
  %v1646 = vunpack.c.l.b16 %v310
  %v1647 = vunpack.c.l.b16 %v311
  %v1648 = vunpack.c.l.b16 %v312
  %v1649 = vunpack.c.l.b16 %v313
  %v1650 = vunpack.c.l.b16 %v314
  %v1651 = vunpack.c.l.b16 %v315
  %v1652 = vunpack.c.l.b16 %v316
  %v1653 = vunpack.c.l.b16 %v317
  %v1654 = vunpack.c.l.b16 %v318
  %v1655 = vunpack.c.l.b16 %v319
  %v1656 = vunpack.c.l.b16 %v320
  %v1657 = vunpack.c.l.b16 %v321
  %v1658 = vunpack.c.l.b16 %v322
  %v1659 = vunpack.c.l.b16 %v323
  %v1660 = vunpack.c.l.b16 %v324
  %v1661 = vunpack.c.l.b16 %v325
  %v1662 = vunpack.c.l.b16 %v326
  %v1663 = vunpack.c.l.b16 %v327
  %v1664 = vunpack.c.l.b16 %v328
  %v1665 = vunpack.c.l.b16 %v329
  %v1666 = vunpack.c.l.b16 %v330
  %v1667 = vunpack.c.l.b16 %v331
  %v1668 = vunpack.c.l.b16 %v332
  %v1669 = vunpack.c.l.b16 %v333
  %v1670 = vunpack.c.l.b16 %v334
  %v1671 = vunpack.c.l.b16 %v335
  %v1672 = vunpack.c.l.b16 %v336
  %v1673 = vunpack.c.l.b16 %v337
  %v1674 = vunpack.c.l.b16 %v338
  %v1675 = vunpack.c.l.b16 %v339
  %v1676 = vunpack.c.l.b16 %v340
  %v1677 = vunpack.c.l.b16 %v341
  %v1678 = vunpack.c.l.b16 %v342
  %v1679 = vunpack.c.l.b16 %v343
  %v1680 = vunpack.c.l.b16 %v344
  %v1681 = vunpack.c.l.b16 %v345
  %v1682 = vunpack.c.l.b16 %v346
  %v1683 = vunpack.c.l.b16 %v347
  %v1684 = vunpack.c.l.b16 %v348
  %v1685 = vunpack.c.l.b16 %v349
  %v1686 = vunpack.c.l.b16 %v350
  %v1687 = vunpack.c.l.b16 %v351
  %v1688 = vunpack.c.l.b16 %v352
  %v1689 = vunpack.c.l.b16 %v353
  %v1690 = vunpack.c.l.b16 %v354
  %v1691 = vunpack.c.l.b16 %v355
  %v1692 = vunpack.c.l.b16 %v356
  %v1693 = vunpack.c.l.b16 %v357
  %v1694 = vunpack.c.l.b16 %v358
  %v1695 = vunpack.c.l.b16 %v359
  %v1696 = vunpack.c.l.b16 %v360
  %v1697 = vunpack.c.l.b16 %v361
  %v1698 = vunpack.c.l.b16 %v362
  %v1699 = vunpack.c.l.b16 %v363
  %v1700 = vunpack.c.l.b16 %v364
  %v1701 = vunpack.c.l.b16 %v365
  %v1702 = vunpack.c.l.b16 %v366
  %v1703 = vunpack.c.l.b16 %v367
  %v1704 = vunpack.c.l.b16 %v368
  %v1705 = vunpack.c.l.b16 %v369
  %v1706 = vunpack.c.l.b16 %v370
  %v1707 = vunpack.c.l.b16 %v371
  %v1708 = vunpack.c.l.b16 %v372
  %v1709 = vunpack.c.l.b16 %v373
  %v1710 = vunpack.c.l.b16 %v374
  %v1711 = vunpack.c.l.b16 %v375
  %v1712 = vunpack.c.l.b16 %v376
  %v1713 = vunpack.c.l.b16 %v377
  %v1714 = vunpack.c.l.b16 %v378
  %v1715 = vunpack.c.l.b16 %v379
  %v1716 = vunpack.c.l.b16 %v380
  %v1717 = vunpack.c.l.b16 %v381
  %v1718 = vpack.c.b16 %v1611, %v1610
  %v1719 = vpack.c.b16 %v1613, %v1612
  %v1720 = vpack.c.b16 %v1615, %v1614
  %v1721 = vpack.c.b16 %v1617, %v1616
  %v1722 = vpack.c.b16 %v1619, %v1618
  %v1723 = vpack.c.b16 %v1621, %v1620
  %v1724 = vpack.c.b16 %v1623, %v1622
  %v1725 = vpack.c.b16 %v1625, %v1624
  %v1726 = vpack.c.b16 %v1627, %v1626
  %v1727 = vpack.c.b16 %v1629, %v1628
  %v1728 = vpack.c.b16 %v1631, %v1630
  %v1729 = vpack.c.b16 %v1633, %v1632
  %v1730 = vpack.c.b16 %v1635, %v1634
  %v1731 = vpack.c.b16 %v1637, %v1636
  %v1732 = vpack.c.b16 %v1639, %v1638
  %v1733 = vpack.c.b16 %v1641, %v1640
  %v1734 = vpack.c.b16 %v1643, %v1642
  %v1735 = vpack.c.b16 %v1645, %v1644
  %v1736 = vpack.c.b16 %v1647, %v1646
  %v1737 = vpack.c.b16 %v1649, %v1648
  %v1738 = vpack.c.b16 %v1651, %v1650
  %v1739 = vpack.c.b16 %v1653, %v1652
  %v1740 = vpack.c.b16 %v1655, %v1654
  %v1741 = vpack.c.b16 %v1657, %v1656
  %v1742 = vpack.c.b16 %v1659, %v1658
  %v1743 = vpack.c.b16 %v1661, %v1660
  %v1744 = vpack.c.b16 %v1663, %v1662
  %v1745 = vpack.c.b16 %v1665, %v1664
  %v1746 = vpack.c.b16 %v1667, %v1666
  %v1747 = vpack.c.b16 %v1669, %v1668
  %v1748 = vpack.c.b16 %v1671, %v1670
  %v1749 = vpack.c.b16 %v1673, %v1672
  %v1750 = vpack.c.b16 %v1675, %v1674
  %v1751 = vpack.c.b16 %v1677, %v1676
  %v1752 = vpack.c.b16 %v1679, %v1678
  %v1753 = vpack.c.b16 %v1681, %v1680
  %v1754 = vpack.c.b16 %v1683, %v1682
  %v1755 = vpack.c.b16 %v1685, %v1684
  %v1756 = vpack.c.b16 %v1687, %v1686
  %v1757 = vpack.c.b16 %v1689, %v1688
  %v1758 = vpack.c.b16 %v1691, %v1690
  %v1759 = vpack.c.b16 %v1693, %v1692
  %v1760 = vpack.c.b16 %v1695, %v1694
  %v1761 = vpack.c.b16 %v1697, %v1696
  %v1762 = vpack.c.b16 %v1699, %v1698
  %v1763 = vpack.c.b16 %v1701, %v1700
  %v1764 = vpack.c.b16 %v1703, %v1702
  %v1765 = vpack.c.b16 %v1705, %v1704
  %v1766 = vpack.c.b16 %v1707, %v1706
  %v1767 = vpack.c.b16 %v1709, %v1708
  %v1768 = vpack.c.b16 %v1711, %v1710
  %v1769 = vpack.c.b16 %v1713, %v1712
  %v1770 = vpack.c.b16 %v1715, %v1714
  %v1771 = vpack.c.b16 %v1717, %v1716
  %vm1826 = vcmask 785408
  %v1828 = vsel %vm1826, %v1092, 0
  %v1831 = vsel %vm1826, %v1099, 0
  %v1834 = vsel %vm1826, %v1106, 0
  %v1837 = vsel %vm1826, %v1113, 0
  %v1840 = vsel %vm1826, %v1120, 0
  %v1843 = vsel %vm1826, %v1127, 0
  %v1846 = vsel %vm1826, %v1134, 0
  %v1849 = vsel %vm1826, %v1141, 0
  %v1852 = vsel %vm1826, %v1148, 0
  %v1855 = vsel %vm1826, %v1155, 0
  %v1858 = vsel %vm1826, %v1162, 0
  %v1861 = vsel %vm1826, %v1169, 0
  %v1864 = vsel %vm1826, %v1176, 0
  %v1867 = vsel %vm1826, %v1183, 0
  %v1870 = vsel %vm1826, %v1190, 0
  %v1873 = vsel %vm1826, %v1197, 0
  %v1876 = vsel %vm1826, %v1204, 0
  %v1879 = vsel %vm1826, %v1211, 0
  %v1882 = vsel %vm1826, %v1218, 0
  %v1885 = vsel %vm1826, %v1225, 0
  %v1888 = vsel %vm1826, %v1232, 0
  %v1891 = vsel %vm1826, %v1239, 0
  %v1894 = vsel %vm1826, %v1246, 0
  %v1897 = vsel %vm1826, %v1253, 0
  %v1900 = vsel %vm1826, %v1260, 0
  %v1903 = vsel %vm1826, %v1267, 0
  %v1906 = vsel %vm1826, %v1274, 0
  %v1909 = vsel %vm1826, %v1281, 0
  %v1912 = vsel %vm1826, %v1288, 0
  %v1915 = vsel %vm1826, %v1295, 0
  %v1918 = vsel %vm1826, %v1302, 0
  %v1921 = vsel %vm1826, %v1309, 0
  %1923 = vmatpush.bf16.msra.mxu0 %v1725
  %1924 = vmatpush.bf16.msra.mxu0 %v1724
  %1925 = vmatpush.bf16.msra.mxu0 %v1723
  %1926 = vmatpush.bf16.msra.mxu0 %v1722
  %1927 = vmatpush.bf16.msra.mxu0 %v1721
  %1928 = vmatpush.bf16.msra.mxu0 %v1720
  %1929 = vmatpush.bf16.msra.mxu0 %v1719
  %1930 = vmatpush.bf16.msra.mxu0 %v1718
  %1931 = vmatmul.bf16.gmra.mxu0 %v1086
  %v1932 = vpop.f32.mrf.mxu0
  %v1933 = vadd.f32 0.0, %v1932
  %v1934 = vpop.f32.mrf.mxu0
  %v1935 = vadd.f32 0.0, %v1934
  %1936 = vmatmul.bf16.gmra.mxu0 %v1093
  %v1937 = vpop.f32.mrf.mxu0
  %v1938 = vadd.f32 0.0, %v1937
  %v1939 = vpop.f32.mrf.mxu0
  %v1940 = vadd.f32 0.0, %v1939
  %1941 = vmatmul.bf16.gmra.mxu0 %v1100
  %v1942 = vpop.f32.mrf.mxu0
  %v1943 = vadd.f32 0.0, %v1942
  %v1944 = vpop.f32.mrf.mxu0
  %v1945 = vadd.f32 0.0, %v1944
  %1946 = vmatmul.bf16.gmra.mxu0 %v1107
  %v1947 = vpop.f32.mrf.mxu0
  %v1948 = vadd.f32 0.0, %v1947
  %v1949 = vpop.f32.mrf.mxu0
  %v1950 = vadd.f32 0.0, %v1949
  %1951 = vmatmul.bf16.gmra.mxu0 %v1114
  %v1952 = vpop.f32.mrf.mxu0
  %v1953 = vadd.f32 0.0, %v1952
  %v1954 = vpop.f32.mrf.mxu0
  %v1955 = vadd.f32 0.0, %v1954
  %1956 = vmatmul.bf16.gmra.mxu0 %v1121
  %v1957 = vpop.f32.mrf.mxu0
  %v1958 = vadd.f32 0.0, %v1957
  %v1959 = vpop.f32.mrf.mxu0
  %v1960 = vadd.f32 0.0, %v1959
  %1961 = vmatmul.bf16.gmra.mxu0 %v1128
  %v1962 = vpop.f32.mrf.mxu0
  %v1963 = vadd.f32 0.0, %v1962
  %v1964 = vpop.f32.mrf.mxu0
  %v1965 = vadd.f32 0.0, %v1964
  %1966 = vmatmul.bf16.gmra.mxu0 %v1135
  %v1967 = vpop.f32.mrf.mxu0
  %v1968 = vadd.f32 0.0, %v1967
  %v1969 = vpop.f32.mrf.mxu0
  %v1970 = vadd.f32 0.0, %v1969
  %1971 = vmatmul.bf16.gmra.mxu0 %v1142
  %v1972 = vpop.f32.mrf.mxu0
  %v1973 = vadd.f32 0.0, %v1972
  %v1974 = vpop.f32.mrf.mxu0
  %v1975 = vadd.f32 0.0, %v1974
  %1976 = vmatmul.bf16.gmra.mxu0 %v1149
  %v1977 = vpop.f32.mrf.mxu0
  %v1978 = vadd.f32 0.0, %v1977
  %v1979 = vpop.f32.mrf.mxu0
  %v1980 = vadd.f32 0.0, %v1979
  %1981 = vmatmul.bf16.gmra.mxu0 %v1156
  %v1982 = vpop.f32.mrf.mxu0
  %v1983 = vadd.f32 0.0, %v1982
  %v1984 = vpop.f32.mrf.mxu0
  %v1985 = vadd.f32 0.0, %v1984
  %1986 = vmatmul.bf16.gmra.mxu0 %v1163
  %v1987 = vpop.f32.mrf.mxu0
  %v1988 = vadd.f32 0.0, %v1987
  %v1989 = vpop.f32.mrf.mxu0
  %v1990 = vadd.f32 0.0, %v1989
  %1991 = vmatmul.bf16.gmra.mxu0 %v1170
  %v1992 = vpop.f32.mrf.mxu0
  %v1993 = vadd.f32 0.0, %v1992
  %v1994 = vpop.f32.mrf.mxu0
  %v1995 = vadd.f32 0.0, %v1994
  %1996 = vmatmul.bf16.gmra.mxu0 %v1177
  %v1997 = vpop.f32.mrf.mxu0
  %v1998 = vadd.f32 0.0, %v1997
  %v1999 = vpop.f32.mrf.mxu0
  %v2000 = vadd.f32 0.0, %v1999
  %2001 = vmatmul.bf16.gmra.mxu0 %v1184
  %v2002 = vpop.f32.mrf.mxu0
  %v2003 = vadd.f32 0.0, %v2002
  %v2004 = vpop.f32.mrf.mxu0
  %v2005 = vadd.f32 0.0, %v2004
  %2006 = vmatmul.bf16.gmra.mxu0 %v1191
  %v2007 = vpop.f32.mrf.mxu0
  %v2008 = vadd.f32 0.0, %v2007
  %v2009 = vpop.f32.mrf.mxu0
  %v2010 = vadd.f32 0.0, %v2009
  %2011 = vmatmul.bf16.gmra.mxu0 %v1198
  %v2012 = vpop.f32.mrf.mxu0
  %v2013 = vadd.f32 0.0, %v2012
  %v2014 = vpop.f32.mrf.mxu0
  %v2015 = vadd.f32 0.0, %v2014
  %2016 = vmatmul.bf16.gmra.mxu0 %v1205
  %v2017 = vpop.f32.mrf.mxu0
  %v2018 = vadd.f32 0.0, %v2017
  %v2019 = vpop.f32.mrf.mxu0
  %v2020 = vadd.f32 0.0, %v2019
  %2021 = vmatmul.bf16.gmra.mxu0 %v1212
  %v2022 = vpop.f32.mrf.mxu0
  %v2023 = vadd.f32 0.0, %v2022
  %v2024 = vpop.f32.mrf.mxu0
  %v2025 = vadd.f32 0.0, %v2024
  %2026 = vmatmul.bf16.gmra.mxu0 %v1219
  %v2027 = vpop.f32.mrf.mxu0
  %v2028 = vadd.f32 0.0, %v2027
  %v2029 = vpop.f32.mrf.mxu0
  %v2030 = vadd.f32 0.0, %v2029
  %2031 = vmatmul.bf16.gmra.mxu0 %v1226
  %v2032 = vpop.f32.mrf.mxu0
  %v2033 = vadd.f32 0.0, %v2032
  %v2034 = vpop.f32.mrf.mxu0
  %v2035 = vadd.f32 0.0, %v2034
  %2036 = vmatmul.bf16.gmra.mxu0 %v1233
  %v2037 = vpop.f32.mrf.mxu0
  %v2038 = vadd.f32 0.0, %v2037
  %v2039 = vpop.f32.mrf.mxu0
  %v2040 = vadd.f32 0.0, %v2039
  %2041 = vmatmul.bf16.gmra.mxu0 %v1240
  %v2042 = vpop.f32.mrf.mxu0
  %v2043 = vadd.f32 0.0, %v2042
  %v2044 = vpop.f32.mrf.mxu0
  %v2045 = vadd.f32 0.0, %v2044
  %2046 = vmatmul.bf16.gmra.mxu0 %v1247
  %v2047 = vpop.f32.mrf.mxu0
  %v2048 = vadd.f32 0.0, %v2047
  %v2049 = vpop.f32.mrf.mxu0
  %v2050 = vadd.f32 0.0, %v2049
  %2051 = vmatmul.bf16.gmra.mxu0 %v1254
  %v2052 = vpop.f32.mrf.mxu0
  %v2053 = vadd.f32 0.0, %v2052
  %v2054 = vpop.f32.mrf.mxu0
  %v2055 = vadd.f32 0.0, %v2054
  %2056 = vmatmul.bf16.gmra.mxu0 %v1261
  %v2057 = vpop.f32.mrf.mxu0
  %v2058 = vadd.f32 0.0, %v2057
  %v2059 = vpop.f32.mrf.mxu0
  %v2060 = vadd.f32 0.0, %v2059
  %2061 = vmatmul.bf16.gmra.mxu0 %v1268
  %v2062 = vpop.f32.mrf.mxu0
  %v2063 = vadd.f32 0.0, %v2062
  %v2064 = vpop.f32.mrf.mxu0
  %v2065 = vadd.f32 0.0, %v2064
  %2066 = vmatmul.bf16.gmra.mxu0 %v1275
  %v2067 = vpop.f32.mrf.mxu0
  %v2068 = vadd.f32 0.0, %v2067
  %v2069 = vpop.f32.mrf.mxu0
  %v2070 = vadd.f32 0.0, %v2069
  %2071 = vmatmul.bf16.gmra.mxu0 %v1282
  %v2072 = vpop.f32.mrf.mxu0
  %v2073 = vadd.f32 0.0, %v2072
  %v2074 = vpop.f32.mrf.mxu0
  %v2075 = vadd.f32 0.0, %v2074
  %2076 = vmatmul.bf16.gmra.mxu0 %v1289
  %v2077 = vpop.f32.mrf.mxu0
  %v2078 = vadd.f32 0.0, %v2077
  %v2079 = vpop.f32.mrf.mxu0
  %v2080 = vadd.f32 0.0, %v2079
  %2081 = vmatmul.bf16.gmra.mxu0 %v1296
  %v2082 = vpop.f32.mrf.mxu0
  %v2083 = vadd.f32 0.0, %v2082
  %v2084 = vpop.f32.mrf.mxu0
  %v2085 = vadd.f32 0.0, %v2084
  %2086 = vmatmul.bf16.gmra.mxu0 %v1303
  %v2087 = vpop.f32.mrf.mxu0
  %v2088 = vadd.f32 0.0, %v2087
  %v2089 = vpop.f32.mrf.mxu0
  %v2090 = vadd.f32 0.0, %v2089
  %2091 = vdwg.mxu0
  %2092 = vmatpush.bf16.msra.mxu0 %v1733
  %2093 = vmatpush.bf16.msra.mxu0 %v1732
  %2094 = vmatpush.bf16.msra.mxu0 %v1731
  %2095 = vmatpush.bf16.msra.mxu0 %v1730
  %2096 = vmatpush.bf16.msra.mxu0 %v1729
  %2097 = vmatpush.bf16.msra.mxu0 %v1728
  %2098 = vmatpush.bf16.msra.mxu0 %v1727
  %2099 = vmatpush.bf16.msra.mxu0 %v1726
  %2100 = vmatmul.bf16.gmra.mxu0 %v1087
  %v2101 = vpop.f32.mrf.mxu0
  %v2102 = vadd.f32 %v1933, %v2101
  %v2103 = vpop.f32.mrf.mxu0
  %v2104 = vadd.f32 %v1935, %v2103
  %2105 = vmatmul.bf16.gmra.mxu0 %v1094
  %v2106 = vpop.f32.mrf.mxu0
  %v2107 = vadd.f32 %v1938, %v2106
  %v2108 = vpop.f32.mrf.mxu0
  %v2109 = vadd.f32 %v1940, %v2108
  %2110 = vmatmul.bf16.gmra.mxu0 %v1101
  %v2111 = vpop.f32.mrf.mxu0
  %v2112 = vadd.f32 %v1943, %v2111
  %v2113 = vpop.f32.mrf.mxu0
  %v2114 = vadd.f32 %v1945, %v2113
  %2115 = vmatmul.bf16.gmra.mxu0 %v1108
  %v2116 = vpop.f32.mrf.mxu0
  %v2117 = vadd.f32 %v1948, %v2116
  %v2118 = vpop.f32.mrf.mxu0
  %v2119 = vadd.f32 %v1950, %v2118
  %2120 = vmatmul.bf16.gmra.mxu0 %v1115
  %v2121 = vpop.f32.mrf.mxu0
  %v2122 = vadd.f32 %v1953, %v2121
  %v2123 = vpop.f32.mrf.mxu0
  %v2124 = vadd.f32 %v1955, %v2123
  %2125 = vmatmul.bf16.gmra.mxu0 %v1122
  %v2126 = vpop.f32.mrf.mxu0
  %v2127 = vadd.f32 %v1958, %v2126
  %v2128 = vpop.f32.mrf.mxu0
  %v2129 = vadd.f32 %v1960, %v2128
  %2130 = vmatmul.bf16.gmra.mxu0 %v1129
  %v2131 = vpop.f32.mrf.mxu0
  %v2132 = vadd.f32 %v1963, %v2131
  %v2133 = vpop.f32.mrf.mxu0
  %v2134 = vadd.f32 %v1965, %v2133
  %2135 = vmatmul.bf16.gmra.mxu0 %v1136
  %v2136 = vpop.f32.mrf.mxu0
  %v2137 = vadd.f32 %v1968, %v2136
  %v2138 = vpop.f32.mrf.mxu0
  %v2139 = vadd.f32 %v1970, %v2138
  %2140 = vmatmul.bf16.gmra.mxu0 %v1143
  %v2141 = vpop.f32.mrf.mxu0
  %v2142 = vadd.f32 %v1973, %v2141
  %v2143 = vpop.f32.mrf.mxu0
  %v2144 = vadd.f32 %v1975, %v2143
  %2145 = vmatmul.bf16.gmra.mxu0 %v1150
  %v2146 = vpop.f32.mrf.mxu0
  %v2147 = vadd.f32 %v1978, %v2146
  %v2148 = vpop.f32.mrf.mxu0
  %v2149 = vadd.f32 %v1980, %v2148
  %2150 = vmatmul.bf16.gmra.mxu0 %v1157
  %v2151 = vpop.f32.mrf.mxu0
  %v2152 = vadd.f32 %v1983, %v2151
  %v2153 = vpop.f32.mrf.mxu0
  %v2154 = vadd.f32 %v1985, %v2153
  %2155 = vmatmul.bf16.gmra.mxu0 %v1164
  %v2156 = vpop.f32.mrf.mxu0
  %v2157 = vadd.f32 %v1988, %v2156
  %v2158 = vpop.f32.mrf.mxu0
  %v2159 = vadd.f32 %v1990, %v2158
  %2160 = vmatmul.bf16.gmra.mxu0 %v1171
  %v2161 = vpop.f32.mrf.mxu0
  %v2162 = vadd.f32 %v1993, %v2161
  %v2163 = vpop.f32.mrf.mxu0
  %v2164 = vadd.f32 %v1995, %v2163
  %2165 = vmatmul.bf16.gmra.mxu0 %v1178
  %v2166 = vpop.f32.mrf.mxu0
  %v2167 = vadd.f32 %v1998, %v2166
  %v2168 = vpop.f32.mrf.mxu0
  %v2169 = vadd.f32 %v2000, %v2168
  %2170 = vmatmul.bf16.gmra.mxu0 %v1185
  %v2171 = vpop.f32.mrf.mxu0
  %v2172 = vadd.f32 %v2003, %v2171
  %v2173 = vpop.f32.mrf.mxu0
  %v2174 = vadd.f32 %v2005, %v2173
  %2175 = vmatmul.bf16.gmra.mxu0 %v1192
  %v2176 = vpop.f32.mrf.mxu0
  %v2177 = vadd.f32 %v2008, %v2176
  %v2178 = vpop.f32.mrf.mxu0
  %v2179 = vadd.f32 %v2010, %v2178
  %2180 = vmatmul.bf16.gmra.mxu0 %v1199
  %v2181 = vpop.f32.mrf.mxu0
  %v2182 = vadd.f32 %v2013, %v2181
  %v2183 = vpop.f32.mrf.mxu0
  %v2184 = vadd.f32 %v2015, %v2183
  %2185 = vmatmul.bf16.gmra.mxu0 %v1206
  %v2186 = vpop.f32.mrf.mxu0
  %v2187 = vadd.f32 %v2018, %v2186
  %v2188 = vpop.f32.mrf.mxu0
  %v2189 = vadd.f32 %v2020, %v2188
  %2190 = vmatmul.bf16.gmra.mxu0 %v1213
  %v2191 = vpop.f32.mrf.mxu0
  %v2192 = vadd.f32 %v2023, %v2191
  %v2193 = vpop.f32.mrf.mxu0
  %v2194 = vadd.f32 %v2025, %v2193
  %2195 = vmatmul.bf16.gmra.mxu0 %v1220
  %v2196 = vpop.f32.mrf.mxu0
  %v2197 = vadd.f32 %v2028, %v2196
  %v2198 = vpop.f32.mrf.mxu0
  %v2199 = vadd.f32 %v2030, %v2198
  %2200 = vmatmul.bf16.gmra.mxu0 %v1227
  %v2201 = vpop.f32.mrf.mxu0
  %v2202 = vadd.f32 %v2033, %v2201
  %v2203 = vpop.f32.mrf.mxu0
  %v2204 = vadd.f32 %v2035, %v2203
  %2205 = vmatmul.bf16.gmra.mxu0 %v1234
  %v2206 = vpop.f32.mrf.mxu0
  %v2207 = vadd.f32 %v2038, %v2206
  %v2208 = vpop.f32.mrf.mxu0
  %v2209 = vadd.f32 %v2040, %v2208
  %2210 = vmatmul.bf16.gmra.mxu0 %v1241
  %v2211 = vpop.f32.mrf.mxu0
  %v2212 = vadd.f32 %v2043, %v2211
  %v2213 = vpop.f32.mrf.mxu0
  %v2214 = vadd.f32 %v2045, %v2213
  %2215 = vmatmul.bf16.gmra.mxu0 %v1248
  %v2216 = vpop.f32.mrf.mxu0
  %v2217 = vadd.f32 %v2048, %v2216
  %v2218 = vpop.f32.mrf.mxu0
  %v2219 = vadd.f32 %v2050, %v2218
  %2220 = vmatmul.bf16.gmra.mxu0 %v1255
  %v2221 = vpop.f32.mrf.mxu0
  %v2222 = vadd.f32 %v2053, %v2221
  %v2223 = vpop.f32.mrf.mxu0
  %v2224 = vadd.f32 %v2055, %v2223
  %2225 = vmatmul.bf16.gmra.mxu0 %v1262
  %v2226 = vpop.f32.mrf.mxu0
  %v2227 = vadd.f32 %v2058, %v2226
  %v2228 = vpop.f32.mrf.mxu0
  %v2229 = vadd.f32 %v2060, %v2228
  %2230 = vmatmul.bf16.gmra.mxu0 %v1269
  %v2231 = vpop.f32.mrf.mxu0
  %v2232 = vadd.f32 %v2063, %v2231
  %v2233 = vpop.f32.mrf.mxu0
  %v2234 = vadd.f32 %v2065, %v2233
  %2235 = vmatmul.bf16.gmra.mxu0 %v1276
  %v2236 = vpop.f32.mrf.mxu0
  %v2237 = vadd.f32 %v2068, %v2236
  %v2238 = vpop.f32.mrf.mxu0
  %v2239 = vadd.f32 %v2070, %v2238
  %2240 = vmatmul.bf16.gmra.mxu0 %v1283
  %v2241 = vpop.f32.mrf.mxu0
  %v2242 = vadd.f32 %v2073, %v2241
  %v2243 = vpop.f32.mrf.mxu0
  %v2244 = vadd.f32 %v2075, %v2243
  %2245 = vmatmul.bf16.gmra.mxu0 %v1290
  %v2246 = vpop.f32.mrf.mxu0
  %v2247 = vadd.f32 %v2078, %v2246
  %v2248 = vpop.f32.mrf.mxu0
  %v2249 = vadd.f32 %v2080, %v2248
  %2250 = vmatmul.bf16.gmra.mxu0 %v1297
  %v2251 = vpop.f32.mrf.mxu0
  %v2252 = vadd.f32 %v2083, %v2251
  %v2253 = vpop.f32.mrf.mxu0
  %v2254 = vadd.f32 %v2085, %v2253
  %2255 = vmatmul.bf16.gmra.mxu0 %v1304
  %v2256 = vpop.f32.mrf.mxu0
  %v2257 = vadd.f32 %v2088, %v2256
  %v2258 = vpop.f32.mrf.mxu0
  %v2259 = vadd.f32 %v2090, %v2258
  %2260 = vdwg.mxu0
  %2261 = vmatpush.bf16.msra.mxu0 %v1741
  %2262 = vmatpush.bf16.msra.mxu0 %v1740
  %2263 = vmatpush.bf16.msra.mxu0 %v1739
  %2264 = vmatpush.bf16.msra.mxu0 %v1738
  %2265 = vmatpush.bf16.msra.mxu0 %v1737
  %2266 = vmatpush.bf16.msra.mxu0 %v1736
  %2267 = vmatpush.bf16.msra.mxu0 %v1735
  %2268 = vmatpush.bf16.msra.mxu0 %v1734
  %2269 = vmatmul.bf16.gmra.mxu0 %v1088
  %v2270 = vpop.f32.mrf.mxu0
  %v2271 = vadd.f32 %v2102, %v2270
  %v2272 = vpop.f32.mrf.mxu0
  %v2273 = vadd.f32 %v2104, %v2272
  %2274 = vmatmul.bf16.gmra.mxu0 %v1095
  %v2275 = vpop.f32.mrf.mxu0
  %v2276 = vadd.f32 %v2107, %v2275
  %v2277 = vpop.f32.mrf.mxu0
  %v2278 = vadd.f32 %v2109, %v2277
  %2279 = vmatmul.bf16.gmra.mxu0 %v1102
  %v2280 = vpop.f32.mrf.mxu0
  %v2281 = vadd.f32 %v2112, %v2280
  %v2282 = vpop.f32.mrf.mxu0
  %v2283 = vadd.f32 %v2114, %v2282
  %2284 = vmatmul.bf16.gmra.mxu0 %v1109
  %v2285 = vpop.f32.mrf.mxu0
  %v2286 = vadd.f32 %v2117, %v2285
  %v2287 = vpop.f32.mrf.mxu0
  %v2288 = vadd.f32 %v2119, %v2287
  %2289 = vmatmul.bf16.gmra.mxu0 %v1116
  %v2290 = vpop.f32.mrf.mxu0
  %v2291 = vadd.f32 %v2122, %v2290
  %v2292 = vpop.f32.mrf.mxu0
  %v2293 = vadd.f32 %v2124, %v2292
  %2294 = vmatmul.bf16.gmra.mxu0 %v1123
  %v2295 = vpop.f32.mrf.mxu0
  %v2296 = vadd.f32 %v2127, %v2295
  %v2297 = vpop.f32.mrf.mxu0
  %v2298 = vadd.f32 %v2129, %v2297
  %2299 = vmatmul.bf16.gmra.mxu0 %v1130
  %v2300 = vpop.f32.mrf.mxu0
  %v2301 = vadd.f32 %v2132, %v2300
  %v2302 = vpop.f32.mrf.mxu0
  %v2303 = vadd.f32 %v2134, %v2302
  %2304 = vmatmul.bf16.gmra.mxu0 %v1137
  %v2305 = vpop.f32.mrf.mxu0
  %v2306 = vadd.f32 %v2137, %v2305
  %v2307 = vpop.f32.mrf.mxu0
  %v2308 = vadd.f32 %v2139, %v2307
  %2309 = vmatmul.bf16.gmra.mxu0 %v1144
  %v2310 = vpop.f32.mrf.mxu0
  %v2311 = vadd.f32 %v2142, %v2310
  %v2312 = vpop.f32.mrf.mxu0
  %v2313 = vadd.f32 %v2144, %v2312
  %2314 = vmatmul.bf16.gmra.mxu0 %v1151
  %v2315 = vpop.f32.mrf.mxu0
  %v2316 = vadd.f32 %v2147, %v2315
  %v2317 = vpop.f32.mrf.mxu0
  %v2318 = vadd.f32 %v2149, %v2317
  %2319 = vmatmul.bf16.gmra.mxu0 %v1158
  %v2320 = vpop.f32.mrf.mxu0
  %v2321 = vadd.f32 %v2152, %v2320
  %v2322 = vpop.f32.mrf.mxu0
  %v2323 = vadd.f32 %v2154, %v2322
  %2324 = vmatmul.bf16.gmra.mxu0 %v1165
  %v2325 = vpop.f32.mrf.mxu0
  %v2326 = vadd.f32 %v2157, %v2325
  %v2327 = vpop.f32.mrf.mxu0
  %v2328 = vadd.f32 %v2159, %v2327
  %2329 = vmatmul.bf16.gmra.mxu0 %v1172
  %v2330 = vpop.f32.mrf.mxu0
  %v2331 = vadd.f32 %v2162, %v2330
  %v2332 = vpop.f32.mrf.mxu0
  %v2333 = vadd.f32 %v2164, %v2332
  %2334 = vmatmul.bf16.gmra.mxu0 %v1179
  %v2335 = vpop.f32.mrf.mxu0
  %v2336 = vadd.f32 %v2167, %v2335
  %v2337 = vpop.f32.mrf.mxu0
  %v2338 = vadd.f32 %v2169, %v2337
  %2339 = vmatmul.bf16.gmra.mxu0 %v1186
  %v2340 = vpop.f32.mrf.mxu0
  %v2341 = vadd.f32 %v2172, %v2340
  %v2342 = vpop.f32.mrf.mxu0
  %v2343 = vadd.f32 %v2174, %v2342
  %2344 = vmatmul.bf16.gmra.mxu0 %v1193
  %v2345 = vpop.f32.mrf.mxu0
  %v2346 = vadd.f32 %v2177, %v2345
  %v2347 = vpop.f32.mrf.mxu0
  %v2348 = vadd.f32 %v2179, %v2347
  %2349 = vmatmul.bf16.gmra.mxu0 %v1200
  %v2350 = vpop.f32.mrf.mxu0
  %v2351 = vadd.f32 %v2182, %v2350
  %v2352 = vpop.f32.mrf.mxu0
  %v2353 = vadd.f32 %v2184, %v2352
  %2354 = vmatmul.bf16.gmra.mxu0 %v1207
  %v2355 = vpop.f32.mrf.mxu0
  %v2356 = vadd.f32 %v2187, %v2355
  %v2357 = vpop.f32.mrf.mxu0
  %v2358 = vadd.f32 %v2189, %v2357
  %2359 = vmatmul.bf16.gmra.mxu0 %v1214
  %v2360 = vpop.f32.mrf.mxu0
  %v2361 = vadd.f32 %v2192, %v2360
  %v2362 = vpop.f32.mrf.mxu0
  %v2363 = vadd.f32 %v2194, %v2362
  %2364 = vmatmul.bf16.gmra.mxu0 %v1221
  %v2365 = vpop.f32.mrf.mxu0
  %v2366 = vadd.f32 %v2197, %v2365
  %v2367 = vpop.f32.mrf.mxu0
  %v2368 = vadd.f32 %v2199, %v2367
  %2369 = vmatmul.bf16.gmra.mxu0 %v1228
  %v2370 = vpop.f32.mrf.mxu0
  %v2371 = vadd.f32 %v2202, %v2370
  %v2372 = vpop.f32.mrf.mxu0
  %v2373 = vadd.f32 %v2204, %v2372
  %2374 = vmatmul.bf16.gmra.mxu0 %v1235
  %v2375 = vpop.f32.mrf.mxu0
  %v2376 = vadd.f32 %v2207, %v2375
  %v2377 = vpop.f32.mrf.mxu0
  %v2378 = vadd.f32 %v2209, %v2377
  %2379 = vmatmul.bf16.gmra.mxu0 %v1242
  %v2380 = vpop.f32.mrf.mxu0
  %v2381 = vadd.f32 %v2212, %v2380
  %v2382 = vpop.f32.mrf.mxu0
  %v2383 = vadd.f32 %v2214, %v2382
  %2384 = vmatmul.bf16.gmra.mxu0 %v1249
  %v2385 = vpop.f32.mrf.mxu0
  %v2386 = vadd.f32 %v2217, %v2385
  %v2387 = vpop.f32.mrf.mxu0
  %v2388 = vadd.f32 %v2219, %v2387
  %2389 = vmatmul.bf16.gmra.mxu0 %v1256
  %v2390 = vpop.f32.mrf.mxu0
  %v2391 = vadd.f32 %v2222, %v2390
  %v2392 = vpop.f32.mrf.mxu0
  %v2393 = vadd.f32 %v2224, %v2392
  %2394 = vmatmul.bf16.gmra.mxu0 %v1263
  %v2395 = vpop.f32.mrf.mxu0
  %v2396 = vadd.f32 %v2227, %v2395
  %v2397 = vpop.f32.mrf.mxu0
  %v2398 = vadd.f32 %v2229, %v2397
  %2399 = vmatmul.bf16.gmra.mxu0 %v1270
  %v2400 = vpop.f32.mrf.mxu0
  %v2401 = vadd.f32 %v2232, %v2400
  %v2402 = vpop.f32.mrf.mxu0
  %v2403 = vadd.f32 %v2234, %v2402
  %2404 = vmatmul.bf16.gmra.mxu0 %v1277
  %v2405 = vpop.f32.mrf.mxu0
  %v2406 = vadd.f32 %v2237, %v2405
  %v2407 = vpop.f32.mrf.mxu0
  %v2408 = vadd.f32 %v2239, %v2407
  %2409 = vmatmul.bf16.gmra.mxu0 %v1284
  %v2410 = vpop.f32.mrf.mxu0
  %v2411 = vadd.f32 %v2242, %v2410
  %v2412 = vpop.f32.mrf.mxu0
  %v2413 = vadd.f32 %v2244, %v2412
  %2414 = vmatmul.bf16.gmra.mxu0 %v1291
  %v2415 = vpop.f32.mrf.mxu0
  %v2416 = vadd.f32 %v2247, %v2415
  %v2417 = vpop.f32.mrf.mxu0
  %v2418 = vadd.f32 %v2249, %v2417
  %2419 = vmatmul.bf16.gmra.mxu0 %v1298
  %v2420 = vpop.f32.mrf.mxu0
  %v2421 = vadd.f32 %v2252, %v2420
  %v2422 = vpop.f32.mrf.mxu0
  %v2423 = vadd.f32 %v2254, %v2422
  %2424 = vmatmul.bf16.gmra.mxu0 %v1305
  %v2425 = vpop.f32.mrf.mxu0
  %v2426 = vadd.f32 %v2257, %v2425
  %v2427 = vpop.f32.mrf.mxu0
  %v2428 = vadd.f32 %v2259, %v2427
  %2429 = vdwg.mxu0
  %2430 = vmatpush.bf16.msra.mxu0 %v1749
  %2431 = vmatpush.bf16.msra.mxu0 %v1748
  %2432 = vmatpush.bf16.msra.mxu0 %v1747
  %2433 = vmatpush.bf16.msra.mxu0 %v1746
  %2434 = vmatpush.bf16.msra.mxu0 %v1745
  %2435 = vmatpush.bf16.msra.mxu0 %v1744
  %2436 = vmatpush.bf16.msra.mxu0 %v1743
  %2437 = vmatpush.bf16.msra.mxu0 %v1742
  %2438 = vmatmul.bf16.gmra.mxu0 %v1089
  %v2439 = vpop.f32.mrf.mxu0
  %v2440 = vadd.f32 %v2271, %v2439
  %v2441 = vpop.f32.mrf.mxu0
  %v2442 = vadd.f32 %v2273, %v2441
  %2443 = vmatmul.bf16.gmra.mxu0 %v1096
  %v2444 = vpop.f32.mrf.mxu0
  %v2445 = vadd.f32 %v2276, %v2444
  %v2446 = vpop.f32.mrf.mxu0
  %v2447 = vadd.f32 %v2278, %v2446
  %2448 = vmatmul.bf16.gmra.mxu0 %v1103
  %v2449 = vpop.f32.mrf.mxu0
  %v2450 = vadd.f32 %v2281, %v2449
  %v2451 = vpop.f32.mrf.mxu0
  %v2452 = vadd.f32 %v2283, %v2451
  %2453 = vmatmul.bf16.gmra.mxu0 %v1110
  %v2454 = vpop.f32.mrf.mxu0
  %v2455 = vadd.f32 %v2286, %v2454
  %v2456 = vpop.f32.mrf.mxu0
  %v2457 = vadd.f32 %v2288, %v2456
  %2458 = vmatmul.bf16.gmra.mxu0 %v1117
  %v2459 = vpop.f32.mrf.mxu0
  %v2460 = vadd.f32 %v2291, %v2459
  %v2461 = vpop.f32.mrf.mxu0
  %v2462 = vadd.f32 %v2293, %v2461
  %2463 = vmatmul.bf16.gmra.mxu0 %v1124
  %v2464 = vpop.f32.mrf.mxu0
  %v2465 = vadd.f32 %v2296, %v2464
  %v2466 = vpop.f32.mrf.mxu0
  %v2467 = vadd.f32 %v2298, %v2466
  %2468 = vmatmul.bf16.gmra.mxu0 %v1131
  %v2469 = vpop.f32.mrf.mxu0
  %v2470 = vadd.f32 %v2301, %v2469
  %v2471 = vpop.f32.mrf.mxu0
  %v2472 = vadd.f32 %v2303, %v2471
  %2473 = vmatmul.bf16.gmra.mxu0 %v1138
  %v2474 = vpop.f32.mrf.mxu0
  %v2475 = vadd.f32 %v2306, %v2474
  %v2476 = vpop.f32.mrf.mxu0
  %v2477 = vadd.f32 %v2308, %v2476
  %2478 = vmatmul.bf16.gmra.mxu0 %v1145
  %v2479 = vpop.f32.mrf.mxu0
  %v2480 = vadd.f32 %v2311, %v2479
  %v2481 = vpop.f32.mrf.mxu0
  %v2482 = vadd.f32 %v2313, %v2481
  %2483 = vmatmul.bf16.gmra.mxu0 %v1152
  %v2484 = vpop.f32.mrf.mxu0
  %v2485 = vadd.f32 %v2316, %v2484
  %v2486 = vpop.f32.mrf.mxu0
  %v2487 = vadd.f32 %v2318, %v2486
  %2488 = vmatmul.bf16.gmra.mxu0 %v1159
  %v2489 = vpop.f32.mrf.mxu0
  %v2490 = vadd.f32 %v2321, %v2489
  %v2491 = vpop.f32.mrf.mxu0
  %v2492 = vadd.f32 %v2323, %v2491
  %2493 = vmatmul.bf16.gmra.mxu0 %v1166
  %v2494 = vpop.f32.mrf.mxu0
  %v2495 = vadd.f32 %v2326, %v2494
  %v2496 = vpop.f32.mrf.mxu0
  %v2497 = vadd.f32 %v2328, %v2496
  %2498 = vmatmul.bf16.gmra.mxu0 %v1173
  %v2499 = vpop.f32.mrf.mxu0
  %v2500 = vadd.f32 %v2331, %v2499
  %v2501 = vpop.f32.mrf.mxu0
  %v2502 = vadd.f32 %v2333, %v2501
  %2503 = vmatmul.bf16.gmra.mxu0 %v1180
  %v2504 = vpop.f32.mrf.mxu0
  %v2505 = vadd.f32 %v2336, %v2504
  %v2506 = vpop.f32.mrf.mxu0
  %v2507 = vadd.f32 %v2338, %v2506
  %2508 = vmatmul.bf16.gmra.mxu0 %v1187
  %v2509 = vpop.f32.mrf.mxu0
  %v2510 = vadd.f32 %v2341, %v2509
  %v2511 = vpop.f32.mrf.mxu0
  %v2512 = vadd.f32 %v2343, %v2511
  %2513 = vmatmul.bf16.gmra.mxu0 %v1194
  %v2514 = vpop.f32.mrf.mxu0
  %v2515 = vadd.f32 %v2346, %v2514
  %v2516 = vpop.f32.mrf.mxu0
  %v2517 = vadd.f32 %v2348, %v2516
  %2518 = vmatmul.bf16.gmra.mxu0 %v1201
  %v2519 = vpop.f32.mrf.mxu0
  %v2520 = vadd.f32 %v2351, %v2519
  %v2521 = vpop.f32.mrf.mxu0
  %v2522 = vadd.f32 %v2353, %v2521
  %2523 = vmatmul.bf16.gmra.mxu0 %v1208
  %v2524 = vpop.f32.mrf.mxu0
  %v2525 = vadd.f32 %v2356, %v2524
  %v2526 = vpop.f32.mrf.mxu0
  %v2527 = vadd.f32 %v2358, %v2526
  %2528 = vmatmul.bf16.gmra.mxu0 %v1215
  %v2529 = vpop.f32.mrf.mxu0
  %v2530 = vadd.f32 %v2361, %v2529
  %v2531 = vpop.f32.mrf.mxu0
  %v2532 = vadd.f32 %v2363, %v2531
  %2533 = vmatmul.bf16.gmra.mxu0 %v1222
  %v2534 = vpop.f32.mrf.mxu0
  %v2535 = vadd.f32 %v2366, %v2534
  %v2536 = vpop.f32.mrf.mxu0
  %v2537 = vadd.f32 %v2368, %v2536
  %2538 = vmatmul.bf16.gmra.mxu0 %v1229
  %v2539 = vpop.f32.mrf.mxu0
  %v2540 = vadd.f32 %v2371, %v2539
  %v2541 = vpop.f32.mrf.mxu0
  %v2542 = vadd.f32 %v2373, %v2541
  %2543 = vmatmul.bf16.gmra.mxu0 %v1236
  %v2544 = vpop.f32.mrf.mxu0
  %v2545 = vadd.f32 %v2376, %v2544
  %v2546 = vpop.f32.mrf.mxu0
  %v2547 = vadd.f32 %v2378, %v2546
  %2548 = vmatmul.bf16.gmra.mxu0 %v1243
  %v2549 = vpop.f32.mrf.mxu0
  %v2550 = vadd.f32 %v2381, %v2549
  %v2551 = vpop.f32.mrf.mxu0
  %v2552 = vadd.f32 %v2383, %v2551
  %2553 = vmatmul.bf16.gmra.mxu0 %v1250
  %v2554 = vpop.f32.mrf.mxu0
  %v2555 = vadd.f32 %v2386, %v2554
  %v2556 = vpop.f32.mrf.mxu0
  %v2557 = vadd.f32 %v2388, %v2556
  %2558 = vmatmul.bf16.gmra.mxu0 %v1257
  %v2559 = vpop.f32.mrf.mxu0
  %v2560 = vadd.f32 %v2391, %v2559
  %v2561 = vpop.f32.mrf.mxu0
  %v2562 = vadd.f32 %v2393, %v2561
  %2563 = vmatmul.bf16.gmra.mxu0 %v1264
  %v2564 = vpop.f32.mrf.mxu0
  %v2565 = vadd.f32 %v2396, %v2564
  %v2566 = vpop.f32.mrf.mxu0
  %v2567 = vadd.f32 %v2398, %v2566
  %2568 = vmatmul.bf16.gmra.mxu0 %v1271
  %v2569 = vpop.f32.mrf.mxu0
  %v2570 = vadd.f32 %v2401, %v2569
  %v2571 = vpop.f32.mrf.mxu0
  %v2572 = vadd.f32 %v2403, %v2571
  %2573 = vmatmul.bf16.gmra.mxu0 %v1278
  %v2574 = vpop.f32.mrf.mxu0
  %v2575 = vadd.f32 %v2406, %v2574
  %v2576 = vpop.f32.mrf.mxu0
  %v2577 = vadd.f32 %v2408, %v2576
  %2578 = vmatmul.bf16.gmra.mxu0 %v1285
  %v2579 = vpop.f32.mrf.mxu0
  %v2580 = vadd.f32 %v2411, %v2579
  %v2581 = vpop.f32.mrf.mxu0
  %v2582 = vadd.f32 %v2413, %v2581
  %2583 = vmatmul.bf16.gmra.mxu0 %v1292
  %v2584 = vpop.f32.mrf.mxu0
  %v2585 = vadd.f32 %v2416, %v2584
  %v2586 = vpop.f32.mrf.mxu0
  %v2587 = vadd.f32 %v2418, %v2586
  %2588 = vmatmul.bf16.gmra.mxu0 %v1299
  %v2589 = vpop.f32.mrf.mxu0
  %v2590 = vadd.f32 %v2421, %v2589
  %v2591 = vpop.f32.mrf.mxu0
  %v2592 = vadd.f32 %v2423, %v2591
  %2593 = vmatmul.bf16.gmra.mxu0 %v1306
  %v2594 = vpop.f32.mrf.mxu0
  %v2595 = vadd.f32 %v2426, %v2594
  %v2596 = vpop.f32.mrf.mxu0
  %v2597 = vadd.f32 %v2428, %v2596
  %2598 = vdwg.mxu0
  %2599 = vmatpush.bf16.msra.mxu0 %v1757
  %2600 = vmatpush.bf16.msra.mxu0 %v1756
  %2601 = vmatpush.bf16.msra.mxu0 %v1755
  %2602 = vmatpush.bf16.msra.mxu0 %v1754
  %2603 = vmatpush.bf16.msra.mxu0 %v1753
  %2604 = vmatpush.bf16.msra.mxu0 %v1752
  %2605 = vmatpush.bf16.msra.mxu0 %v1751
  %2606 = vmatpush.bf16.msra.mxu0 %v1750
  %2607 = vmatmul.bf16.gmra.mxu0 %v1090
  %v2608 = vpop.f32.mrf.mxu0
  %v2609 = vadd.f32 %v2440, %v2608
  %v2610 = vpop.f32.mrf.mxu0
  %v2611 = vadd.f32 %v2442, %v2610
  %2612 = vmatmul.bf16.gmra.mxu0 %v1097
  %v2613 = vpop.f32.mrf.mxu0
  %v2614 = vadd.f32 %v2445, %v2613
  %v2615 = vpop.f32.mrf.mxu0
  %v2616 = vadd.f32 %v2447, %v2615
  %2617 = vmatmul.bf16.gmra.mxu0 %v1104
  %v2618 = vpop.f32.mrf.mxu0
  %v2619 = vadd.f32 %v2450, %v2618
  %v2620 = vpop.f32.mrf.mxu0
  %v2621 = vadd.f32 %v2452, %v2620
  %2622 = vmatmul.bf16.gmra.mxu0 %v1111
  %v2623 = vpop.f32.mrf.mxu0
  %v2624 = vadd.f32 %v2455, %v2623
  %v2625 = vpop.f32.mrf.mxu0
  %v2626 = vadd.f32 %v2457, %v2625
  %2627 = vmatmul.bf16.gmra.mxu0 %v1118
  %v2628 = vpop.f32.mrf.mxu0
  %v2629 = vadd.f32 %v2460, %v2628
  %v2630 = vpop.f32.mrf.mxu0
  %v2631 = vadd.f32 %v2462, %v2630
  %2632 = vmatmul.bf16.gmra.mxu0 %v1125
  %v2633 = vpop.f32.mrf.mxu0
  %v2634 = vadd.f32 %v2465, %v2633
  %v2635 = vpop.f32.mrf.mxu0
  %v2636 = vadd.f32 %v2467, %v2635
  %2637 = vmatmul.bf16.gmra.mxu0 %v1132
  %v2638 = vpop.f32.mrf.mxu0
  %v2639 = vadd.f32 %v2470, %v2638
  %v2640 = vpop.f32.mrf.mxu0
  %v2641 = vadd.f32 %v2472, %v2640
  %2642 = vmatmul.bf16.gmra.mxu0 %v1139
  %v2643 = vpop.f32.mrf.mxu0
  %v2644 = vadd.f32 %v2475, %v2643
  %v2645 = vpop.f32.mrf.mxu0
  %v2646 = vadd.f32 %v2477, %v2645
  %2647 = vmatmul.bf16.gmra.mxu0 %v1146
  %v2648 = vpop.f32.mrf.mxu0
  %v2649 = vadd.f32 %v2480, %v2648
  %v2650 = vpop.f32.mrf.mxu0
  %v2651 = vadd.f32 %v2482, %v2650
  %2652 = vmatmul.bf16.gmra.mxu0 %v1153
  %v2653 = vpop.f32.mrf.mxu0
  %v2654 = vadd.f32 %v2485, %v2653
  %v2655 = vpop.f32.mrf.mxu0
  %v2656 = vadd.f32 %v2487, %v2655
  %2657 = vmatmul.bf16.gmra.mxu0 %v1160
  %v2658 = vpop.f32.mrf.mxu0
  %v2659 = vadd.f32 %v2490, %v2658
  %v2660 = vpop.f32.mrf.mxu0
  %v2661 = vadd.f32 %v2492, %v2660
  %2662 = vmatmul.bf16.gmra.mxu0 %v1167
  %v2663 = vpop.f32.mrf.mxu0
  %v2664 = vadd.f32 %v2495, %v2663
  %v2665 = vpop.f32.mrf.mxu0
  %v2666 = vadd.f32 %v2497, %v2665
  %2667 = vmatmul.bf16.gmra.mxu0 %v1174
  %v2668 = vpop.f32.mrf.mxu0
  %v2669 = vadd.f32 %v2500, %v2668
  %v2670 = vpop.f32.mrf.mxu0
  %v2671 = vadd.f32 %v2502, %v2670
  %2672 = vmatmul.bf16.gmra.mxu0 %v1181
  %v2673 = vpop.f32.mrf.mxu0
  %v2674 = vadd.f32 %v2505, %v2673
  %v2675 = vpop.f32.mrf.mxu0
  %v2676 = vadd.f32 %v2507, %v2675
  %2677 = vmatmul.bf16.gmra.mxu0 %v1188
  %v2678 = vpop.f32.mrf.mxu0
  %v2679 = vadd.f32 %v2510, %v2678
  %v2680 = vpop.f32.mrf.mxu0
  %v2681 = vadd.f32 %v2512, %v2680
  %2682 = vmatmul.bf16.gmra.mxu0 %v1195
  %v2683 = vpop.f32.mrf.mxu0
  %v2684 = vadd.f32 %v2515, %v2683
  %v2685 = vpop.f32.mrf.mxu0
  %v2686 = vadd.f32 %v2517, %v2685
  %2687 = vmatmul.bf16.gmra.mxu0 %v1202
  %v2688 = vpop.f32.mrf.mxu0
  %v2689 = vadd.f32 %v2520, %v2688
  %v2690 = vpop.f32.mrf.mxu0
  %v2691 = vadd.f32 %v2522, %v2690
  %2692 = vmatmul.bf16.gmra.mxu0 %v1209
  %v2693 = vpop.f32.mrf.mxu0
  %v2694 = vadd.f32 %v2525, %v2693
  %v2695 = vpop.f32.mrf.mxu0
  %v2696 = vadd.f32 %v2527, %v2695
  %2697 = vmatmul.bf16.gmra.mxu0 %v1216
  %v2698 = vpop.f32.mrf.mxu0
  %v2699 = vadd.f32 %v2530, %v2698
  %v2700 = vpop.f32.mrf.mxu0
  %v2701 = vadd.f32 %v2532, %v2700
  %2702 = vmatmul.bf16.gmra.mxu0 %v1223
  %v2703 = vpop.f32.mrf.mxu0
  %v2704 = vadd.f32 %v2535, %v2703
  %v2705 = vpop.f32.mrf.mxu0
  %v2706 = vadd.f32 %v2537, %v2705
  %2707 = vmatmul.bf16.gmra.mxu0 %v1230
  %v2708 = vpop.f32.mrf.mxu0
  %v2709 = vadd.f32 %v2540, %v2708
  %v2710 = vpop.f32.mrf.mxu0
  %v2711 = vadd.f32 %v2542, %v2710
  %2712 = vmatmul.bf16.gmra.mxu0 %v1237
  %v2713 = vpop.f32.mrf.mxu0
  %v2714 = vadd.f32 %v2545, %v2713
  %v2715 = vpop.f32.mrf.mxu0
  %v2716 = vadd.f32 %v2547, %v2715
  %2717 = vmatmul.bf16.gmra.mxu0 %v1244
  %v2718 = vpop.f32.mrf.mxu0
  %v2719 = vadd.f32 %v2550, %v2718
  %v2720 = vpop.f32.mrf.mxu0
  %v2721 = vadd.f32 %v2552, %v2720
  %2722 = vmatmul.bf16.gmra.mxu0 %v1251
  %v2723 = vpop.f32.mrf.mxu0
  %v2724 = vadd.f32 %v2555, %v2723
  %v2725 = vpop.f32.mrf.mxu0
  %v2726 = vadd.f32 %v2557, %v2725
  %2727 = vmatmul.bf16.gmra.mxu0 %v1258
  %v2728 = vpop.f32.mrf.mxu0
  %v2729 = vadd.f32 %v2560, %v2728
  %v2730 = vpop.f32.mrf.mxu0
  %v2731 = vadd.f32 %v2562, %v2730
  %2732 = vmatmul.bf16.gmra.mxu0 %v1265
  %v2733 = vpop.f32.mrf.mxu0
  %v2734 = vadd.f32 %v2565, %v2733
  %v2735 = vpop.f32.mrf.mxu0
  %v2736 = vadd.f32 %v2567, %v2735
  %2737 = vmatmul.bf16.gmra.mxu0 %v1272
  %v2738 = vpop.f32.mrf.mxu0
  %v2739 = vadd.f32 %v2570, %v2738
  %v2740 = vpop.f32.mrf.mxu0
  %v2741 = vadd.f32 %v2572, %v2740
  %2742 = vmatmul.bf16.gmra.mxu0 %v1279
  %v2743 = vpop.f32.mrf.mxu0
  %v2744 = vadd.f32 %v2575, %v2743
  %v2745 = vpop.f32.mrf.mxu0
  %v2746 = vadd.f32 %v2577, %v2745
  %2747 = vmatmul.bf16.gmra.mxu0 %v1286
  %v2748 = vpop.f32.mrf.mxu0
  %v2749 = vadd.f32 %v2580, %v2748
  %v2750 = vpop.f32.mrf.mxu0
  %v2751 = vadd.f32 %v2582, %v2750
  %2752 = vmatmul.bf16.gmra.mxu0 %v1293
  %v2753 = vpop.f32.mrf.mxu0
  %v2754 = vadd.f32 %v2585, %v2753
  %v2755 = vpop.f32.mrf.mxu0
  %v2756 = vadd.f32 %v2587, %v2755
  %2757 = vmatmul.bf16.gmra.mxu0 %v1300
  %v2758 = vpop.f32.mrf.mxu0
  %v2759 = vadd.f32 %v2590, %v2758
  %v2760 = vpop.f32.mrf.mxu0
  %v2761 = vadd.f32 %v2592, %v2760
  %2762 = vmatmul.bf16.gmra.mxu0 %v1307
  %v2763 = vpop.f32.mrf.mxu0
  %v2764 = vadd.f32 %v2595, %v2763
  %v2765 = vpop.f32.mrf.mxu0
  %v2766 = vadd.f32 %v2597, %v2765
  %2767 = vdwg.mxu0
  %2768 = vmatpush.bf16.msra.mxu0 %v1765
  %2769 = vmatpush.bf16.msra.mxu0 %v1764
  %2770 = vmatpush.bf16.msra.mxu0 %v1763
  %2771 = vmatpush.bf16.msra.mxu0 %v1762
  %2772 = vmatpush.bf16.msra.mxu0 %v1761
  %2773 = vmatpush.bf16.msra.mxu0 %v1760
  %2774 = vmatpush.bf16.msra.mxu0 %v1759
  %2775 = vmatpush.bf16.msra.mxu0 %v1758
  %2776 = vmatmul.bf16.gmra.mxu0 %v1091
  %v2777 = vpop.f32.mrf.mxu0
  %v2778 = vadd.f32 %v2609, %v2777
  %v2779 = vpop.f32.mrf.mxu0
  %v2780 = vadd.f32 %v2611, %v2779
  %2781 = vmatmul.bf16.gmra.mxu0 %v1098
  %v2782 = vpop.f32.mrf.mxu0
  %v2783 = vadd.f32 %v2614, %v2782
  %v2784 = vpop.f32.mrf.mxu0
  %v2785 = vadd.f32 %v2616, %v2784
  %2786 = vmatmul.bf16.gmra.mxu0 %v1105
  %v2787 = vpop.f32.mrf.mxu0
  %v2788 = vadd.f32 %v2619, %v2787
  %v2789 = vpop.f32.mrf.mxu0
  %v2790 = vadd.f32 %v2621, %v2789
  %2791 = vmatmul.bf16.gmra.mxu0 %v1112
  %v2792 = vpop.f32.mrf.mxu0
  %v2793 = vadd.f32 %v2624, %v2792
  %v2794 = vpop.f32.mrf.mxu0
  %v2795 = vadd.f32 %v2626, %v2794
  %2796 = vmatmul.bf16.gmra.mxu0 %v1119
  %v2797 = vpop.f32.mrf.mxu0
  %v2798 = vadd.f32 %v2629, %v2797
  %v2799 = vpop.f32.mrf.mxu0
  %v2800 = vadd.f32 %v2631, %v2799
  %2801 = vmatmul.bf16.gmra.mxu0 %v1126
  %v2802 = vpop.f32.mrf.mxu0
  %v2803 = vadd.f32 %v2634, %v2802
  %v2804 = vpop.f32.mrf.mxu0
  %v2805 = vadd.f32 %v2636, %v2804
  %2806 = vmatmul.bf16.gmra.mxu0 %v1133
  %v2807 = vpop.f32.mrf.mxu0
  %v2808 = vadd.f32 %v2639, %v2807
  %v2809 = vpop.f32.mrf.mxu0
  %v2810 = vadd.f32 %v2641, %v2809
  %2811 = vmatmul.bf16.gmra.mxu0 %v1140
  %v2812 = vpop.f32.mrf.mxu0
  %v2813 = vadd.f32 %v2644, %v2812
  %v2814 = vpop.f32.mrf.mxu0
  %v2815 = vadd.f32 %v2646, %v2814
  %2816 = vmatmul.bf16.gmra.mxu0 %v1147
  %v2817 = vpop.f32.mrf.mxu0
  %v2818 = vadd.f32 %v2649, %v2817
  %v2819 = vpop.f32.mrf.mxu0
  %v2820 = vadd.f32 %v2651, %v2819
  %2821 = vmatmul.bf16.gmra.mxu0 %v1154
  %v2822 = vpop.f32.mrf.mxu0
  %v2823 = vadd.f32 %v2654, %v2822
  %v2824 = vpop.f32.mrf.mxu0
  %v2825 = vadd.f32 %v2656, %v2824
  %2826 = vmatmul.bf16.gmra.mxu0 %v1161
  %v2827 = vpop.f32.mrf.mxu0
  %v2828 = vadd.f32 %v2659, %v2827
  %v2829 = vpop.f32.mrf.mxu0
  %v2830 = vadd.f32 %v2661, %v2829
  %2831 = vmatmul.bf16.gmra.mxu0 %v1168
  %v2832 = vpop.f32.mrf.mxu0
  %v2833 = vadd.f32 %v2664, %v2832
  %v2834 = vpop.f32.mrf.mxu0
  %v2835 = vadd.f32 %v2666, %v2834
  %2836 = vmatmul.bf16.gmra.mxu0 %v1175
  %v2837 = vpop.f32.mrf.mxu0
  %v2838 = vadd.f32 %v2669, %v2837
  %v2839 = vpop.f32.mrf.mxu0
  %v2840 = vadd.f32 %v2671, %v2839
  %2841 = vmatmul.bf16.gmra.mxu0 %v1182
  %v2842 = vpop.f32.mrf.mxu0
  %v2843 = vadd.f32 %v2674, %v2842
  %v2844 = vpop.f32.mrf.mxu0
  %v2845 = vadd.f32 %v2676, %v2844
  %2846 = vmatmul.bf16.gmra.mxu0 %v1189
  %v2847 = vpop.f32.mrf.mxu0
  %v2848 = vadd.f32 %v2679, %v2847
  %v2849 = vpop.f32.mrf.mxu0
  %v2850 = vadd.f32 %v2681, %v2849
  %2851 = vmatmul.bf16.gmra.mxu0 %v1196
  %v2852 = vpop.f32.mrf.mxu0
  %v2853 = vadd.f32 %v2684, %v2852
  %v2854 = vpop.f32.mrf.mxu0
  %v2855 = vadd.f32 %v2686, %v2854
  %2856 = vmatmul.bf16.gmra.mxu0 %v1203
  %v2857 = vpop.f32.mrf.mxu0
  %v2858 = vadd.f32 %v2689, %v2857
  %v2859 = vpop.f32.mrf.mxu0
  %v2860 = vadd.f32 %v2691, %v2859
  %2861 = vmatmul.bf16.gmra.mxu0 %v1210
  %v2862 = vpop.f32.mrf.mxu0
  %v2863 = vadd.f32 %v2694, %v2862
  %v2864 = vpop.f32.mrf.mxu0
  %v2865 = vadd.f32 %v2696, %v2864
  %2866 = vmatmul.bf16.gmra.mxu0 %v1217
  %v2867 = vpop.f32.mrf.mxu0
  %v2868 = vadd.f32 %v2699, %v2867
  %v2869 = vpop.f32.mrf.mxu0
  %v2870 = vadd.f32 %v2701, %v2869
  %2871 = vmatmul.bf16.gmra.mxu0 %v1224
  %v2872 = vpop.f32.mrf.mxu0
  %v2873 = vadd.f32 %v2704, %v2872
  %v2874 = vpop.f32.mrf.mxu0
  %v2875 = vadd.f32 %v2706, %v2874
  %2876 = vmatmul.bf16.gmra.mxu0 %v1231
  %v2877 = vpop.f32.mrf.mxu0
  %v2878 = vadd.f32 %v2709, %v2877
  %v2879 = vpop.f32.mrf.mxu0
  %v2880 = vadd.f32 %v2711, %v2879
  %2881 = vmatmul.bf16.gmra.mxu0 %v1238
  %v2882 = vpop.f32.mrf.mxu0
  %v2883 = vadd.f32 %v2714, %v2882
  %v2884 = vpop.f32.mrf.mxu0
  %v2885 = vadd.f32 %v2716, %v2884
  %2886 = vmatmul.bf16.gmra.mxu0 %v1245
  %v2887 = vpop.f32.mrf.mxu0
  %v2888 = vadd.f32 %v2719, %v2887
  %v2889 = vpop.f32.mrf.mxu0
  %v2890 = vadd.f32 %v2721, %v2889
  %2891 = vmatmul.bf16.gmra.mxu0 %v1252
  %v2892 = vpop.f32.mrf.mxu0
  %v2893 = vadd.f32 %v2724, %v2892
  %v2894 = vpop.f32.mrf.mxu0
  %v2895 = vadd.f32 %v2726, %v2894
  %2896 = vmatmul.bf16.gmra.mxu0 %v1259
  %v2897 = vpop.f32.mrf.mxu0
  %v2898 = vadd.f32 %v2729, %v2897
  %v2899 = vpop.f32.mrf.mxu0
  %v2900 = vadd.f32 %v2731, %v2899
  %2901 = vmatmul.bf16.gmra.mxu0 %v1266
  %v2902 = vpop.f32.mrf.mxu0
  %v2903 = vadd.f32 %v2734, %v2902
  %v2904 = vpop.f32.mrf.mxu0
  %v2905 = vadd.f32 %v2736, %v2904
  %2906 = vmatmul.bf16.gmra.mxu0 %v1273
  %v2907 = vpop.f32.mrf.mxu0
  %v2908 = vadd.f32 %v2739, %v2907
  %v2909 = vpop.f32.mrf.mxu0
  %v2910 = vadd.f32 %v2741, %v2909
  %2911 = vmatmul.bf16.gmra.mxu0 %v1280
  %v2912 = vpop.f32.mrf.mxu0
  %v2913 = vadd.f32 %v2744, %v2912
  %v2914 = vpop.f32.mrf.mxu0
  %v2915 = vadd.f32 %v2746, %v2914
  %2916 = vmatmul.bf16.gmra.mxu0 %v1287
  %v2917 = vpop.f32.mrf.mxu0
  %v2918 = vadd.f32 %v2749, %v2917
  %v2919 = vpop.f32.mrf.mxu0
  %v2920 = vadd.f32 %v2751, %v2919
  %2921 = vmatmul.bf16.gmra.mxu0 %v1294
  %v2922 = vpop.f32.mrf.mxu0
  %v2923 = vadd.f32 %v2754, %v2922
  %v2924 = vpop.f32.mrf.mxu0
  %v2925 = vadd.f32 %v2756, %v2924
  %2926 = vmatmul.bf16.gmra.mxu0 %v1301
  %v2927 = vpop.f32.mrf.mxu0
  %v2928 = vadd.f32 %v2759, %v2927
  %v2929 = vpop.f32.mrf.mxu0
  %v2930 = vadd.f32 %v2761, %v2929
  %2931 = vmatmul.bf16.gmra.mxu0 %v1308
  %v2932 = vpop.f32.mrf.mxu0
  %v2933 = vadd.f32 %v2764, %v2932
  %v2934 = vpop.f32.mrf.mxu0
  %v2935 = vadd.f32 %v2766, %v2934
  %2936 = vdwg.mxu0
  %2937 = vmatpush.bf16.msra.mxu0 0
  %2938 = vmatpush.bf16.msra.mxu0 0
  %2939 = vmatpush.bf16.msra.mxu0 %v1771
  %2940 = vmatpush.bf16.msra.mxu0 %v1770
  %2941 = vmatpush.bf16.msra.mxu0 %v1769
  %2942 = vmatpush.bf16.msra.mxu0 %v1768
  %2943 = vmatpush.bf16.msra.mxu0 %v1767
  %2944 = vmatpush.bf16.msra.mxu0 %v1766
  %2945 = vmatmul.bf16.gmra.mxu0 %v1828
  %v2946 = vpop.f32.mrf.mxu0
  %v2947 = vadd.f32 %v2778, %v2946
  %v2948 = vpop.f32.mrf.mxu0
  %v2949 = vadd.f32 %v2780, %v2948
  %2950 = vmatmul.bf16.gmra.mxu0 %v1831
  %v2951 = vpop.f32.mrf.mxu0
  %v2952 = vadd.f32 %v2783, %v2951
  %v2953 = vpop.f32.mrf.mxu0
  %v2954 = vadd.f32 %v2785, %v2953
  %2955 = vmatmul.bf16.gmra.mxu0 %v1834
  %v2956 = vpop.f32.mrf.mxu0
  %v2957 = vadd.f32 %v2788, %v2956
  %v2958 = vpop.f32.mrf.mxu0
  %v2959 = vadd.f32 %v2790, %v2958
  %2960 = vmatmul.bf16.gmra.mxu0 %v1837
  %v2961 = vpop.f32.mrf.mxu0
  %v2962 = vadd.f32 %v2793, %v2961
  %v2963 = vpop.f32.mrf.mxu0
  %v2964 = vadd.f32 %v2795, %v2963
  %2965 = vmatmul.bf16.gmra.mxu0 %v1840
  %v2966 = vpop.f32.mrf.mxu0
  %v2967 = vadd.f32 %v2798, %v2966
  %v2968 = vpop.f32.mrf.mxu0
  %v2969 = vadd.f32 %v2800, %v2968
  %2970 = vmatmul.bf16.gmra.mxu0 %v1843
  %v2971 = vpop.f32.mrf.mxu0
  %v2972 = vadd.f32 %v2803, %v2971
  %v2973 = vpop.f32.mrf.mxu0
  %v2974 = vadd.f32 %v2805, %v2973
  %2975 = vmatmul.bf16.gmra.mxu0 %v1846
  %v2976 = vpop.f32.mrf.mxu0
  %v2977 = vadd.f32 %v2808, %v2976
  %v2978 = vpop.f32.mrf.mxu0
  %v2979 = vadd.f32 %v2810, %v2978
  %2980 = vmatmul.bf16.gmra.mxu0 %v1849
  %v2981 = vpop.f32.mrf.mxu0
  %v2982 = vadd.f32 %v2813, %v2981
  %v2983 = vpop.f32.mrf.mxu0
  %v2984 = vadd.f32 %v2815, %v2983
  %2985 = vmatmul.bf16.gmra.mxu0 %v1852
  %v2986 = vpop.f32.mrf.mxu0
  %v2987 = vadd.f32 %v2818, %v2986
  %v2988 = vpop.f32.mrf.mxu0
  %v2989 = vadd.f32 %v2820, %v2988
  %2990 = vmatmul.bf16.gmra.mxu0 %v1855
  %v2991 = vpop.f32.mrf.mxu0
  %v2992 = vadd.f32 %v2823, %v2991
  %v2993 = vpop.f32.mrf.mxu0
  %v2994 = vadd.f32 %v2825, %v2993
  %2995 = vmatmul.bf16.gmra.mxu0 %v1858
  %v2996 = vpop.f32.mrf.mxu0
  %v2997 = vadd.f32 %v2828, %v2996
  %v2998 = vpop.f32.mrf.mxu0
  %v2999 = vadd.f32 %v2830, %v2998
  %3000 = vmatmul.bf16.gmra.mxu0 %v1861
  %v3001 = vpop.f32.mrf.mxu0
  %v3002 = vadd.f32 %v2833, %v3001
  %v3003 = vpop.f32.mrf.mxu0
  %v3004 = vadd.f32 %v2835, %v3003
  %3005 = vmatmul.bf16.gmra.mxu0 %v1864
  %v3006 = vpop.f32.mrf.mxu0
  %v3007 = vadd.f32 %v2838, %v3006
  %v3008 = vpop.f32.mrf.mxu0
  %v3009 = vadd.f32 %v2840, %v3008
  %3010 = vmatmul.bf16.gmra.mxu0 %v1867
  %v3011 = vpop.f32.mrf.mxu0
  %v3012 = vadd.f32 %v2843, %v3011
  %v3013 = vpop.f32.mrf.mxu0
  %v3014 = vadd.f32 %v2845, %v3013
  %3015 = vmatmul.bf16.gmra.mxu0 %v1870
  %v3016 = vpop.f32.mrf.mxu0
  %v3017 = vadd.f32 %v2848, %v3016
  %v3018 = vpop.f32.mrf.mxu0
  %v3019 = vadd.f32 %v2850, %v3018
  %3020 = vmatmul.bf16.gmra.mxu0 %v1873
  %v3021 = vpop.f32.mrf.mxu0
  %v3022 = vadd.f32 %v2853, %v3021
  %v3023 = vpop.f32.mrf.mxu0
  %v3024 = vadd.f32 %v2855, %v3023
  %3025 = vmatmul.bf16.gmra.mxu0 %v1876
  %v3026 = vpop.f32.mrf.mxu0
  %v3027 = vadd.f32 %v2858, %v3026
  %v3028 = vpop.f32.mrf.mxu0
  %v3029 = vadd.f32 %v2860, %v3028
  %3030 = vmatmul.bf16.gmra.mxu0 %v1879
  %v3031 = vpop.f32.mrf.mxu0
  %v3032 = vadd.f32 %v2863, %v3031
  %v3033 = vpop.f32.mrf.mxu0
  %v3034 = vadd.f32 %v2865, %v3033
  %3035 = vmatmul.bf16.gmra.mxu0 %v1882
  %v3036 = vpop.f32.mrf.mxu0
  %v3037 = vadd.f32 %v2868, %v3036
  %v3038 = vpop.f32.mrf.mxu0
  %v3039 = vadd.f32 %v2870, %v3038
  %3040 = vmatmul.bf16.gmra.mxu0 %v1885
  %v3041 = vpop.f32.mrf.mxu0
  %v3042 = vadd.f32 %v2873, %v3041
  %v3043 = vpop.f32.mrf.mxu0
  %v3044 = vadd.f32 %v2875, %v3043
  %3045 = vmatmul.bf16.gmra.mxu0 %v1888
  %v3046 = vpop.f32.mrf.mxu0
  %v3047 = vadd.f32 %v2878, %v3046
  %v3048 = vpop.f32.mrf.mxu0
  %v3049 = vadd.f32 %v2880, %v3048
  %3050 = vmatmul.bf16.gmra.mxu0 %v1891
  %v3051 = vpop.f32.mrf.mxu0
  %v3052 = vadd.f32 %v2883, %v3051
  %v3053 = vpop.f32.mrf.mxu0
  %v3054 = vadd.f32 %v2885, %v3053
  %3055 = vmatmul.bf16.gmra.mxu0 %v1894
  %v3056 = vpop.f32.mrf.mxu0
  %v3057 = vadd.f32 %v2888, %v3056
  %v3058 = vpop.f32.mrf.mxu0
  %v3059 = vadd.f32 %v2890, %v3058
  %3060 = vmatmul.bf16.gmra.mxu0 %v1897
  %v3061 = vpop.f32.mrf.mxu0
  %v3062 = vadd.f32 %v2893, %v3061
  %v3063 = vpop.f32.mrf.mxu0
  %v3064 = vadd.f32 %v2895, %v3063
  %3065 = vmatmul.bf16.gmra.mxu0 %v1900
  %v3066 = vpop.f32.mrf.mxu0
  %v3067 = vadd.f32 %v2898, %v3066
  %v3068 = vpop.f32.mrf.mxu0
  %v3069 = vadd.f32 %v2900, %v3068
  %3070 = vmatmul.bf16.gmra.mxu0 %v1903
  %v3071 = vpop.f32.mrf.mxu0
  %v3072 = vadd.f32 %v2903, %v3071
  %v3073 = vpop.f32.mrf.mxu0
  %v3074 = vadd.f32 %v2905, %v3073
  %3075 = vmatmul.bf16.gmra.mxu0 %v1906
  %v3076 = vpop.f32.mrf.mxu0
  %v3077 = vadd.f32 %v2908, %v3076
  %v3078 = vpop.f32.mrf.mxu0
  %v3079 = vadd.f32 %v2910, %v3078
  %3080 = vmatmul.bf16.gmra.mxu0 %v1909
  %v3081 = vpop.f32.mrf.mxu0
  %v3082 = vadd.f32 %v2913, %v3081
  %v3083 = vpop.f32.mrf.mxu0
  %v3084 = vadd.f32 %v2915, %v3083
  %3085 = vmatmul.bf16.gmra.mxu0 %v1912
  %v3086 = vpop.f32.mrf.mxu0
  %v3087 = vadd.f32 %v2918, %v3086
  %v3088 = vpop.f32.mrf.mxu0
  %v3089 = vadd.f32 %v2920, %v3088
  %3090 = vmatmul.bf16.gmra.mxu0 %v1915
  %v3091 = vpop.f32.mrf.mxu0
  %v3092 = vadd.f32 %v2923, %v3091
  %v3093 = vpop.f32.mrf.mxu0
  %v3094 = vadd.f32 %v2925, %v3093
  %3095 = vmatmul.bf16.gmra.mxu0 %v1918
  %v3096 = vpop.f32.mrf.mxu0
  %v3097 = vadd.f32 %v2928, %v3096
  %v3098 = vpop.f32.mrf.mxu0
  %v3099 = vadd.f32 %v2930, %v3098
  %3100 = vmatmul.bf16.gmra.mxu0 %v1921
  %v3101 = vpop.f32.mrf.mxu0
  %v3102 = vadd.f32 %v2933, %v3101
  %v3103 = vpop.f32.mrf.mxu0
  %v3104 = vadd.f32 %v2935, %v3103
  %3105 = vdwg.mxu0
  %v3106 = vsel %vm1826, %v2947, 0.0
  %v3107 = vsel %vm1826, %v2949, 0.0
  %v3108 = vadd.f32 %v3106, %v3107
  %v3109 = vsel %vm1826, %v2952, 0.0
  %v3110 = vadd.f32 %v3108, %v3109
  %v3111 = vsel %vm1826, %v2954, 0.0
  %v3112 = vadd.f32 %v3110, %v3111
  %v3113 = vsel %vm1826, %v2957, 0.0
  %v3114 = vadd.f32 %v3112, %v3113
  %v3115 = vsel %vm1826, %v2959, 0.0
  %v3116 = vadd.f32 %v3114, %v3115
  %v3117 = vsel %vm1826, %v2962, 0.0
  %v3118 = vadd.f32 %v3116, %v3117
  %v3119 = vsel %vm1826, %v2964, 0.0
  %v3120 = vadd.f32 %v3118, %v3119
  %v3121 = vsel %vm1826, %v2967, 0.0
  %v3122 = vadd.f32 %v3120, %v3121
  %v3123 = vsel %vm1826, %v2969, 0.0
  %v3124 = vadd.f32 %v3122, %v3123
  %v3125 = vsel %vm1826, %v2972, 0.0
  %v3126 = vadd.f32 %v3124, %v3125
  %v3127 = vsel %vm1826, %v2974, 0.0
  %v3128 = vadd.f32 %v3126, %v3127
  %v3129 = vsel %vm1826, %v2977, 0.0
  %v3130 = vadd.f32 %v3128, %v3129
  %v3131 = vsel %vm1826, %v2979, 0.0
  %v3132 = vadd.f32 %v3130, %v3131
  %v3133 = vsel %vm1826, %v2982, 0.0
  %v3134 = vadd.f32 %v3132, %v3133
  %v3135 = vsel %vm1826, %v2984, 0.0
  %v3136 = vadd.f32 %v3134, %v3135
  %v3137 = vsel %vm1826, %v2987, 0.0
  %v3138 = vadd.f32 %v3136, %v3137
  %v3139 = vsel %vm1826, %v2989, 0.0
  %v3140 = vadd.f32 %v3138, %v3139
  %v3141 = vsel %vm1826, %v2992, 0.0
  %v3142 = vadd.f32 %v3140, %v3141
  %v3143 = vsel %vm1826, %v2994, 0.0
  %v3144 = vadd.f32 %v3142, %v3143
  %v3145 = vsel %vm1826, %v2997, 0.0
  %v3146 = vadd.f32 %v3144, %v3145
  %v3147 = vsel %vm1826, %v2999, 0.0
  %v3148 = vadd.f32 %v3146, %v3147
  %v3149 = vsel %vm1826, %v3002, 0.0
  %v3150 = vadd.f32 %v3148, %v3149
  %v3151 = vsel %vm1826, %v3004, 0.0
  %v3152 = vadd.f32 %v3150, %v3151
  %v3153 = vsel %vm1826, %v3007, 0.0
  %v3154 = vadd.f32 %v3152, %v3153
  %v3155 = vsel %vm1826, %v3009, 0.0
  %v3156 = vadd.f32 %v3154, %v3155
  %v3157 = vsel %vm1826, %v3012, 0.0
  %v3158 = vadd.f32 %v3156, %v3157
  %v3159 = vsel %vm1826, %v3014, 0.0
  %v3160 = vadd.f32 %v3158, %v3159
  %v3161 = vsel %vm1826, %v3017, 0.0
  %v3162 = vadd.f32 %v3160, %v3161
  %v3163 = vsel %vm1826, %v3019, 0.0
  %v3164 = vadd.f32 %v3162, %v3163
  %v3165 = vsel %vm1826, %v3022, 0.0
  %v3166 = vadd.f32 %v3164, %v3165
  %v3167 = vsel %vm1826, %v3024, 0.0
  %v3168 = vadd.f32 %v3166, %v3167
  %v3169 = vsel %vm1826, %v3027, 0.0
  %v3170 = vadd.f32 %v3168, %v3169
  %v3171 = vsel %vm1826, %v3029, 0.0
  %v3172 = vadd.f32 %v3170, %v3171
  %v3173 = vsel %vm1826, %v3032, 0.0
  %v3174 = vadd.f32 %v3172, %v3173
  %v3175 = vsel %vm1826, %v3034, 0.0
  %v3176 = vadd.f32 %v3174, %v3175
  %v3177 = vsel %vm1826, %v3037, 0.0
  %v3178 = vadd.f32 %v3176, %v3177
  %v3179 = vsel %vm1826, %v3039, 0.0
  %v3180 = vadd.f32 %v3178, %v3179
  %v3181 = vsel %vm1826, %v3042, 0.0
  %v3182 = vadd.f32 %v3180, %v3181
  %v3183 = vsel %vm1826, %v3044, 0.0
  %v3184 = vadd.f32 %v3182, %v3183
  %v3185 = vsel %vm1826, %v3047, 0.0
  %v3186 = vadd.f32 %v3184, %v3185
  %v3187 = vsel %vm1826, %v3049, 0.0
  %v3188 = vadd.f32 %v3186, %v3187
  %v3189 = vsel %vm1826, %v3052, 0.0
  %v3190 = vadd.f32 %v3188, %v3189
  %v3191 = vsel %vm1826, %v3054, 0.0
  %v3192 = vadd.f32 %v3190, %v3191
  %v3193 = vsel %vm1826, %v3057, 0.0
  %v3194 = vadd.f32 %v3192, %v3193
  %v3195 = vsel %vm1826, %v3059, 0.0
  %v3196 = vadd.f32 %v3194, %v3195
  %v3197 = vsel %vm1826, %v3062, 0.0
  %v3198 = vadd.f32 %v3196, %v3197
  %v3199 = vsel %vm1826, %v3064, 0.0
  %v3200 = vadd.f32 %v3198, %v3199
  %v3201 = vsel %vm1826, %v3067, 0.0
  %v3202 = vadd.f32 %v3200, %v3201
  %v3203 = vsel %vm1826, %v3069, 0.0
  %v3204 = vadd.f32 %v3202, %v3203
  %v3205 = vsel %vm1826, %v3072, 0.0
  %v3206 = vadd.f32 %v3204, %v3205
  %v3207 = vsel %vm1826, %v3074, 0.0
  %v3208 = vadd.f32 %v3206, %v3207
  %v3209 = vsel %vm1826, %v3077, 0.0
  %v3210 = vadd.f32 %v3208, %v3209
  %v3211 = vsel %vm1826, %v3079, 0.0
  %v3212 = vadd.f32 %v3210, %v3211
  %v3213 = vsel %vm1826, %v3082, 0.0
  %v3214 = vadd.f32 %v3212, %v3213
  %v3215 = vsel %vm1826, %v3084, 0.0
  %v3216 = vadd.f32 %v3214, %v3215
  %v3217 = vsel %vm1826, %v3087, 0.0
  %v3218 = vadd.f32 %v3216, %v3217
  %v3219 = vsel %vm1826, %v3089, 0.0
  %v3220 = vadd.f32 %v3218, %v3219
  %v3221 = vsel %vm1826, %v3092, 0.0
  %v3222 = vadd.f32 %v3220, %v3221
  %v3223 = vsel %vm1826, %v3094, 0.0
  %v3224 = vadd.f32 %v3222, %v3223
  %v3225 = vsel %vm1826, %v3097, 0.0
  %v3226 = vadd.f32 %v3224, %v3225
  %v3227 = vsel %vm1826, %v3099, 0.0
  %v3228 = vadd.f32 %v3226, %v3227
  %v3229 = vsel %vm1826, %v3102, 0.0
  %v3230 = vadd.f32 %v3228, %v3229
  %v3231 = vsel %vm1826, %v3104, 0.0
  %v3232 = vadd.f32 %v3230, %v3231
  %v3233 = vrot.slane %v3232, 4
  %v3234 = vadd.f32 %v3232, %v3233
  %v3235 = vrot.slane %v3234, 2
  %v3236 = vadd.f32 %v3234, %v3235
  %v3237 = vrot.slane %v3236, 1
  %v3238 = vadd.f32 %v3236, %v3237
  %v3239 = vmul.f32 %v3238, 0.001953125
  %v3240 = vsub.f32 %v2947, %v3239
  %v3241 = vsub.f32 %v2949, %v3239
  %v3242 = vsub.f32 %v2952, %v3239
  %v3243 = vsub.f32 %v2954, %v3239
  %v3244 = vsub.f32 %v2957, %v3239
  %v3245 = vsub.f32 %v2959, %v3239
  %v3246 = vsub.f32 %v2962, %v3239
  %v3247 = vsub.f32 %v2964, %v3239
  %v3248 = vsub.f32 %v2967, %v3239
  %v3249 = vsub.f32 %v2969, %v3239
  %v3250 = vsub.f32 %v2972, %v3239
  %v3251 = vsub.f32 %v2974, %v3239
  %v3252 = vsub.f32 %v2977, %v3239
  %v3253 = vsub.f32 %v2979, %v3239
  %v3254 = vsub.f32 %v2982, %v3239
  %v3255 = vsub.f32 %v2984, %v3239
  %v3256 = vsub.f32 %v2987, %v3239
  %v3257 = vsub.f32 %v2989, %v3239
  %v3258 = vsub.f32 %v2992, %v3239
  %v3259 = vsub.f32 %v2994, %v3239
  %v3260 = vsub.f32 %v2997, %v3239
  %v3261 = vsub.f32 %v2999, %v3239
  %v3262 = vsub.f32 %v3002, %v3239
  %v3263 = vsub.f32 %v3004, %v3239
  %v3264 = vsub.f32 %v3007, %v3239
  %v3265 = vsub.f32 %v3009, %v3239
  %v3266 = vsub.f32 %v3012, %v3239
  %v3267 = vsub.f32 %v3014, %v3239
  %v3268 = vsub.f32 %v3017, %v3239
  %v3269 = vsub.f32 %v3019, %v3239
  %v3270 = vsub.f32 %v3022, %v3239
  %v3271 = vsub.f32 %v3024, %v3239
  %v3272 = vsub.f32 %v3027, %v3239
  %v3273 = vsub.f32 %v3029, %v3239
  %v3274 = vsub.f32 %v3032, %v3239
  %v3275 = vsub.f32 %v3034, %v3239
  %v3276 = vsub.f32 %v3037, %v3239
  %v3277 = vsub.f32 %v3039, %v3239
  %v3278 = vsub.f32 %v3042, %v3239
  %v3279 = vsub.f32 %v3044, %v3239
  %v3280 = vsub.f32 %v3047, %v3239
  %v3281 = vsub.f32 %v3049, %v3239
  %v3282 = vsub.f32 %v3052, %v3239
  %v3283 = vsub.f32 %v3054, %v3239
  %v3284 = vsub.f32 %v3057, %v3239
  %v3285 = vsub.f32 %v3059, %v3239
  %v3286 = vsub.f32 %v3062, %v3239
  %v3287 = vsub.f32 %v3064, %v3239
  %v3288 = vsub.f32 %v3067, %v3239
  %v3289 = vsub.f32 %v3069, %v3239
  %v3290 = vsub.f32 %v3072, %v3239
  %v3291 = vsub.f32 %v3074, %v3239
  %v3292 = vsub.f32 %v3077, %v3239
  %v3293 = vsub.f32 %v3079, %v3239
  %v3294 = vsub.f32 %v3082, %v3239
  %v3295 = vsub.f32 %v3084, %v3239
  %v3296 = vsub.f32 %v3087, %v3239
  %v3297 = vsub.f32 %v3089, %v3239
  %v3298 = vsub.f32 %v3092, %v3239
  %v3299 = vsub.f32 %v3094, %v3239
  %v3300 = vsub.f32 %v3097, %v3239
  %v3301 = vsub.f32 %v3099, %v3239
  %v3302 = vsub.f32 %v3102, %v3239
  %v3303 = vsub.f32 %v3104, %v3239
  %v3304 = vmul.f32 %v3240, %v3240
  %v3305 = vmul.f32 %v3241, %v3241
  %v3306 = vmul.f32 %v3242, %v3242
  %v3307 = vmul.f32 %v3243, %v3243
  %v3308 = vmul.f32 %v3244, %v3244
  %v3309 = vmul.f32 %v3245, %v3245
  %v3310 = vmul.f32 %v3246, %v3246
  %v3311 = vmul.f32 %v3247, %v3247
  %v3312 = vmul.f32 %v3248, %v3248
  %v3313 = vmul.f32 %v3249, %v3249
  %v3314 = vmul.f32 %v3250, %v3250
  %v3315 = vmul.f32 %v3251, %v3251
  %v3316 = vmul.f32 %v3252, %v3252
  %v3317 = vmul.f32 %v3253, %v3253
  %v3318 = vmul.f32 %v3254, %v3254
  %v3319 = vmul.f32 %v3255, %v3255
  %v3320 = vmul.f32 %v3256, %v3256
  %v3321 = vmul.f32 %v3257, %v3257
  %v3322 = vmul.f32 %v3258, %v3258
  %v3323 = vmul.f32 %v3259, %v3259
  %v3324 = vmul.f32 %v3260, %v3260
  %v3325 = vmul.f32 %v3261, %v3261
  %v3326 = vmul.f32 %v3262, %v3262
  %v3327 = vmul.f32 %v3263, %v3263
  %v3328 = vmul.f32 %v3264, %v3264
  %v3329 = vmul.f32 %v3265, %v3265
  %v3330 = vmul.f32 %v3266, %v3266
  %v3331 = vmul.f32 %v3267, %v3267
  %v3332 = vmul.f32 %v3268, %v3268
  %v3333 = vmul.f32 %v3269, %v3269
  %v3334 = vmul.f32 %v3270, %v3270
  %v3335 = vmul.f32 %v3271, %v3271
  %v3336 = vmul.f32 %v3272, %v3272
  %v3337 = vmul.f32 %v3273, %v3273
  %v3338 = vmul.f32 %v3274, %v3274
  %v3339 = vmul.f32 %v3275, %v3275
  %v3340 = vmul.f32 %v3276, %v3276
  %v3341 = vmul.f32 %v3277, %v3277
  %v3342 = vmul.f32 %v3278, %v3278
  %v3343 = vmul.f32 %v3279, %v3279
  %v3344 = vmul.f32 %v3280, %v3280
  %v3345 = vmul.f32 %v3281, %v3281
  %v3346 = vmul.f32 %v3282, %v3282
  %v3347 = vmul.f32 %v3283, %v3283
  %v3348 = vmul.f32 %v3284, %v3284
  %v3349 = vmul.f32 %v3285, %v3285
  %v3350 = vmul.f32 %v3286, %v3286
  %v3351 = vmul.f32 %v3287, %v3287
  %v3352 = vmul.f32 %v3288, %v3288
  %v3353 = vmul.f32 %v3289, %v3289
  %v3354 = vmul.f32 %v3290, %v3290
  %v3355 = vmul.f32 %v3291, %v3291
  %v3356 = vmul.f32 %v3292, %v3292
  %v3357 = vmul.f32 %v3293, %v3293
  %v3358 = vmul.f32 %v3294, %v3294
  %v3359 = vmul.f32 %v3295, %v3295
  %v3360 = vmul.f32 %v3296, %v3296
  %v3361 = vmul.f32 %v3297, %v3297
  %v3362 = vmul.f32 %v3298, %v3298
  %v3363 = vmul.f32 %v3299, %v3299
  %v3364 = vmul.f32 %v3300, %v3300
  %v3365 = vmul.f32 %v3301, %v3301
  %v3366 = vmul.f32 %v3302, %v3302
  %v3367 = vmul.f32 %v3303, %v3303
  %v3368 = vsel %vm1826, %v3304, 0.0
  %v3369 = vsel %vm1826, %v3305, 0.0
  %v3370 = vadd.f32 %v3368, %v3369
  %v3371 = vsel %vm1826, %v3306, 0.0
  %v3372 = vadd.f32 %v3370, %v3371
  %v3373 = vsel %vm1826, %v3307, 0.0
  %v3374 = vadd.f32 %v3372, %v3373
  %v3375 = vsel %vm1826, %v3308, 0.0
  %v3376 = vadd.f32 %v3374, %v3375
  %v3377 = vsel %vm1826, %v3309, 0.0
  %v3378 = vadd.f32 %v3376, %v3377
  %v3379 = vsel %vm1826, %v3310, 0.0
  %v3380 = vadd.f32 %v3378, %v3379
  %v3381 = vsel %vm1826, %v3311, 0.0
  %v3382 = vadd.f32 %v3380, %v3381
  %v3383 = vsel %vm1826, %v3312, 0.0
  %v3384 = vadd.f32 %v3382, %v3383
  %v3385 = vsel %vm1826, %v3313, 0.0
  %v3386 = vadd.f32 %v3384, %v3385
  %v3387 = vsel %vm1826, %v3314, 0.0
  %v3388 = vadd.f32 %v3386, %v3387
  %v3389 = vsel %vm1826, %v3315, 0.0
  %v3390 = vadd.f32 %v3388, %v3389
  %v3391 = vsel %vm1826, %v3316, 0.0
  %v3392 = vadd.f32 %v3390, %v3391
  %v3393 = vsel %vm1826, %v3317, 0.0
  %v3394 = vadd.f32 %v3392, %v3393
  %v3395 = vsel %vm1826, %v3318, 0.0
  %v3396 = vadd.f32 %v3394, %v3395
  %v3397 = vsel %vm1826, %v3319, 0.0
  %v3398 = vadd.f32 %v3396, %v3397
  %v3399 = vsel %vm1826, %v3320, 0.0
  %v3400 = vadd.f32 %v3398, %v3399
  %v3401 = vsel %vm1826, %v3321, 0.0
  %v3402 = vadd.f32 %v3400, %v3401
  %v3403 = vsel %vm1826, %v3322, 0.0
  %v3404 = vadd.f32 %v3402, %v3403
  %v3405 = vsel %vm1826, %v3323, 0.0
  %v3406 = vadd.f32 %v3404, %v3405
  %v3407 = vsel %vm1826, %v3324, 0.0
  %v3408 = vadd.f32 %v3406, %v3407
  %v3409 = vsel %vm1826, %v3325, 0.0
  %v3410 = vadd.f32 %v3408, %v3409
  %v3411 = vsel %vm1826, %v3326, 0.0
  %v3412 = vadd.f32 %v3410, %v3411
  %v3413 = vsel %vm1826, %v3327, 0.0
  %v3414 = vadd.f32 %v3412, %v3413
  %v3415 = vsel %vm1826, %v3328, 0.0
  %v3416 = vadd.f32 %v3414, %v3415
  %v3417 = vsel %vm1826, %v3329, 0.0
  %v3418 = vadd.f32 %v3416, %v3417
  %v3419 = vsel %vm1826, %v3330, 0.0
  %v3420 = vadd.f32 %v3418, %v3419
  %v3421 = vsel %vm1826, %v3331, 0.0
  %v3422 = vadd.f32 %v3420, %v3421
  %v3423 = vsel %vm1826, %v3332, 0.0
  %v3424 = vadd.f32 %v3422, %v3423
  %v3425 = vsel %vm1826, %v3333, 0.0
  %v3426 = vadd.f32 %v3424, %v3425
  %v3427 = vsel %vm1826, %v3334, 0.0
  %v3428 = vadd.f32 %v3426, %v3427
  %v3429 = vsel %vm1826, %v3335, 0.0
  %v3430 = vadd.f32 %v3428, %v3429
  %v3431 = vsel %vm1826, %v3336, 0.0
  %v3432 = vadd.f32 %v3430, %v3431
  %v3433 = vsel %vm1826, %v3337, 0.0
  %v3434 = vadd.f32 %v3432, %v3433
  %v3435 = vsel %vm1826, %v3338, 0.0
  %v3436 = vadd.f32 %v3434, %v3435
  %v3437 = vsel %vm1826, %v3339, 0.0
  %v3438 = vadd.f32 %v3436, %v3437
  %v3439 = vsel %vm1826, %v3340, 0.0
  %v3440 = vadd.f32 %v3438, %v3439
  %v3441 = vsel %vm1826, %v3341, 0.0
  %v3442 = vadd.f32 %v3440, %v3441
  %v3443 = vsel %vm1826, %v3342, 0.0
  %v3444 = vadd.f32 %v3442, %v3443
  %v3445 = vsel %vm1826, %v3343, 0.0
  %v3446 = vadd.f32 %v3444, %v3445
  %v3447 = vsel %vm1826, %v3344, 0.0
  %v3448 = vadd.f32 %v3446, %v3447
  %v3449 = vsel %vm1826, %v3345, 0.0
  %v3450 = vadd.f32 %v3448, %v3449
  %v3451 = vsel %vm1826, %v3346, 0.0
  %v3452 = vadd.f32 %v3450, %v3451
  %v3453 = vsel %vm1826, %v3347, 0.0
  %v3454 = vadd.f32 %v3452, %v3453
  %v3455 = vsel %vm1826, %v3348, 0.0
  %v3456 = vadd.f32 %v3454, %v3455
  %v3457 = vsel %vm1826, %v3349, 0.0
  %v3458 = vadd.f32 %v3456, %v3457
  %v3459 = vsel %vm1826, %v3350, 0.0
  %v3460 = vadd.f32 %v3458, %v3459
  %v3461 = vsel %vm1826, %v3351, 0.0
  %v3462 = vadd.f32 %v3460, %v3461
  %v3463 = vsel %vm1826, %v3352, 0.0
  %v3464 = vadd.f32 %v3462, %v3463
  %v3465 = vsel %vm1826, %v3353, 0.0
  %v3466 = vadd.f32 %v3464, %v3465
  %v3467 = vsel %vm1826, %v3354, 0.0
  %v3468 = vadd.f32 %v3466, %v3467
  %v3469 = vsel %vm1826, %v3355, 0.0
  %v3470 = vadd.f32 %v3468, %v3469
  %v3471 = vsel %vm1826, %v3356, 0.0
  %v3472 = vadd.f32 %v3470, %v3471
  %v3473 = vsel %vm1826, %v3357, 0.0
  %v3474 = vadd.f32 %v3472, %v3473
  %v3475 = vsel %vm1826, %v3358, 0.0
  %v3476 = vadd.f32 %v3474, %v3475
  %v3477 = vsel %vm1826, %v3359, 0.0
  %v3478 = vadd.f32 %v3476, %v3477
  %v3479 = vsel %vm1826, %v3360, 0.0
  %v3480 = vadd.f32 %v3478, %v3479
  %v3481 = vsel %vm1826, %v3361, 0.0
  %v3482 = vadd.f32 %v3480, %v3481
  %v3483 = vsel %vm1826, %v3362, 0.0
  %v3484 = vadd.f32 %v3482, %v3483
  %v3485 = vsel %vm1826, %v3363, 0.0
  %v3486 = vadd.f32 %v3484, %v3485
  %v3487 = vsel %vm1826, %v3364, 0.0
  %v3488 = vadd.f32 %v3486, %v3487
  %v3489 = vsel %vm1826, %v3365, 0.0
  %v3490 = vadd.f32 %v3488, %v3489
  %v3491 = vsel %vm1826, %v3366, 0.0
  %v3492 = vadd.f32 %v3490, %v3491
  %v3493 = vsel %vm1826, %v3367, 0.0
  %v3494 = vadd.f32 %v3492, %v3493
  %v3495 = vrot.slane %v3494, 4
  %v3496 = vadd.f32 %v3494, %v3495
  %v3497 = vrot.slane %v3496, 2
  %v3498 = vadd.f32 %v3496, %v3497
  %v3499 = vrot.slane %v3498, 1
  %v3500 = vadd.f32 %v3498, %v3499
  %v3501 = vmul.f32 %v3500, 0.001953125
  %v3502 = vld [vmem:[%s2] sm:$0x1]
  %v3503 = vadd.f32 %v3501, 0.001
  %v3504 = vrsqrt.pop %v3503
  %v3505 = vmul.f32 %v3504, %v3503
  %v3506 = vmul.f32 %v3505, %v3504
  %v3507 = vmul.f32 0.5, %v3506
  %v3508 = vsub.f32 1.5, %v3507
  %v3509 = vmul.f32 %v3504, %v3508
  %vm3510 = vweird.f32 %v3503
  %vm3511 = vweird.f32 %v3504
  %vm3512 = vmor %vm3510, %vm3511
  %v3513 = vsel %vm3512, %v3504, %v3509
  %v3514 = vmul.f32 %v3502, %v3513
  %v3516 = vperm.slane %v3514, 0
  %v3518 = vmul.f32 %v3240, %v3516
  %v3519 = vmul.f32 %v3241, %v3516
  %v3520 = vmul.f32 %v3242, %v3516
  %v3521 = vmul.f32 %v3243, %v3516
  %v3522 = vmul.f32 %v3244, %v3516
  %v3523 = vmul.f32 %v3245, %v3516
  %v3524 = vmul.f32 %v3246, %v3516
  %v3525 = vmul.f32 %v3247, %v3516
  %v3526 = vmul.f32 %v3248, %v3516
  %v3527 = vmul.f32 %v3249, %v3516
  %v3528 = vmul.f32 %v3250, %v3516
  %v3529 = vmul.f32 %v3251, %v3516
  %v3530 = vmul.f32 %v3252, %v3516
  %v3531 = vmul.f32 %v3253, %v3516
  %v3532 = vmul.f32 %v3254, %v3516
  %v3533 = vmul.f32 %v3255, %v3516
  %v3534 = vmul.f32 %v3256, %v3516
  %v3535 = vmul.f32 %v3257, %v3516
  %v3536 = vmul.f32 %v3258, %v3516
  %v3537 = vmul.f32 %v3259, %v3516
  %v3538 = vmul.f32 %v3260, %v3516
  %v3539 = vmul.f32 %v3261, %v3516
  %v3540 = vmul.f32 %v3262, %v3516
  %v3541 = vmul.f32 %v3263, %v3516
  %v3542 = vmul.f32 %v3264, %v3516
  %v3543 = vmul.f32 %v3265, %v3516
  %v3544 = vmul.f32 %v3266, %v3516
  %v3545 = vmul.f32 %v3267, %v3516
  %v3546 = vmul.f32 %v3268, %v3516
  %v3547 = vmul.f32 %v3269, %v3516
  %v3548 = vmul.f32 %v3270, %v3516
  %v3549 = vmul.f32 %v3271, %v3516
  %v3550 = vmul.f32 %v3272, %v3516
  %v3551 = vmul.f32 %v3273, %v3516
  %v3552 = vmul.f32 %v3274, %v3516
  %v3553 = vmul.f32 %v3275, %v3516
  %v3554 = vmul.f32 %v3276, %v3516
  %v3555 = vmul.f32 %v3277, %v3516
  %v3556 = vmul.f32 %v3278, %v3516
  %v3557 = vmul.f32 %v3279, %v3516
  %v3558 = vmul.f32 %v3280, %v3516
  %v3559 = vmul.f32 %v3281, %v3516
  %v3560 = vmul.f32 %v3282, %v3516
  %v3561 = vmul.f32 %v3283, %v3516
  %v3562 = vmul.f32 %v3284, %v3516
  %v3563 = vmul.f32 %v3285, %v3516
  %v3564 = vmul.f32 %v3286, %v3516
  %v3565 = vmul.f32 %v3287, %v3516
  %v3566 = vmul.f32 %v3288, %v3516
  %v3567 = vmul.f32 %v3289, %v3516
  %v3568 = vmul.f32 %v3290, %v3516
  %v3569 = vmul.f32 %v3291, %v3516
  %v3570 = vmul.f32 %v3292, %v3516
  %v3571 = vmul.f32 %v3293, %v3516
  %v3572 = vmul.f32 %v3294, %v3516
  %v3573 = vmul.f32 %v3295, %v3516
  %v3574 = vmul.f32 %v3296, %v3516
  %v3575 = vmul.f32 %v3297, %v3516
  %v3576 = vmul.f32 %v3298, %v3516
  %v3577 = vmul.f32 %v3299, %v3516
  %v3578 = vmul.f32 %v3300, %v3516
  %v3579 = vmul.f32 %v3301, %v3516
  %v3580 = vmul.f32 %v3302, %v3516
  %v3581 = vmul.f32 %v3303, %v3516
  %v3582 = vld [vmem:[%s3] sm:$0x1]
  %v3584 = vperm.slane %v3582, 0
  %v3586 = vadd.f32 %v3518, %v3584
  %v3587 = vadd.f32 %v3519, %v3584
  %v3588 = vadd.f32 %v3520, %v3584
  %v3589 = vadd.f32 %v3521, %v3584
  %v3590 = vadd.f32 %v3522, %v3584
  %v3591 = vadd.f32 %v3523, %v3584
  %v3592 = vadd.f32 %v3524, %v3584
  %v3593 = vadd.f32 %v3525, %v3584
  %v3594 = vadd.f32 %v3526, %v3584
  %v3595 = vadd.f32 %v3527, %v3584
  %v3596 = vadd.f32 %v3528, %v3584
  %v3597 = vadd.f32 %v3529, %v3584
  %v3598 = vadd.f32 %v3530, %v3584
  %v3599 = vadd.f32 %v3531, %v3584
  %v3600 = vadd.f32 %v3532, %v3584
  %v3601 = vadd.f32 %v3533, %v3584
  %v3602 = vadd.f32 %v3534, %v3584
  %v3603 = vadd.f32 %v3535, %v3584
  %v3604 = vadd.f32 %v3536, %v3584
  %v3605 = vadd.f32 %v3537, %v3584
  %v3606 = vadd.f32 %v3538, %v3584
  %v3607 = vadd.f32 %v3539, %v3584
  %v3608 = vadd.f32 %v3540, %v3584
  %v3609 = vadd.f32 %v3541, %v3584
  %v3610 = vadd.f32 %v3542, %v3584
  %v3611 = vadd.f32 %v3543, %v3584
  %v3612 = vadd.f32 %v3544, %v3584
  %v3613 = vadd.f32 %v3545, %v3584
  %v3614 = vadd.f32 %v3546, %v3584
  %v3615 = vadd.f32 %v3547, %v3584
  %v3616 = vadd.f32 %v3548, %v3584
  %v3617 = vadd.f32 %v3549, %v3584
  %v3618 = vadd.f32 %v3550, %v3584
  %v3619 = vadd.f32 %v3551, %v3584
  %v3620 = vadd.f32 %v3552, %v3584
  %v3621 = vadd.f32 %v3553, %v3584
  %v3622 = vadd.f32 %v3554, %v3584
  %v3623 = vadd.f32 %v3555, %v3584
  %v3624 = vadd.f32 %v3556, %v3584
  %v3625 = vadd.f32 %v3557, %v3584
  %v3626 = vadd.f32 %v3558, %v3584
  %v3627 = vadd.f32 %v3559, %v3584
  %v3628 = vadd.f32 %v3560, %v3584
  %v3629 = vadd.f32 %v3561, %v3584
  %v3630 = vadd.f32 %v3562, %v3584
  %v3631 = vadd.f32 %v3563, %v3584
  %v3632 = vadd.f32 %v3564, %v3584
  %v3633 = vadd.f32 %v3565, %v3584
  %v3634 = vadd.f32 %v3566, %v3584
  %v3635 = vadd.f32 %v3567, %v3584
  %v3636 = vadd.f32 %v3568, %v3584
  %v3637 = vadd.f32 %v3569, %v3584
  %v3638 = vadd.f32 %v3570, %v3584
  %v3639 = vadd.f32 %v3571, %v3584
  %v3640 = vadd.f32 %v3572, %v3584
  %v3641 = vadd.f32 %v3573, %v3584
  %v3642 = vadd.f32 %v3574, %v3584
  %v3643 = vadd.f32 %v3575, %v3584
  %v3644 = vadd.f32 %v3576, %v3584
  %v3645 = vadd.f32 %v3577, %v3584
  %v3646 = vadd.f32 %v3578, %v3584
  %v3647 = vadd.f32 %v3579, %v3584
  %v3648 = vadd.f32 %v3580, %v3584
  %v3649 = vadd.f32 %v3581, %v3584
  %v3650 = vmax.f32 %v3586, 0.0
  %v3651 = vmax.f32 %v3587, 0.0
  %v3652 = vmax.f32 %v3588, 0.0
  %v3653 = vmax.f32 %v3589, 0.0
  %v3654 = vmax.f32 %v3590, 0.0
  %v3655 = vmax.f32 %v3591, 0.0
  %v3656 = vmax.f32 %v3592, 0.0
  %v3657 = vmax.f32 %v3593, 0.0
  %v3658 = vmax.f32 %v3594, 0.0
  %v3659 = vmax.f32 %v3595, 0.0
  %v3660 = vmax.f32 %v3596, 0.0
  %v3661 = vmax.f32 %v3597, 0.0
  %v3662 = vmax.f32 %v3598, 0.0
  %v3663 = vmax.f32 %v3599, 0.0
  %v3664 = vmax.f32 %v3600, 0.0
  %v3665 = vmax.f32 %v3601, 0.0
  %v3666 = vmax.f32 %v3602, 0.0
  %v3667 = vmax.f32 %v3603, 0.0
  %v3668 = vmax.f32 %v3604, 0.0
  %v3669 = vmax.f32 %v3605, 0.0
  %v3670 = vmax.f32 %v3606, 0.0
  %v3671 = vmax.f32 %v3607, 0.0
  %v3672 = vmax.f32 %v3608, 0.0
  %v3673 = vmax.f32 %v3609, 0.0
  %v3674 = vmax.f32 %v3610, 0.0
  %v3675 = vmax.f32 %v3611, 0.0
  %v3676 = vmax.f32 %v3612, 0.0
  %v3677 = vmax.f32 %v3613, 0.0
  %v3678 = vmax.f32 %v3614, 0.0
  %v3679 = vmax.f32 %v3615, 0.0
  %v3680 = vmax.f32 %v3616, 0.0
  %v3681 = vmax.f32 %v3617, 0.0
  %v3682 = vmax.f32 %v3618, 0.0
  %v3683 = vmax.f32 %v3619, 0.0
  %v3684 = vmax.f32 %v3620, 0.0
  %v3685 = vmax.f32 %v3621, 0.0
  %v3686 = vmax.f32 %v3622, 0.0
  %v3687 = vmax.f32 %v3623, 0.0
  %v3688 = vmax.f32 %v3624, 0.0
  %v3689 = vmax.f32 %v3625, 0.0
  %v3690 = vmax.f32 %v3626, 0.0
  %v3691 = vmax.f32 %v3627, 0.0
  %v3692 = vmax.f32 %v3628, 0.0
  %v3693 = vmax.f32 %v3629, 0.0
  %v3694 = vmax.f32 %v3630, 0.0
  %v3695 = vmax.f32 %v3631, 0.0
  %v3696 = vmax.f32 %v3632, 0.0
  %v3697 = vmax.f32 %v3633, 0.0
  %v3698 = vmax.f32 %v3634, 0.0
  %v3699 = vmax.f32 %v3635, 0.0
  %v3700 = vmax.f32 %v3636, 0.0
  %v3701 = vmax.f32 %v3637, 0.0
  %v3702 = vmax.f32 %v3638, 0.0
  %v3703 = vmax.f32 %v3639, 0.0
  %v3704 = vmax.f32 %v3640, 0.0
  %v3705 = vmax.f32 %v3641, 0.0
  %v3706 = vmax.f32 %v3642, 0.0
  %v3707 = vmax.f32 %v3643, 0.0
  %v3708 = vmax.f32 %v3644, 0.0
  %v3709 = vmax.f32 %v3645, 0.0
  %v3710 = vmax.f32 %v3646, 0.0
  %v3711 = vmax.f32 %v3647, 0.0
  %v3712 = vmax.f32 %v3648, 0.0
  %v3713 = vmax.f32 %v3649, 0.0
  %3714 = vst.msk [vmem:[%s4] sm:$0xff] %vm1826, %v3650
  %3715 = vst.msk [vmem:[%s4 + $0x8] sm:$0xff] %vm1826, %v3651
  %3716 = vst.msk [vmem:[%s4 + $0x10] sm:$0xff] %vm1826, %v3652
  %3717 = vst.msk [vmem:[%s4 + $0x18] sm:$0xff] %vm1826, %v3653
  %3718 = vst.msk [vmem:[%s4 + $0x20] sm:$0xff] %vm1826, %v3654
  %3719 = vst.msk [vmem:[%s4 + $0x28] sm:$0xff] %vm1826, %v3655
  %3720 = vst.msk [vmem:[%s4 + $0x30] sm:$0xff] %vm1826, %v3656
  %3721 = vst.msk [vmem:[%s4 + $0x38] sm:$0xff] %vm1826, %v3657
  %3722 = vst.msk [vmem:[%s4 + $0x40] sm:$0xff] %vm1826, %v3658
  %3723 = vst.msk [vmem:[%s4 + $0x48] sm:$0xff] %vm1826, %v3659
  %3724 = vst.msk [vmem:[%s4 + $0x50] sm:$0xff] %vm1826, %v3660
  %3725 = vst.msk [vmem:[%s4 + $0x58] sm:$0xff] %vm1826, %v3661
  %3726 = vst.msk [vmem:[%s4 + $0x60] sm:$0xff] %vm1826, %v3662
  %3727 = vst.msk [vmem:[%s4 + $0x68] sm:$0xff] %vm1826, %v3663
  %3728 = vst.msk [vmem:[%s4 + $0x70] sm:$0xff] %vm1826, %v3664
  %3729 = vst.msk [vmem:[%s4 + $0x78] sm:$0xff] %vm1826, %v3665
  %3730 = vst.msk [vmem:[%s4 + $0x80] sm:$0xff] %vm1826, %v3666
  %3731 = vst.msk [vmem:[%s4 + $0x88] sm:$0xff] %vm1826, %v3667
  %3732 = vst.msk [vmem:[%s4 + $0x90] sm:$0xff] %vm1826, %v3668
  %3733 = vst.msk [vmem:[%s4 + $0x98] sm:$0xff] %vm1826, %v3669
  %3734 = vst.msk [vmem:[%s4 + $0xa0] sm:$0xff] %vm1826, %v3670
  %3735 = vst.msk [vmem:[%s4 + $0xa8] sm:$0xff] %vm1826, %v3671
  %3736 = vst.msk [vmem:[%s4 + $0xb0] sm:$0xff] %vm1826, %v3672
  %3737 = vst.msk [vmem:[%s4 + $0xb8] sm:$0xff] %vm1826, %v3673
  %3738 = vst.msk [vmem:[%s4 + $0xc0] sm:$0xff] %vm1826, %v3674
  %3739 = vst.msk [vmem:[%s4 + $0xc8] sm:$0xff] %vm1826, %v3675
  %3740 = vst.msk [vmem:[%s4 + $0xd0] sm:$0xff] %vm1826, %v3676
  %3741 = vst.msk [vmem:[%s4 + $0xd8] sm:$0xff] %vm1826, %v3677
  %3742 = vst.msk [vmem:[%s4 + $0xe0] sm:$0xff] %vm1826, %v3678
  %3743 = vst.msk [vmem:[%s4 + $0xe8] sm:$0xff] %vm1826, %v3679
  %3744 = vst.msk [vmem:[%s4 + $0xf0] sm:$0xff] %vm1826, %v3680
  %3745 = vst.msk [vmem:[%s4 + $0xf8] sm:$0xff] %vm1826, %v3681
  %3746 = vst.msk [vmem:[%s4 + $0x100] sm:$0xff] %vm1826, %v3682
  %3747 = vst.msk [vmem:[%s4 + $0x108] sm:$0xff] %vm1826, %v3683
  %3748 = vst.msk [vmem:[%s4 + $0x110] sm:$0xff] %vm1826, %v3684
  %3749 = vst.msk [vmem:[%s4 + $0x118] sm:$0xff] %vm1826, %v3685
  %3750 = vst.msk [vmem:[%s4 + $0x120] sm:$0xff] %vm1826, %v3686
  %3751 = vst.msk [vmem:[%s4 + $0x128] sm:$0xff] %vm1826, %v3687
  %3752 = vst.msk [vmem:[%s4 + $0x130] sm:$0xff] %vm1826, %v3688
  %3753 = vst.msk [vmem:[%s4 + $0x138] sm:$0xff] %vm1826, %v3689
  %3754 = vst.msk [vmem:[%s4 + $0x140] sm:$0xff] %vm1826, %v3690
  %3755 = vst.msk [vmem:[%s4 + $0x148] sm:$0xff] %vm1826, %v3691
  %3756 = vst.msk [vmem:[%s4 + $0x150] sm:$0xff] %vm1826, %v3692
  %3757 = vst.msk [vmem:[%s4 + $0x158] sm:$0xff] %vm1826, %v3693
  %3758 = vst.msk [vmem:[%s4 + $0x160] sm:$0xff] %vm1826, %v3694
  %3759 = vst.msk [vmem:[%s4 + $0x168] sm:$0xff] %vm1826, %v3695
  %3760 = vst.msk [vmem:[%s4 + $0x170] sm:$0xff] %vm1826, %v3696
  %3761 = vst.msk [vmem:[%s4 + $0x178] sm:$0xff] %vm1826, %v3697
  %3762 = vst.msk [vmem:[%s4 + $0x180] sm:$0xff] %vm1826, %v3698
  %3763 = vst.msk [vmem:[%s4 + $0x188] sm:$0xff] %vm1826, %v3699
  %3764 = vst.msk [vmem:[%s4 + $0x190] sm:$0xff] %vm1826, %v3700
  %3765 = vst.msk [vmem:[%s4 + $0x198] sm:$0xff] %vm1826, %v3701
  %3766 = vst.msk [vmem:[%s4 + $0x1a0] sm:$0xff] %vm1826, %v3702
  %3767 = vst.msk [vmem:[%s4 + $0x1a8] sm:$0xff] %vm1826, %v3703
  %3768 = vst.msk [vmem:[%s4 + $0x1b0] sm:$0xff] %vm1826, %v3704
  %3769 = vst.msk [vmem:[%s4 + $0x1b8] sm:$0xff] %vm1826, %v3705
  %3770 = vst.msk [vmem:[%s4 + $0x1c0] sm:$0xff] %vm1826, %v3706
  %3771 = vst.msk [vmem:[%s4 + $0x1c8] sm:$0xff] %vm1826, %v3707
  %3772 = vst.msk [vmem:[%s4 + $0x1d0] sm:$0xff] %vm1826, %v3708
  %3773 = vst.msk [vmem:[%s4 + $0x1d8] sm:$0xff] %vm1826, %v3709
  %3774 = vst.msk [vmem:[%s4 + $0x1e0] sm:$0xff] %vm1826, %v3710
  %3775 = vst.msk [vmem:[%s4 + $0x1e8] sm:$0xff] %vm1826, %v3711
  %3776 = vst.msk [vmem:[%s4 + $0x1f0] sm:$0xff] %vm1826, %v3712
  %3777 = vst.msk [vmem:[%s4 + $0x1f8] sm:$0xff] %vm1826, %v3713
  // Predicated region
  $region18: #{inception1_forward.7} parent=0 // pred_check
    _
  $region19: #{inception1_forward.7} parent=0 // pred_check_branch
    %3779 = sbr.rel (0) target = $region21
  $region20: #{inception1_forward.7} parent=0 // pred_region
    _
  $region21: #{inception1_forward.7} parent=0 // pred_fallthru
    _
  // Predicated region
  $region22: #{inception1_forward.7} parent=0 // pred_check
    _
  $region23: #{inception1_forward.7} parent=0 // pred_check_branch
    %3781 = sbr.rel (0) target = $region25
  $region24: #{inception1_forward.7} parent=0 // pred_region
    _
  $region25: #{inception1_forward.7} parent=0 // pred_fallthru
    _

</llo_original>
